<compile_context>
chip_gen: v7x
topology: tpu7x:2x2x1
jax: 0.10.0
libtpu: 0.0.40
codegen_flags: <defaults>
</compile_context>

<pallas_src>
import jax
import jax.numpy as jnp
from jax import lax
from jax.experimental import pallas as pl
from jax.experimental.pallas import tpu as pltpu


_TAPS = tuple((kh, kw) for kh in range(3) for kw in range(3))


def _dense_conv3x3(xv, wp, n_rows, w_ref, b_ref, cin):
    """3x3 conv evaluated at every anchor row of a flattened padded grid.

    xv    : (n_rows + 2*wp + 2, cin) f32 value — padded grid (row = h*wp + w)
            plus a zero tail so every tap slice stays in bounds.
    w_ref : (9*cin, cout) ref, rows ordered (kh, kw, cin).
    b_ref : (1, cout) ref.
    Returns (n_rows, cout) f32; row r is the conv output whose receptive field
    top-left corner is padded-grid row r.  Rows near the right/bottom border
    are garbage and are simply never sampled by the caller.
    """
    acc = None
    for t, (kh, kw) in enumerate(_TAPS):
        off = kh * wp + kw
        a = xv[off:off + n_rows, :]
        wt = w_ref[t * cin:(t + 1) * cin, :]
        p = jnp.dot(a, wt, preferred_element_type=jnp.float32)
        acc = p if acc is None else acc + p
    return acc + b_ref[...]


def _pool2x2_window_max(yv, wp, n):
    """m[r] = max of the 2x2 window anchored at flattened-grid row r."""
    return jnp.maximum(
        jnp.maximum(yv[0:n, :], yv[1:n + 1, :]),
        jnp.maximum(yv[wp:wp + n, :], yv[wp + 1:wp + 1 + n, :]),
    )


# ----------------------------------------------------------------------------
# Fused forward
# ----------------------------------------------------------------------------
@jax.jit
def wide_cipsi_forward(params, x_nchw):
    B, cin, H, W = x_nchw.shape

    # channel sizes (from the synthetic params)
    w1, b1 = params["conv1"]
    c1 = w1.shape[3]
    cb = params["conv2a"][0].shape[3]
    c3 = params["conv3a"][0].shape[3]
    c7 = params["conv7"][0].shape[3]
    c8 = params["conv8"][0].shape[3]
    cbr = c1 + 3 * cb          # lanes of the fused conv3 input  [a|b|c|d]
    ccat = 4 * c3              # lanes of torch.cat([a,b,c,d])
    cin_p = cin if cin >= 8 else 8   # pad K of conv1 taps to a full sublane

    # spatial geometry (flattened padded grids)
    wp0 = W + 2
    n0 = (H + 2) * wp0
    t0 = 2 * wp0 + 2
    H1, W1s = H // 2, W // 2             # after mp1_5
    wp1 = W1s + 2
    n1 = (H1 + 2) * wp1
    t1 = 2 * wp1 + 2
    Hq, Wq = H1 // 2, W1s // 2           # branch spatial (4x4)
    wp2 = Wq + 2
    n2 = (Hq + 2) * wp2
    t2 = 2 * wp2 + 2
    Ho, Wo = Hq // 2, Wq // 2            # after mp4 (2x2)

    # ---- input: NCHW -> NHWC -> zero-padded flattened grid + zero tail -----
    x_nhwc = jnp.transpose(x_nchw, (0, 2, 3, 1)).astype(jnp.float32)
    xpad = jnp.pad(x_nhwc, ((0, 0), (1, 1), (1, 1), (0, cin_p - cin)))
    x_flat = xpad.reshape(B, n0, cin_p)
    x_flat = jnp.pad(x_flat, ((0, 0), (0, t0), (0, 0)))

    # ---- weight packing (plain-JAX, tiny, done once per call) --------------
    w1p = jnp.pad(w1, ((0, 0), (0, 0), (0, cin_p - cin), (0, 0)))
    W1m = w1p.reshape(9 * cin_p, c1)
    b1m = b1.reshape(1, c1)

    w2a, b2a = params["conv2a"]
    w2b, b2b = params["conv2b"]
    w2c, b2c = params["conv2c"]
    W2m = jnp.concatenate([w2a, w2b, w2c], axis=3).reshape(9 * c1, 3 * cb)
    b2m = jnp.concatenate([b2a, b2b, b2c]).reshape(1, 3 * cb)

    w3a, b3a = params["conv3a"]
    w3b, b3b = params["conv3b"]
    w3c, b3c = params["conv3c"]
    w3d, b3d = params["conv3d"]
    w3 = jnp.zeros((3, 3, cbr, ccat), jnp.float32)
    w3 = w3.at[:, :, 0:c1, 0:c3].set(w3a)
    w3 = w3.at[:, :, c1:c1 + cb, c3:2 * c3].set(w3b)
    w3 = w3.at[:, :, c1 + cb:c1 + 2 * cb, 2 * c3:3 * c3].set(w3c)
    w3 = w3.at[:, :, c1 + 2 * cb:c1 + 3 * cb, 3 * c3:4 * c3].set(w3d)
    W3m = w3.reshape(9 * cbr, ccat)
    b3m = jnp.concatenate([b3a, b3b, b3c, b3d]).reshape(1, ccat)

    w7, b7 = params["conv7"]
    W7m = w7.reshape(9 * ccat, c7)
    b7m = b7.reshape(1, c7)
    w8, b8 = params["conv8"]
    W8m = w8.reshape(c7, c8)
    b8m = b8.reshape(1, c8)

    # ------------------------------------------------------------------------
    # The single fused kernel (one grid step = one batch element)
    # ------------------------------------------------------------------------
    def kernel(x_ref, w1_ref, b1_ref, w2_ref, b2_ref, w3_ref, b3_ref,
               w7_ref, b7_ref, w8_ref, b8_ref, o_ref, xp1, xp2, xp3):
        # Scratch padded grids: borders / tails must be zero (conv padding).
        xp1[...] = jnp.zeros(xp1.shape, jnp.float32)
        xp2[...] = jnp.zeros(xp2.shape, jnp.float32)
        xp3[...] = jnp.zeros(xp3.shape, jnp.float32)

        # ---- conv1 : 3x3 s1 p1 ---------------------------------------------
        x0 = x_ref[...]                                          # (n0+t0, cin_p)
        y1 = _dense_conv3x3(x0, wp0, n0, w1_ref, b1_ref, cin_p)  # (n0, c1)

        # ---- mp1_5 : 2x2 s2  -> padded grid xp1 ------------------------------
        m1 = _pool2x2_window_max(y1, wp0, n0 - wp0 - 1)
        for oh in range(H1):
            for ow in range(W1s):
                src = (2 * oh) * wp0 + 2 * ow
                dst = (oh + 1) * wp1 + (ow + 1)
                xp1[dst:dst + 1, :] = m1[src:src + 1, :]
        x1v = xp1[...]                                           # (n1+t1, c1)

        # ---- branch a : mp2  -> xp2 lanes [0:c1] -----------------------------
        m2 = _pool2x2_window_max(x1v, wp1, n1 - wp1 - 1)
        for oh in range(Hq):
            for ow in range(Wq):
                src = (2 * oh + 1) * wp1 + (2 * ow + 1)
                dst = (oh + 1) * wp2 + (ow + 1)
                xp2[dst:dst + 1, 0:c1] = m2[src:src + 1, :]

        # ---- branches b,c,d : conv2a|2b|2c fused (3x3 s2 p1) -----------------
        y2 = _dense_conv3x3(x1v, wp1, n1, w2_ref, b2_ref, c1)   # (n1, 3*cb)
        for oh in range(Hq):
            for ow in range(Wq):
                src = (2 * oh) * wp1 + 2 * ow                    # stride-2 anchor
                dst = (oh + 1) * wp2 + (ow + 1)
                xp2[dst:dst + 1, c1:cbr] = y2[src:src + 1, :]

        # ---- conv3a..d fused (block-diag)  == torch.cat([a,b,c,d], dim=1) ----
        x2v = xp2[...]                                           # (n2+t2, cbr)
        y3 = _dense_conv3x3(x2v, wp2, n2, w3_ref, b3_ref, cbr)   # (n2, ccat)
        for oh in range(Hq):
            src = oh * wp2
            dst = (oh + 1) * wp2 + 1
            xp3[dst:dst + Wq, :] = y3[src:src + Wq, :]

        # ---- conv7 : 3x3 s1 p1 ------------------------------------------------
        x3v = xp3[...]                                           # (n2+t2, ccat)
        y7 = _dense_conv3x3(x3v, wp2, n2, w7_ref, b7_ref, ccat)  # (n2, c7)

        # ---- mp4 : 2x2 s2  +  conv8 : 1x1 -------------------------------------
        m4 = _pool2x2_window_max(y7, wp2, n2 - wp2 - 1)
        y8 = jnp.dot(m4, w8_ref[...], preferred_element_type=jnp.float32)
        y8 = y8 + b8_ref[...]
        i = 0
        for oh in range(Ho):
            for ow in range(Wo):
                src = (2 * oh) * wp2 + 2 * ow
                o_ref[i:i + 1, :] = y8[src:src + 1, :].astype(o_ref.dtype)
                i += 1

    out_flat = pl.pallas_call(
        kernel,
        out_shape=jax.ShapeDtypeStruct((B, Ho * Wo, c8), jnp.float32),
        grid=(B,),
        in_specs=[
            pl.BlockSpec((None, n0 + t0, cin_p), lambda b: (b, 0, 0)),
            pl.BlockSpec((9 * cin_p, c1), lambda b: (0, 0)),
            pl.BlockSpec((1, c1), lambda b: (0, 0)),
            pl.BlockSpec((9 * c1, 3 * cb), lambda b: (0, 0)),
            pl.BlockSpec((1, 3 * cb), lambda b: (0, 0)),
            pl.BlockSpec((9 * cbr, ccat), lambda b: (0, 0)),
            pl.BlockSpec((1, ccat), lambda b: (0, 0)),
            pl.BlockSpec((9 * ccat, c7), lambda b: (0, 0)),
            pl.BlockSpec((1, c7), lambda b: (0, 0)),
            pl.BlockSpec((c7, c8), lambda b: (0, 0)),
            pl.BlockSpec((1, c8), lambda b: (0, 0)),
        ],
        out_specs=pl.BlockSpec((None, Ho * Wo, c8), lambda b: (b, 0, 0)),
        scratch_shapes=[
            pltpu.VMEM((n1 + t1, c1), jnp.float32),     # padded mp1_5 output
            pltpu.VMEM((n2 + t2, cbr), jnp.float32),    # padded [a|b|c|d] input
            pltpu.VMEM((n2 + t2, ccat), jnp.float32),   # padded cat output
        ],
        compiler_params=pltpu.CompilerParams(
            dimension_semantics=("parallel",),
        ),
    )(x_flat, W1m, b1m, W2m, b2m, W3m, b3m, W7m, b7m, W8m, b8m)

    out = out_flat.reshape(B, Ho, Wo, c8)
    return jnp.transpose(out, (0, 3, 1, 2))   # NHWC -> NCHW


# ----------------------------------------------------------------------------
# Deterministic parameter construction (synthetic, PyTorch-ish fan-in scaling)
# ----------------------------------------------------------------------------
def _init_conv(key, kh, kw, cin, cout):
    kw_key, kb_key = jax.random.split(key)
    fan_in = kh * kw * cin
    w = jax.random.normal(kw_key, (kh, kw, cin, cout), jnp.float32) / jnp.sqrt(
        float(fan_in)
    )
    b = 0.01 * jax.random.normal(kb_key, (cout,), jnp.float32)
    return w, b


def make_params(key, cin=4, c1=16, cb=16, c3=8, c7=32, c8=16):
    keys = jax.random.split(key, 10)
    return {
        "conv1": _init_conv(keys[0], 3, 3, cin, c1),
        "conv2a": _init_conv(keys[1], 3, 3, c1, cb),
        "conv2b": _init_conv(keys[2], 3, 3, c1, cb),
        "conv2c": _init_conv(keys[3], 3, 3, c1, cb),
        "conv3a": _init_conv(keys[4], 3, 3, c1, c3),
        "conv3b": _init_conv(keys[5], 3, 3, cb, c3),
        "conv3c": _init_conv(keys[6], 3, 3, cb, c3),
        "conv3d": _init_conv(keys[7], 3, 3, cb, c3),
        "conv7": _init_conv(keys[8], 3, 3, 4 * c3, c7),
        "conv8": _init_conv(keys[9], 1, 1, c7, c8),
    }


# ----------------------------------------------------------------------------
# Pure-JAX reference (correctness check only)
# ----------------------------------------------------------------------------
def _ref_conv(x, w, b, stride, padding):
    y = lax.conv_general_dilated(
        x, w, (stride, stride), [(padding, padding)] * 2,
        dimension_numbers=("NHWC", "HWIO", "NHWC"),
        precision=lax.Precision.HIGHEST,
    )
    return y + b.reshape(1, 1, 1, -1)


def _ref_pool(x):
    return lax.reduce_window(
        x, -jnp.inf, lax.max, (1, 2, 2, 1), (1, 2, 2, 1), "VALID"
    )


def reference_forward(params, x_nchw):
    x = jnp.transpose(x_nchw, (0, 2, 3, 1))
    x = _ref_conv(x, *params["conv1"], 1, 1)
    x = _ref_pool(x)
    a = _ref_pool(x)
    b = _ref_conv(x, *params["conv2a"], 2, 1)
    c = _ref_conv(x, *params["conv2b"], 2, 1)
    d = _ref_conv(x, *params["conv2c"], 2, 1)
    a = _ref_conv(a, *params["conv3a"], 1, 1)
    b = _ref_conv(b, *params["conv3b"], 1, 1)
    c = _ref_conv(c, *params["conv3c"], 1, 1)
    d = _ref_conv(d, *params["conv3d"], 1, 1)
    x = jnp.concatenate([a, b, c, d], axis=-1)
    x = _ref_conv(x, *params["conv7"], 1, 1)
    x = _ref_pool(x)
    x = _ref_conv(x, *params["conv8"], 1, 0)
    return jnp.transpose(x, (0, 3, 1, 2))


# ----------------------------------------------------------------------------
if __name__ == "__main__":
    key = jax.random.PRNGKey(0)
    pkey, xkey = jax.random.split(key)
    params = make_params(pkey)

    # small shapes consistent with the forward: batch=2, channels=4, 16x16
    x = jax.random.normal(xkey, (2, 4, 16, 16), jnp.float32)  # NCHW

    out = wide_cipsi_forward(params, x)
    out = jax.block_until_ready(out)
    assert out.shape == (2, 16, 2, 2), out.shape

    ref = jax.block_until_ready(reference_forward(params, x))
    max_err = float(jnp.max(jnp.abs(out - ref)))
    assert max_err < 5e-2, f"max abs error vs reference too large: {max_err}"

    print("KERNEL_OK")
</pallas_src>

<mosaic_0001>
module attributes {stable_mosaic.version = 11 : i64} {
  func.func @kernel(%arg0: i32, %arg1: memref<1x362x8xf32, #tpu.memory_space<vmem>>, %arg2: memref<72x16xf32, #tpu.memory_space<vmem>>, %arg3: memref<1x16xf32, #tpu.memory_space<vmem>>, %arg4: memref<144x48xf32, #tpu.memory_space<vmem>>, %arg5: memref<1x48xf32, #tpu.memory_space<vmem>>, %arg6: memref<576x32xf32, #tpu.memory_space<vmem>>, %arg7: memref<1x32xf32, #tpu.memory_space<vmem>>, %arg8: memref<288x32xf32, #tpu.memory_space<vmem>>, %arg9: memref<1x32xf32, #tpu.memory_space<vmem>>, %arg10: memref<32x16xf32, #tpu.memory_space<vmem>>, %arg11: memref<1x16xf32, #tpu.memory_space<vmem>>, %arg12: memref<1x4x16xf32, #tpu.memory_space<vmem>>, %arg13: memref<122x16xf32, #tpu.memory_space<vmem>>, %arg14: memref<50x64xf32, #tpu.memory_space<vmem>>, %arg15: memref<50x32xf32, #tpu.memory_space<vmem>>) attributes {dimension_semantics = [#tpu.dimension_semantics<parallel>], iteration_bounds = array<i64: 2>, scalar_prefetch = 0 : i64, scratch_operands = 3 : i64, tpu.core_type = #tpu.core_type<tc>, window_params = [{transform_indices = @transform_0, window_bounds = array<i64: 1, 362, 8>}, {pipeline_mode = #tpu.pipeline_mode<synchronous>, transform_indices = @transform_1, window_bounds = array<i64: 72, 16>}, {pipeline_mode = #tpu.pipeline_mode<synchronous>, transform_indices = @transform_2, window_bounds = array<i64: 1, 16>}, {pipeline_mode = #tpu.pipeline_mode<synchronous>, transform_indices = @transform_3, window_bounds = array<i64: 144, 48>}, {pipeline_mode = #tpu.pipeline_mode<synchronous>, transform_indices = @transform_4, window_bounds = array<i64: 1, 48>}, {pipeline_mode = #tpu.pipeline_mode<synchronous>, transform_indices = @transform_5, window_bounds = array<i64: 576, 32>}, {pipeline_mode = #tpu.pipeline_mode<synchronous>, transform_indices = @transform_6, window_bounds = array<i64: 1, 32>}, {pipeline_mode = #tpu.pipeline_mode<synchronous>, transform_indices = @transform_7, window_bounds = array<i64: 288, 32>}, {pipeline_mode = #tpu.pipeline_mode<synchronous>, transform_indices = @transform_8, window_bounds = array<i64: 1, 32>}, {pipeline_mode = #tpu.pipeline_mode<synchronous>, transform_indices = @transform_9, window_bounds = array<i64: 32, 16>}, {pipeline_mode = #tpu.pipeline_mode<synchronous>, transform_indices = @transform_10, window_bounds = array<i64: 1, 16>}, {transform_indices = @transform_11, window_bounds = array<i64: 1, 4, 16>}]} {
    %cst = arith.constant 0.000000e+00 : f32
    %0 = vector.broadcast %cst : f32 to vector<122x16xf32>
    %c0 = arith.constant 0 : index
    %c0_0 = arith.constant 0 : index
    %1 = vector.load %arg13[%c0, %c0_0] : memref<122x16xf32, #tpu.memory_space<vmem>>, vector<122x16xf32>
    tpu.vector_store %arg13[%c0, %c0_0], %0 {strides = array<i32>} : memref<122x16xf32, #tpu.memory_space<vmem>>, vector<122x16xf32>,
    %cst_1 = arith.constant 0.000000e+00 : f32
    %2 = vector.broadcast %cst_1 : f32 to vector<50x64xf32>
    %c0_2 = arith.constant 0 : index
    %c0_3 = arith.constant 0 : index
    %3 = vector.load %arg14[%c0_2, %c0_3] : memref<50x64xf32, #tpu.memory_space<vmem>>, vector<50x64xf32>
    tpu.vector_store %arg14[%c0_2, %c0_3], %2 {strides = array<i32>} : memref<50x64xf32, #tpu.memory_space<vmem>>, vector<50x64xf32>,
    %cst_4 = arith.constant 0.000000e+00 : f32
    %4 = vector.broadcast %cst_4 : f32 to vector<50x32xf32>
    %c0_5 = arith.constant 0 : index
    %c0_6 = arith.constant 0 : index
    %5 = vector.load %arg15[%c0_5, %c0_6] : memref<50x32xf32, #tpu.memory_space<vmem>>, vector<50x32xf32>
    tpu.vector_store %arg15[%c0_5, %c0_6], %4 {strides = array<i32>} : memref<50x32xf32, #tpu.memory_space<vmem>>, vector<50x32xf32>,
    %c0_7 = arith.constant 0 : index
    %c0_8 = arith.constant 0 : index
    %c0_9 = arith.constant 0 : index
    %6 = vector.load %arg1[%c0_7, %c0_8, %c0_9] : memref<1x362x8xf32, #tpu.memory_space<vmem>>, vector<1x362x8xf32>
    %7 = vector.shape_cast %6 : vector<1x362x8xf32> to vector<362x8xf32>
    %8 = vector.extract_strided_slice %7 {offsets = [0, 0], sizes = [324, 8], strides = [1, 1]} : vector<362x8xf32> to vector<324x8xf32>
    %c0_10 = arith.constant 0 : index
    %c0_11 = arith.constant 0 : index
    %9 = vector.load %arg2[%c0_10, %c0_11] : memref<72x16xf32, #tpu.memory_space<vmem>>, vector<8x16xf32>
    %cst_12 = arith.constant dense<0.000000e+00> : vector<324x16xf32>
    %10 = tpu.matmul %8, %9, %cst_12 {dimension_numbers = #tpu.dot_dimension_numbers<[1], [0], [0], [1], [0, 0, 1, 1], [], []>} : vector<324x8xf32>, vector<8x16xf32>, vector<324x16xf32> -> vector<324x16xf32>
    %11 = vector.extract_strided_slice %7 {offsets = [1, 0], sizes = [324, 8], strides = [1, 1]} : vector<362x8xf32> to vector<324x8xf32>
    %c8 = arith.constant 8 : index
    %c0_13 = arith.constant 0 : index
    %12 = vector.load %arg2[%c8, %c0_13] : memref<72x16xf32, #tpu.memory_space<vmem>>, vector<8x16xf32>
    %cst_14 = arith.constant dense<0.000000e+00> : vector<324x16xf32>
    %13 = tpu.matmul %11, %12, %cst_14 {dimension_numbers = #tpu.dot_dimension_numbers<[1], [0], [0], [1], [0, 0, 1, 1], [], []>} : vector<324x8xf32>, vector<8x16xf32>, vector<324x16xf32> -> vector<324x16xf32>
    %14 = arith.addf %10, %13 : vector<324x16xf32>
    %15 = vector.extract_strided_slice %7 {offsets = [2, 0], sizes = [324, 8], strides = [1, 1]} : vector<362x8xf32> to vector<324x8xf32>
    %c16 = arith.constant 16 : index
    %c0_15 = arith.constant 0 : index
    %16 = vector.load %arg2[%c16, %c0_15] : memref<72x16xf32, #tpu.memory_space<vmem>>, vector<8x16xf32>
    %cst_16 = arith.constant dense<0.000000e+00> : vector<324x16xf32>
    %17 = tpu.matmul %15, %16, %cst_16 {dimension_numbers = #tpu.dot_dimension_numbers<[1], [0], [0], [1], [0, 0, 1, 1], [], []>} : vector<324x8xf32>, vector<8x16xf32>, vector<324x16xf32> -> vector<324x16xf32>
    %18 = arith.addf %14, %17 : vector<324x16xf32>
    %19 = vector.extract_strided_slice %7 {offsets = [18, 0], sizes = [324, 8], strides = [1, 1]} : vector<362x8xf32> to vector<324x8xf32>
    %c24 = arith.constant 24 : index
    %c0_17 = arith.constant 0 : index
    %20 = vector.load %arg2[%c24, %c0_17] : memref<72x16xf32, #tpu.memory_space<vmem>>, vector<8x16xf32>
    %cst_18 = arith.constant dense<0.000000e+00> : vector<324x16xf32>
    %21 = tpu.matmul %19, %20, %cst_18 {dimension_numbers = #tpu.dot_dimension_numbers<[1], [0], [0], [1], [0, 0, 1, 1], [], []>} : vector<324x8xf32>, vector<8x16xf32>, vector<324x16xf32> -> vector<324x16xf32>
    %22 = arith.addf %18, %21 : vector<324x16xf32>
    %23 = vector.extract_strided_slice %7 {offsets = [19, 0], sizes = [324, 8], strides = [1, 1]} : vector<362x8xf32> to vector<324x8xf32>
    %c32 = arith.constant 32 : index
    %c0_19 = arith.constant 0 : index
    %24 = vector.load %arg2[%c32, %c0_19] : memref<72x16xf32, #tpu.memory_space<vmem>>, vector<8x16xf32>
    %cst_20 = arith.constant dense<0.000000e+00> : vector<324x16xf32>
    %25 = tpu.matmul %23, %24, %cst_20 {dimension_numbers = #tpu.dot_dimension_numbers<[1], [0], [0], [1], [0, 0, 1, 1], [], []>} : vector<324x8xf32>, vector<8x16xf32>, vector<324x16xf32> -> vector<324x16xf32>
    %26 = arith.addf %22, %25 : vector<324x16xf32>
    %27 = vector.extract_strided_slice %7 {offsets = [20, 0], sizes = [324, 8], strides = [1, 1]} : vector<362x8xf32> to vector<324x8xf32>
    %c40 = arith.constant 40 : index
    %c0_21 = arith.constant 0 : index
    %28 = vector.load %arg2[%c40, %c0_21] : memref<72x16xf32, #tpu.memory_space<vmem>>, vector<8x16xf32>
    %cst_22 = arith.constant dense<0.000000e+00> : vector<324x16xf32>
    %29 = tpu.matmul %27, %28, %cst_22 {dimension_numbers = #tpu.dot_dimension_numbers<[1], [0], [0], [1], [0, 0, 1, 1], [], []>} : vector<324x8xf32>, vector<8x16xf32>, vector<324x16xf32> -> vector<324x16xf32>
    %30 = arith.addf %26, %29 : vector<324x16xf32>
    %31 = vector.extract_strided_slice %7 {offsets = [36, 0], sizes = [324, 8], strides = [1, 1]} : vector<362x8xf32> to vector<324x8xf32>
    %c48 = arith.constant 48 : index
    %c0_23 = arith.constant 0 : index
    %32 = vector.load %arg2[%c48, %c0_23] : memref<72x16xf32, #tpu.memory_space<vmem>>, vector<8x16xf32>
    %cst_24 = arith.constant dense<0.000000e+00> : vector<324x16xf32>
    %33 = tpu.matmul %31, %32, %cst_24 {dimension_numbers = #tpu.dot_dimension_numbers<[1], [0], [0], [1], [0, 0, 1, 1], [], []>} : vector<324x8xf32>, vector<8x16xf32>, vector<324x16xf32> -> vector<324x16xf32>
    %34 = arith.addf %30, %33 : vector<324x16xf32>
    %35 = vector.extract_strided_slice %7 {offsets = [37, 0], sizes = [324, 8], strides = [1, 1]} : vector<362x8xf32> to vector<324x8xf32>
    %c56 = arith.constant 56 : index
    %c0_25 = arith.constant 0 : index
    %36 = vector.load %arg2[%c56, %c0_25] : memref<72x16xf32, #tpu.memory_space<vmem>>, vector<8x16xf32>
    %cst_26 = arith.constant dense<0.000000e+00> : vector<324x16xf32>
    %37 = tpu.matmul %35, %36, %cst_26 {dimension_numbers = #tpu.dot_dimension_numbers<[1], [0], [0], [1], [0, 0, 1, 1], [], []>} : vector<324x8xf32>, vector<8x16xf32>, vector<324x16xf32> -> vector<324x16xf32>
    %38 = arith.addf %34, %37 : vector<324x16xf32>
    %39 = vector.extract_strided_slice %7 {offsets = [38, 0], sizes = [324, 8], strides = [1, 1]} : vector<362x8xf32> to vector<324x8xf32>
    %c64 = arith.constant 64 : index
    %c0_27 = arith.constant 0 : index
    %40 = vector.load %arg2[%c64, %c0_27] : memref<72x16xf32, #tpu.memory_space<vmem>>, vector<8x16xf32>
    %cst_28 = arith.constant dense<0.000000e+00> : vector<324x16xf32>
    %41 = tpu.matmul %39, %40, %cst_28 {dimension_numbers = #tpu.dot_dimension_numbers<[1], [0], [0], [1], [0, 0, 1, 1], [], []>} : vector<324x8xf32>, vector<8x16xf32>, vector<324x16xf32> -> vector<324x16xf32>
    %42 = arith.addf %38, %41 : vector<324x16xf32>
    %c0_29 = arith.constant 0 : index
    %c0_30 = arith.constant 0 : index
    %43 = vector.load %arg3[%c0_29, %c0_30] : memref<1x16xf32, #tpu.memory_space<vmem>>, vector<1x16xf32>
    %44 = vector.broadcast %43 : vector<1x16xf32> to vector<324x16xf32>
    %45 = arith.addf %42, %44 : vector<324x16xf32>
    %46 = vector.extract_strided_slice %45 {offsets = [0, 0], sizes = [305, 16], strides = [1, 1]} : vector<324x16xf32> to vector<305x16xf32>
    %47 = vector.extract_strided_slice %45 {offsets = [1, 0], sizes = [305, 16], strides = [1, 1]} : vector<324x16xf32> to vector<305x16xf32>
    %48 = arith.maximumf %46, %47 : vector<305x16xf32>
    %49 = vector.extract_strided_slice %45 {offsets = [18, 0], sizes = [305, 16], strides = [1, 1]} : vector<324x16xf32> to vector<305x16xf32>
    %50 = vector.extract_strided_slice %45 {offsets = [19, 0], sizes = [305, 16], strides = [1, 1]} : vector<324x16xf32> to vector<305x16xf32>
    %51 = arith.maximumf %49, %50 : vector<305x16xf32>
    %52 = arith.maximumf %48, %51 : vector<305x16xf32>
    %53 = vector.extract_strided_slice %52 {offsets = [0, 0], sizes = [1, 16], strides = [1, 1]} : vector<305x16xf32> to vector<1x16xf32>
    %c11 = arith.constant 11 : index
    %c0_31 = arith.constant 0 : index
    %54 = vector.load %arg13[%c11, %c0_31] : memref<122x16xf32, #tpu.memory_space<vmem>>, vector<1x16xf32>
    tpu.vector_store %arg13[%c11, %c0_31], %53 {strides = array<i32>} : memref<122x16xf32, #tpu.memory_space<vmem>>, vector<1x16xf32>,
    %55 = vector.extract_strided_slice %52 {offsets = [2, 0], sizes = [1, 16], strides = [1, 1]} : vector<305x16xf32> to vector<1x16xf32>
    %c12 = arith.constant 12 : index
    %c0_32 = arith.constant 0 : index
    %56 = vector.load %arg13[%c12, %c0_32] : memref<122x16xf32, #tpu.memory_space<vmem>>, vector<1x16xf32>
    tpu.vector_store %arg13[%c12, %c0_32], %55 {strides = array<i32>} : memref<122x16xf32, #tpu.memory_space<vmem>>, vector<1x16xf32>,
    %57 = vector.extract_strided_slice %52 {offsets = [4, 0], sizes = [1, 16], strides = [1, 1]} : vector<305x16xf32> to vector<1x16xf32>
    %c13 = arith.constant 13 : index
    %c0_33 = arith.constant 0 : index
    %58 = vector.load %arg13[%c13, %c0_33] : memref<122x16xf32, #tpu.memory_space<vmem>>, vector<1x16xf32>
    tpu.vector_store %arg13[%c13, %c0_33], %57 {strides = array<i32>} : memref<122x16xf32, #tpu.memory_space<vmem>>, vector<1x16xf32>,
    %59 = vector.extract_strided_slice %52 {offsets = [6, 0], sizes = [1, 16], strides = [1, 1]} : vector<305x16xf32> to vector<1x16xf32>
    %c14 = arith.constant 14 : index
    %c0_34 = arith.constant 0 : index
    %60 = vector.load %arg13[%c14, %c0_34] : memref<122x16xf32, #tpu.memory_space<vmem>>, vector<1x16xf32>
    tpu.vector_store %arg13[%c14, %c0_34], %59 {strides = array<i32>} : memref<122x16xf32, #tpu.memory_space<vmem>>, vector<1x16xf32>,
    %61 = vector.extract_strided_slice %52 {offsets = [8, 0], sizes = [1, 16], strides = [1, 1]} : vector<305x16xf32> to vector<1x16xf32>
    %c15 = arith.constant 15 : index
    %c0_35 = arith.constant 0 : index
    %62 = vector.load %arg13[%c15, %c0_35] : memref<122x16xf32, #tpu.memory_space<vmem>>, vector<1x16xf32>
    tpu.vector_store %arg13[%c15, %c0_35], %61 {strides = array<i32>} : memref<122x16xf32, #tpu.memory_space<vmem>>, vector<1x16xf32>,
    %63 = vector.extract_strided_slice %52 {offsets = [10, 0], sizes = [1, 16], strides = [1, 1]} : vector<305x16xf32> to vector<1x16xf32>
    %c16_36 = arith.constant 16 : index
    %c0_37 = arith.constant 0 : index
    %64 = vector.load %arg13[%c16_36, %c0_37] : memref<122x16xf32, #tpu.memory_space<vmem>>, vector<1x16xf32>
    tpu.vector_store %arg13[%c16_36, %c0_37], %63 {strides = array<i32>} : memref<122x16xf32, #tpu.memory_space<vmem>>, vector<1x16xf32>,
    %65 = vector.extract_strided_slice %52 {offsets = [12, 0], sizes = [1, 16], strides = [1, 1]} : vector<305x16xf32> to vector<1x16xf32>
    %c17 = arith.constant 17 : index
    %c0_38 = arith.constant 0 : index
    %66 = vector.load %arg13[%c17, %c0_38] : memref<122x16xf32, #tpu.memory_space<vmem>>, vector<1x16xf32>
    tpu.vector_store %arg13[%c17, %c0_38], %65 {strides = array<i32>} : memref<122x16xf32, #tpu.memory_space<vmem>>, vector<1x16xf32>,
    %67 = vector.extract_strided_slice %52 {offsets = [14, 0], sizes = [1, 16], strides = [1, 1]} : vector<305x16xf32> to vector<1x16xf32>
    %c18 = arith.constant 18 : index
    %c0_39 = arith.constant 0 : index
    %68 = vector.load %arg13[%c18, %c0_39] : memref<122x16xf32, #tpu.memory_space<vmem>>, vector<1x16xf32>
    tpu.vector_store %arg13[%c18, %c0_39], %67 {strides = array<i32>} : memref<122x16xf32, #tpu.memory_space<vmem>>, vector<1x16xf32>,
    %69 = vector.extract_strided_slice %52 {offsets = [36, 0], sizes = [1, 16], strides = [1, 1]} : vector<305x16xf32> to vector<1x16xf32>
    %c21 = arith.constant 21 : index
    %c0_40 = arith.constant 0 : index
    %70 = vector.load %arg13[%c21, %c0_40] : memref<122x16xf32, #tpu.memory_space<vmem>>, vector<1x16xf32>
    tpu.vector_store %arg13[%c21, %c0_40], %69 {strides = array<i32>} : memref<122x16xf32, #tpu.memory_space<vmem>>, vector<1x16xf32>,
    %71 = vector.extract_strided_slice %52 {offsets = [38, 0], sizes = [1, 16], strides = [1, 1]} : vector<305x16xf32> to vector<1x16xf32>
    %c22 = arith.constant 22 : index
    %c0_41 = arith.constant 0 : index
    %72 = vector.load %arg13[%c22, %c0_41] : memref<122x16xf32, #tpu.memory_space<vmem>>, vector<1x16xf32>
    tpu.vector_store %arg13[%c22, %c0_41], %71 {strides = array<i32>} : memref<122x16xf32, #tpu.memory_space<vmem>>, vector<1x16xf32>,
    %73 = vector.extract_strided_slice %52 {offsets = [40, 0], sizes = [1, 16], strides = [1, 1]} : vector<305x16xf32> to vector<1x16xf32>
    %c23 = arith.constant 23 : index
    %c0_42 = arith.constant 0 : index
    %74 = vector.load %arg13[%c23, %c0_42] : memref<122x16xf32, #tpu.memory_space<vmem>>, vector<1x16xf32>
    tpu.vector_store %arg13[%c23, %c0_42], %73 {strides = array<i32>} : memref<122x16xf32, #tpu.memory_space<vmem>>, vector<1x16xf32>,
    %75 = vector.extract_strided_slice %52 {offsets = [42, 0], sizes = [1, 16], strides = [1, 1]} : vector<305x16xf32> to vector<1x16xf32>
    %c24_43 = arith.constant 24 : index
    %c0_44 = arith.constant 0 : index
    %76 = vector.load %arg13[%c24_43, %c0_44] : memref<122x16xf32, #tpu.memory_space<vmem>>, vector<1x16xf32>
    tpu.vector_store %arg13[%c24_43, %c0_44], %75 {strides = array<i32>} : memref<122x16xf32, #tpu.memory_space<vmem>>, vector<1x16xf32>,
    %77 = vector.extract_strided_slice %52 {offsets = [44, 0], sizes = [1, 16], strides = [1, 1]} : vector<305x16xf32> to vector<1x16xf32>
    %c25 = arith.constant 25 : index
    %c0_45 = arith.constant 0 : index
    %78 = vector.load %arg13[%c25, %c0_45] : memref<122x16xf32, #tpu.memory_space<vmem>>, vector<1x16xf32>
    tpu.vector_store %arg13[%c25, %c0_45], %77 {strides = array<i32>} : memref<122x16xf32, #tpu.memory_space<vmem>>, vector<1x16xf32>,
    %79 = vector.extract_strided_slice %52 {offsets = [46, 0], sizes = [1, 16], strides = [1, 1]} : vector<305x16xf32> to vector<1x16xf32>
    %c26 = arith.constant 26 : index
    %c0_46 = arith.constant 0 : index
    %80 = vector.load %arg13[%c26, %c0_46] : memref<122x16xf32, #tpu.memory_space<vmem>>, vector<1x16xf32>
    tpu.vector_store %arg13[%c26, %c0_46], %79 {strides = array<i32>} : memref<122x16xf32, #tpu.memory_space<vmem>>, vector<1x16xf32>,
    %81 = vector.extract_strided_slice %52 {offsets = [48, 0], sizes = [1, 16], strides = [1, 1]} : vector<305x16xf32> to vector<1x16xf32>
    %c27 = arith.constant 27 : index
    %c0_47 = arith.constant 0 : index
    %82 = vector.load %arg13[%c27, %c0_47] : memref<122x16xf32, #tpu.memory_space<vmem>>, vector<1x16xf32>
    tpu.vector_store %arg13[%c27, %c0_47], %81 {strides = array<i32>} : memref<122x16xf32, #tpu.memory_space<vmem>>, vector<1x16xf32>,
    %83 = vector.extract_strided_slice %52 {offsets = [50, 0], sizes = [1, 16], strides = [1, 1]} : vector<305x16xf32> to vector<1x16xf32>
    %c28 = arith.constant 28 : index
    %c0_48 = arith.constant 0 : index
    %84 = vector.load %arg13[%c28, %c0_48] : memref<122x16xf32, #tpu.memory_space<vmem>>, vector<1x16xf32>
    tpu.vector_store %arg13[%c28, %c0_48], %83 {strides = array<i32>} : memref<122x16xf32, #tpu.memory_space<vmem>>, vector<1x16xf32>,
    %85 = vector.extract_strided_slice %52 {offsets = [72, 0], sizes = [1, 16], strides = [1, 1]} : vector<305x16xf32> to vector<1x16xf32>
    %c31 = arith.constant 31 : index
    %c0_49 = arith.constant 0 : index
    %86 = vector.load %arg13[%c31, %c0_49] : memref<122x16xf32, #tpu.memory_space<vmem>>, vector<1x16xf32>
    tpu.vector_store %arg13[%c31, %c0_49], %85 {strides = array<i32>} : memref<122x16xf32, #tpu.memory_space<vmem>>, vector<1x16xf32>,
    %87 = vector.extract_strided_slice %52 {offsets = [74, 0], sizes = [1, 16], strides = [1, 1]} : vector<305x16xf32> to vector<1x16xf32>
    %c32_50 = arith.constant 32 : index
    %c0_51 = arith.constant 0 : index
    %88 = vector.load %arg13[%c32_50, %c0_51] : memref<122x16xf32, #tpu.memory_space<vmem>>, vector<1x16xf32>
    tpu.vector_store %arg13[%c32_50, %c0_51], %87 {strides = array<i32>} : memref<122x16xf32, #tpu.memory_space<vmem>>, vector<1x16xf32>,
    %89 = vector.extract_strided_slice %52 {offsets = [76, 0], sizes = [1, 16], strides = [1, 1]} : vector<305x16xf32> to vector<1x16xf32>
    %c33 = arith.constant 33 : index
    %c0_52 = arith.constant 0 : index
    %90 = vector.load %arg13[%c33, %c0_52] : memref<122x16xf32, #tpu.memory_space<vmem>>, vector<1x16xf32>
    tpu.vector_store %arg13[%c33, %c0_52], %89 {strides = array<i32>} : memref<122x16xf32, #tpu.memory_space<vmem>>, vector<1x16xf32>,
    %91 = vector.extract_strided_slice %52 {offsets = [78, 0], sizes = [1, 16], strides = [1, 1]} : vector<305x16xf32> to vector<1x16xf32>
    %c34 = arith.constant 34 : index
    %c0_53 = arith.constant 0 : index
    %92 = vector.load %arg13[%c34, %c0_53] : memref<122x16xf32, #tpu.memory_space<vmem>>, vector<1x16xf32>
    tpu.vector_store %arg13[%c34, %c0_53], %91 {strides = array<i32>} : memref<122x16xf32, #tpu.memory_space<vmem>>, vector<1x16xf32>,
    %93 = vector.extract_strided_slice %52 {offsets = [80, 0], sizes = [1, 16], strides = [1, 1]} : vector<305x16xf32> to vector<1x16xf32>
    %c35 = arith.constant 35 : index
    %c0_54 = arith.constant 0 : index
    %94 = vector.load %arg13[%c35, %c0_54] : memref<122x16xf32, #tpu.memory_space<vmem>>, vector<1x16xf32>
    tpu.vector_store %arg13[%c35, %c0_54], %93 {strides = array<i32>} : memref<122x16xf32, #tpu.memory_space<vmem>>, vector<1x16xf32>,
    %95 = vector.extract_strided_slice %52 {offsets = [82, 0], sizes = [1, 16], strides = [1, 1]} : vector<305x16xf32> to vector<1x16xf32>
    %c36 = arith.constant 36 : index
    %c0_55 = arith.constant 0 : index
    %96 = vector.load %arg13[%c36, %c0_55] : memref<122x16xf32, #tpu.memory_space<vmem>>, vector<1x16xf32>
    tpu.vector_store %arg13[%c36, %c0_55], %95 {strides = array<i32>} : memref<122x16xf32, #tpu.memory_space<vmem>>, vector<1x16xf32>,
    %97 = vector.extract_strided_slice %52 {offsets = [84, 0], sizes = [1, 16], strides = [1, 1]} : vector<305x16xf32> to vector<1x16xf32>
    %c37 = arith.constant 37 : index
    %c0_56 = arith.constant 0 : index
    %98 = vector.load %arg13[%c37, %c0_56] : memref<122x16xf32, #tpu.memory_space<vmem>>, vector<1x16xf32>
    tpu.vector_store %arg13[%c37, %c0_56], %97 {strides = array<i32>} : memref<122x16xf32, #tpu.memory_space<vmem>>, vector<1x16xf32>,
    %99 = vector.extract_strided_slice %52 {offsets = [86, 0], sizes = [1, 16], strides = [1, 1]} : vector<305x16xf32> to vector<1x16xf32>
    %c38 = arith.constant 38 : index
    %c0_57 = arith.constant 0 : index
    %100 = vector.load %arg13[%c38, %c0_57] : memref<122x16xf32, #tpu.memory_space<vmem>>, vector<1x16xf32>
    tpu.vector_store %arg13[%c38, %c0_57], %99 {strides = array<i32>} : memref<122x16xf32, #tpu.memory_space<vmem>>, vector<1x16xf32>,
    %101 = vector.extract_strided_slice %52 {offsets = [108, 0], sizes = [1, 16], strides = [1, 1]} : vector<305x16xf32> to vector<1x16xf32>
    %c41 = arith.constant 41 : index
    %c0_58 = arith.constant 0 : index
    %102 = vector.load %arg13[%c41, %c0_58] : memref<122x16xf32, #tpu.memory_space<vmem>>, vector<1x16xf32>
    tpu.vector_store %arg13[%c41, %c0_58], %101 {strides = array<i32>} : memref<122x16xf32, #tpu.memory_space<vmem>>, vector<1x16xf32>,
    %103 = vector.extract_strided_slice %52 {offsets = [110, 0], sizes = [1, 16], strides = [1, 1]} : vector<305x16xf32> to vector<1x16xf32>
    %c42 = arith.constant 42 : index
    %c0_59 = arith.constant 0 : index
    %104 = vector.load %arg13[%c42, %c0_59] : memref<122x16xf32, #tpu.memory_space<vmem>>, vector<1x16xf32>
    tpu.vector_store %arg13[%c42, %c0_59], %103 {strides = array<i32>} : memref<122x16xf32, #tpu.memory_space<vmem>>, vector<1x16xf32>,
    %105 = vector.extract_strided_slice %52 {offsets = [112, 0], sizes = [1, 16], strides = [1, 1]} : vector<305x16xf32> to vector<1x16xf32>
    %c43 = arith.constant 43 : index
    %c0_60 = arith.constant 0 : index
    %106 = vector.load %arg13[%c43, %c0_60] : memref<122x16xf32, #tpu.memory_space<vmem>>, vector<1x16xf32>
    tpu.vector_store %arg13[%c43, %c0_60], %105 {strides = array<i32>} : memref<122x16xf32, #tpu.memory_space<vmem>>, vector<1x16xf32>,
    %107 = vector.extract_strided_slice %52 {offsets = [114, 0], sizes = [1, 16], strides = [1, 1]} : vector<305x16xf32> to vector<1x16xf32>
    %c44 = arith.constant 44 : index
    %c0_61 = arith.constant 0 : index
    %108 = vector.load %arg13[%c44, %c0_61] : memref<122x16xf32, #tpu.memory_space<vmem>>, vector<1x16xf32>
    tpu.vector_store %arg13[%c44, %c0_61], %107 {strides = array<i32>} : memref<122x16xf32, #tpu.memory_space<vmem>>, vector<1x16xf32>,
    %109 = vector.extract_strided_slice %52 {offsets = [116, 0], sizes = [1, 16], strides = [1, 1]} : vector<305x16xf32> to vector<1x16xf32>
    %c45 = arith.constant 45 : index
    %c0_62 = arith.constant 0 : index
    %110 = vector.load %arg13[%c45, %c0_62] : memref<122x16xf32, #tpu.memory_space<vmem>>, vector<1x16xf32>
    tpu.vector_store %arg13[%c45, %c0_62], %109 {strides = array<i32>} : memref<122x16xf32, #tpu.memory_space<vmem>>, vector<1x16xf32>,
    %111 = vector.extract_strided_slice %52 {offsets = [118, 0], sizes = [1, 16], strides = [1, 1]} : vector<305x16xf32> to vector<1x16xf32>
    %c46 = arith.constant 46 : index
    %c0_63 = arith.constant 0 : index
    %112 = vector.load %arg13[%c46, %c0_63] : memref<122x16xf32, #tpu.memory_space<vmem>>, vector<1x16xf32>
    tpu.vector_store %arg13[%c46, %c0_63], %111 {strides = array<i32>} : memref<122x16xf32, #tpu.memory_space<vmem>>, vector<1x16xf32>,
    %113 = vector.extract_strided_slice %52 {offsets = [120, 0], sizes = [1, 16], strides = [1, 1]} : vector<305x16xf32> to vector<1x16xf32>
    %c47 = arith.constant 47 : index
    %c0_64 = arith.constant 0 : index
    %114 = vector.load %arg13[%c47, %c0_64] : memref<122x16xf32, #tpu.memory_space<vmem>>, vector<1x16xf32>
    tpu.vector_store %arg13[%c47, %c0_64], %113 {strides = array<i32>} : memref<122x16xf32, #tpu.memory_space<vmem>>, vector<1x16xf32>,
    %115 = vector.extract_strided_slice %52 {offsets = [122, 0], sizes = [1, 16], strides = [1, 1]} : vector<305x16xf32> to vector<1x16xf32>
    %c48_65 = arith.constant 48 : index
    %c0_66 = arith.constant 0 : index
    %116 = vector.load %arg13[%c48_65, %c0_66] : memref<122x16xf32, #tpu.memory_space<vmem>>, vector<1x16xf32>
    tpu.vector_store %arg13[%c48_65, %c0_66], %115 {strides = array<i32>} : memref<122x16xf32, #tpu.memory_space<vmem>>, vector<1x16xf32>,
    %117 = vector.extract_strided_slice %52 {offsets = [144, 0], sizes = [1, 16], strides = [1, 1]} : vector<305x16xf32> to vector<1x16xf32>
    %c51 = arith.constant 51 : index
    %c0_67 = arith.constant 0 : index
    %118 = vector.load %arg13[%c51, %c0_67] : memref<122x16xf32, #tpu.memory_space<vmem>>, vector<1x16xf32>
    tpu.vector_store %arg13[%c51, %c0_67], %117 {strides = array<i32>} : memref<122x16xf32, #tpu.memory_space<vmem>>, vector<1x16xf32>,
    %119 = vector.extract_strided_slice %52 {offsets = [146, 0], sizes = [1, 16], strides = [1, 1]} : vector<305x16xf32> to vector<1x16xf32>
    %c52 = arith.constant 52 : index
    %c0_68 = arith.constant 0 : index
    %120 = vector.load %arg13[%c52, %c0_68] : memref<122x16xf32, #tpu.memory_space<vmem>>, vector<1x16xf32>
    tpu.vector_store %arg13[%c52, %c0_68], %119 {strides = array<i32>} : memref<122x16xf32, #tpu.memory_space<vmem>>, vector<1x16xf32>,
    %121 = vector.extract_strided_slice %52 {offsets = [148, 0], sizes = [1, 16], strides = [1, 1]} : vector<305x16xf32> to vector<1x16xf32>
    %c53 = arith.constant 53 : index
    %c0_69 = arith.constant 0 : index
    %122 = vector.load %arg13[%c53, %c0_69] : memref<122x16xf32, #tpu.memory_space<vmem>>, vector<1x16xf32>
    tpu.vector_store %arg13[%c53, %c0_69], %121 {strides = array<i32>} : memref<122x16xf32, #tpu.memory_space<vmem>>, vector<1x16xf32>,
    %123 = vector.extract_strided_slice %52 {offsets = [150, 0], sizes = [1, 16], strides = [1, 1]} : vector<305x16xf32> to vector<1x16xf32>
    %c54 = arith.constant 54 : index
    %c0_70 = arith.constant 0 : index
    %124 = vector.load %arg13[%c54, %c0_70] : memref<122x16xf32, #tpu.memory_space<vmem>>, vector<1x16xf32>
    tpu.vector_store %arg13[%c54, %c0_70], %123 {strides = array<i32>} : memref<122x16xf32, #tpu.memory_space<vmem>>, vector<1x16xf32>,
    %125 = vector.extract_strided_slice %52 {offsets = [152, 0], sizes = [1, 16], strides = [1, 1]} : vector<305x16xf32> to vector<1x16xf32>
    %c55 = arith.constant 55 : index
    %c0_71 = arith.constant 0 : index
    %126 = vector.load %arg13[%c55, %c0_71] : memref<122x16xf32, #tpu.memory_space<vmem>>, vector<1x16xf32>
    tpu.vector_store %arg13[%c55, %c0_71], %125 {strides = array<i32>} : memref<122x16xf32, #tpu.memory_space<vmem>>, vector<1x16xf32>,
    %127 = vector.extract_strided_slice %52 {offsets = [154, 0], sizes = [1, 16], strides = [1, 1]} : vector<305x16xf32> to vector<1x16xf32>
    %c56_72 = arith.constant 56 : index
    %c0_73 = arith.constant 0 : index
    %128 = vector.load %arg13[%c56_72, %c0_73] : memref<122x16xf32, #tpu.memory_space<vmem>>, vector<1x16xf32>
    tpu.vector_store %arg13[%c56_72, %c0_73], %127 {strides = array<i32>} : memref<122x16xf32, #tpu.memory_space<vmem>>, vector<1x16xf32>,
    %129 = vector.extract_strided_slice %52 {offsets = [156, 0], sizes = [1, 16], strides = [1, 1]} : vector<305x16xf32> to vector<1x16xf32>
    %c57 = arith.constant 57 : index
    %c0_74 = arith.constant 0 : index
    %130 = vector.load %arg13[%c57, %c0_74] : memref<122x16xf32, #tpu.memory_space<vmem>>, vector<1x16xf32>
    tpu.vector_store %arg13[%c57, %c0_74], %129 {strides = array<i32>} : memref<122x16xf32, #tpu.memory_space<vmem>>, vector<1x16xf32>,
    %131 = vector.extract_strided_slice %52 {offsets = [158, 0], sizes = [1, 16], strides = [1, 1]} : vector<305x16xf32> to vector<1x16xf32>
    %c58 = arith.constant 58 : index
    %c0_75 = arith.constant 0 : index
    %132 = vector.load %arg13[%c58, %c0_75] : memref<122x16xf32, #tpu.memory_space<vmem>>, vector<1x16xf32>
    tpu.vector_store %arg13[%c58, %c0_75], %131 {strides = array<i32>} : memref<122x16xf32, #tpu.memory_space<vmem>>, vector<1x16xf32>,
    %133 = vector.extract_strided_slice %52 {offsets = [180, 0], sizes = [1, 16], strides = [1, 1]} : vector<305x16xf32> to vector<1x16xf32>
    %c61 = arith.constant 61 : index
    %c0_76 = arith.constant 0 : index
    %134 = vector.load %arg13[%c61, %c0_76] : memref<122x16xf32, #tpu.memory_space<vmem>>, vector<1x16xf32>
    tpu.vector_store %arg13[%c61, %c0_76], %133 {strides = array<i32>} : memref<122x16xf32, #tpu.memory_space<vmem>>, vector<1x16xf32>,
    %135 = vector.extract_strided_slice %52 {offsets = [182, 0], sizes = [1, 16], strides = [1, 1]} : vector<305x16xf32> to vector<1x16xf32>
    %c62 = arith.constant 62 : index
    %c0_77 = arith.constant 0 : index
    %136 = vector.load %arg13[%c62, %c0_77] : memref<122x16xf32, #tpu.memory_space<vmem>>, vector<1x16xf32>
    tpu.vector_store %arg13[%c62, %c0_77], %135 {strides = array<i32>} : memref<122x16xf32, #tpu.memory_space<vmem>>, vector<1x16xf32>,
    %137 = vector.extract_strided_slice %52 {offsets = [184, 0], sizes = [1, 16], strides = [1, 1]} : vector<305x16xf32> to vector<1x16xf32>
    %c63 = arith.constant 63 : index
    %c0_78 = arith.constant 0 : index
    %138 = vector.load %arg13[%c63, %c0_78] : memref<122x16xf32, #tpu.memory_space<vmem>>, vector<1x16xf32>
    tpu.vector_store %arg13[%c63, %c0_78], %137 {strides = array<i32>} : memref<122x16xf32, #tpu.memory_space<vmem>>, vector<1x16xf32>,
    %139 = vector.extract_strided_slice %52 {offsets = [186, 0], sizes = [1, 16], strides = [1, 1]} : vector<305x16xf32> to vector<1x16xf32>
    %c64_79 = arith.constant 64 : index
    %c0_80 = arith.constant 0 : index
    %140 = vector.load %arg13[%c64_79, %c0_80] : memref<122x16xf32, #tpu.memory_space<vmem>>, vector<1x16xf32>
    tpu.vector_store %arg13[%c64_79, %c0_80], %139 {strides = array<i32>} : memref<122x16xf32, #tpu.memory_space<vmem>>, vector<1x16xf32>,
    %141 = vector.extract_strided_slice %52 {offsets = [188, 0], sizes = [1, 16], strides = [1, 1]} : vector<305x16xf32> to vector<1x16xf32>
    %c65 = arith.constant 65 : index
    %c0_81 = arith.constant 0 : index
    %142 = vector.load %arg13[%c65, %c0_81] : memref<122x16xf32, #tpu.memory_space<vmem>>, vector<1x16xf32>
    tpu.vector_store %arg13[%c65, %c0_81], %141 {strides = array<i32>} : memref<122x16xf32, #tpu.memory_space<vmem>>, vector<1x16xf32>,
    %143 = vector.extract_strided_slice %52 {offsets = [190, 0], sizes = [1, 16], strides = [1, 1]} : vector<305x16xf32> to vector<1x16xf32>
    %c66 = arith.constant 66 : index
    %c0_82 = arith.constant 0 : index
    %144 = vector.load %arg13[%c66, %c0_82] : memref<122x16xf32, #tpu.memory_space<vmem>>, vector<1x16xf32>
    tpu.vector_store %arg13[%c66, %c0_82], %143 {strides = array<i32>} : memref<122x16xf32, #tpu.memory_space<vmem>>, vector<1x16xf32>,
    %145 = vector.extract_strided_slice %52 {offsets = [192, 0], sizes = [1, 16], strides = [1, 1]} : vector<305x16xf32> to vector<1x16xf32>
    %c67 = arith.constant 67 : index
    %c0_83 = arith.constant 0 : index
    %146 = vector.load %arg13[%c67, %c0_83] : memref<122x16xf32, #tpu.memory_space<vmem>>, vector<1x16xf32>
    tpu.vector_store %arg13[%c67, %c0_83], %145 {strides = array<i32>} : memref<122x16xf32, #tpu.memory_space<vmem>>, vector<1x16xf32>,
    %147 = vector.extract_strided_slice %52 {offsets = [194, 0], sizes = [1, 16], strides = [1, 1]} : vector<305x16xf32> to vector<1x16xf32>
    %c68 = arith.constant 68 : index
    %c0_84 = arith.constant 0 : index
    %148 = vector.load %arg13[%c68, %c0_84] : memref<122x16xf32, #tpu.memory_space<vmem>>, vector<1x16xf32>
    tpu.vector_store %arg13[%c68, %c0_84], %147 {strides = array<i32>} : memref<122x16xf32, #tpu.memory_space<vmem>>, vector<1x16xf32>,
    %149 = vector.extract_strided_slice %52 {offsets = [216, 0], sizes = [1, 16], strides = [1, 1]} : vector<305x16xf32> to vector<1x16xf32>
    %c71 = arith.constant 71 : index
    %c0_85 = arith.constant 0 : index
    %150 = vector.load %arg13[%c71, %c0_85] : memref<122x16xf32, #tpu.memory_space<vmem>>, vector<1x16xf32>
    tpu.vector_store %arg13[%c71, %c0_85], %149 {strides = array<i32>} : memref<122x16xf32, #tpu.memory_space<vmem>>, vector<1x16xf32>,
    %151 = vector.extract_strided_slice %52 {offsets = [218, 0], sizes = [1, 16], strides = [1, 1]} : vector<305x16xf32> to vector<1x16xf32>
    %c72 = arith.constant 72 : index
    %c0_86 = arith.constant 0 : index
    %152 = vector.load %arg13[%c72, %c0_86] : memref<122x16xf32, #tpu.memory_space<vmem>>, vector<1x16xf32>
    tpu.vector_store %arg13[%c72, %c0_86], %151 {strides = array<i32>} : memref<122x16xf32, #tpu.memory_space<vmem>>, vector<1x16xf32>,
    %153 = vector.extract_strided_slice %52 {offsets = [220, 0], sizes = [1, 16], strides = [1, 1]} : vector<305x16xf32> to vector<1x16xf32>
    %c73 = arith.constant 73 : index
    %c0_87 = arith.constant 0 : index
    %154 = vector.load %arg13[%c73, %c0_87] : memref<122x16xf32, #tpu.memory_space<vmem>>, vector<1x16xf32>
    tpu.vector_store %arg13[%c73, %c0_87], %153 {strides = array<i32>} : memref<122x16xf32, #tpu.memory_space<vmem>>, vector<1x16xf32>,
    %155 = vector.extract_strided_slice %52 {offsets = [222, 0], sizes = [1, 16], strides = [1, 1]} : vector<305x16xf32> to vector<1x16xf32>
    %c74 = arith.constant 74 : index
    %c0_88 = arith.constant 0 : index
    %156 = vector.load %arg13[%c74, %c0_88] : memref<122x16xf32, #tpu.memory_space<vmem>>, vector<1x16xf32>
    tpu.vector_store %arg13[%c74, %c0_88], %155 {strides = array<i32>} : memref<122x16xf32, #tpu.memory_space<vmem>>, vector<1x16xf32>,
    %157 = vector.extract_strided_slice %52 {offsets = [224, 0], sizes = [1, 16], strides = [1, 1]} : vector<305x16xf32> to vector<1x16xf32>
    %c75 = arith.constant 75 : index
    %c0_89 = arith.constant 0 : index
    %158 = vector.load %arg13[%c75, %c0_89] : memref<122x16xf32, #tpu.memory_space<vmem>>, vector<1x16xf32>
    tpu.vector_store %arg13[%c75, %c0_89], %157 {strides = array<i32>} : memref<122x16xf32, #tpu.memory_space<vmem>>, vector<1x16xf32>,
    %159 = vector.extract_strided_slice %52 {offsets = [226, 0], sizes = [1, 16], strides = [1, 1]} : vector<305x16xf32> to vector<1x16xf32>
    %c76 = arith.constant 76 : index
    %c0_90 = arith.constant 0 : index
    %160 = vector.load %arg13[%c76, %c0_90] : memref<122x16xf32, #tpu.memory_space<vmem>>, vector<1x16xf32>
    tpu.vector_store %arg13[%c76, %c0_90], %159 {strides = array<i32>} : memref<122x16xf32, #tpu.memory_space<vmem>>, vector<1x16xf32>,
    %161 = vector.extract_strided_slice %52 {offsets = [228, 0], sizes = [1, 16], strides = [1, 1]} : vector<305x16xf32> to vector<1x16xf32>
    %c77 = arith.constant 77 : index
    %c0_91 = arith.constant 0 : index
    %162 = vector.load %arg13[%c77, %c0_91] : memref<122x16xf32, #tpu.memory_space<vmem>>, vector<1x16xf32>
    tpu.vector_store %arg13[%c77, %c0_91], %161 {strides = array<i32>} : memref<122x16xf32, #tpu.memory_space<vmem>>, vector<1x16xf32>,
    %163 = vector.extract_strided_slice %52 {offsets = [230, 0], sizes = [1, 16], strides = [1, 1]} : vector<305x16xf32> to vector<1x16xf32>
    %c78 = arith.constant 78 : index
    %c0_92 = arith.constant 0 : index
    %164 = vector.load %arg13[%c78, %c0_92] : memref<122x16xf32, #tpu.memory_space<vmem>>, vector<1x16xf32>
    tpu.vector_store %arg13[%c78, %c0_92], %163 {strides = array<i32>} : memref<122x16xf32, #tpu.memory_space<vmem>>, vector<1x16xf32>,
    %165 = vector.extract_strided_slice %52 {offsets = [252, 0], sizes = [1, 16], strides = [1, 1]} : vector<305x16xf32> to vector<1x16xf32>
    %c81 = arith.constant 81 : index
    %c0_93 = arith.constant 0 : index
    %166 = vector.load %arg13[%c81, %c0_93] : memref<122x16xf32, #tpu.memory_space<vmem>>, vector<1x16xf32>
    tpu.vector_store %arg13[%c81, %c0_93], %165 {strides = array<i32>} : memref<122x16xf32, #tpu.memory_space<vmem>>, vector<1x16xf32>,
    %167 = vector.extract_strided_slice %52 {offsets = [254, 0], sizes = [1, 16], strides = [1, 1]} : vector<305x16xf32> to vector<1x16xf32>
    %c82 = arith.constant 82 : index
    %c0_94 = arith.constant 0 : index
    %168 = vector.load %arg13[%c82, %c0_94] : memref<122x16xf32, #tpu.memory_space<vmem>>, vector<1x16xf32>
    tpu.vector_store %arg13[%c82, %c0_94], %167 {strides = array<i32>} : memref<122x16xf32, #tpu.memory_space<vmem>>, vector<1x16xf32>,
    %169 = vector.extract_strided_slice %52 {offsets = [256, 0], sizes = [1, 16], strides = [1, 1]} : vector<305x16xf32> to vector<1x16xf32>
    %c83 = arith.constant 83 : index
    %c0_95 = arith.constant 0 : index
    %170 = vector.load %arg13[%c83, %c0_95] : memref<122x16xf32, #tpu.memory_space<vmem>>, vector<1x16xf32>
    tpu.vector_store %arg13[%c83, %c0_95], %169 {strides = array<i32>} : memref<122x16xf32, #tpu.memory_space<vmem>>, vector<1x16xf32>,
    %171 = vector.extract_strided_slice %52 {offsets = [258, 0], sizes = [1, 16], strides = [1, 1]} : vector<305x16xf32> to vector<1x16xf32>
    %c84 = arith.constant 84 : index
    %c0_96 = arith.constant 0 : index
    %172 = vector.load %arg13[%c84, %c0_96] : memref<122x16xf32, #tpu.memory_space<vmem>>, vector<1x16xf32>
    tpu.vector_store %arg13[%c84, %c0_96], %171 {strides = array<i32>} : memref<122x16xf32, #tpu.memory_space<vmem>>, vector<1x16xf32>,
    %173 = vector.extract_strided_slice %52 {offsets = [260, 0], sizes = [1, 16], strides = [1, 1]} : vector<305x16xf32> to vector<1x16xf32>
    %c85 = arith.constant 85 : index
    %c0_97 = arith.constant 0 : index
    %174 = vector.load %arg13[%c85, %c0_97] : memref<122x16xf32, #tpu.memory_space<vmem>>, vector<1x16xf32>
    tpu.vector_store %arg13[%c85, %c0_97], %173 {strides = array<i32>} : memref<122x16xf32, #tpu.memory_space<vmem>>, vector<1x16xf32>,
    %175 = vector.extract_strided_slice %52 {offsets = [262, 0], sizes = [1, 16], strides = [1, 1]} : vector<305x16xf32> to vector<1x16xf32>
    %c86 = arith.constant 86 : index
    %c0_98 = arith.constant 0 : index
    %176 = vector.load %arg13[%c86, %c0_98] : memref<122x16xf32, #tpu.memory_space<vmem>>, vector<1x16xf32>
    tpu.vector_store %arg13[%c86, %c0_98], %175 {strides = array<i32>} : memref<122x16xf32, #tpu.memory_space<vmem>>, vector<1x16xf32>,
    %177 = vector.extract_strided_slice %52 {offsets = [264, 0], sizes = [1, 16], strides = [1, 1]} : vector<305x16xf32> to vector<1x16xf32>
    %c87 = arith.constant 87 : index
    %c0_99 = arith.constant 0 : index
    %178 = vector.load %arg13[%c87, %c0_99] : memref<122x16xf32, #tpu.memory_space<vmem>>, vector<1x16xf32>
    tpu.vector_store %arg13[%c87, %c0_99], %177 {strides = array<i32>} : memref<122x16xf32, #tpu.memory_space<vmem>>, vector<1x16xf32>,
    %179 = vector.extract_strided_slice %52 {offsets = [266, 0], sizes = [1, 16], strides = [1, 1]} : vector<305x16xf32> to vector<1x16xf32>
    %c88 = arith.constant 88 : index
    %c0_100 = arith.constant 0 : index
    %180 = vector.load %arg13[%c88, %c0_100] : memref<122x16xf32, #tpu.memory_space<vmem>>, vector<1x16xf32>
    tpu.vector_store %arg13[%c88, %c0_100], %179 {strides = array<i32>} : memref<122x16xf32, #tpu.memory_space<vmem>>, vector<1x16xf32>,
    %c0_101 = arith.constant 0 : index
    %c0_102 = arith.constant 0 : index
    %181 = vector.load %arg13[%c0_101, %c0_102] : memref<122x16xf32, #tpu.memory_space<vmem>>, vector<122x16xf32>
    %182 = vector.extract_strided_slice %181 {offsets = [0, 0], sizes = [89, 16], strides = [1, 1]} : vector<122x16xf32> to vector<89x16xf32>
    %183 = vector.extract_strided_slice %181 {offsets = [1, 0], sizes = [89, 16], strides = [1, 1]} : vector<122x16xf32> to vector<89x16xf32>
    %184 = arith.maximumf %182, %183 : vector<89x16xf32>
    %185 = vector.extract_strided_slice %181 {offsets = [10, 0], sizes = [89, 16], strides = [1, 1]} : vector<122x16xf32> to vector<89x16xf32>
    %186 = vector.extract_strided_slice %181 {offsets = [11, 0], sizes = [89, 16], strides = [1, 1]} : vector<122x16xf32> to vector<89x16xf32>
    %187 = arith.maximumf %185, %186 : vector<89x16xf32>
    %188 = arith.maximumf %184, %187 : vector<89x16xf32>
    %189 = vector.extract_strided_slice %188 {offsets = [11, 0], sizes = [1, 16], strides = [1, 1]} : vector<89x16xf32> to vector<1x16xf32>
    %c7 = arith.constant 7 : index
    %c0_103 = arith.constant 0 : index
    %190 = vector.load %arg14[%c7, %c0_103] : memref<50x64xf32, #tpu.memory_space<vmem>>, vector<1x16xf32>
    tpu.vector_store %arg14[%c7, %c0_103], %189 {strides = array<i32>} : memref<50x64xf32, #tpu.memory_space<vmem>>, vector<1x16xf32>,
    %191 = vector.extract_strided_slice %188 {offsets = [13, 0], sizes = [1, 16], strides = [1, 1]} : vector<89x16xf32> to vector<1x16xf32>
    %c8_104 = arith.constant 8 : index
    %c0_105 = arith.constant 0 : index
    %192 = vector.load %arg14[%c8_104, %c0_105] : memref<50x64xf32, #tpu.memory_space<vmem>>, vector<1x16xf32>
    tpu.vector_store %arg14[%c8_104, %c0_105], %191 {strides = array<i32>} : memref<50x64xf32, #tpu.memory_space<vmem>>, vector<1x16xf32>,
    %193 = vector.extract_strided_slice %188 {offsets = [15, 0], sizes = [1, 16], strides = [1, 1]} : vector<89x16xf32> to vector<1x16xf32>
    %c9 = arith.constant 9 : index
    %c0_106 = arith.constant 0 : index
    %194 = vector.load %arg14[%c9, %c0_106] : memref<50x64xf32, #tpu.memory_space<vmem>>, vector<1x16xf32>
    tpu.vector_store %arg14[%c9, %c0_106], %193 {strides = array<i32>} : memref<50x64xf32, #tpu.memory_space<vmem>>, vector<1x16xf32>,
    %195 = vector.extract_strided_slice %188 {offsets = [17, 0], sizes = [1, 16], strides = [1, 1]} : vector<89x16xf32> to vector<1x16xf32>
    %c10 = arith.constant 10 : index
    %c0_107 = arith.constant 0 : index
    %196 = vector.load %arg14[%c10, %c0_107] : memref<50x64xf32, #tpu.memory_space<vmem>>, vector<1x16xf32>
    tpu.vector_store %arg14[%c10, %c0_107], %195 {strides = array<i32>} : memref<50x64xf32, #tpu.memory_space<vmem>>, vector<1x16xf32>,
    %197 = vector.extract_strided_slice %188 {offsets = [31, 0], sizes = [1, 16], strides = [1, 1]} : vector<89x16xf32> to vector<1x16xf32>
    %c13_108 = arith.constant 13 : index
    %c0_109 = arith.constant 0 : index
    %198 = vector.load %arg14[%c13_108, %c0_109] : memref<50x64xf32, #tpu.memory_space<vmem>>, vector<1x16xf32>
    tpu.vector_store %arg14[%c13_108, %c0_109], %197 {strides = array<i32>} : memref<50x64xf32, #tpu.memory_space<vmem>>, vector<1x16xf32>,
    %199 = vector.extract_strided_slice %188 {offsets = [33, 0], sizes = [1, 16], strides = [1, 1]} : vector<89x16xf32> to vector<1x16xf32>
    %c14_110 = arith.constant 14 : index
    %c0_111 = arith.constant 0 : index
    %200 = vector.load %arg14[%c14_110, %c0_111] : memref<50x64xf32, #tpu.memory_space<vmem>>, vector<1x16xf32>
    tpu.vector_store %arg14[%c14_110, %c0_111], %199 {strides = array<i32>} : memref<50x64xf32, #tpu.memory_space<vmem>>, vector<1x16xf32>,
    %201 = vector.extract_strided_slice %188 {offsets = [35, 0], sizes = [1, 16], strides = [1, 1]} : vector<89x16xf32> to vector<1x16xf32>
    %c15_112 = arith.constant 15 : index
    %c0_113 = arith.constant 0 : index
    %202 = vector.load %arg14[%c15_112, %c0_113] : memref<50x64xf32, #tpu.memory_space<vmem>>, vector<1x16xf32>
    tpu.vector_store %arg14[%c15_112, %c0_113], %201 {strides = array<i32>} : memref<50x64xf32, #tpu.memory_space<vmem>>, vector<1x16xf32>,
    %203 = vector.extract_strided_slice %188 {offsets = [37, 0], sizes = [1, 16], strides = [1, 1]} : vector<89x16xf32> to vector<1x16xf32>
    %c16_114 = arith.constant 16 : index
    %c0_115 = arith.constant 0 : index
    %204 = vector.load %arg14[%c16_114, %c0_115] : memref<50x64xf32, #tpu.memory_space<vmem>>, vector<1x16xf32>
    tpu.vector_store %arg14[%c16_114, %c0_115], %203 {strides = array<i32>} : memref<50x64xf32, #tpu.memory_space<vmem>>, vector<1x16xf32>,
    %205 = vector.extract_strided_slice %188 {offsets = [51, 0], sizes = [1, 16], strides = [1, 1]} : vector<89x16xf32> to vector<1x16xf32>
    %c19 = arith.constant 19 : index
    %c0_116 = arith.constant 0 : index
    %206 = vector.load %arg14[%c19, %c0_116] : memref<50x64xf32, #tpu.memory_space<vmem>>, vector<1x16xf32>
    tpu.vector_store %arg14[%c19, %c0_116], %205 {strides = array<i32>} : memref<50x64xf32, #tpu.memory_space<vmem>>, vector<1x16xf32>,
    %207 = vector.extract_strided_slice %188 {offsets = [53, 0], sizes = [1, 16], strides = [1, 1]} : vector<89x16xf32> to vector<1x16xf32>
    %c20 = arith.constant 20 : index
    %c0_117 = arith.constant 0 : index
    %208 = vector.load %arg14[%c20, %c0_117] : memref<50x64xf32, #tpu.memory_space<vmem>>, vector<1x16xf32>
    tpu.vector_store %arg14[%c20, %c0_117], %207 {strides = array<i32>} : memref<50x64xf32, #tpu.memory_space<vmem>>, vector<1x16xf32>,
    %209 = vector.extract_strided_slice %188 {offsets = [55, 0], sizes = [1, 16], strides = [1, 1]} : vector<89x16xf32> to vector<1x16xf32>
    %c21_118 = arith.constant 21 : index
    %c0_119 = arith.constant 0 : index
    %210 = vector.load %arg14[%c21_118, %c0_119] : memref<50x64xf32, #tpu.memory_space<vmem>>, vector<1x16xf32>
    tpu.vector_store %arg14[%c21_118, %c0_119], %209 {strides = array<i32>} : memref<50x64xf32, #tpu.memory_space<vmem>>, vector<1x16xf32>,
    %211 = vector.extract_strided_slice %188 {offsets = [57, 0], sizes = [1, 16], strides = [1, 1]} : vector<89x16xf32> to vector<1x16xf32>
    %c22_120 = arith.constant 22 : index
    %c0_121 = arith.constant 0 : index
    %212 = vector.load %arg14[%c22_120, %c0_121] : memref<50x64xf32, #tpu.memory_space<vmem>>, vector<1x16xf32>
    tpu.vector_store %arg14[%c22_120, %c0_121], %211 {strides = array<i32>} : memref<50x64xf32, #tpu.memory_space<vmem>>, vector<1x16xf32>,
    %213 = vector.extract_strided_slice %188 {offsets = [71, 0], sizes = [1, 16], strides = [1, 1]} : vector<89x16xf32> to vector<1x16xf32>
    %c25_122 = arith.constant 25 : index
    %c0_123 = arith.constant 0 : index
    %214 = vector.load %arg14[%c25_122, %c0_123] : memref<50x64xf32, #tpu.memory_space<vmem>>, vector<1x16xf32>
    tpu.vector_store %arg14[%c25_122, %c0_123], %213 {strides = array<i32>} : memref<50x64xf32, #tpu.memory_space<vmem>>, vector<1x16xf32>,
    %215 = vector.extract_strided_slice %188 {offsets = [73, 0], sizes = [1, 16], strides = [1, 1]} : vector<89x16xf32> to vector<1x16xf32>
    %c26_124 = arith.constant 26 : index
    %c0_125 = arith.constant 0 : index
    %216 = vector.load %arg14[%c26_124, %c0_125] : memref<50x64xf32, #tpu.memory_space<vmem>>, vector<1x16xf32>
    tpu.vector_store %arg14[%c26_124, %c0_125], %215 {strides = array<i32>} : memref<50x64xf32, #tpu.memory_space<vmem>>, vector<1x16xf32>,
    %217 = vector.extract_strided_slice %188 {offsets = [75, 0], sizes = [1, 16], strides = [1, 1]} : vector<89x16xf32> to vector<1x16xf32>
    %c27_126 = arith.constant 27 : index
    %c0_127 = arith.constant 0 : index
    %218 = vector.load %arg14[%c27_126, %c0_127] : memref<50x64xf32, #tpu.memory_space<vmem>>, vector<1x16xf32>
    tpu.vector_store %arg14[%c27_126, %c0_127], %217 {strides = array<i32>} : memref<50x64xf32, #tpu.memory_space<vmem>>, vector<1x16xf32>,
    %219 = vector.extract_strided_slice %188 {offsets = [77, 0], sizes = [1, 16], strides = [1, 1]} : vector<89x16xf32> to vector<1x16xf32>
    %c28_128 = arith.constant 28 : index
    %c0_129 = arith.constant 0 : index
    %220 = vector.load %arg14[%c28_128, %c0_129] : memref<50x64xf32, #tpu.memory_space<vmem>>, vector<1x16xf32>
    tpu.vector_store %arg14[%c28_128, %c0_129], %219 {strides = array<i32>} : memref<50x64xf32, #tpu.memory_space<vmem>>, vector<1x16xf32>,
    %221 = vector.extract_strided_slice %181 {offsets = [0, 0], sizes = [100, 16], strides = [1, 1]} : vector<122x16xf32> to vector<100x16xf32>
    %c0_130 = arith.constant 0 : index
    %c0_131 = arith.constant 0 : index
    %222 = vector.load %arg4[%c0_130, %c0_131] : memref<144x48xf32, #tpu.memory_space<vmem>>, vector<16x48xf32>
    %cst_132 = arith.constant dense<0.000000e+00> : vector<100x48xf32>
    %223 = tpu.matmul %221, %222, %cst_132 {dimension_numbers = #tpu.dot_dimension_numbers<[1], [0], [0], [1], [0, 0, 1, 1], [], []>} : vector<100x16xf32>, vector<16x48xf32>, vector<100x48xf32> -> vector<100x48xf32>
    %224 = vector.extract_strided_slice %181 {offsets = [1, 0], sizes = [100, 16], strides = [1, 1]} : vector<122x16xf32> to vector<100x16xf32>
    %c16_133 = arith.constant 16 : index
    %c0_134 = arith.constant 0 : index
    %225 = vector.load %arg4[%c16_133, %c0_134] : memref<144x48xf32, #tpu.memory_space<vmem>>, vector<16x48xf32>
    %cst_135 = arith.constant dense<0.000000e+00> : vector<100x48xf32>
    %226 = tpu.matmul %224, %225, %cst_135 {dimension_numbers = #tpu.dot_dimension_numbers<[1], [0], [0], [1], [0, 0, 1, 1], [], []>} : vector<100x16xf32>, vector<16x48xf32>, vector<100x48xf32> -> vector<100x48xf32>
    %227 = arith.addf %223, %226 : vector<100x48xf32>
    %228 = vector.extract_strided_slice %181 {offsets = [2, 0], sizes = [100, 16], strides = [1, 1]} : vector<122x16xf32> to vector<100x16xf32>
    %c32_136 = arith.constant 32 : index
    %c0_137 = arith.constant 0 : index
    %229 = vector.load %arg4[%c32_136, %c0_137] : memref<144x48xf32, #tpu.memory_space<vmem>>, vector<16x48xf32>
    %cst_138 = arith.constant dense<0.000000e+00> : vector<100x48xf32>
    %230 = tpu.matmul %228, %229, %cst_138 {dimension_numbers = #tpu.dot_dimension_numbers<[1], [0], [0], [1], [0, 0, 1, 1], [], []>} : vector<100x16xf32>, vector<16x48xf32>, vector<100x48xf32> -> vector<100x48xf32>
    %231 = arith.addf %227, %230 : vector<100x48xf32>
    %232 = vector.extract_strided_slice %181 {offsets = [10, 0], sizes = [100, 16], strides = [1, 1]} : vector<122x16xf32> to vector<100x16xf32>
    %c48_139 = arith.constant 48 : index
    %c0_140 = arith.constant 0 : index
    %233 = vector.load %arg4[%c48_139, %c0_140] : memref<144x48xf32, #tpu.memory_space<vmem>>, vector<16x48xf32>
    %cst_141 = arith.constant dense<0.000000e+00> : vector<100x48xf32>
    %234 = tpu.matmul %232, %233, %cst_141 {dimension_numbers = #tpu.dot_dimension_numbers<[1], [0], [0], [1], [0, 0, 1, 1], [], []>} : vector<100x16xf32>, vector<16x48xf32>, vector<100x48xf32> -> vector<100x48xf32>
    %235 = arith.addf %231, %234 : vector<100x48xf32>
    %236 = vector.extract_strided_slice %181 {offsets = [11, 0], sizes = [100, 16], strides = [1, 1]} : vector<122x16xf32> to vector<100x16xf32>
    %c64_142 = arith.constant 64 : index
    %c0_143 = arith.constant 0 : index
    %237 = vector.load %arg4[%c64_142, %c0_143] : memref<144x48xf32, #tpu.memory_space<vmem>>, vector<16x48xf32>
    %cst_144 = arith.constant dense<0.000000e+00> : vector<100x48xf32>
    %238 = tpu.matmul %236, %237, %cst_144 {dimension_numbers = #tpu.dot_dimension_numbers<[1], [0], [0], [1], [0, 0, 1, 1], [], []>} : vector<100x16xf32>, vector<16x48xf32>, vector<100x48xf32> -> vector<100x48xf32>
    %239 = arith.addf %235, %238 : vector<100x48xf32>
    %240 = vector.extract_strided_slice %181 {offsets = [12, 0], sizes = [100, 16], strides = [1, 1]} : vector<122x16xf32> to vector<100x16xf32>
    %c80 = arith.constant 80 : index
    %c0_145 = arith.constant 0 : index
    %241 = vector.load %arg4[%c80, %c0_145] : memref<144x48xf32, #tpu.memory_space<vmem>>, vector<16x48xf32>
    %cst_146 = arith.constant dense<0.000000e+00> : vector<100x48xf32>
    %242 = tpu.matmul %240, %241, %cst_146 {dimension_numbers = #tpu.dot_dimension_numbers<[1], [0], [0], [1], [0, 0, 1, 1], [], []>} : vector<100x16xf32>, vector<16x48xf32>, vector<100x48xf32> -> vector<100x48xf32>
    %243 = arith.addf %239, %242 : vector<100x48xf32>
    %244 = vector.extract_strided_slice %181 {offsets = [20, 0], sizes = [100, 16], strides = [1, 1]} : vector<122x16xf32> to vector<100x16xf32>
    %c96 = arith.constant 96 : index
    %c0_147 = arith.constant 0 : index
    %245 = vector.load %arg4[%c96, %c0_147] : memref<144x48xf32, #tpu.memory_space<vmem>>, vector<16x48xf32>
    %cst_148 = arith.constant dense<0.000000e+00> : vector<100x48xf32>
    %246 = tpu.matmul %244, %245, %cst_148 {dimension_numbers = #tpu.dot_dimension_numbers<[1], [0], [0], [1], [0, 0, 1, 1], [], []>} : vector<100x16xf32>, vector<16x48xf32>, vector<100x48xf32> -> vector<100x48xf32>
    %247 = arith.addf %243, %246 : vector<100x48xf32>
    %248 = vector.extract_strided_slice %181 {offsets = [21, 0], sizes = [100, 16], strides = [1, 1]} : vector<122x16xf32> to vector<100x16xf32>
    %c112 = arith.constant 112 : index
    %c0_149 = arith.constant 0 : index
    %249 = vector.load %arg4[%c112, %c0_149] : memref<144x48xf32, #tpu.memory_space<vmem>>, vector<16x48xf32>
    %cst_150 = arith.constant dense<0.000000e+00> : vector<100x48xf32>
    %250 = tpu.matmul %248, %249, %cst_150 {dimension_numbers = #tpu.dot_dimension_numbers<[1], [0], [0], [1], [0, 0, 1, 1], [], []>} : vector<100x16xf32>, vector<16x48xf32>, vector<100x48xf32> -> vector<100x48xf32>
    %251 = arith.addf %247, %250 : vector<100x48xf32>
    %252 = vector.extract_strided_slice %181 {offsets = [22, 0], sizes = [100, 16], strides = [1, 1]} : vector<122x16xf32> to vector<100x16xf32>
    %c128 = arith.constant 128 : index
    %c0_151 = arith.constant 0 : index
    %253 = vector.load %arg4[%c128, %c0_151] : memref<144x48xf32, #tpu.memory_space<vmem>>, vector<16x48xf32>
    %cst_152 = arith.constant dense<0.000000e+00> : vector<100x48xf32>
    %254 = tpu.matmul %252, %253, %cst_152 {dimension_numbers = #tpu.dot_dimension_numbers<[1], [0], [0], [1], [0, 0, 1, 1], [], []>} : vector<100x16xf32>, vector<16x48xf32>, vector<100x48xf32> -> vector<100x48xf32>
    %255 = arith.addf %251, %254 : vector<100x48xf32>
    %c0_153 = arith.constant 0 : index
    %c0_154 = arith.constant 0 : index
    %256 = vector.load %arg5[%c0_153, %c0_154] : memref<1x48xf32, #tpu.memory_space<vmem>>, vector<1x48xf32>
    %257 = vector.broadcast %256 : vector<1x48xf32> to vector<100x48xf32>
    %258 = arith.addf %255, %257 : vector<100x48xf32>
    %259 = vector.extract_strided_slice %258 {offsets = [0, 0], sizes = [1, 48], strides = [1, 1]} : vector<100x48xf32> to vector<1x48xf32>
    %c7_155 = arith.constant 7 : index
    %c16_156 = arith.constant 16 : index
    %260 = vector.load %arg14[%c7_155, %c16_156] : memref<50x64xf32, #tpu.memory_space<vmem>>, vector<1x48xf32>
    tpu.vector_store %arg14[%c7_155, %c16_156], %259 {strides = array<i32>} : memref<50x64xf32, #tpu.memory_space<vmem>>, vector<1x48xf32>,
    %261 = vector.extract_strided_slice %258 {offsets = [2, 0], sizes = [1, 48], strides = [1, 1]} : vector<100x48xf32> to vector<1x48xf32>
    %c8_157 = arith.constant 8 : index
    %c16_158 = arith.constant 16 : index
    %262 = vector.load %arg14[%c8_157, %c16_158] : memref<50x64xf32, #tpu.memory_space<vmem>>, vector<1x48xf32>
    tpu.vector_store %arg14[%c8_157, %c16_158], %261 {strides = array<i32>} : memref<50x64xf32, #tpu.memory_space<vmem>>, vector<1x48xf32>,
    %263 = vector.extract_strided_slice %258 {offsets = [4, 0], sizes = [1, 48], strides = [1, 1]} : vector<100x48xf32> to vector<1x48xf32>
    %c9_159 = arith.constant 9 : index
    %c16_160 = arith.constant 16 : index
    %264 = vector.load %arg14[%c9_159, %c16_160] : memref<50x64xf32, #tpu.memory_space<vmem>>, vector<1x48xf32>
    tpu.vector_store %arg14[%c9_159, %c16_160], %263 {strides = array<i32>} : memref<50x64xf32, #tpu.memory_space<vmem>>, vector<1x48xf32>,
    %265 = vector.extract_strided_slice %258 {offsets = [6, 0], sizes = [1, 48], strides = [1, 1]} : vector<100x48xf32> to vector<1x48xf32>
    %c10_161 = arith.constant 10 : index
    %c16_162 = arith.constant 16 : index
    %266 = vector.load %arg14[%c10_161, %c16_162] : memref<50x64xf32, #tpu.memory_space<vmem>>, vector<1x48xf32>
    tpu.vector_store %arg14[%c10_161, %c16_162], %265 {strides = array<i32>} : memref<50x64xf32, #tpu.memory_space<vmem>>, vector<1x48xf32>,
    %267 = vector.extract_strided_slice %258 {offsets = [20, 0], sizes = [1, 48], strides = [1, 1]} : vector<100x48xf32> to vector<1x48xf32>
    %c13_163 = arith.constant 13 : index
    %c16_164 = arith.constant 16 : index
    %268 = vector.load %arg14[%c13_163, %c16_164] : memref<50x64xf32, #tpu.memory_space<vmem>>, vector<1x48xf32>
    tpu.vector_store %arg14[%c13_163, %c16_164], %267 {strides = array<i32>} : memref<50x64xf32, #tpu.memory_space<vmem>>, vector<1x48xf32>,
    %269 = vector.extract_strided_slice %258 {offsets = [22, 0], sizes = [1, 48], strides = [1, 1]} : vector<100x48xf32> to vector<1x48xf32>
    %c14_165 = arith.constant 14 : index
    %c16_166 = arith.constant 16 : index
    %270 = vector.load %arg14[%c14_165, %c16_166] : memref<50x64xf32, #tpu.memory_space<vmem>>, vector<1x48xf32>
    tpu.vector_store %arg14[%c14_165, %c16_166], %269 {strides = array<i32>} : memref<50x64xf32, #tpu.memory_space<vmem>>, vector<1x48xf32>,
    %271 = vector.extract_strided_slice %258 {offsets = [24, 0], sizes = [1, 48], strides = [1, 1]} : vector<100x48xf32> to vector<1x48xf32>
    %c15_167 = arith.constant 15 : index
    %c16_168 = arith.constant 16 : index
    %272 = vector.load %arg14[%c15_167, %c16_168] : memref<50x64xf32, #tpu.memory_space<vmem>>, vector<1x48xf32>
    tpu.vector_store %arg14[%c15_167, %c16_168], %271 {strides = array<i32>} : memref<50x64xf32, #tpu.memory_space<vmem>>, vector<1x48xf32>,
    %273 = vector.extract_strided_slice %258 {offsets = [26, 0], sizes = [1, 48], strides = [1, 1]} : vector<100x48xf32> to vector<1x48xf32>
    %c16_169 = arith.constant 16 : index
    %c16_170 = arith.constant 16 : index
    %274 = vector.load %arg14[%c16_169, %c16_170] : memref<50x64xf32, #tpu.memory_space<vmem>>, vector<1x48xf32>
    tpu.vector_store %arg14[%c16_169, %c16_170], %273 {strides = array<i32>} : memref<50x64xf32, #tpu.memory_space<vmem>>, vector<1x48xf32>,
    %275 = vector.extract_strided_slice %258 {offsets = [40, 0], sizes = [1, 48], strides = [1, 1]} : vector<100x48xf32> to vector<1x48xf32>
    %c19_171 = arith.constant 19 : index
    %c16_172 = arith.constant 16 : index
    %276 = vector.load %arg14[%c19_171, %c16_172] : memref<50x64xf32, #tpu.memory_space<vmem>>, vector<1x48xf32>
    tpu.vector_store %arg14[%c19_171, %c16_172], %275 {strides = array<i32>} : memref<50x64xf32, #tpu.memory_space<vmem>>, vector<1x48xf32>,
    %277 = vector.extract_strided_slice %258 {offsets = [42, 0], sizes = [1, 48], strides = [1, 1]} : vector<100x48xf32> to vector<1x48xf32>
    %c20_173 = arith.constant 20 : index
    %c16_174 = arith.constant 16 : index
    %278 = vector.load %arg14[%c20_173, %c16_174] : memref<50x64xf32, #tpu.memory_space<vmem>>, vector<1x48xf32>
    tpu.vector_store %arg14[%c20_173, %c16_174], %277 {strides = array<i32>} : memref<50x64xf32, #tpu.memory_space<vmem>>, vector<1x48xf32>,
    %279 = vector.extract_strided_slice %258 {offsets = [44, 0], sizes = [1, 48], strides = [1, 1]} : vector<100x48xf32> to vector<1x48xf32>
    %c21_175 = arith.constant 21 : index
    %c16_176 = arith.constant 16 : index
    %280 = vector.load %arg14[%c21_175, %c16_176] : memref<50x64xf32, #tpu.memory_space<vmem>>, vector<1x48xf32>
    tpu.vector_store %arg14[%c21_175, %c16_176], %279 {strides = array<i32>} : memref<50x64xf32, #tpu.memory_space<vmem>>, vector<1x48xf32>,
    %281 = vector.extract_strided_slice %258 {offsets = [46, 0], sizes = [1, 48], strides = [1, 1]} : vector<100x48xf32> to vector<1x48xf32>
    %c22_177 = arith.constant 22 : index
    %c16_178 = arith.constant 16 : index
    %282 = vector.load %arg14[%c22_177, %c16_178] : memref<50x64xf32, #tpu.memory_space<vmem>>, vector<1x48xf32>
    tpu.vector_store %arg14[%c22_177, %c16_178], %281 {strides = array<i32>} : memref<50x64xf32, #tpu.memory_space<vmem>>, vector<1x48xf32>,
    %283 = vector.extract_strided_slice %258 {offsets = [60, 0], sizes = [1, 48], strides = [1, 1]} : vector<100x48xf32> to vector<1x48xf32>
    %c25_179 = arith.constant 25 : index
    %c16_180 = arith.constant 16 : index
    %284 = vector.load %arg14[%c25_179, %c16_180] : memref<50x64xf32, #tpu.memory_space<vmem>>, vector<1x48xf32>
    tpu.vector_store %arg14[%c25_179, %c16_180], %283 {strides = array<i32>} : memref<50x64xf32, #tpu.memory_space<vmem>>, vector<1x48xf32>,
    %285 = vector.extract_strided_slice %258 {offsets = [62, 0], sizes = [1, 48], strides = [1, 1]} : vector<100x48xf32> to vector<1x48xf32>
    %c26_181 = arith.constant 26 : index
    %c16_182 = arith.constant 16 : index
    %286 = vector.load %arg14[%c26_181, %c16_182] : memref<50x64xf32, #tpu.memory_space<vmem>>, vector<1x48xf32>
    tpu.vector_store %arg14[%c26_181, %c16_182], %285 {strides = array<i32>} : memref<50x64xf32, #tpu.memory_space<vmem>>, vector<1x48xf32>,
    %287 = vector.extract_strided_slice %258 {offsets = [64, 0], sizes = [1, 48], strides = [1, 1]} : vector<100x48xf32> to vector<1x48xf32>
    %c27_183 = arith.constant 27 : index
    %c16_184 = arith.constant 16 : index
    %288 = vector.load %arg14[%c27_183, %c16_184] : memref<50x64xf32, #tpu.memory_space<vmem>>, vector<1x48xf32>
    tpu.vector_store %arg14[%c27_183, %c16_184], %287 {strides = array<i32>} : memref<50x64xf32, #tpu.memory_space<vmem>>, vector<1x48xf32>,
    %289 = vector.extract_strided_slice %258 {offsets = [66, 0], sizes = [1, 48], strides = [1, 1]} : vector<100x48xf32> to vector<1x48xf32>
    %c28_185 = arith.constant 28 : index
    %c16_186 = arith.constant 16 : index
    %290 = vector.load %arg14[%c28_185, %c16_186] : memref<50x64xf32, #tpu.memory_space<vmem>>, vector<1x48xf32>
    tpu.vector_store %arg14[%c28_185, %c16_186], %289 {strides = array<i32>} : memref<50x64xf32, #tpu.memory_space<vmem>>, vector<1x48xf32>,
    %c0_187 = arith.constant 0 : index
    %c0_188 = arith.constant 0 : index
    %291 = vector.load %arg14[%c0_187, %c0_188] : memref<50x64xf32, #tpu.memory_space<vmem>>, vector<50x64xf32>
    %292 = vector.extract_strided_slice %291 {offsets = [0, 0], sizes = [36, 64], strides = [1, 1]} : vector<50x64xf32> to vector<36x64xf32>
    %c0_189 = arith.constant 0 : index
    %c0_190 = arith.constant 0 : index
    %293 = vector.load %arg6[%c0_189, %c0_190] : memref<576x32xf32, #tpu.memory_space<vmem>>, vector<64x32xf32>
    %cst_191 = arith.constant dense<0.000000e+00> : vector<36x32xf32>
    %294 = tpu.matmul %292, %293, %cst_191 {dimension_numbers = #tpu.dot_dimension_numbers<[1], [0], [0], [1], [0, 0, 1, 1], [], []>} : vector<36x64xf32>, vector<64x32xf32>, vector<36x32xf32> -> vector<36x32xf32>
    %295 = vector.extract_strided_slice %291 {offsets = [1, 0], sizes = [36, 64], strides = [1, 1]} : vector<50x64xf32> to vector<36x64xf32>
    %c64_192 = arith.constant 64 : index
    %c0_193 = arith.constant 0 : index
    %296 = vector.load %arg6[%c64_192, %c0_193] : memref<576x32xf32, #tpu.memory_space<vmem>>, vector<64x32xf32>
    %cst_194 = arith.constant dense<0.000000e+00> : vector<36x32xf32>
    %297 = tpu.matmul %295, %296, %cst_194 {dimension_numbers = #tpu.dot_dimension_numbers<[1], [0], [0], [1], [0, 0, 1, 1], [], []>} : vector<36x64xf32>, vector<64x32xf32>, vector<36x32xf32> -> vector<36x32xf32>
    %298 = arith.addf %294, %297 : vector<36x32xf32>
    %299 = vector.extract_strided_slice %291 {offsets = [2, 0], sizes = [36, 64], strides = [1, 1]} : vector<50x64xf32> to vector<36x64xf32>
    %c128_195 = arith.constant 128 : index
    %c0_196 = arith.constant 0 : index
    %300 = vector.load %arg6[%c128_195, %c0_196] : memref<576x32xf32, #tpu.memory_space<vmem>>, vector<64x32xf32>
    %cst_197 = arith.constant dense<0.000000e+00> : vector<36x32xf32>
    %301 = tpu.matmul %299, %300, %cst_197 {dimension_numbers = #tpu.dot_dimension_numbers<[1], [0], [0], [1], [0, 0, 1, 1], [], []>} : vector<36x64xf32>, vector<64x32xf32>, vector<36x32xf32> -> vector<36x32xf32>
    %302 = arith.addf %298, %301 : vector<36x32xf32>
    %303 = vector.extract_strided_slice %291 {offsets = [6, 0], sizes = [36, 64], strides = [1, 1]} : vector<50x64xf32> to vector<36x64xf32>
    %c192 = arith.constant 192 : index
    %c0_198 = arith.constant 0 : index
    %304 = vector.load %arg6[%c192, %c0_198] : memref<576x32xf32, #tpu.memory_space<vmem>>, vector<64x32xf32>
    %cst_199 = arith.constant dense<0.000000e+00> : vector<36x32xf32>
    %305 = tpu.matmul %303, %304, %cst_199 {dimension_numbers = #tpu.dot_dimension_numbers<[1], [0], [0], [1], [0, 0, 1, 1], [], []>} : vector<36x64xf32>, vector<64x32xf32>, vector<36x32xf32> -> vector<36x32xf32>
    %306 = arith.addf %302, %305 : vector<36x32xf32>
    %307 = vector.extract_strided_slice %291 {offsets = [7, 0], sizes = [36, 64], strides = [1, 1]} : vector<50x64xf32> to vector<36x64xf32>
    %c256 = arith.constant 256 : index
    %c0_200 = arith.constant 0 : index
    %308 = vector.load %arg6[%c256, %c0_200] : memref<576x32xf32, #tpu.memory_space<vmem>>, vector<64x32xf32>
    %cst_201 = arith.constant dense<0.000000e+00> : vector<36x32xf32>
    %309 = tpu.matmul %307, %308, %cst_201 {dimension_numbers = #tpu.dot_dimension_numbers<[1], [0], [0], [1], [0, 0, 1, 1], [], []>} : vector<36x64xf32>, vector<64x32xf32>, vector<36x32xf32> -> vector<36x32xf32>
    %310 = arith.addf %306, %309 : vector<36x32xf32>
    %311 = vector.extract_strided_slice %291 {offsets = [8, 0], sizes = [36, 64], strides = [1, 1]} : vector<50x64xf32> to vector<36x64xf32>
    %c320 = arith.constant 320 : index
    %c0_202 = arith.constant 0 : index
    %312 = vector.load %arg6[%c320, %c0_202] : memref<576x32xf32, #tpu.memory_space<vmem>>, vector<64x32xf32>
    %cst_203 = arith.constant dense<0.000000e+00> : vector<36x32xf32>
    %313 = tpu.matmul %311, %312, %cst_203 {dimension_numbers = #tpu.dot_dimension_numbers<[1], [0], [0], [1], [0, 0, 1, 1], [], []>} : vector<36x64xf32>, vector<64x32xf32>, vector<36x32xf32> -> vector<36x32xf32>
    %314 = arith.addf %310, %313 : vector<36x32xf32>
    %315 = vector.extract_strided_slice %291 {offsets = [12, 0], sizes = [36, 64], strides = [1, 1]} : vector<50x64xf32> to vector<36x64xf32>
    %c384 = arith.constant 384 : index
    %c0_204 = arith.constant 0 : index
    %316 = vector.load %arg6[%c384, %c0_204] : memref<576x32xf32, #tpu.memory_space<vmem>>, vector<64x32xf32>
    %cst_205 = arith.constant dense<0.000000e+00> : vector<36x32xf32>
    %317 = tpu.matmul %315, %316, %cst_205 {dimension_numbers = #tpu.dot_dimension_numbers<[1], [0], [0], [1], [0, 0, 1, 1], [], []>} : vector<36x64xf32>, vector<64x32xf32>, vector<36x32xf32> -> vector<36x32xf32>
    %318 = arith.addf %314, %317 : vector<36x32xf32>
    %319 = vector.extract_strided_slice %291 {offsets = [13, 0], sizes = [36, 64], strides = [1, 1]} : vector<50x64xf32> to vector<36x64xf32>
    %c448 = arith.constant 448 : index
    %c0_206 = arith.constant 0 : index
    %320 = vector.load %arg6[%c448, %c0_206] : memref<576x32xf32, #tpu.memory_space<vmem>>, vector<64x32xf32>
    %cst_207 = arith.constant dense<0.000000e+00> : vector<36x32xf32>
    %321 = tpu.matmul %319, %320, %cst_207 {dimension_numbers = #tpu.dot_dimension_numbers<[1], [0], [0], [1], [0, 0, 1, 1], [], []>} : vector<36x64xf32>, vector<64x32xf32>, vector<36x32xf32> -> vector<36x32xf32>
    %322 = arith.addf %318, %321 : vector<36x32xf32>
    %323 = vector.extract_strided_slice %291 {offsets = [14, 0], sizes = [36, 64], strides = [1, 1]} : vector<50x64xf32> to vector<36x64xf32>
    %c512 = arith.constant 512 : index
    %c0_208 = arith.constant 0 : index
    %324 = vector.load %arg6[%c512, %c0_208] : memref<576x32xf32, #tpu.memory_space<vmem>>, vector<64x32xf32>
    %cst_209 = arith.constant dense<0.000000e+00> : vector<36x32xf32>
    %325 = tpu.matmul %323, %324, %cst_209 {dimension_numbers = #tpu.dot_dimension_numbers<[1], [0], [0], [1], [0, 0, 1, 1], [], []>} : vector<36x64xf32>, vector<64x32xf32>, vector<36x32xf32> -> vector<36x32xf32>
    %326 = arith.addf %322, %325 : vector<36x32xf32>
    %c0_210 = arith.constant 0 : index
    %c0_211 = arith.constant 0 : index
    %327 = vector.load %arg7[%c0_210, %c0_211] : memref<1x32xf32, #tpu.memory_space<vmem>>, vector<1x32xf32>
    %328 = vector.broadcast %327 : vector<1x32xf32> to vector<36x32xf32>
    %329 = arith.addf %326, %328 : vector<36x32xf32>
    %330 = vector.extract_strided_slice %329 {offsets = [0, 0], sizes = [4, 32], strides = [1, 1]} : vector<36x32xf32> to vector<4x32xf32>
    %c7_212 = arith.constant 7 : index
    %c0_213 = arith.constant 0 : index
    %331 = vector.load %arg15[%c7_212, %c0_213] : memref<50x32xf32, #tpu.memory_space<vmem>>, vector<4x32xf32>
    tpu.vector_store %arg15[%c7_212, %c0_213], %330 {strides = array<i32>} : memref<50x32xf32, #tpu.memory_space<vmem>>, vector<4x32xf32>,
    %332 = vector.extract_strided_slice %329 {offsets = [6, 0], sizes = [4, 32], strides = [1, 1]} : vector<36x32xf32> to vector<4x32xf32>
    %c13_214 = arith.constant 13 : index
    %c0_215 = arith.constant 0 : index
    %333 = vector.load %arg15[%c13_214, %c0_215] : memref<50x32xf32, #tpu.memory_space<vmem>>, vector<4x32xf32>
    tpu.vector_store %arg15[%c13_214, %c0_215], %332 {strides = array<i32>} : memref<50x32xf32, #tpu.memory_space<vmem>>, vector<4x32xf32>,
    %334 = vector.extract_strided_slice %329 {offsets = [12, 0], sizes = [4, 32], strides = [1, 1]} : vector<36x32xf32> to vector<4x32xf32>
    %c19_216 = arith.constant 19 : index
    %c0_217 = arith.constant 0 : index
    %335 = vector.load %arg15[%c19_216, %c0_217] : memref<50x32xf32, #tpu.memory_space<vmem>>, vector<4x32xf32>
    tpu.vector_store %arg15[%c19_216, %c0_217], %334 {strides = array<i32>} : memref<50x32xf32, #tpu.memory_space<vmem>>, vector<4x32xf32>,
    %336 = vector.extract_strided_slice %329 {offsets = [18, 0], sizes = [4, 32], strides = [1, 1]} : vector<36x32xf32> to vector<4x32xf32>
    %c25_218 = arith.constant 25 : index
    %c0_219 = arith.constant 0 : index
    %337 = vector.load %arg15[%c25_218, %c0_219] : memref<50x32xf32, #tpu.memory_space<vmem>>, vector<4x32xf32>
    tpu.vector_store %arg15[%c25_218, %c0_219], %336 {strides = array<i32>} : memref<50x32xf32, #tpu.memory_space<vmem>>, vector<4x32xf32>,
    %c0_220 = arith.constant 0 : index
    %c0_221 = arith.constant 0 : index
    %338 = vector.load %arg15[%c0_220, %c0_221] : memref<50x32xf32, #tpu.memory_space<vmem>>, vector<50x32xf32>
    %339 = vector.extract_strided_slice %338 {offsets = [0, 0], sizes = [36, 32], strides = [1, 1]} : vector<50x32xf32> to vector<36x32xf32>
    %c0_222 = arith.constant 0 : index
    %c0_223 = arith.constant 0 : index
    %340 = vector.load %arg8[%c0_222, %c0_223] : memref<288x32xf32, #tpu.memory_space<vmem>>, vector<32x32xf32>
    %cst_224 = arith.constant dense<0.000000e+00> : vector<36x32xf32>
    %341 = tpu.matmul %339, %340, %cst_224 {dimension_numbers = #tpu.dot_dimension_numbers<[1], [0], [0], [1], [0, 0, 1, 1], [], []>} : vector<36x32xf32>, vector<32x32xf32>, vector<36x32xf32> -> vector<36x32xf32>
    %342 = vector.extract_strided_slice %338 {offsets = [1, 0], sizes = [36, 32], strides = [1, 1]} : vector<50x32xf32> to vector<36x32xf32>
    %c32_225 = arith.constant 32 : index
    %c0_226 = arith.constant 0 : index
    %343 = vector.load %arg8[%c32_225, %c0_226] : memref<288x32xf32, #tpu.memory_space<vmem>>, vector<32x32xf32>
    %cst_227 = arith.constant dense<0.000000e+00> : vector<36x32xf32>
    %344 = tpu.matmul %342, %343, %cst_227 {dimension_numbers = #tpu.dot_dimension_numbers<[1], [0], [0], [1], [0, 0, 1, 1], [], []>} : vector<36x32xf32>, vector<32x32xf32>, vector<36x32xf32> -> vector<36x32xf32>
    %345 = arith.addf %341, %344 : vector<36x32xf32>
    %346 = vector.extract_strided_slice %338 {offsets = [2, 0], sizes = [36, 32], strides = [1, 1]} : vector<50x32xf32> to vector<36x32xf32>
    %c64_228 = arith.constant 64 : index
    %c0_229 = arith.constant 0 : index
    %347 = vector.load %arg8[%c64_228, %c0_229] : memref<288x32xf32, #tpu.memory_space<vmem>>, vector<32x32xf32>
    %cst_230 = arith.constant dense<0.000000e+00> : vector<36x32xf32>
    %348 = tpu.matmul %346, %347, %cst_230 {dimension_numbers = #tpu.dot_dimension_numbers<[1], [0], [0], [1], [0, 0, 1, 1], [], []>} : vector<36x32xf32>, vector<32x32xf32>, vector<36x32xf32> -> vector<36x32xf32>
    %349 = arith.addf %345, %348 : vector<36x32xf32>
    %350 = vector.extract_strided_slice %338 {offsets = [6, 0], sizes = [36, 32], strides = [1, 1]} : vector<50x32xf32> to vector<36x32xf32>
    %c96_231 = arith.constant 96 : index
    %c0_232 = arith.constant 0 : index
    %351 = vector.load %arg8[%c96_231, %c0_232] : memref<288x32xf32, #tpu.memory_space<vmem>>, vector<32x32xf32>
    %cst_233 = arith.constant dense<0.000000e+00> : vector<36x32xf32>
    %352 = tpu.matmul %350, %351, %cst_233 {dimension_numbers = #tpu.dot_dimension_numbers<[1], [0], [0], [1], [0, 0, 1, 1], [], []>} : vector<36x32xf32>, vector<32x32xf32>, vector<36x32xf32> -> vector<36x32xf32>
    %353 = arith.addf %349, %352 : vector<36x32xf32>
    %354 = vector.extract_strided_slice %338 {offsets = [7, 0], sizes = [36, 32], strides = [1, 1]} : vector<50x32xf32> to vector<36x32xf32>
    %c128_234 = arith.constant 128 : index
    %c0_235 = arith.constant 0 : index
    %355 = vector.load %arg8[%c128_234, %c0_235] : memref<288x32xf32, #tpu.memory_space<vmem>>, vector<32x32xf32>
    %cst_236 = arith.constant dense<0.000000e+00> : vector<36x32xf32>
    %356 = tpu.matmul %354, %355, %cst_236 {dimension_numbers = #tpu.dot_dimension_numbers<[1], [0], [0], [1], [0, 0, 1, 1], [], []>} : vector<36x32xf32>, vector<32x32xf32>, vector<36x32xf32> -> vector<36x32xf32>
    %357 = arith.addf %353, %356 : vector<36x32xf32>
    %358 = vector.extract_strided_slice %338 {offsets = [8, 0], sizes = [36, 32], strides = [1, 1]} : vector<50x32xf32> to vector<36x32xf32>
    %c160 = arith.constant 160 : index
    %c0_237 = arith.constant 0 : index
    %359 = vector.load %arg8[%c160, %c0_237] : memref<288x32xf32, #tpu.memory_space<vmem>>, vector<32x32xf32>
    %cst_238 = arith.constant dense<0.000000e+00> : vector<36x32xf32>
    %360 = tpu.matmul %358, %359, %cst_238 {dimension_numbers = #tpu.dot_dimension_numbers<[1], [0], [0], [1], [0, 0, 1, 1], [], []>} : vector<36x32xf32>, vector<32x32xf32>, vector<36x32xf32> -> vector<36x32xf32>
    %361 = arith.addf %357, %360 : vector<36x32xf32>
    %362 = vector.extract_strided_slice %338 {offsets = [12, 0], sizes = [36, 32], strides = [1, 1]} : vector<50x32xf32> to vector<36x32xf32>
    %c192_239 = arith.constant 192 : index
    %c0_240 = arith.constant 0 : index
    %363 = vector.load %arg8[%c192_239, %c0_240] : memref<288x32xf32, #tpu.memory_space<vmem>>, vector<32x32xf32>
    %cst_241 = arith.constant dense<0.000000e+00> : vector<36x32xf32>
    %364 = tpu.matmul %362, %363, %cst_241 {dimension_numbers = #tpu.dot_dimension_numbers<[1], [0], [0], [1], [0, 0, 1, 1], [], []>} : vector<36x32xf32>, vector<32x32xf32>, vector<36x32xf32> -> vector<36x32xf32>
    %365 = arith.addf %361, %364 : vector<36x32xf32>
    %366 = vector.extract_strided_slice %338 {offsets = [13, 0], sizes = [36, 32], strides = [1, 1]} : vector<50x32xf32> to vector<36x32xf32>
    %c224 = arith.constant 224 : index
    %c0_242 = arith.constant 0 : index
    %367 = vector.load %arg8[%c224, %c0_242] : memref<288x32xf32, #tpu.memory_space<vmem>>, vector<32x32xf32>
    %cst_243 = arith.constant dense<0.000000e+00> : vector<36x32xf32>
    %368 = tpu.matmul %366, %367, %cst_243 {dimension_numbers = #tpu.dot_dimension_numbers<[1], [0], [0], [1], [0, 0, 1, 1], [], []>} : vector<36x32xf32>, vector<32x32xf32>, vector<36x32xf32> -> vector<36x32xf32>
    %369 = arith.addf %365, %368 : vector<36x32xf32>
    %370 = vector.extract_strided_slice %338 {offsets = [14, 0], sizes = [36, 32], strides = [1, 1]} : vector<50x32xf32> to vector<36x32xf32>
    %c256_244 = arith.constant 256 : index
    %c0_245 = arith.constant 0 : index
    %371 = vector.load %arg8[%c256_244, %c0_245] : memref<288x32xf32, #tpu.memory_space<vmem>>, vector<32x32xf32>
    %cst_246 = arith.constant dense<0.000000e+00> : vector<36x32xf32>
    %372 = tpu.matmul %370, %371, %cst_246 {dimension_numbers = #tpu.dot_dimension_numbers<[1], [0], [0], [1], [0, 0, 1, 1], [], []>} : vector<36x32xf32>, vector<32x32xf32>, vector<36x32xf32> -> vector<36x32xf32>
    %373 = arith.addf %369, %372 : vector<36x32xf32>
    %c0_247 = arith.constant 0 : index
    %c0_248 = arith.constant 0 : index
    %374 = vector.load %arg9[%c0_247, %c0_248] : memref<1x32xf32, #tpu.memory_space<vmem>>, vector<1x32xf32>
    %375 = vector.broadcast %374 : vector<1x32xf32> to vector<36x32xf32>
    %376 = arith.addf %373, %375 : vector<36x32xf32>
    %377 = vector.extract_strided_slice %376 {offsets = [0, 0], sizes = [29, 32], strides = [1, 1]} : vector<36x32xf32> to vector<29x32xf32>
    %378 = vector.extract_strided_slice %376 {offsets = [1, 0], sizes = [29, 32], strides = [1, 1]} : vector<36x32xf32> to vector<29x32xf32>
    %379 = arith.maximumf %377, %378 : vector<29x32xf32>
    %380 = vector.extract_strided_slice %376 {offsets = [6, 0], sizes = [29, 32], strides = [1, 1]} : vector<36x32xf32> to vector<29x32xf32>
    %381 = vector.extract_strided_slice %376 {offsets = [7, 0], sizes = [29, 32], strides = [1, 1]} : vector<36x32xf32> to vector<29x32xf32>
    %382 = arith.maximumf %380, %381 : vector<29x32xf32>
    %383 = arith.maximumf %379, %382 : vector<29x32xf32>
    %c0_249 = arith.constant 0 : index
    %c0_250 = arith.constant 0 : index
    %384 = vector.load %arg10[%c0_249, %c0_250] : memref<32x16xf32, #tpu.memory_space<vmem>>, vector<32x16xf32>
    %cst_251 = arith.constant dense<0.000000e+00> : vector<29x16xf32>
    %385 = tpu.matmul %383, %384, %cst_251 {dimension_numbers = #tpu.dot_dimension_numbers<[1], [0], [0], [1], [0, 0, 1, 1], [], []>} : vector<29x32xf32>, vector<32x16xf32>, vector<29x16xf32> -> vector<29x16xf32>
    %c0_252 = arith.constant 0 : index
    %c0_253 = arith.constant 0 : index
    %386 = vector.load %arg11[%c0_252, %c0_253] : memref<1x16xf32, #tpu.memory_space<vmem>>, vector<1x16xf32>
    %387 = vector.broadcast %386 : vector<1x16xf32> to vector<29x16xf32>
    %388 = arith.addf %385, %387 : vector<29x16xf32>
    %389 = vector.extract_strided_slice %388 {offsets = [0, 0], sizes = [1, 16], strides = [1, 1]} : vector<29x16xf32> to vector<1x16xf32>
    %c0_254 = arith.constant 0 : index
    %c0_255 = arith.constant 0 : index
    %c0_256 = arith.constant 0 : index
    %390 = vector.load %arg12[%c0_254, %c0_255, %c0_256] : memref<1x4x16xf32, #tpu.memory_space<vmem>>, vector<1x1x16xf32>
    %391 = vector.shape_cast %390 : vector<1x1x16xf32> to vector<1x16xf32>
    %392 = vector.shape_cast %389 : vector<1x16xf32> to vector<1x1x16xf32>
    tpu.vector_store %arg12[%c0_254, %c0_255, %c0_256], %392 {strides = array<i32>} : memref<1x4x16xf32, #tpu.memory_space<vmem>>, vector<1x1x16xf32>,
    %393 = vector.extract_strided_slice %388 {offsets = [2, 0], sizes = [1, 16], strides = [1, 1]} : vector<29x16xf32> to vector<1x16xf32>
    %c0_257 = arith.constant 0 : index
    %c1 = arith.constant 1 : index
    %c0_258 = arith.constant 0 : index
    %394 = vector.load %arg12[%c0_257, %c1, %c0_258] : memref<1x4x16xf32, #tpu.memory_space<vmem>>, vector<1x1x16xf32>
    %395 = vector.shape_cast %394 : vector<1x1x16xf32> to vector<1x16xf32>
    %396 = vector.shape_cast %393 : vector<1x16xf32> to vector<1x1x16xf32>
    tpu.vector_store %arg12[%c0_257, %c1, %c0_258], %396 {strides = array<i32>} : memref<1x4x16xf32, #tpu.memory_space<vmem>>, vector<1x1x16xf32>,
    %397 = vector.extract_strided_slice %388 {offsets = [12, 0], sizes = [1, 16], strides = [1, 1]} : vector<29x16xf32> to vector<1x16xf32>
    %c0_259 = arith.constant 0 : index
    %c2 = arith.constant 2 : index
    %c0_260 = arith.constant 0 : index
    %398 = vector.load %arg12[%c0_259, %c2, %c0_260] : memref<1x4x16xf32, #tpu.memory_space<vmem>>, vector<1x1x16xf32>
    %399 = vector.shape_cast %398 : vector<1x1x16xf32> to vector<1x16xf32>
    %400 = vector.shape_cast %397 : vector<1x16xf32> to vector<1x1x16xf32>
    tpu.vector_store %arg12[%c0_259, %c2, %c0_260], %400 {strides = array<i32>} : memref<1x4x16xf32, #tpu.memory_space<vmem>>, vector<1x1x16xf32>,
    %401 = vector.extract_strided_slice %388 {offsets = [14, 0], sizes = [1, 16], strides = [1, 1]} : vector<29x16xf32> to vector<1x16xf32>
    %c0_261 = arith.constant 0 : index
    %c3 = arith.constant 3 : index
    %c0_262 = arith.constant 0 : index
    %402 = vector.load %arg12[%c0_261, %c3, %c0_262] : memref<1x4x16xf32, #tpu.memory_space<vmem>>, vector<1x1x16xf32>
    %403 = vector.shape_cast %402 : vector<1x1x16xf32> to vector<1x16xf32>
    %404 = vector.shape_cast %401 : vector<1x16xf32> to vector<1x1x16xf32>
    tpu.vector_store %arg12[%c0_261, %c3, %c0_262], %404 {strides = array<i32>} : memref<1x4x16xf32, #tpu.memory_space<vmem>>, vector<1x1x16xf32>,
    return
  }
  func.func @transform_0(%arg0: i32) -> (i32, i32, i32) {
    %c0_i32 = arith.constant 0 : i32
    %c0_i32_0 = arith.constant 0 : i32
    %c0_i32_1 = arith.constant 0 : i32
    return %arg0, %c0_i32, %c0_i32_0 : i32, i32, i32
  }
  func.func @transform_1(%arg0: i32) -> (i32, i32) {
    %c0_i32 = arith.constant 0 : i32
    %c0_i32_0 = arith.constant 0 : i32
    %c0_i32_1 = arith.constant 0 : i32
    return %c0_i32, %c0_i32_0 : i32, i32
  }
  func.func @transform_2(%arg0: i32) -> (i32, i32) {
    %c0_i32 = arith.constant 0 : i32
    %c0_i32_0 = arith.constant 0 : i32
    %c0_i32_1 = arith.constant 0 : i32
    return %c0_i32, %c0_i32_0 : i32, i32
  }
  func.func @transform_3(%arg0: i32) -> (i32, i32) {
    %c0_i32 = arith.constant 0 : i32
    %c0_i32_0 = arith.constant 0 : i32
    %c0_i32_1 = arith.constant 0 : i32
    return %c0_i32, %c0_i32_0 : i32, i32
  }
  func.func @transform_4(%arg0: i32) -> (i32, i32) {
    %c0_i32 = arith.constant 0 : i32
    %c0_i32_0 = arith.constant 0 : i32
    %c0_i32_1 = arith.constant 0 : i32
    return %c0_i32, %c0_i32_0 : i32, i32
  }
  func.func @transform_5(%arg0: i32) -> (i32, i32) {
    %c0_i32 = arith.constant 0 : i32
    %c0_i32_0 = arith.constant 0 : i32
    %c0_i32_1 = arith.constant 0 : i32
    return %c0_i32, %c0_i32_0 : i32, i32
  }
  func.func @transform_6(%arg0: i32) -> (i32, i32) {
    %c0_i32 = arith.constant 0 : i32
    %c0_i32_0 = arith.constant 0 : i32
    %c0_i32_1 = arith.constant 0 : i32
    return %c0_i32, %c0_i32_0 : i32, i32
  }
  func.func @transform_7(%arg0: i32) -> (i32, i32) {
    %c0_i32 = arith.constant 0 : i32
    %c0_i32_0 = arith.constant 0 : i32
    %c0_i32_1 = arith.constant 0 : i32
    return %c0_i32, %c0_i32_0 : i32, i32
  }
  func.func @transform_8(%arg0: i32) -> (i32, i32) {
    %c0_i32 = arith.constant 0 : i32
    %c0_i32_0 = arith.constant 0 : i32
    %c0_i32_1 = arith.constant 0 : i32
    return %c0_i32, %c0_i32_0 : i32, i32
  }
  func.func @transform_9(%arg0: i32) -> (i32, i32) {
    %c0_i32 = arith.constant 0 : i32
    %c0_i32_0 = arith.constant 0 : i32
    %c0_i32_1 = arith.constant 0 : i32
    return %c0_i32, %c0_i32_0 : i32, i32
  }
  func.func @transform_10(%arg0: i32) -> (i32, i32) {
    %c0_i32 = arith.constant 0 : i32
    %c0_i32_0 = arith.constant 0 : i32
    %c0_i32_1 = arith.constant 0 : i32
    return %c0_i32, %c0_i32_0 : i32, i32
  }
  func.func @transform_11(%arg0: i32) -> (i32, i32, i32) {
    %c0_i32 = arith.constant 0 : i32
    %c0_i32_0 = arith.constant 0 : i32
    %c0_i32_1 = arith.constant 0 : i32
    return %arg0, %c0_i32, %c0_i32_0 : i32, i32, i32
  }
}

</mosaic_0001>

<llo_original>
// kernel: wide_cipsi_forward.1
$region0: #{wide_cipsi_forward.1}
  #allocation0 [shape = 'u32[]', space=smem, size = 0x4, offset = 0x4, fixed_abs, tag = 'smem constant byte address 0x4 - core index']
  #allocation1 [shape = 'u32[144,128]{1,0:T(1,128)}', space=vmem, size = 0x12000, scoped, tag = 'internal scratch']
  #allocation2 [shape = 'f32[122,16]{1,0:T(8,128)}', space=vmem, size = 0x10000, scoped, tag = 'scratch operand']
  #allocation3 [shape = 'f32[50,64]{1,0:T(8,128)}', space=vmem, size = 0x7000, scoped, tag = 'scratch operand']
  #allocation4 [shape = 'f32[50,32]{1,0:T(8,128)}', space=vmem, size = 0x7000, scoped, tag = 'scratch operand']
  %s0 = inlined_call_operand.vmem [shape: f32[2,362,8], index: 0, kind: input, shape index: {}]
  %s1 = inlined_call_operand.vmem [shape: f32[72,16], index: 1, kind: input, shape index: {}]
  %s2 = inlined_call_operand.vmem [shape: f32[1,16], index: 2, kind: input, shape index: {}]
  %s3 = inlined_call_operand.vmem [shape: f32[144,48], index: 3, kind: input, shape index: {}]
  %s4 = inlined_call_operand.vmem [shape: f32[1,48], index: 4, kind: input, shape index: {}]
  %s5 = inlined_call_operand.vmem [shape: f32[576,32], index: 5, kind: input, shape index: {}]
  %s6 = inlined_call_operand.vmem [shape: f32[1,32], index: 6, kind: input, shape index: {}]
  %s7 = inlined_call_operand.vmem [shape: f32[288,32], index: 7, kind: input, shape index: {}]
  %s8 = inlined_call_operand.vmem [shape: f32[1,32], index: 8, kind: input, shape index: {}]
  %s9 = inlined_call_operand.vmem [shape: f32[32,16], index: 9, kind: input, shape index: {}]
  %s10 = inlined_call_operand.vmem [shape: f32[1,16], index: 10, kind: input, shape index: {}]
  %s11 = inlined_call_operand.hbm [shape: f32[2,4,16], index: 11, kind: output, shape index: {}]
  %s12 = sld [smem:[#allocation0]]
  $region77: #{wide_cipsi_forward.1} parent=0
    _
  %s14 = ssub.s32 1, %s12
  %s15 = scalar_select 0, %s14, %s12
  $region1: #{wide_cipsi_forward.1} parent=0
    #allocation5 [shape = 'u8[4096]{0}', space=vmem, size = 0x1000, scoped, tag = 'output window, operand 0']
    #allocation6 [shape = 's32[2]{0}', space=sflag, size = 0x8, scoped, tag = 'scoped memory for wide_cipsi_forward.1']
    %16 = vsyncpa [#allocation6], 0
    %s17 = scalar_lea.sflag [#allocation6], 1
    %18 = vsyncpa %s17, 0
    loop: start=0, step=1, limit=4
    $region2: #{wide_cipsi_forward.1} parent=1 // loop_pre_header
      _
    $region3: #{wide_cipsi_forward.1} parent=1 // loop_header
      %s20 = sphi 0, %s24
      %p21 = scmp.ge.s32.totalorder %s20, 4
      %s30 = sphi 0, %s32
      %s33 = sphi 0, %s30
      %s34 = sphi 0, %s33
      %s50 = sphi 0, %s34
      %s54 = sphi 0, %s54
      %s56 = sphi 0, %s54
      %s57 = sphi 0, %s56
      %s71 = sphi 0, %s57
      %s75 = sphi 0, %s75
      %s77 = sphi 0, %s75
      %s78 = sphi 0, %s77
      %s92 = sphi 0, %s78
      %s96 = sphi 0, %s96
      %s98 = sphi 0, %s96
      %s99 = sphi 0, %s98
      %s113 = sphi 0, %s99
      %s117 = sphi 0, %s117
      %s119 = sphi 0, %s117
      %s120 = sphi 0, %s119
      %s134 = sphi 0, %s120
      %s138 = sphi 0, %s138
      %s140 = sphi 0, %s138
      %s141 = sphi 0, %s140
      %s155 = sphi 0, %s141
      %s159 = sphi 0, %s159
      %s161 = sphi 0, %s159
      %s162 = sphi 0, %s161
      %s176 = sphi 0, %s162
      %s180 = sphi 0, %s180
      %s182 = sphi 0, %s180
      %s183 = sphi 0, %s182
      %s197 = sphi 0, %s183
      %s201 = sphi 0, %s201
      %s203 = sphi 0, %s201
      %s204 = sphi 0, %s203
      %s218 = sphi 0, %s204
      %s222 = sphi 0, %s222
      %s224 = sphi 0, %s222
      %s225 = sphi 0, %s224
      %s239 = sphi 0, %s225
      %s243 = sphi 0, %s243
      %s245 = sphi 0, %s243
      %s246 = sphi 0, %s245
      %s260 = sphi 0, %s246
      %s266 = sphi 0, %s268
      %s269 = sphi 0, %s266
      %s270 = sphi 0, %s269
      %s286 = sphi 0, %s270
    $region4: #{wide_cipsi_forward.1} parent=1 // loop_header_branch
      %23 = sbr.rel (%p21) target = $region8
    $region5: #{wide_cipsi_forward.1} parent=1 // loop_body
      %s25 = ssub.s32 %s20, 1
      %s26 = ssub.s32 %s20, 2
      %s27 = sadd.s32 %s20, 1
      %s28 = ssub.s32 %s20, %s27
      %p29 = scmp.eq.s32.totalorder %s28, 0
      %s31 = sadd.s32 %s30, 1
      %s32 = scalar_select %p29, %s30, %s31
      %p35 = pneg %p29
      %p36 = scmp.eq.s32.totalorder %s20, 1
      %p37 = por %p35, %p36
      %p38 = scmp.ne.s32.totalorder %s30, %s33
      %p39 = scmp.eq.s32.totalorder %s20, 0
      %p40 = por %p38, %p39
      %p41 = scmp.ne.s32.totalorder %s30, %s33
      %p42 = scmp.eq.s32.totalorder %s25, 1
      %p43 = por %p41, %p42
      %p44 = scmp.ne.s32.totalorder %s33, %s34
      %p45 = scmp.eq.s32.totalorder %s25, 0
      %p46 = por %p44, %p45
      %p47 = scmp.ne.s32.totalorder %s33, %s34
      %p48 = scmp.eq.s32.totalorder %s26, 1
      %p49 = por %p47, %p48
      %p51 = scmp.ne.s32.totalorder %s34, %s50
      %p52 = scmp.eq.s32.totalorder %s26, 0
      %p53 = por %p51, %p52
      %s55 = sadd.s32 %s54, 1
      %p58 = scmp.eq.s32.totalorder %s20, 1
      %p59 = scmp.ne.s32.totalorder %s54, %s56
      %p60 = scmp.eq.s32.totalorder %s20, 0
      %p61 = por %p59, %p60
      %p62 = scmp.ne.s32.totalorder %s54, %s56
      %p63 = scmp.eq.s32.totalorder %s25, 1
      %p64 = por %p62, %p63
      %p65 = scmp.ne.s32.totalorder %s56, %s57
      %p66 = scmp.eq.s32.totalorder %s25, 0
      %p67 = por %p65, %p66
      %p68 = scmp.ne.s32.totalorder %s56, %s57
      %p69 = scmp.eq.s32.totalorder %s26, 1
      %p70 = por %p68, %p69
      %p72 = scmp.ne.s32.totalorder %s57, %s71
      %p73 = scmp.eq.s32.totalorder %s26, 0
      %p74 = por %p72, %p73
      %s76 = sadd.s32 %s75, 1
      %p79 = scmp.eq.s32.totalorder %s20, 1
      %p80 = scmp.ne.s32.totalorder %s75, %s77
      %p81 = scmp.eq.s32.totalorder %s20, 0
      %p82 = por %p80, %p81
      %p83 = scmp.ne.s32.totalorder %s75, %s77
      %p84 = scmp.eq.s32.totalorder %s25, 1
      %p85 = por %p83, %p84
      %p86 = scmp.ne.s32.totalorder %s77, %s78
      %p87 = scmp.eq.s32.totalorder %s25, 0
      %p88 = por %p86, %p87
      %p89 = scmp.ne.s32.totalorder %s77, %s78
      %p90 = scmp.eq.s32.totalorder %s26, 1
      %p91 = por %p89, %p90
      %p93 = scmp.ne.s32.totalorder %s78, %s92
      %p94 = scmp.eq.s32.totalorder %s26, 0
      %p95 = por %p93, %p94
      %s97 = sadd.s32 %s96, 1
      %p100 = scmp.eq.s32.totalorder %s20, 1
      %p101 = scmp.ne.s32.totalorder %s96, %s98
      %p102 = scmp.eq.s32.totalorder %s20, 0
      %p103 = por %p101, %p102
      %p104 = scmp.ne.s32.totalorder %s96, %s98
      %p105 = scmp.eq.s32.totalorder %s25, 1
      %p106 = por %p104, %p105
      %p107 = scmp.ne.s32.totalorder %s98, %s99
      %p108 = scmp.eq.s32.totalorder %s25, 0
      %p109 = por %p107, %p108
      %p110 = scmp.ne.s32.totalorder %s98, %s99
      %p111 = scmp.eq.s32.totalorder %s26, 1
      %p112 = por %p110, %p111
      %p114 = scmp.ne.s32.totalorder %s99, %s113
      %p115 = scmp.eq.s32.totalorder %s26, 0
      %p116 = por %p114, %p115
      %s118 = sadd.s32 %s117, 1
      %p121 = scmp.eq.s32.totalorder %s20, 1
      %p122 = scmp.ne.s32.totalorder %s117, %s119
      %p123 = scmp.eq.s32.totalorder %s20, 0
      %p124 = por %p122, %p123
      %p125 = scmp.ne.s32.totalorder %s117, %s119
      %p126 = scmp.eq.s32.totalorder %s25, 1
      %p127 = por %p125, %p126
      %p128 = scmp.ne.s32.totalorder %s119, %s120
      %p129 = scmp.eq.s32.totalorder %s25, 0
      %p130 = por %p128, %p129
      %p131 = scmp.ne.s32.totalorder %s119, %s120
      %p132 = scmp.eq.s32.totalorder %s26, 1
      %p133 = por %p131, %p132
      %p135 = scmp.ne.s32.totalorder %s120, %s134
      %p136 = scmp.eq.s32.totalorder %s26, 0
      %p137 = por %p135, %p136
      %s139 = sadd.s32 %s138, 1
      %p142 = scmp.eq.s32.totalorder %s20, 1
      %p143 = scmp.ne.s32.totalorder %s138, %s140
      %p144 = scmp.eq.s32.totalorder %s20, 0
      %p145 = por %p143, %p144
      %p146 = scmp.ne.s32.totalorder %s138, %s140
      %p147 = scmp.eq.s32.totalorder %s25, 1
      %p148 = por %p146, %p147
      %p149 = scmp.ne.s32.totalorder %s140, %s141
      %p150 = scmp.eq.s32.totalorder %s25, 0
      %p151 = por %p149, %p150
      %p152 = scmp.ne.s32.totalorder %s140, %s141
      %p153 = scmp.eq.s32.totalorder %s26, 1
      %p154 = por %p152, %p153
      %p156 = scmp.ne.s32.totalorder %s141, %s155
      %p157 = scmp.eq.s32.totalorder %s26, 0
      %p158 = por %p156, %p157
      %s160 = sadd.s32 %s159, 1
      %p163 = scmp.eq.s32.totalorder %s20, 1
      %p164 = scmp.ne.s32.totalorder %s159, %s161
      %p165 = scmp.eq.s32.totalorder %s20, 0
      %p166 = por %p164, %p165
      %p167 = scmp.ne.s32.totalorder %s159, %s161
      %p168 = scmp.eq.s32.totalorder %s25, 1
      %p169 = por %p167, %p168
      %p170 = scmp.ne.s32.totalorder %s161, %s162
      %p171 = scmp.eq.s32.totalorder %s25, 0
      %p172 = por %p170, %p171
      %p173 = scmp.ne.s32.totalorder %s161, %s162
      %p174 = scmp.eq.s32.totalorder %s26, 1
      %p175 = por %p173, %p174
      %p177 = scmp.ne.s32.totalorder %s162, %s176
      %p178 = scmp.eq.s32.totalorder %s26, 0
      %p179 = por %p177, %p178
      %s181 = sadd.s32 %s180, 1
      %p184 = scmp.eq.s32.totalorder %s20, 1
      %p185 = scmp.ne.s32.totalorder %s180, %s182
      %p186 = scmp.eq.s32.totalorder %s20, 0
      %p187 = por %p185, %p186
      %p188 = scmp.ne.s32.totalorder %s180, %s182
      %p189 = scmp.eq.s32.totalorder %s25, 1
      %p190 = por %p188, %p189
      %p191 = scmp.ne.s32.totalorder %s182, %s183
      %p192 = scmp.eq.s32.totalorder %s25, 0
      %p193 = por %p191, %p192
      %p194 = scmp.ne.s32.totalorder %s182, %s183
      %p195 = scmp.eq.s32.totalorder %s26, 1
      %p196 = por %p194, %p195
      %p198 = scmp.ne.s32.totalorder %s183, %s197
      %p199 = scmp.eq.s32.totalorder %s26, 0
      %p200 = por %p198, %p199
      %s202 = sadd.s32 %s201, 1
      %p205 = scmp.eq.s32.totalorder %s20, 1
      %p206 = scmp.ne.s32.totalorder %s201, %s203
      %p207 = scmp.eq.s32.totalorder %s20, 0
      %p208 = por %p206, %p207
      %p209 = scmp.ne.s32.totalorder %s201, %s203
      %p210 = scmp.eq.s32.totalorder %s25, 1
      %p211 = por %p209, %p210
      %p212 = scmp.ne.s32.totalorder %s203, %s204
      %p213 = scmp.eq.s32.totalorder %s25, 0
      %p214 = por %p212, %p213
      %p215 = scmp.ne.s32.totalorder %s203, %s204
      %p216 = scmp.eq.s32.totalorder %s26, 1
      %p217 = por %p215, %p216
      %p219 = scmp.ne.s32.totalorder %s204, %s218
      %p220 = scmp.eq.s32.totalorder %s26, 0
      %p221 = por %p219, %p220
      %s223 = sadd.s32 %s222, 1
      %p226 = scmp.eq.s32.totalorder %s20, 1
      %p227 = scmp.ne.s32.totalorder %s222, %s224
      %p228 = scmp.eq.s32.totalorder %s20, 0
      %p229 = por %p227, %p228
      %p230 = scmp.ne.s32.totalorder %s222, %s224
      %p231 = scmp.eq.s32.totalorder %s25, 1
      %p232 = por %p230, %p231
      %p233 = scmp.ne.s32.totalorder %s224, %s225
      %p234 = scmp.eq.s32.totalorder %s25, 0
      %p235 = por %p233, %p234
      %p236 = scmp.ne.s32.totalorder %s224, %s225
      %p237 = scmp.eq.s32.totalorder %s26, 1
      %p238 = por %p236, %p237
      %p240 = scmp.ne.s32.totalorder %s225, %s239
      %p241 = scmp.eq.s32.totalorder %s26, 0
      %p242 = por %p240, %p241
      %s244 = sadd.s32 %s243, 1
      %p247 = scmp.eq.s32.totalorder %s20, 1
      %p248 = scmp.ne.s32.totalorder %s243, %s245
      %p249 = scmp.eq.s32.totalorder %s20, 0
      %p250 = por %p248, %p249
      %p251 = scmp.ne.s32.totalorder %s243, %s245
      %p252 = scmp.eq.s32.totalorder %s25, 1
      %p253 = por %p251, %p252
      %p254 = scmp.ne.s32.totalorder %s245, %s246
      %p255 = scmp.eq.s32.totalorder %s25, 0
      %p256 = por %p254, %p255
      %p257 = scmp.ne.s32.totalorder %s245, %s246
      %p258 = scmp.eq.s32.totalorder %s26, 1
      %p259 = por %p257, %p258
      %p261 = scmp.ne.s32.totalorder %s246, %s260
      %p262 = scmp.eq.s32.totalorder %s26, 0
      %p263 = por %p261, %p262
      %s264 = ssub.s32 %s20, %s27
      %p265 = scmp.eq.s32.totalorder %s264, 0
      %s267 = sadd.s32 %s266, 1
      %s268 = scalar_select %p265, %s266, %s267
      %p271 = pneg %p265
      %p272 = scmp.eq.s32.totalorder %s20, 1
      %p273 = por %p271, %p272
      %p274 = scmp.ne.s32.totalorder %s266, %s269
      %p275 = scmp.eq.s32.totalorder %s20, 0
      %p276 = por %p274, %p275
      %p277 = scmp.ne.s32.totalorder %s266, %s269
      %p278 = scmp.eq.s32.totalorder %s25, 1
      %p279 = por %p277, %p278
      %p280 = scmp.ne.s32.totalorder %s269, %s270
      %p281 = scmp.eq.s32.totalorder %s25, 0
      %p282 = por %p280, %p281
      %p283 = scmp.ne.s32.totalorder %s269, %s270
      %p284 = scmp.eq.s32.totalorder %s26, 1
      %p285 = por %p283, %p284
      %p287 = scmp.ne.s32.totalorder %s270, %s286
      %p288 = scmp.eq.s32.totalorder %s26, 0
      %p289 = por %p287, %p288
      %p290 = scmp.le.s32.totalorder 1, %s20
      %p291 = scmp.lt.s32.totalorder %s20, 3
      %p292 = pnand %p290, %p291
      %p293 = pneg %p292
      // Predicated region
      $region9: #{wide_cipsi_forward.1} parent=5 // pred_check
        _
      $region10: #{wide_cipsi_forward.1} parent=5 // pred_check_branch
        %295 = sbr.rel (%p292) target = $region12
      $region11: #{wide_cipsi_forward.1} parent=5 // pred_region
        %s296 = ssub.s32 %s20, 1
        // Predicated region
        $region13: #{wide_cipsi_forward.1} parent=11 // pred_check
          %p297 = pneg %p67
        $region14: #{wide_cipsi_forward.1} parent=11 // pred_check_branch
          %299 = sbr.rel (%p297) target = $region16
        $region15: #{wide_cipsi_forward.1} parent=11 // pred_region
          _
        $region16: #{wide_cipsi_forward.1} parent=11 // pred_fallthru
          _
        // Predicated region
        $region17: #{wide_cipsi_forward.1} parent=11 // pred_check
          %p300 = pneg %p88
        $region18: #{wide_cipsi_forward.1} parent=11 // pred_check_branch
          %302 = sbr.rel (%p300) target = $region20
        $region19: #{wide_cipsi_forward.1} parent=11 // pred_region
          _
        $region20: #{wide_cipsi_forward.1} parent=11 // pred_fallthru
          _
        // Predicated region
        $region21: #{wide_cipsi_forward.1} parent=11 // pred_check
          %p303 = pneg %p109
        $region22: #{wide_cipsi_forward.1} parent=11 // pred_check_branch
          %305 = sbr.rel (%p303) target = $region24
        $region23: #{wide_cipsi_forward.1} parent=11 // pred_region
          _
        $region24: #{wide_cipsi_forward.1} parent=11 // pred_fallthru
          _
        // Predicated region
        $region25: #{wide_cipsi_forward.1} parent=11 // pred_check
          %p306 = pneg %p130
        $region26: #{wide_cipsi_forward.1} parent=11 // pred_check_branch
          %308 = sbr.rel (%p306) target = $region28
        $region27: #{wide_cipsi_forward.1} parent=11 // pred_region
          _
        $region28: #{wide_cipsi_forward.1} parent=11 // pred_fallthru
          _
        // Predicated region
        $region29: #{wide_cipsi_forward.1} parent=11 // pred_check
          %p309 = pneg %p151
        $region30: #{wide_cipsi_forward.1} parent=11 // pred_check_branch
          %311 = sbr.rel (%p309) target = $region32
        $region31: #{wide_cipsi_forward.1} parent=11 // pred_region
          _
        $region32: #{wide_cipsi_forward.1} parent=11 // pred_fallthru
          _
        // Predicated region
        $region33: #{wide_cipsi_forward.1} parent=11 // pred_check
          %p312 = pneg %p172
        $region34: #{wide_cipsi_forward.1} parent=11 // pred_check_branch
          %314 = sbr.rel (%p312) target = $region36
        $region35: #{wide_cipsi_forward.1} parent=11 // pred_region
          _
        $region36: #{wide_cipsi_forward.1} parent=11 // pred_fallthru
          _
        // Predicated region
        $region37: #{wide_cipsi_forward.1} parent=11 // pred_check
          %p315 = pneg %p193
        $region38: #{wide_cipsi_forward.1} parent=11 // pred_check_branch
          %317 = sbr.rel (%p315) target = $region40
        $region39: #{wide_cipsi_forward.1} parent=11 // pred_region
          _
        $region40: #{wide_cipsi_forward.1} parent=11 // pred_fallthru
          _
        // Predicated region
        $region41: #{wide_cipsi_forward.1} parent=11 // pred_check
          %p318 = pneg %p214
        $region42: #{wide_cipsi_forward.1} parent=11 // pred_check_branch
          %320 = sbr.rel (%p318) target = $region44
        $region43: #{wide_cipsi_forward.1} parent=11 // pred_region
          _
        $region44: #{wide_cipsi_forward.1} parent=11 // pred_fallthru
          _
        // Predicated region
        $region45: #{wide_cipsi_forward.1} parent=11 // pred_check
          %p321 = pneg %p235
        $region46: #{wide_cipsi_forward.1} parent=11 // pred_check_branch
          %323 = sbr.rel (%p321) target = $region48
        $region47: #{wide_cipsi_forward.1} parent=11 // pred_region
          _
        $region48: #{wide_cipsi_forward.1} parent=11 // pred_fallthru
          _
        // Predicated region
        $region49: #{wide_cipsi_forward.1} parent=11 // pred_check
          %p324 = pneg %p256
        $region50: #{wide_cipsi_forward.1} parent=11 // pred_check_branch
          %326 = sbr.rel (%p324) target = $region52
        $region51: #{wide_cipsi_forward.1} parent=11 // pred_region
          _
        $region52: #{wide_cipsi_forward.1} parent=11 // pred_fallthru
          _
      $region12: #{wide_cipsi_forward.1} parent=5 // pred_fallthru
        _
      %p327 = scmp.lt.s32.totalorder %s20, 2
      // Predicated region
      $region53: #{wide_cipsi_forward.1} parent=5 // pred_check
        %p328 = pneg %p327
      $region54: #{wide_cipsi_forward.1} parent=5 // pred_check_branch
        %330 = sbr.rel (%p328) target = $region56
      $region55: #{wide_cipsi_forward.1} parent=5 // pred_region
        // Predicated region
        $region57: #{wide_cipsi_forward.1} parent=55 // pred_check
          %p331 = pneg %p40
        $region58: #{wide_cipsi_forward.1} parent=55 // pred_check_branch
          %333 = sbr.rel (%p331) target = $region60
        $region59: #{wide_cipsi_forward.1} parent=55 // pred_region
          %p334 = scmp.lt.s32.totalorder %s20, 1
          %s335 = scalar_select %p334, %s20, 1
          %s336 = smul.addr %s335, 46
          %s337 = smul.addr %s336, 8
          %s338 = scalar_lea.vmem %s0, %s337
        $region60: #{wide_cipsi_forward.1} parent=55 // pred_fallthru
          _
      $region56: #{wide_cipsi_forward.1} parent=5 // pred_fallthru
        _
      %p339 = scmp.le.s32.totalorder 1, %s20
      %p340 = scmp.lt.s32.totalorder %s20, 3
      %p341 = pnand %p339, %p340
      %p342 = pneg %p341
      // Predicated region
      $region61: #{wide_cipsi_forward.1} parent=5 // pred_check
        _
      $region62: #{wide_cipsi_forward.1} parent=5 // pred_check_branch
        %344 = sbr.rel (%p341) target = $region64
      $region63: #{wide_cipsi_forward.1} parent=5 // pred_region
        %s345 = ssub.s32 %s20, 1
        %p346 = scmp.lt.s32.totalorder %s25, 1
        %s347 = scalar_select %p346, %s25, 1
        %s348 = smul.addr %s347, 46
        %s349 = smul.addr %s348, 8
        %s350 = scalar_lea.vmem %s0, %s349
        %p351 = pneg %p46
        %p352 = pneg %p43
        %p353 = pneg %p67
        %p354 = pneg %p64
        %p355 = pneg %p88
        %p356 = pneg %p85
        %p357 = pneg %p109
        %p358 = pneg %p106
        %p359 = pneg %p130
        %p360 = pneg %p127
        %p361 = pneg %p151
        %p362 = pneg %p148
        %p363 = pneg %p172
        %p364 = pneg %p169
        %p365 = pneg %p193
        %p366 = pneg %p190
        %p367 = pneg %p214
        %p368 = pneg %p211
        %p369 = pneg %p235
        %p370 = pneg %p232
        %p371 = pneg %p256
        %p372 = pneg %p253
        %p373 = pneg %p282
        %p374 = pneg %p279
        %s375 = sand.u32 %s269, 1
        %s376 = scalar_lea.sflag [#allocation6], %s375
        %s377 = sand.u32 %s269, 1
        %s378 = smul.addr %s377, 4
        %s379 = scalar_lea.vmem [#allocation5], %s378
        %p380 = scmp.lt.s32.totalorder %s25, 1
        %s381 = scalar_select %p380, %s25, 1
        %s382 = smul.addr %s381, 46
        %s383 = smul.addr %s382, 8
        %s384 = scalar_lea.vmem %s0, %s383
        %vm385 = vcmask 130048
        %386 = vst.msk [vmem:[#allocation2] sm:$0xff] %vm385, 0.0
        %387 = vst.msk [vmem:[#allocation2 + $0x8] sm:$0xff] %vm385, 0.0
        %388 = vst.msk [vmem:[#allocation2 + $0x10] sm:$0xff] %vm385, 0.0
        %389 = vst.msk [vmem:[#allocation2 + $0x18] sm:$0xff] %vm385, 0.0
        %390 = vst.msk [vmem:[#allocation2 + $0x20] sm:$0xff] %vm385, 0.0
        %391 = vst.msk [vmem:[#allocation2 + $0x28] sm:$0xff] %vm385, 0.0
        %392 = vst.msk [vmem:[#allocation2 + $0x30] sm:$0xff] %vm385, 0.0
        %393 = vst.msk [vmem:[#allocation2 + $0x38] sm:$0xff] %vm385, 0.0
        %394 = vst.msk [vmem:[#allocation2 + $0x40] sm:$0xff] %vm385, 0.0
        %395 = vst.msk [vmem:[#allocation2 + $0x48] sm:$0xff] %vm385, 0.0
        %396 = vst.msk [vmem:[#allocation2 + $0x50] sm:$0xff] %vm385, 0.0
        %397 = vst.msk [vmem:[#allocation2 + $0x58] sm:$0xff] %vm385, 0.0
        %398 = vst.msk [vmem:[#allocation2 + $0x60] sm:$0xff] %vm385, 0.0
        %399 = vst.msk [vmem:[#allocation2 + $0x68] sm:$0xff] %vm385, 0.0
        %400 = vst.msk [vmem:[#allocation2 + $0x70] sm:$0xff] %vm385, 0.0
        %vm401 = vcmask 123904
        %402 = vst.msk [vmem:[#allocation2 + $0x78] sm:$0x3] %vm401, 0.0
        %vm403 = vcmask 523264
        %404 = vst.msk [vmem:[#allocation3] sm:$0xff] %vm403, 0.0
        %405 = vst.msk [vmem:[#allocation3 + $0x8] sm:$0xff] %vm403, 0.0
        %406 = vst.msk [vmem:[#allocation3 + $0x10] sm:$0xff] %vm403, 0.0
        %407 = vst.msk [vmem:[#allocation3 + $0x18] sm:$0xff] %vm403, 0.0
        %408 = vst.msk [vmem:[#allocation3 + $0x20] sm:$0xff] %vm403, 0.0
        %409 = vst.msk [vmem:[#allocation3 + $0x28] sm:$0xff] %vm403, 0.0
        %vm410 = vcmask 517120
        %411 = vst.msk [vmem:[#allocation3 + $0x30] sm:$0x3] %vm410, 0.0
        %vm412 = vcmask 261120
        %413 = vst.msk [vmem:[#allocation4] sm:$0xff] %vm412, 0.0
        %414 = vst.msk [vmem:[#allocation4 + $0x8] sm:$0xff] %vm412, 0.0
        %415 = vst.msk [vmem:[#allocation4 + $0x10] sm:$0xff] %vm412, 0.0
        %416 = vst.msk [vmem:[#allocation4 + $0x18] sm:$0xff] %vm412, 0.0
        %417 = vst.msk [vmem:[#allocation4 + $0x20] sm:$0xff] %vm412, 0.0
        %418 = vst.msk [vmem:[#allocation4 + $0x28] sm:$0xff] %vm412, 0.0
        %vm419 = vcmask 254976
        %420 = vst.msk [vmem:[#allocation4 + $0x30] sm:$0x3] %vm419, 0.0
        %v421 = vld [vmem:[%s384] sm:$0xff]
        %v422 = vld [vmem:[%s384 + $0x8] sm:$0xff]
        %v423 = vld [vmem:[%s384 + $0x10] sm:$0xff]
        %v424 = vld [vmem:[%s384 + $0x18] sm:$0xff]
        %v425 = vld [vmem:[%s384 + $0x20] sm:$0xff]
        %v426 = vld [vmem:[%s384 + $0x28] sm:$0xff]
        %v427 = vld [vmem:[%s384 + $0x30] sm:$0xff]
        %v428 = vld [vmem:[%s384 + $0x38] sm:$0xff]
        %v429 = vld [vmem:[%s384 + $0x40] sm:$0xff]
        %v430 = vld [vmem:[%s384 + $0x48] sm:$0xff]
        %v431 = vld [vmem:[%s384 + $0x50] sm:$0xff]
        %v432 = vld [vmem:[%s384 + $0x58] sm:$0xff]
        %v433 = vld [vmem:[%s384 + $0x60] sm:$0xff]
        %v434 = vld [vmem:[%s384 + $0x68] sm:$0xff]
        %v435 = vld [vmem:[%s384 + $0x70] sm:$0xff]
        %v436 = vld [vmem:[%s384 + $0x78] sm:$0xff]
        %v437 = vld [vmem:[%s384 + $0x80] sm:$0xff]
        %v438 = vld [vmem:[%s384 + $0x88] sm:$0xff]
        %v439 = vld [vmem:[%s384 + $0x90] sm:$0xff]
        %v440 = vld [vmem:[%s384 + $0x98] sm:$0xff]
        %v441 = vld [vmem:[%s384 + $0xa0] sm:$0xff]
        %v442 = vld [vmem:[%s384 + $0xa8] sm:$0xff]
        %v443 = vld [vmem:[%s384 + $0xb0] sm:$0xff]
        %v444 = vld [vmem:[%s384 + $0xb8] sm:$0xff]
        %v445 = vld [vmem:[%s384 + $0xc0] sm:$0xff]
        %v446 = vld [vmem:[%s384 + $0xc8] sm:$0xff]
        %v447 = vld [vmem:[%s384 + $0xd0] sm:$0xff]
        %v448 = vld [vmem:[%s384 + $0xd8] sm:$0xff]
        %v449 = vld [vmem:[%s384 + $0xe0] sm:$0xff]
        %v450 = vld [vmem:[%s384 + $0xe8] sm:$0xff]
        %v451 = vld [vmem:[%s384 + $0xf0] sm:$0xff]
        %v452 = vld [vmem:[%s384 + $0xf8] sm:$0xff]
        %v453 = vld [vmem:[%s384 + $0x100] sm:$0xff]
        %v454 = vld [vmem:[%s384 + $0x108] sm:$0xff]
        %v455 = vld [vmem:[%s384 + $0x110] sm:$0xff]
        %v456 = vld [vmem:[%s384 + $0x118] sm:$0xff]
        %v457 = vld [vmem:[%s384 + $0x120] sm:$0xff]
        %v458 = vld [vmem:[%s384 + $0x128] sm:$0xff]
        %v459 = vld [vmem:[%s384 + $0x130] sm:$0xff]
        %v460 = vld [vmem:[%s384 + $0x138] sm:$0xff]
        %v461 = vld [vmem:[%s384 + $0x140] sm:$0xff]
        %v462 = vld [vmem:[%s384 + $0x148] sm:$0xff]
        %v463 = vld [vmem:[%s384 + $0x150] sm:$0xff]
        %v464 = vld [vmem:[%s384 + $0x158] sm:$0xff]
        %v465 = vld [vmem:[%s384 + $0x160] sm:$0xff]
        %v466 = vld [vmem:[%s384 + $0x168] sm:$0x3]
        %v467 = vld [vmem:[%s1] sm:$0xff]
        %v468 = vld [vmem:[%s1 + $0x8] sm:$0xff]
        %vm510 = vcmask 1046528
        %v511 = vrot.slane %v421, 1
        %v512 = vrot.slane %v422, 1
        %v513 = vsel %vm510, %v511, %v512
        %v514 = vrot.slane %v423, 1
        %v515 = vsel %vm510, %v512, %v514
        %v516 = vrot.slane %v424, 1
        %v517 = vsel %vm510, %v514, %v516
        %v518 = vrot.slane %v425, 1
        %v519 = vsel %vm510, %v516, %v518
        %v520 = vrot.slane %v426, 1
        %v521 = vsel %vm510, %v518, %v520
        %v522 = vrot.slane %v427, 1
        %v523 = vsel %vm510, %v520, %v522
        %v524 = vrot.slane %v428, 1
        %v525 = vsel %vm510, %v522, %v524
        %v526 = vrot.slane %v429, 1
        %v527 = vsel %vm510, %v524, %v526
        %v528 = vrot.slane %v430, 1
        %v529 = vsel %vm510, %v526, %v528
        %v530 = vrot.slane %v431, 1
        %v531 = vsel %vm510, %v528, %v530
        %v532 = vrot.slane %v432, 1
        %v533 = vsel %vm510, %v530, %v532
        %v534 = vrot.slane %v433, 1
        %v535 = vsel %vm510, %v532, %v534
        %v536 = vrot.slane %v434, 1
        %v537 = vsel %vm510, %v534, %v536
        %v538 = vrot.slane %v435, 1
        %v539 = vsel %vm510, %v536, %v538
        %v540 = vrot.slane %v436, 1
        %v541 = vsel %vm510, %v538, %v540
        %v542 = vrot.slane %v437, 1
        %v543 = vsel %vm510, %v540, %v542
        %v544 = vrot.slane %v438, 1
        %v545 = vsel %vm510, %v542, %v544
        %v546 = vrot.slane %v439, 1
        %v547 = vsel %vm510, %v544, %v546
        %v548 = vrot.slane %v440, 1
        %v549 = vsel %vm510, %v546, %v548
        %v550 = vrot.slane %v441, 1
        %v551 = vsel %vm510, %v548, %v550
        %v552 = vrot.slane %v442, 1
        %v553 = vsel %vm510, %v550, %v552
        %v554 = vrot.slane %v443, 1
        %v555 = vsel %vm510, %v552, %v554
        %v556 = vrot.slane %v444, 1
        %v557 = vsel %vm510, %v554, %v556
        %v558 = vrot.slane %v445, 1
        %v559 = vsel %vm510, %v556, %v558
        %v560 = vrot.slane %v446, 1
        %v561 = vsel %vm510, %v558, %v560
        %v562 = vrot.slane %v447, 1
        %v563 = vsel %vm510, %v560, %v562
        %v564 = vrot.slane %v448, 1
        %v565 = vsel %vm510, %v562, %v564
        %v566 = vrot.slane %v449, 1
        %v567 = vsel %vm510, %v564, %v566
        %v568 = vrot.slane %v450, 1
        %v569 = vsel %vm510, %v566, %v568
        %v570 = vrot.slane %v451, 1
        %v571 = vsel %vm510, %v568, %v570
        %v572 = vrot.slane %v452, 1
        %v573 = vsel %vm510, %v570, %v572
        %v574 = vrot.slane %v453, 1
        %v575 = vsel %vm510, %v572, %v574
        %v576 = vrot.slane %v454, 1
        %v577 = vsel %vm510, %v574, %v576
        %v578 = vrot.slane %v455, 1
        %v579 = vsel %vm510, %v576, %v578
        %v580 = vrot.slane %v456, 1
        %v581 = vsel %vm510, %v578, %v580
        %v582 = vrot.slane %v457, 1
        %v583 = vsel %vm510, %v580, %v582
        %v584 = vrot.slane %v458, 1
        %v585 = vsel %vm510, %v582, %v584
        %v586 = vrot.slane %v459, 1
        %v587 = vsel %vm510, %v584, %v586
        %v588 = vrot.slane %v460, 1
        %v589 = vsel %vm510, %v586, %v588
        %v590 = vrot.slane %v461, 1
        %v591 = vsel %vm510, %v588, %v590
        %vm592 = vcmask 64512
        %v593 = vsel %vm592, %v513, 0
        %v595 = vsel %vm592, %v515, 0
        %v597 = vsel %vm592, %v517, 0
        %v599 = vsel %vm592, %v519, 0
        %v601 = vsel %vm592, %v521, 0
        %v603 = vsel %vm592, %v523, 0
        %v605 = vsel %vm592, %v525, 0
        %v607 = vsel %vm592, %v527, 0
        %v609 = vsel %vm592, %v529, 0
        %v611 = vsel %vm592, %v531, 0
        %v613 = vsel %vm592, %v533, 0
        %v615 = vsel %vm592, %v535, 0
        %v617 = vsel %vm592, %v537, 0
        %v619 = vsel %vm592, %v539, 0
        %v621 = vsel %vm592, %v541, 0
        %v623 = vsel %vm592, %v543, 0
        %v625 = vsel %vm592, %v545, 0
        %v627 = vsel %vm592, %v547, 0
        %v629 = vsel %vm592, %v549, 0
        %v631 = vsel %vm592, %v551, 0
        %v633 = vsel %vm592, %v553, 0
        %v635 = vsel %vm592, %v555, 0
        %v637 = vsel %vm592, %v557, 0
        %v639 = vsel %vm592, %v559, 0
        %v641 = vsel %vm592, %v561, 0
        %v643 = vsel %vm592, %v563, 0
        %v645 = vsel %vm592, %v565, 0
        %v647 = vsel %vm592, %v567, 0
        %v649 = vsel %vm592, %v569, 0
        %v651 = vsel %vm592, %v571, 0
        %v653 = vsel %vm592, %v573, 0
        %v655 = vsel %vm592, %v575, 0
        %v657 = vsel %vm592, %v577, 0
        %v659 = vsel %vm592, %v579, 0
        %v661 = vsel %vm592, %v581, 0
        %v663 = vsel %vm592, %v583, 0
        %v665 = vsel %vm592, %v585, 0
        %v667 = vsel %vm592, %v587, 0
        %v669 = vsel %vm592, %v589, 0
        %v671 = vsel %vm592, %v591, 0
        %v673 = vsel %vm592, %v590, 0
        %675 = vmatprep.subr.mxu0 0.0
        %676 = vmatpush1.msra.mxu0 %v468
        %677 = vmatprep.subr.mxu0 0.0
        %678 = vmatpush1.msra.mxu0 0.0
        %679 = vmatprep.subr.mxu0 0.0
        %680 = vmatpush1.msra.mxu0 0.0
        %681 = vmatprep.subr.mxu0 0.0
        %682 = vmatpush1.msra.mxu0 0.0
        %683 = vmatprep.subr.mxu0 0.0
        %684 = vmatpush1.msra.mxu0 0.0
        %685 = vmatprep.subr.mxu0 0.0
        %686 = vmatpush1.msra.mxu0 0.0
        %687 = vmatprep.subr.mxu0 0.0
        %688 = vmatpush1.msra.mxu0 0.0
        %689 = vmatprep.subr.mxu0 0.0
        %690 = vmatpush1.msra.mxu0 0.0
        %691 = vmatprep.subr.mxu0 0.0
        %692 = vmatpush1.msra.mxu0 0.0
        %693 = vmatprep.subr.mxu0 0.0
        %694 = vmatpush1.msra.mxu0 0.0
        %695 = vmatprep.subr.mxu0 0.0
        %696 = vmatpush1.msra.mxu0 0.0
        %697 = vmatprep.subr.mxu0 0.0
        %698 = vmatpush1.msra.mxu0 0.0
        %699 = vmatprep.subr.mxu0 0.0
        %700 = vmatpush1.msra.mxu0 0.0
        %701 = vmatprep.subr.mxu0 0.0
        %702 = vmatpush1.msra.mxu0 0.0
        %703 = vmatprep.subr.mxu0 0.0
        %704 = vmatpush1.msra.mxu0 0.0
        %705 = vmatprep.subr.mxu0 0.0
        %706 = vmatpush1.msra.mxu0 0.0
        %707 = vmatprep.subr.mxu0 0.0
        %708 = vmatpush1.msra.mxu0 0.0
        %709 = vmatprep.subr.mxu0 0.0
        %710 = vmatpush1.msra.mxu0 0.0
        %711 = vmatprep.subr.mxu0 0.0
        %712 = vmatpush1.msra.mxu0 0.0
        %713 = vmatprep.subr.mxu0 0.0
        %714 = vmatpush1.msra.mxu0 0.0
        %715 = vmatprep.subr.mxu0 0.0
        %716 = vmatpush1.msra.mxu0 0.0
        %717 = vmatprep.subr.mxu0 0.0
        %718 = vmatpush1.msra.mxu0 0.0
        %719 = vmatprep.subr.mxu0 0.0
        %720 = vmatpush1.msra.mxu0 0.0
        %721 = vmatprep.subr.mxu0 0.0
        %722 = vmatpush1.msra.mxu0 0.0
        %723 = vmatprep.subr.mxu0 0.0
        %724 = vmatpush1.msra.mxu0 0.0
        %725 = vmatprep.subr.mxu0 0.0
        %726 = vmatpush1.msra.mxu0 0.0
        %727 = vmatprep.subr.mxu0 0.0
        %728 = vmatpush1.msra.mxu0 0.0
        %729 = vmatprep.subr.mxu0 0.0
        %730 = vmatpush1.msra.mxu0 0.0
        %731 = vmatprep.subr.mxu0 0.0
        %732 = vmatpush1.msra.mxu0 0.0
        %733 = vmatprep.subr.mxu0 0.0
        %734 = vmatpush1.msra.mxu0 0.0
        %735 = vmatprep.subr.mxu0 0.0
        %736 = vmatpush1.msra.mxu0 0.0
        %737 = vmatprep.subr.mxu0 0.0
        %738 = vmatpush1.msra.mxu0 0.0
        %739 = vmatprep.mubr.f32.mxu0 0.0
        %740 = vmatmul.mubr.f32.gmra.mrb[0].mxu0 %v593
        %v741 = vpop.f32.mrb[0].mxu0
        %v742 = vadd.f32 0.0, %v741
        %v743 = vpop.f32.mrb[0].mxu0
        %744 = vmatprep.mubr.f32.mxu0 0.0
        %745 = vmatmul.mubr.f32.gmra.mrb[0].mxu0 %v595
        %v746 = vpop.f32.mrb[0].mxu0
        %v747 = vadd.f32 0.0, %v746
        %v748 = vpop.f32.mrb[0].mxu0
        %749 = vmatprep.mubr.f32.mxu0 0.0
        %750 = vmatmul.mubr.f32.gmra.mrb[0].mxu0 %v597
        %v751 = vpop.f32.mrb[0].mxu0
        %v752 = vadd.f32 0.0, %v751
        %v753 = vpop.f32.mrb[0].mxu0
        %754 = vmatprep.mubr.f32.mxu0 0.0
        %755 = vmatmul.mubr.f32.gmra.mrb[0].mxu0 %v599
        %v756 = vpop.f32.mrb[0].mxu0
        %v757 = vadd.f32 0.0, %v756
        %v758 = vpop.f32.mrb[0].mxu0
        %759 = vmatprep.mubr.f32.mxu0 0.0
        %760 = vmatmul.mubr.f32.gmra.mrb[0].mxu0 %v601
        %v761 = vpop.f32.mrb[0].mxu0
        %v762 = vadd.f32 0.0, %v761
        %v763 = vpop.f32.mrb[0].mxu0
        %764 = vmatprep.mubr.f32.mxu0 0.0
        %765 = vmatmul.mubr.f32.gmra.mrb[0].mxu0 %v603
        %v766 = vpop.f32.mrb[0].mxu0
        %v767 = vadd.f32 0.0, %v766
        %v768 = vpop.f32.mrb[0].mxu0
        %769 = vmatprep.mubr.f32.mxu0 0.0
        %770 = vmatmul.mubr.f32.gmra.mrb[0].mxu0 %v605
        %v771 = vpop.f32.mrb[0].mxu0
        %v772 = vadd.f32 0.0, %v771
        %v773 = vpop.f32.mrb[0].mxu0
        %774 = vmatprep.mubr.f32.mxu0 0.0
        %775 = vmatmul.mubr.f32.gmra.mrb[0].mxu0 %v607
        %v776 = vpop.f32.mrb[0].mxu0
        %v777 = vadd.f32 0.0, %v776
        %v778 = vpop.f32.mrb[0].mxu0
        %779 = vmatprep.mubr.f32.mxu0 0.0
        %780 = vmatmul.mubr.f32.gmra.mrb[0].mxu0 %v609
        %v781 = vpop.f32.mrb[0].mxu0
        %v782 = vadd.f32 0.0, %v781
        %v783 = vpop.f32.mrb[0].mxu0
        %784 = vmatprep.mubr.f32.mxu0 0.0
        %785 = vmatmul.mubr.f32.gmra.mrb[0].mxu0 %v611
        %v786 = vpop.f32.mrb[0].mxu0
        %v787 = vadd.f32 0.0, %v786
        %v788 = vpop.f32.mrb[0].mxu0
        %789 = vmatprep.mubr.f32.mxu0 0.0
        %790 = vmatmul.mubr.f32.gmra.mrb[0].mxu0 %v613
        %v791 = vpop.f32.mrb[0].mxu0
        %v792 = vadd.f32 0.0, %v791
        %v793 = vpop.f32.mrb[0].mxu0
        %794 = vmatprep.mubr.f32.mxu0 0.0
        %795 = vmatmul.mubr.f32.gmra.mrb[0].mxu0 %v615
        %v796 = vpop.f32.mrb[0].mxu0
        %v797 = vadd.f32 0.0, %v796
        %v798 = vpop.f32.mrb[0].mxu0
        %799 = vmatprep.mubr.f32.mxu0 0.0
        %800 = vmatmul.mubr.f32.gmra.mrb[0].mxu0 %v617
        %v801 = vpop.f32.mrb[0].mxu0
        %v802 = vadd.f32 0.0, %v801
        %v803 = vpop.f32.mrb[0].mxu0
        %804 = vmatprep.mubr.f32.mxu0 0.0
        %805 = vmatmul.mubr.f32.gmra.mrb[0].mxu0 %v619
        %v806 = vpop.f32.mrb[0].mxu0
        %v807 = vadd.f32 0.0, %v806
        %v808 = vpop.f32.mrb[0].mxu0
        %809 = vmatprep.mubr.f32.mxu0 0.0
        %810 = vmatmul.mubr.f32.gmra.mrb[0].mxu0 %v621
        %v811 = vpop.f32.mrb[0].mxu0
        %v812 = vadd.f32 0.0, %v811
        %v813 = vpop.f32.mrb[0].mxu0
        %814 = vmatprep.mubr.f32.mxu0 0.0
        %815 = vmatmul.mubr.f32.gmra.mrb[0].mxu0 %v623
        %v816 = vpop.f32.mrb[0].mxu0
        %v817 = vadd.f32 0.0, %v816
        %v818 = vpop.f32.mrb[0].mxu0
        %819 = vmatprep.mubr.f32.mxu0 0.0
        %820 = vmatmul.mubr.f32.gmra.mrb[0].mxu0 %v625
        %v821 = vpop.f32.mrb[0].mxu0
        %v822 = vadd.f32 0.0, %v821
        %v823 = vpop.f32.mrb[0].mxu0
        %824 = vmatprep.mubr.f32.mxu0 0.0
        %825 = vmatmul.mubr.f32.gmra.mrb[0].mxu0 %v627
        %v826 = vpop.f32.mrb[0].mxu0
        %v827 = vadd.f32 0.0, %v826
        %v828 = vpop.f32.mrb[0].mxu0
        %829 = vmatprep.mubr.f32.mxu0 0.0
        %830 = vmatmul.mubr.f32.gmra.mrb[0].mxu0 %v629
        %v831 = vpop.f32.mrb[0].mxu0
        %v832 = vadd.f32 0.0, %v831
        %v833 = vpop.f32.mrb[0].mxu0
        %834 = vmatprep.mubr.f32.mxu0 0.0
        %835 = vmatmul.mubr.f32.gmra.mrb[0].mxu0 %v631
        %v836 = vpop.f32.mrb[0].mxu0
        %v837 = vadd.f32 0.0, %v836
        %v838 = vpop.f32.mrb[0].mxu0
        %839 = vmatprep.mubr.f32.mxu0 0.0
        %840 = vmatmul.mubr.f32.gmra.mrb[0].mxu0 %v633
        %v841 = vpop.f32.mrb[0].mxu0
        %v842 = vadd.f32 0.0, %v841
        %v843 = vpop.f32.mrb[0].mxu0
        %844 = vmatprep.mubr.f32.mxu0 0.0
        %845 = vmatmul.mubr.f32.gmra.mrb[0].mxu0 %v635
        %v846 = vpop.f32.mrb[0].mxu0
        %v847 = vadd.f32 0.0, %v846
        %v848 = vpop.f32.mrb[0].mxu0
        %849 = vmatprep.mubr.f32.mxu0 0.0
        %850 = vmatmul.mubr.f32.gmra.mrb[0].mxu0 %v637
        %v851 = vpop.f32.mrb[0].mxu0
        %v852 = vadd.f32 0.0, %v851
        %v853 = vpop.f32.mrb[0].mxu0
        %854 = vmatprep.mubr.f32.mxu0 0.0
        %855 = vmatmul.mubr.f32.gmra.mrb[0].mxu0 %v639
        %v856 = vpop.f32.mrb[0].mxu0
        %v857 = vadd.f32 0.0, %v856
        %v858 = vpop.f32.mrb[0].mxu0
        %859 = vmatprep.mubr.f32.mxu0 0.0
        %860 = vmatmul.mubr.f32.gmra.mrb[0].mxu0 %v641
        %v861 = vpop.f32.mrb[0].mxu0
        %v862 = vadd.f32 0.0, %v861
        %v863 = vpop.f32.mrb[0].mxu0
        %864 = vmatprep.mubr.f32.mxu0 0.0
        %865 = vmatmul.mubr.f32.gmra.mrb[0].mxu0 %v643
        %v866 = vpop.f32.mrb[0].mxu0
        %v867 = vadd.f32 0.0, %v866
        %v868 = vpop.f32.mrb[0].mxu0
        %869 = vmatprep.mubr.f32.mxu0 0.0
        %870 = vmatmul.mubr.f32.gmra.mrb[0].mxu0 %v645
        %v871 = vpop.f32.mrb[0].mxu0
        %v872 = vadd.f32 0.0, %v871
        %v873 = vpop.f32.mrb[0].mxu0
        %874 = vmatprep.mubr.f32.mxu0 0.0
        %875 = vmatmul.mubr.f32.gmra.mrb[0].mxu0 %v647
        %v876 = vpop.f32.mrb[0].mxu0
        %v877 = vadd.f32 0.0, %v876
        %v878 = vpop.f32.mrb[0].mxu0
        %879 = vmatprep.mubr.f32.mxu0 0.0
        %880 = vmatmul.mubr.f32.gmra.mrb[0].mxu0 %v649
        %v881 = vpop.f32.mrb[0].mxu0
        %v882 = vadd.f32 0.0, %v881
        %v883 = vpop.f32.mrb[0].mxu0
        %884 = vmatprep.mubr.f32.mxu0 0.0
        %885 = vmatmul.mubr.f32.gmra.mrb[0].mxu0 %v651
        %v886 = vpop.f32.mrb[0].mxu0
        %v887 = vadd.f32 0.0, %v886
        %v888 = vpop.f32.mrb[0].mxu0
        %889 = vmatprep.mubr.f32.mxu0 0.0
        %890 = vmatmul.mubr.f32.gmra.mrb[0].mxu0 %v653
        %v891 = vpop.f32.mrb[0].mxu0
        %v892 = vadd.f32 0.0, %v891
        %v893 = vpop.f32.mrb[0].mxu0
        %894 = vmatprep.mubr.f32.mxu0 0.0
        %895 = vmatmul.mubr.f32.gmra.mrb[0].mxu0 %v655
        %v896 = vpop.f32.mrb[0].mxu0
        %v897 = vadd.f32 0.0, %v896
        %v898 = vpop.f32.mrb[0].mxu0
        %899 = vmatprep.mubr.f32.mxu0 0.0
        %900 = vmatmul.mubr.f32.gmra.mrb[0].mxu0 %v657
        %v901 = vpop.f32.mrb[0].mxu0
        %v902 = vadd.f32 0.0, %v901
        %v903 = vpop.f32.mrb[0].mxu0
        %904 = vmatprep.mubr.f32.mxu0 0.0
        %905 = vmatmul.mubr.f32.gmra.mrb[0].mxu0 %v659
        %v906 = vpop.f32.mrb[0].mxu0
        %v907 = vadd.f32 0.0, %v906
        %v908 = vpop.f32.mrb[0].mxu0
        %909 = vmatprep.mubr.f32.mxu0 0.0
        %910 = vmatmul.mubr.f32.gmra.mrb[0].mxu0 %v661
        %v911 = vpop.f32.mrb[0].mxu0
        %v912 = vadd.f32 0.0, %v911
        %v913 = vpop.f32.mrb[0].mxu0
        %914 = vmatprep.mubr.f32.mxu0 0.0
        %915 = vmatmul.mubr.f32.gmra.mrb[0].mxu0 %v663
        %v916 = vpop.f32.mrb[0].mxu0
        %v917 = vadd.f32 0.0, %v916
        %v918 = vpop.f32.mrb[0].mxu0
        %919 = vmatprep.mubr.f32.mxu0 0.0
        %920 = vmatmul.mubr.f32.gmra.mrb[0].mxu0 %v665
        %v921 = vpop.f32.mrb[0].mxu0
        %v922 = vadd.f32 0.0, %v921
        %v923 = vpop.f32.mrb[0].mxu0
        %924 = vmatprep.mubr.f32.mxu0 0.0
        %925 = vmatmul.mubr.f32.gmra.mrb[0].mxu0 %v667
        %v926 = vpop.f32.mrb[0].mxu0
        %v927 = vadd.f32 0.0, %v926
        %v928 = vpop.f32.mrb[0].mxu0
        %929 = vmatprep.mubr.f32.mxu0 0.0
        %930 = vmatmul.mubr.f32.gmra.mrb[0].mxu0 %v669
        %v931 = vpop.f32.mrb[0].mxu0
        %v932 = vpop.f32.mrb[0].mxu0
        %933 = vmatprep.mubr.f32.mxu0 0.0
        %934 = vmatmul.mubr.f32.gmra.mrb[0].mxu0 %v671
        %v935 = vpop.f32.mrb[0].mxu0
        %v936 = vpop.f32.mrb[0].mxu0
        %937 = vmatprep.mubr.f32.mxu0 0.0
        %938 = vmatmul.mubr.f32.gmra.mrb[0].mxu0 %v673
        %v939 = vpop.f32.mrb[0].mxu0
        %v940 = vpop.f32.mrb[0].mxu0
        %941 = vdwg.mxu0
        %v942 = vsel %vm592, %v421, 0
        %v944 = vsel %vm592, %v422, 0
        %v946 = vsel %vm592, %v423, 0
        %v948 = vsel %vm592, %v424, 0
        %v950 = vsel %vm592, %v425, 0
        %v952 = vsel %vm592, %v426, 0
        %v954 = vsel %vm592, %v427, 0
        %v956 = vsel %vm592, %v428, 0
        %v958 = vsel %vm592, %v429, 0
        %v960 = vsel %vm592, %v430, 0
        %v962 = vsel %vm592, %v431, 0
        %v964 = vsel %vm592, %v432, 0
        %v966 = vsel %vm592, %v433, 0
        %v968 = vsel %vm592, %v434, 0
        %v970 = vsel %vm592, %v435, 0
        %v972 = vsel %vm592, %v436, 0
        %v974 = vsel %vm592, %v437, 0
        %v976 = vsel %vm592, %v438, 0
        %v978 = vsel %vm592, %v439, 0
        %v980 = vsel %vm592, %v440, 0
        %v982 = vsel %vm592, %v441, 0
        %v984 = vsel %vm592, %v442, 0
        %v986 = vsel %vm592, %v443, 0
        %v988 = vsel %vm592, %v444, 0
        %v990 = vsel %vm592, %v445, 0
        %v992 = vsel %vm592, %v446, 0
        %v994 = vsel %vm592, %v447, 0
        %v996 = vsel %vm592, %v448, 0
        %v998 = vsel %vm592, %v449, 0
        %v1000 = vsel %vm592, %v450, 0
        %v1002 = vsel %vm592, %v451, 0
        %v1004 = vsel %vm592, %v452, 0
        %v1006 = vsel %vm592, %v453, 0
        %v1008 = vsel %vm592, %v454, 0
        %v1010 = vsel %vm592, %v455, 0
        %v1012 = vsel %vm592, %v456, 0
        %v1014 = vsel %vm592, %v457, 0
        %v1016 = vsel %vm592, %v458, 0
        %v1018 = vsel %vm592, %v459, 0
        %v1020 = vsel %vm592, %v460, 0
        %v1022 = vsel %vm592, %v461, 0
        %1024 = vmatprep.subr.mxu0 0.0
        %1025 = vmatpush1.msra.mxu0 %v467
        %1026 = vmatprep.subr.mxu0 0.0
        %1027 = vmatpush1.msra.mxu0 0.0
        %1028 = vmatprep.subr.mxu0 0.0
        %1029 = vmatpush1.msra.mxu0 0.0
        %1030 = vmatprep.subr.mxu0 0.0
        %1031 = vmatpush1.msra.mxu0 0.0
        %1032 = vmatprep.subr.mxu0 0.0
        %1033 = vmatpush1.msra.mxu0 0.0
        %1034 = vmatprep.subr.mxu0 0.0
        %1035 = vmatpush1.msra.mxu0 0.0
        %1036 = vmatprep.subr.mxu0 0.0
        %1037 = vmatpush1.msra.mxu0 0.0
        %1038 = vmatprep.subr.mxu0 0.0
        %1039 = vmatpush1.msra.mxu0 0.0
        %1040 = vmatprep.subr.mxu0 0.0
        %1041 = vmatpush1.msra.mxu0 0.0
        %1042 = vmatprep.subr.mxu0 0.0
        %1043 = vmatpush1.msra.mxu0 0.0
        %1044 = vmatprep.subr.mxu0 0.0
        %1045 = vmatpush1.msra.mxu0 0.0
        %1046 = vmatprep.subr.mxu0 0.0
        %1047 = vmatpush1.msra.mxu0 0.0
        %1048 = vmatprep.subr.mxu0 0.0
        %1049 = vmatpush1.msra.mxu0 0.0
        %1050 = vmatprep.subr.mxu0 0.0
        %1051 = vmatpush1.msra.mxu0 0.0
        %1052 = vmatprep.subr.mxu0 0.0
        %1053 = vmatpush1.msra.mxu0 0.0
        %1054 = vmatprep.subr.mxu0 0.0
        %1055 = vmatpush1.msra.mxu0 0.0
        %1056 = vmatprep.subr.mxu0 0.0
        %1057 = vmatpush1.msra.mxu0 0.0
        %1058 = vmatprep.subr.mxu0 0.0
        %1059 = vmatpush1.msra.mxu0 0.0
        %1060 = vmatprep.subr.mxu0 0.0
        %1061 = vmatpush1.msra.mxu0 0.0
        %1062 = vmatprep.subr.mxu0 0.0
        %1063 = vmatpush1.msra.mxu0 0.0
        %1064 = vmatprep.subr.mxu0 0.0
        %1065 = vmatpush1.msra.mxu0 0.0
        %1066 = vmatprep.subr.mxu0 0.0
        %1067 = vmatpush1.msra.mxu0 0.0
        %1068 = vmatprep.subr.mxu0 0.0
        %1069 = vmatpush1.msra.mxu0 0.0
        %1070 = vmatprep.subr.mxu0 0.0
        %1071 = vmatpush1.msra.mxu0 0.0
        %1072 = vmatprep.subr.mxu0 0.0
        %1073 = vmatpush1.msra.mxu0 0.0
        %1074 = vmatprep.subr.mxu0 0.0
        %1075 = vmatpush1.msra.mxu0 0.0
        %1076 = vmatprep.subr.mxu0 0.0
        %1077 = vmatpush1.msra.mxu0 0.0
        %1078 = vmatprep.subr.mxu0 0.0
        %1079 = vmatpush1.msra.mxu0 0.0
        %1080 = vmatprep.subr.mxu0 0.0
        %1081 = vmatpush1.msra.mxu0 0.0
        %1082 = vmatprep.subr.mxu0 0.0
        %1083 = vmatpush1.msra.mxu0 0.0
        %1084 = vmatprep.subr.mxu0 0.0
        %1085 = vmatpush1.msra.mxu0 0.0
        %1086 = vmatprep.subr.mxu0 0.0
        %1087 = vmatpush1.msra.mxu0 0.0
        %1088 = vmatprep.mubr.f32.mxu0 0.0
        %1089 = vmatmul.mubr.f32.gmra.mrb[0].mxu0 %v942
        %v1090 = vpop.f32.mrb[0].mxu0
        %v1091 = vadd.f32 %v742, %v1090
        %v1092 = vpop.f32.mrb[0].mxu0
        %1093 = vmatprep.mubr.f32.mxu0 0.0
        %1094 = vmatmul.mubr.f32.gmra.mrb[0].mxu0 %v944
        %v1095 = vpop.f32.mrb[0].mxu0
        %v1096 = vadd.f32 %v747, %v1095
        %v1097 = vpop.f32.mrb[0].mxu0
        %1098 = vmatprep.mubr.f32.mxu0 0.0
        %1099 = vmatmul.mubr.f32.gmra.mrb[0].mxu0 %v946
        %v1100 = vpop.f32.mrb[0].mxu0
        %v1101 = vadd.f32 %v752, %v1100
        %v1102 = vpop.f32.mrb[0].mxu0
        %1103 = vmatprep.mubr.f32.mxu0 0.0
        %1104 = vmatmul.mubr.f32.gmra.mrb[0].mxu0 %v948
        %v1105 = vpop.f32.mrb[0].mxu0
        %v1106 = vadd.f32 %v757, %v1105
        %v1107 = vpop.f32.mrb[0].mxu0
        %1108 = vmatprep.mubr.f32.mxu0 0.0
        %1109 = vmatmul.mubr.f32.gmra.mrb[0].mxu0 %v950
        %v1110 = vpop.f32.mrb[0].mxu0
        %v1111 = vadd.f32 %v762, %v1110
        %v1112 = vpop.f32.mrb[0].mxu0
        %1113 = vmatprep.mubr.f32.mxu0 0.0
        %1114 = vmatmul.mubr.f32.gmra.mrb[0].mxu0 %v952
        %v1115 = vpop.f32.mrb[0].mxu0
        %v1116 = vadd.f32 %v767, %v1115
        %v1117 = vpop.f32.mrb[0].mxu0
        %1118 = vmatprep.mubr.f32.mxu0 0.0
        %1119 = vmatmul.mubr.f32.gmra.mrb[0].mxu0 %v954
        %v1120 = vpop.f32.mrb[0].mxu0
        %v1121 = vadd.f32 %v772, %v1120
        %v1122 = vpop.f32.mrb[0].mxu0
        %1123 = vmatprep.mubr.f32.mxu0 0.0
        %1124 = vmatmul.mubr.f32.gmra.mrb[0].mxu0 %v956
        %v1125 = vpop.f32.mrb[0].mxu0
        %v1126 = vadd.f32 %v777, %v1125
        %v1127 = vpop.f32.mrb[0].mxu0
        %1128 = vmatprep.mubr.f32.mxu0 0.0
        %1129 = vmatmul.mubr.f32.gmra.mrb[0].mxu0 %v958
        %v1130 = vpop.f32.mrb[0].mxu0
        %v1131 = vadd.f32 %v782, %v1130
        %v1132 = vpop.f32.mrb[0].mxu0
        %1133 = vmatprep.mubr.f32.mxu0 0.0
        %1134 = vmatmul.mubr.f32.gmra.mrb[0].mxu0 %v960
        %v1135 = vpop.f32.mrb[0].mxu0
        %v1136 = vadd.f32 %v787, %v1135
        %v1137 = vpop.f32.mrb[0].mxu0
        %1138 = vmatprep.mubr.f32.mxu0 0.0
        %1139 = vmatmul.mubr.f32.gmra.mrb[0].mxu0 %v962
        %v1140 = vpop.f32.mrb[0].mxu0
        %v1141 = vadd.f32 %v792, %v1140
        %v1142 = vpop.f32.mrb[0].mxu0
        %1143 = vmatprep.mubr.f32.mxu0 0.0
        %1144 = vmatmul.mubr.f32.gmra.mrb[0].mxu0 %v964
        %v1145 = vpop.f32.mrb[0].mxu0
        %v1146 = vadd.f32 %v797, %v1145
        %v1147 = vpop.f32.mrb[0].mxu0
        %1148 = vmatprep.mubr.f32.mxu0 0.0
        %1149 = vmatmul.mubr.f32.gmra.mrb[0].mxu0 %v966
        %v1150 = vpop.f32.mrb[0].mxu0
        %v1151 = vadd.f32 %v802, %v1150
        %v1152 = vpop.f32.mrb[0].mxu0
        %1153 = vmatprep.mubr.f32.mxu0 0.0
        %1154 = vmatmul.mubr.f32.gmra.mrb[0].mxu0 %v968
        %v1155 = vpop.f32.mrb[0].mxu0
        %v1156 = vadd.f32 %v807, %v1155
        %v1157 = vpop.f32.mrb[0].mxu0
        %1158 = vmatprep.mubr.f32.mxu0 0.0
        %1159 = vmatmul.mubr.f32.gmra.mrb[0].mxu0 %v970
        %v1160 = vpop.f32.mrb[0].mxu0
        %v1161 = vadd.f32 %v812, %v1160
        %v1162 = vpop.f32.mrb[0].mxu0
        %1163 = vmatprep.mubr.f32.mxu0 0.0
        %1164 = vmatmul.mubr.f32.gmra.mrb[0].mxu0 %v972
        %v1165 = vpop.f32.mrb[0].mxu0
        %v1166 = vadd.f32 %v817, %v1165
        %v1167 = vpop.f32.mrb[0].mxu0
        %1168 = vmatprep.mubr.f32.mxu0 0.0
        %1169 = vmatmul.mubr.f32.gmra.mrb[0].mxu0 %v974
        %v1170 = vpop.f32.mrb[0].mxu0
        %v1171 = vadd.f32 %v822, %v1170
        %v1172 = vpop.f32.mrb[0].mxu0
        %1173 = vmatprep.mubr.f32.mxu0 0.0
        %1174 = vmatmul.mubr.f32.gmra.mrb[0].mxu0 %v976
        %v1175 = vpop.f32.mrb[0].mxu0
        %v1176 = vadd.f32 %v827, %v1175
        %v1177 = vpop.f32.mrb[0].mxu0
        %1178 = vmatprep.mubr.f32.mxu0 0.0
        %1179 = vmatmul.mubr.f32.gmra.mrb[0].mxu0 %v978
        %v1180 = vpop.f32.mrb[0].mxu0
        %v1181 = vadd.f32 %v832, %v1180
        %v1182 = vpop.f32.mrb[0].mxu0
        %1183 = vmatprep.mubr.f32.mxu0 0.0
        %1184 = vmatmul.mubr.f32.gmra.mrb[0].mxu0 %v980
        %v1185 = vpop.f32.mrb[0].mxu0
        %v1186 = vadd.f32 %v837, %v1185
        %v1187 = vpop.f32.mrb[0].mxu0
        %1188 = vmatprep.mubr.f32.mxu0 0.0
        %1189 = vmatmul.mubr.f32.gmra.mrb[0].mxu0 %v982
        %v1190 = vpop.f32.mrb[0].mxu0
        %v1191 = vadd.f32 %v842, %v1190
        %v1192 = vpop.f32.mrb[0].mxu0
        %1193 = vmatprep.mubr.f32.mxu0 0.0
        %1194 = vmatmul.mubr.f32.gmra.mrb[0].mxu0 %v984
        %v1195 = vpop.f32.mrb[0].mxu0
        %v1196 = vadd.f32 %v847, %v1195
        %v1197 = vpop.f32.mrb[0].mxu0
        %1198 = vmatprep.mubr.f32.mxu0 0.0
        %1199 = vmatmul.mubr.f32.gmra.mrb[0].mxu0 %v986
        %v1200 = vpop.f32.mrb[0].mxu0
        %v1201 = vadd.f32 %v852, %v1200
        %v1202 = vpop.f32.mrb[0].mxu0
        %1203 = vmatprep.mubr.f32.mxu0 0.0
        %1204 = vmatmul.mubr.f32.gmra.mrb[0].mxu0 %v988
        %v1205 = vpop.f32.mrb[0].mxu0
        %v1206 = vadd.f32 %v857, %v1205
        %v1207 = vpop.f32.mrb[0].mxu0
        %1208 = vmatprep.mubr.f32.mxu0 0.0
        %1209 = vmatmul.mubr.f32.gmra.mrb[0].mxu0 %v990
        %v1210 = vpop.f32.mrb[0].mxu0
        %v1211 = vadd.f32 %v862, %v1210
        %v1212 = vpop.f32.mrb[0].mxu0
        %1213 = vmatprep.mubr.f32.mxu0 0.0
        %1214 = vmatmul.mubr.f32.gmra.mrb[0].mxu0 %v992
        %v1215 = vpop.f32.mrb[0].mxu0
        %v1216 = vadd.f32 %v867, %v1215
        %v1217 = vpop.f32.mrb[0].mxu0
        %1218 = vmatprep.mubr.f32.mxu0 0.0
        %1219 = vmatmul.mubr.f32.gmra.mrb[0].mxu0 %v994
        %v1220 = vpop.f32.mrb[0].mxu0
        %v1221 = vadd.f32 %v872, %v1220
        %v1222 = vpop.f32.mrb[0].mxu0
        %1223 = vmatprep.mubr.f32.mxu0 0.0
        %1224 = vmatmul.mubr.f32.gmra.mrb[0].mxu0 %v996
        %v1225 = vpop.f32.mrb[0].mxu0
        %v1226 = vadd.f32 %v877, %v1225
        %v1227 = vpop.f32.mrb[0].mxu0
        %1228 = vmatprep.mubr.f32.mxu0 0.0
        %1229 = vmatmul.mubr.f32.gmra.mrb[0].mxu0 %v998
        %v1230 = vpop.f32.mrb[0].mxu0
        %v1231 = vadd.f32 %v882, %v1230
        %v1232 = vpop.f32.mrb[0].mxu0
        %1233 = vmatprep.mubr.f32.mxu0 0.0
        %1234 = vmatmul.mubr.f32.gmra.mrb[0].mxu0 %v1000
        %v1235 = vpop.f32.mrb[0].mxu0
        %v1236 = vadd.f32 %v887, %v1235
        %v1237 = vpop.f32.mrb[0].mxu0
        %1238 = vmatprep.mubr.f32.mxu0 0.0
        %1239 = vmatmul.mubr.f32.gmra.mrb[0].mxu0 %v1002
        %v1240 = vpop.f32.mrb[0].mxu0
        %v1241 = vadd.f32 %v892, %v1240
        %v1242 = vpop.f32.mrb[0].mxu0
        %1243 = vmatprep.mubr.f32.mxu0 0.0
        %1244 = vmatmul.mubr.f32.gmra.mrb[0].mxu0 %v1004
        %v1245 = vpop.f32.mrb[0].mxu0
        %v1246 = vadd.f32 %v897, %v1245
        %v1247 = vpop.f32.mrb[0].mxu0
        %1248 = vmatprep.mubr.f32.mxu0 0.0
        %1249 = vmatmul.mubr.f32.gmra.mrb[0].mxu0 %v1006
        %v1250 = vpop.f32.mrb[0].mxu0
        %v1251 = vadd.f32 %v902, %v1250
        %v1252 = vpop.f32.mrb[0].mxu0
        %1253 = vmatprep.mubr.f32.mxu0 0.0
        %1254 = vmatmul.mubr.f32.gmra.mrb[0].mxu0 %v1008
        %v1255 = vpop.f32.mrb[0].mxu0
        %v1256 = vadd.f32 %v907, %v1255
        %v1257 = vpop.f32.mrb[0].mxu0
        %1258 = vmatprep.mubr.f32.mxu0 0.0
        %1259 = vmatmul.mubr.f32.gmra.mrb[0].mxu0 %v1010
        %v1260 = vpop.f32.mrb[0].mxu0
        %v1261 = vadd.f32 %v912, %v1260
        %v1262 = vpop.f32.mrb[0].mxu0
        %1263 = vmatprep.mubr.f32.mxu0 0.0
        %1264 = vmatmul.mubr.f32.gmra.mrb[0].mxu0 %v1012
        %v1265 = vpop.f32.mrb[0].mxu0
        %v1266 = vadd.f32 %v917, %v1265
        %v1267 = vpop.f32.mrb[0].mxu0
        %1268 = vmatprep.mubr.f32.mxu0 0.0
        %1269 = vmatmul.mubr.f32.gmra.mrb[0].mxu0 %v1014
        %v1270 = vpop.f32.mrb[0].mxu0
        %v1271 = vadd.f32 %v922, %v1270
        %v1272 = vpop.f32.mrb[0].mxu0
        %1273 = vmatprep.mubr.f32.mxu0 0.0
        %1274 = vmatmul.mubr.f32.gmra.mrb[0].mxu0 %v1016
        %v1275 = vpop.f32.mrb[0].mxu0
        %v1276 = vadd.f32 %v927, %v1275
        %v1277 = vpop.f32.mrb[0].mxu0
        %1278 = vmatprep.mubr.f32.mxu0 0.0
        %1279 = vmatmul.mubr.f32.gmra.mrb[0].mxu0 %v1018
        %v1280 = vpop.f32.mrb[0].mxu0
        %v1281 = vpop.f32.mrb[0].mxu0
        %1282 = vmatprep.mubr.f32.mxu0 0.0
        %1283 = vmatmul.mubr.f32.gmra.mrb[0].mxu0 %v1020
        %v1284 = vpop.f32.mrb[0].mxu0
        %v1285 = vpop.f32.mrb[0].mxu0
        %1286 = vmatprep.mubr.f32.mxu0 0.0
        %1287 = vmatmul.mubr.f32.gmra.mrb[0].mxu0 %v1022
        %v1288 = vpop.f32.mrb[0].mxu0
        %v1289 = vpop.f32.mrb[0].mxu0
        %1290 = vdwg.mxu0
        %v1291 = vld [vmem:[%s1 + $0x10] sm:$0xff]
        %vm1292 = vcmask 1045504
        %v1293 = vrot.slane %v421, 2
        %v1294 = vrot.slane %v422, 2
        %v1295 = vsel %vm1292, %v1293, %v1294
        %v1296 = vrot.slane %v423, 2
        %v1297 = vsel %vm1292, %v1294, %v1296
        %v1298 = vrot.slane %v424, 2
        %v1299 = vsel %vm1292, %v1296, %v1298
        %v1300 = vrot.slane %v425, 2
        %v1301 = vsel %vm1292, %v1298, %v1300
        %v1302 = vrot.slane %v426, 2
        %v1303 = vsel %vm1292, %v1300, %v1302
        %v1304 = vrot.slane %v427, 2
        %v1305 = vsel %vm1292, %v1302, %v1304
        %v1306 = vrot.slane %v428, 2
        %v1307 = vsel %vm1292, %v1304, %v1306
        %v1308 = vrot.slane %v429, 2
        %v1309 = vsel %vm1292, %v1306, %v1308
        %v1310 = vrot.slane %v430, 2
        %v1311 = vsel %vm1292, %v1308, %v1310
        %v1312 = vrot.slane %v431, 2
        %v1313 = vsel %vm1292, %v1310, %v1312
        %v1314 = vrot.slane %v432, 2
        %v1315 = vsel %vm1292, %v1312, %v1314
        %v1316 = vrot.slane %v433, 2
        %v1317 = vsel %vm1292, %v1314, %v1316
        %v1318 = vrot.slane %v434, 2
        %v1319 = vsel %vm1292, %v1316, %v1318
        %v1320 = vrot.slane %v435, 2
        %v1321 = vsel %vm1292, %v1318, %v1320
        %v1322 = vrot.slane %v436, 2
        %v1323 = vsel %vm1292, %v1320, %v1322
        %v1324 = vrot.slane %v437, 2
        %v1325 = vsel %vm1292, %v1322, %v1324
        %v1326 = vrot.slane %v438, 2
        %v1327 = vsel %vm1292, %v1324, %v1326
        %v1328 = vrot.slane %v439, 2
        %v1329 = vsel %vm1292, %v1326, %v1328
        %v1330 = vrot.slane %v440, 2
        %v1331 = vsel %vm1292, %v1328, %v1330
        %v1332 = vrot.slane %v441, 2
        %v1333 = vsel %vm1292, %v1330, %v1332
        %v1334 = vrot.slane %v442, 2
        %v1335 = vsel %vm1292, %v1332, %v1334
        %v1336 = vrot.slane %v443, 2
        %v1337 = vsel %vm1292, %v1334, %v1336
        %v1338 = vrot.slane %v444, 2
        %v1339 = vsel %vm1292, %v1336, %v1338
        %v1340 = vrot.slane %v445, 2
        %v1341 = vsel %vm1292, %v1338, %v1340
        %v1342 = vrot.slane %v446, 2
        %v1343 = vsel %vm1292, %v1340, %v1342
        %v1344 = vrot.slane %v447, 2
        %v1345 = vsel %vm1292, %v1342, %v1344
        %v1346 = vrot.slane %v448, 2
        %v1347 = vsel %vm1292, %v1344, %v1346
        %v1348 = vrot.slane %v449, 2
        %v1349 = vsel %vm1292, %v1346, %v1348
        %v1350 = vrot.slane %v450, 2
        %v1351 = vsel %vm1292, %v1348, %v1350
        %v1352 = vrot.slane %v451, 2
        %v1353 = vsel %vm1292, %v1350, %v1352
        %v1354 = vrot.slane %v452, 2
        %v1355 = vsel %vm1292, %v1352, %v1354
        %v1356 = vrot.slane %v453, 2
        %v1357 = vsel %vm1292, %v1354, %v1356
        %v1358 = vrot.slane %v454, 2
        %v1359 = vsel %vm1292, %v1356, %v1358
        %v1360 = vrot.slane %v455, 2
        %v1361 = vsel %vm1292, %v1358, %v1360
        %v1362 = vrot.slane %v456, 2
        %v1363 = vsel %vm1292, %v1360, %v1362
        %v1364 = vrot.slane %v457, 2
        %v1365 = vsel %vm1292, %v1362, %v1364
        %v1366 = vrot.slane %v458, 2
        %v1367 = vsel %vm1292, %v1364, %v1366
        %v1368 = vrot.slane %v459, 2
        %v1369 = vsel %vm1292, %v1366, %v1368
        %v1370 = vrot.slane %v460, 2
        %v1371 = vsel %vm1292, %v1368, %v1370
        %v1372 = vrot.slane %v461, 2
        %v1373 = vsel %vm1292, %v1370, %v1372
        %v1374 = vsel %vm592, %v1295, 0
        %v1376 = vsel %vm592, %v1297, 0
        %v1378 = vsel %vm592, %v1299, 0
        %v1380 = vsel %vm592, %v1301, 0
        %v1382 = vsel %vm592, %v1303, 0
        %v1384 = vsel %vm592, %v1305, 0
        %v1386 = vsel %vm592, %v1307, 0
        %v1388 = vsel %vm592, %v1309, 0
        %v1390 = vsel %vm592, %v1311, 0
        %v1392 = vsel %vm592, %v1313, 0
        %v1394 = vsel %vm592, %v1315, 0
        %v1396 = vsel %vm592, %v1317, 0
        %v1398 = vsel %vm592, %v1319, 0
        %v1400 = vsel %vm592, %v1321, 0
        %v1402 = vsel %vm592, %v1323, 0
        %v1404 = vsel %vm592, %v1325, 0
        %v1406 = vsel %vm592, %v1327, 0
        %v1408 = vsel %vm592, %v1329, 0
        %v1410 = vsel %vm592, %v1331, 0
        %v1412 = vsel %vm592, %v1333, 0
        %v1414 = vsel %vm592, %v1335, 0
        %v1416 = vsel %vm592, %v1337, 0
        %v1418 = vsel %vm592, %v1339, 0
        %v1420 = vsel %vm592, %v1341, 0
        %v1422 = vsel %vm592, %v1343, 0
        %v1424 = vsel %vm592, %v1345, 0
        %v1426 = vsel %vm592, %v1347, 0
        %v1428 = vsel %vm592, %v1349, 0
        %v1430 = vsel %vm592, %v1351, 0
        %v1432 = vsel %vm592, %v1353, 0
        %v1434 = vsel %vm592, %v1355, 0
        %v1436 = vsel %vm592, %v1357, 0
        %v1438 = vsel %vm592, %v1359, 0
        %v1440 = vsel %vm592, %v1361, 0
        %v1442 = vsel %vm592, %v1363, 0
        %v1444 = vsel %vm592, %v1365, 0
        %v1446 = vsel %vm592, %v1367, 0
        %v1448 = vsel %vm592, %v1369, 0
        %v1450 = vsel %vm592, %v1371, 0
        %v1452 = vsel %vm592, %v1373, 0
        %v1454 = vsel %vm592, %v1372, 0
        %1456 = vmatprep.subr.mxu0 0.0
        %1457 = vmatpush1.msra.mxu0 %v1291
        %1458 = vmatprep.subr.mxu0 0.0
        %1459 = vmatpush1.msra.mxu0 0.0
        %1460 = vmatprep.subr.mxu0 0.0
        %1461 = vmatpush1.msra.mxu0 0.0
        %1462 = vmatprep.subr.mxu0 0.0
        %1463 = vmatpush1.msra.mxu0 0.0
        %1464 = vmatprep.subr.mxu0 0.0
        %1465 = vmatpush1.msra.mxu0 0.0
        %1466 = vmatprep.subr.mxu0 0.0
        %1467 = vmatpush1.msra.mxu0 0.0
        %1468 = vmatprep.subr.mxu0 0.0
        %1469 = vmatpush1.msra.mxu0 0.0
        %1470 = vmatprep.subr.mxu0 0.0
        %1471 = vmatpush1.msra.mxu0 0.0
        %1472 = vmatprep.subr.mxu0 0.0
        %1473 = vmatpush1.msra.mxu0 0.0
        %1474 = vmatprep.subr.mxu0 0.0
        %1475 = vmatpush1.msra.mxu0 0.0
        %1476 = vmatprep.subr.mxu0 0.0
        %1477 = vmatpush1.msra.mxu0 0.0
        %1478 = vmatprep.subr.mxu0 0.0
        %1479 = vmatpush1.msra.mxu0 0.0
        %1480 = vmatprep.subr.mxu0 0.0
        %1481 = vmatpush1.msra.mxu0 0.0
        %1482 = vmatprep.subr.mxu0 0.0
        %1483 = vmatpush1.msra.mxu0 0.0
        %1484 = vmatprep.subr.mxu0 0.0
        %1485 = vmatpush1.msra.mxu0 0.0
        %1486 = vmatprep.subr.mxu0 0.0
        %1487 = vmatpush1.msra.mxu0 0.0
        %1488 = vmatprep.subr.mxu0 0.0
        %1489 = vmatpush1.msra.mxu0 0.0
        %1490 = vmatprep.subr.mxu0 0.0
        %1491 = vmatpush1.msra.mxu0 0.0
        %1492 = vmatprep.subr.mxu0 0.0
        %1493 = vmatpush1.msra.mxu0 0.0
        %1494 = vmatprep.subr.mxu0 0.0
        %1495 = vmatpush1.msra.mxu0 0.0
        %1496 = vmatprep.subr.mxu0 0.0
        %1497 = vmatpush1.msra.mxu0 0.0
        %1498 = vmatprep.subr.mxu0 0.0
        %1499 = vmatpush1.msra.mxu0 0.0
        %1500 = vmatprep.subr.mxu0 0.0
        %1501 = vmatpush1.msra.mxu0 0.0
        %1502 = vmatprep.subr.mxu0 0.0
        %1503 = vmatpush1.msra.mxu0 0.0
        %1504 = vmatprep.subr.mxu0 0.0
        %1505 = vmatpush1.msra.mxu0 0.0
        %1506 = vmatprep.subr.mxu0 0.0
        %1507 = vmatpush1.msra.mxu0 0.0
        %1508 = vmatprep.subr.mxu0 0.0
        %1509 = vmatpush1.msra.mxu0 0.0
        %1510 = vmatprep.subr.mxu0 0.0
        %1511 = vmatpush1.msra.mxu0 0.0
        %1512 = vmatprep.subr.mxu0 0.0
        %1513 = vmatpush1.msra.mxu0 0.0
        %1514 = vmatprep.subr.mxu0 0.0
        %1515 = vmatpush1.msra.mxu0 0.0
        %1516 = vmatprep.subr.mxu0 0.0
        %1517 = vmatpush1.msra.mxu0 0.0
        %1518 = vmatprep.subr.mxu0 0.0
        %1519 = vmatpush1.msra.mxu0 0.0
        %1520 = vmatprep.mubr.f32.mxu0 0.0
        %1521 = vmatmul.mubr.f32.gmra.mrb[0].mxu0 %v1374
        %v1522 = vpop.f32.mrb[0].mxu0
        %v1523 = vadd.f32 0.0, %v1522
        %v1524 = vpop.f32.mrb[0].mxu0
        %1525 = vmatprep.mubr.f32.mxu0 0.0
        %1526 = vmatmul.mubr.f32.gmra.mrb[0].mxu0 %v1376
        %v1527 = vpop.f32.mrb[0].mxu0
        %v1528 = vadd.f32 0.0, %v1527
        %v1529 = vpop.f32.mrb[0].mxu0
        %1530 = vmatprep.mubr.f32.mxu0 0.0
        %1531 = vmatmul.mubr.f32.gmra.mrb[0].mxu0 %v1378
        %v1532 = vpop.f32.mrb[0].mxu0
        %v1533 = vadd.f32 0.0, %v1532
        %v1534 = vpop.f32.mrb[0].mxu0
        %1535 = vmatprep.mubr.f32.mxu0 0.0
        %1536 = vmatmul.mubr.f32.gmra.mrb[0].mxu0 %v1380
        %v1537 = vpop.f32.mrb[0].mxu0
        %v1538 = vadd.f32 0.0, %v1537
        %v1539 = vpop.f32.mrb[0].mxu0
        %1540 = vmatprep.mubr.f32.mxu0 0.0
        %1541 = vmatmul.mubr.f32.gmra.mrb[0].mxu0 %v1382
        %v1542 = vpop.f32.mrb[0].mxu0
        %v1543 = vadd.f32 0.0, %v1542
        %v1544 = vpop.f32.mrb[0].mxu0
        %1545 = vmatprep.mubr.f32.mxu0 0.0
        %1546 = vmatmul.mubr.f32.gmra.mrb[0].mxu0 %v1384
        %v1547 = vpop.f32.mrb[0].mxu0
        %v1548 = vadd.f32 0.0, %v1547
        %v1549 = vpop.f32.mrb[0].mxu0
        %1550 = vmatprep.mubr.f32.mxu0 0.0
        %1551 = vmatmul.mubr.f32.gmra.mrb[0].mxu0 %v1386
        %v1552 = vpop.f32.mrb[0].mxu0
        %v1553 = vadd.f32 0.0, %v1552
        %v1554 = vpop.f32.mrb[0].mxu0
        %1555 = vmatprep.mubr.f32.mxu0 0.0
        %1556 = vmatmul.mubr.f32.gmra.mrb[0].mxu0 %v1388
        %v1557 = vpop.f32.mrb[0].mxu0
        %v1558 = vadd.f32 0.0, %v1557
        %v1559 = vpop.f32.mrb[0].mxu0
        %1560 = vmatprep.mubr.f32.mxu0 0.0
        %1561 = vmatmul.mubr.f32.gmra.mrb[0].mxu0 %v1390
        %v1562 = vpop.f32.mrb[0].mxu0
        %v1563 = vadd.f32 0.0, %v1562
        %v1564 = vpop.f32.mrb[0].mxu0
        %1565 = vmatprep.mubr.f32.mxu0 0.0
        %1566 = vmatmul.mubr.f32.gmra.mrb[0].mxu0 %v1392
        %v1567 = vpop.f32.mrb[0].mxu0
        %v1568 = vadd.f32 0.0, %v1567
        %v1569 = vpop.f32.mrb[0].mxu0
        %1570 = vmatprep.mubr.f32.mxu0 0.0
        %1571 = vmatmul.mubr.f32.gmra.mrb[0].mxu0 %v1394
        %v1572 = vpop.f32.mrb[0].mxu0
        %v1573 = vadd.f32 0.0, %v1572
        %v1574 = vpop.f32.mrb[0].mxu0
        %1575 = vmatprep.mubr.f32.mxu0 0.0
        %1576 = vmatmul.mubr.f32.gmra.mrb[0].mxu0 %v1396
        %v1577 = vpop.f32.mrb[0].mxu0
        %v1578 = vadd.f32 0.0, %v1577
        %v1579 = vpop.f32.mrb[0].mxu0
        %1580 = vmatprep.mubr.f32.mxu0 0.0
        %1581 = vmatmul.mubr.f32.gmra.mrb[0].mxu0 %v1398
        %v1582 = vpop.f32.mrb[0].mxu0
        %v1583 = vadd.f32 0.0, %v1582
        %v1584 = vpop.f32.mrb[0].mxu0
        %1585 = vmatprep.mubr.f32.mxu0 0.0
        %1586 = vmatmul.mubr.f32.gmra.mrb[0].mxu0 %v1400
        %v1587 = vpop.f32.mrb[0].mxu0
        %v1588 = vadd.f32 0.0, %v1587
        %v1589 = vpop.f32.mrb[0].mxu0
        %1590 = vmatprep.mubr.f32.mxu0 0.0
        %1591 = vmatmul.mubr.f32.gmra.mrb[0].mxu0 %v1402
        %v1592 = vpop.f32.mrb[0].mxu0
        %v1593 = vadd.f32 0.0, %v1592
        %v1594 = vpop.f32.mrb[0].mxu0
        %1595 = vmatprep.mubr.f32.mxu0 0.0
        %1596 = vmatmul.mubr.f32.gmra.mrb[0].mxu0 %v1404
        %v1597 = vpop.f32.mrb[0].mxu0
        %v1598 = vadd.f32 0.0, %v1597
        %v1599 = vpop.f32.mrb[0].mxu0
        %1600 = vmatprep.mubr.f32.mxu0 0.0
        %1601 = vmatmul.mubr.f32.gmra.mrb[0].mxu0 %v1406
        %v1602 = vpop.f32.mrb[0].mxu0
        %v1603 = vadd.f32 0.0, %v1602
        %v1604 = vpop.f32.mrb[0].mxu0
        %1605 = vmatprep.mubr.f32.mxu0 0.0
        %1606 = vmatmul.mubr.f32.gmra.mrb[0].mxu0 %v1408
        %v1607 = vpop.f32.mrb[0].mxu0
        %v1608 = vadd.f32 0.0, %v1607
        %v1609 = vpop.f32.mrb[0].mxu0
        %1610 = vmatprep.mubr.f32.mxu0 0.0
        %1611 = vmatmul.mubr.f32.gmra.mrb[0].mxu0 %v1410
        %v1612 = vpop.f32.mrb[0].mxu0
        %v1613 = vadd.f32 0.0, %v1612
        %v1614 = vpop.f32.mrb[0].mxu0
        %1615 = vmatprep.mubr.f32.mxu0 0.0
        %1616 = vmatmul.mubr.f32.gmra.mrb[0].mxu0 %v1412
        %v1617 = vpop.f32.mrb[0].mxu0
        %v1618 = vadd.f32 0.0, %v1617
        %v1619 = vpop.f32.mrb[0].mxu0
        %1620 = vmatprep.mubr.f32.mxu0 0.0
        %1621 = vmatmul.mubr.f32.gmra.mrb[0].mxu0 %v1414
        %v1622 = vpop.f32.mrb[0].mxu0
        %v1623 = vadd.f32 0.0, %v1622
        %v1624 = vpop.f32.mrb[0].mxu0
        %1625 = vmatprep.mubr.f32.mxu0 0.0
        %1626 = vmatmul.mubr.f32.gmra.mrb[0].mxu0 %v1416
        %v1627 = vpop.f32.mrb[0].mxu0
        %v1628 = vadd.f32 0.0, %v1627
        %v1629 = vpop.f32.mrb[0].mxu0
        %1630 = vmatprep.mubr.f32.mxu0 0.0
        %1631 = vmatmul.mubr.f32.gmra.mrb[0].mxu0 %v1418
        %v1632 = vpop.f32.mrb[0].mxu0
        %v1633 = vadd.f32 0.0, %v1632
        %v1634 = vpop.f32.mrb[0].mxu0
        %1635 = vmatprep.mubr.f32.mxu0 0.0
        %1636 = vmatmul.mubr.f32.gmra.mrb[0].mxu0 %v1420
        %v1637 = vpop.f32.mrb[0].mxu0
        %v1638 = vadd.f32 0.0, %v1637
        %v1639 = vpop.f32.mrb[0].mxu0
        %1640 = vmatprep.mubr.f32.mxu0 0.0
        %1641 = vmatmul.mubr.f32.gmra.mrb[0].mxu0 %v1422
        %v1642 = vpop.f32.mrb[0].mxu0
        %v1643 = vadd.f32 0.0, %v1642
        %v1644 = vpop.f32.mrb[0].mxu0
        %1645 = vmatprep.mubr.f32.mxu0 0.0
        %1646 = vmatmul.mubr.f32.gmra.mrb[0].mxu0 %v1424
        %v1647 = vpop.f32.mrb[0].mxu0
        %v1648 = vadd.f32 0.0, %v1647
        %v1649 = vpop.f32.mrb[0].mxu0
        %1650 = vmatprep.mubr.f32.mxu0 0.0
        %1651 = vmatmul.mubr.f32.gmra.mrb[0].mxu0 %v1426
        %v1652 = vpop.f32.mrb[0].mxu0
        %v1653 = vadd.f32 0.0, %v1652
        %v1654 = vpop.f32.mrb[0].mxu0
        %1655 = vmatprep.mubr.f32.mxu0 0.0
        %1656 = vmatmul.mubr.f32.gmra.mrb[0].mxu0 %v1428
        %v1657 = vpop.f32.mrb[0].mxu0
        %v1658 = vadd.f32 0.0, %v1657
        %v1659 = vpop.f32.mrb[0].mxu0
        %1660 = vmatprep.mubr.f32.mxu0 0.0
        %1661 = vmatmul.mubr.f32.gmra.mrb[0].mxu0 %v1430
        %v1662 = vpop.f32.mrb[0].mxu0
        %v1663 = vadd.f32 0.0, %v1662
        %v1664 = vpop.f32.mrb[0].mxu0
        %1665 = vmatprep.mubr.f32.mxu0 0.0
        %1666 = vmatmul.mubr.f32.gmra.mrb[0].mxu0 %v1432
        %v1667 = vpop.f32.mrb[0].mxu0
        %v1668 = vadd.f32 0.0, %v1667
        %v1669 = vpop.f32.mrb[0].mxu0
        %1670 = vmatprep.mubr.f32.mxu0 0.0
        %1671 = vmatmul.mubr.f32.gmra.mrb[0].mxu0 %v1434
        %v1672 = vpop.f32.mrb[0].mxu0
        %v1673 = vadd.f32 0.0, %v1672
        %v1674 = vpop.f32.mrb[0].mxu0
        %1675 = vmatprep.mubr.f32.mxu0 0.0
        %1676 = vmatmul.mubr.f32.gmra.mrb[0].mxu0 %v1436
        %v1677 = vpop.f32.mrb[0].mxu0
        %v1678 = vadd.f32 0.0, %v1677
        %v1679 = vpop.f32.mrb[0].mxu0
        %1680 = vmatprep.mubr.f32.mxu0 0.0
        %1681 = vmatmul.mubr.f32.gmra.mrb[0].mxu0 %v1438
        %v1682 = vpop.f32.mrb[0].mxu0
        %v1683 = vadd.f32 0.0, %v1682
        %v1684 = vpop.f32.mrb[0].mxu0
        %1685 = vmatprep.mubr.f32.mxu0 0.0
        %1686 = vmatmul.mubr.f32.gmra.mrb[0].mxu0 %v1440
        %v1687 = vpop.f32.mrb[0].mxu0
        %v1688 = vadd.f32 0.0, %v1687
        %v1689 = vpop.f32.mrb[0].mxu0
        %1690 = vmatprep.mubr.f32.mxu0 0.0
        %1691 = vmatmul.mubr.f32.gmra.mrb[0].mxu0 %v1442
        %v1692 = vpop.f32.mrb[0].mxu0
        %v1693 = vadd.f32 0.0, %v1692
        %v1694 = vpop.f32.mrb[0].mxu0
        %1695 = vmatprep.mubr.f32.mxu0 0.0
        %1696 = vmatmul.mubr.f32.gmra.mrb[0].mxu0 %v1444
        %v1697 = vpop.f32.mrb[0].mxu0
        %v1698 = vadd.f32 0.0, %v1697
        %v1699 = vpop.f32.mrb[0].mxu0
        %1700 = vmatprep.mubr.f32.mxu0 0.0
        %1701 = vmatmul.mubr.f32.gmra.mrb[0].mxu0 %v1446
        %v1702 = vpop.f32.mrb[0].mxu0
        %v1703 = vadd.f32 0.0, %v1702
        %v1704 = vpop.f32.mrb[0].mxu0
        %1705 = vmatprep.mubr.f32.mxu0 0.0
        %1706 = vmatmul.mubr.f32.gmra.mrb[0].mxu0 %v1448
        %v1707 = vpop.f32.mrb[0].mxu0
        %v1708 = vadd.f32 0.0, %v1707
        %v1709 = vpop.f32.mrb[0].mxu0
        %1710 = vmatprep.mubr.f32.mxu0 0.0
        %1711 = vmatmul.mubr.f32.gmra.mrb[0].mxu0 %v1450
        %v1712 = vpop.f32.mrb[0].mxu0
        %v1713 = vpop.f32.mrb[0].mxu0
        %1714 = vmatprep.mubr.f32.mxu0 0.0
        %1715 = vmatmul.mubr.f32.gmra.mrb[0].mxu0 %v1452
        %v1716 = vpop.f32.mrb[0].mxu0
        %v1717 = vpop.f32.mrb[0].mxu0
        %1718 = vmatprep.mubr.f32.mxu0 0.0
        %1719 = vmatmul.mubr.f32.gmra.mrb[0].mxu0 %v1454
        %v1720 = vpop.f32.mrb[0].mxu0
        %v1721 = vpop.f32.mrb[0].mxu0
        %1722 = vdwg.mxu0
        %v1723 = vadd.f32 %v1091, %v1523
        %v1724 = vadd.f32 %v1096, %v1528
        %v1725 = vadd.f32 %v1101, %v1533
        %v1726 = vadd.f32 %v1106, %v1538
        %v1727 = vadd.f32 %v1111, %v1543
        %v1728 = vadd.f32 %v1116, %v1548
        %v1729 = vadd.f32 %v1121, %v1553
        %v1730 = vadd.f32 %v1126, %v1558
        %v1731 = vadd.f32 %v1131, %v1563
        %v1732 = vadd.f32 %v1136, %v1568
        %v1733 = vadd.f32 %v1141, %v1573
        %v1734 = vadd.f32 %v1146, %v1578
        %v1735 = vadd.f32 %v1151, %v1583
        %v1736 = vadd.f32 %v1156, %v1588
        %v1737 = vadd.f32 %v1161, %v1593
        %v1738 = vadd.f32 %v1166, %v1598
        %v1739 = vadd.f32 %v1171, %v1603
        %v1740 = vadd.f32 %v1176, %v1608
        %v1741 = vadd.f32 %v1181, %v1613
        %v1742 = vadd.f32 %v1186, %v1618
        %v1743 = vadd.f32 %v1191, %v1623
        %v1744 = vadd.f32 %v1196, %v1628
        %v1745 = vadd.f32 %v1201, %v1633
        %v1746 = vadd.f32 %v1206, %v1638
        %v1747 = vadd.f32 %v1211, %v1643
        %v1748 = vadd.f32 %v1216, %v1648
        %v1749 = vadd.f32 %v1221, %v1653
        %v1750 = vadd.f32 %v1226, %v1658
        %v1751 = vadd.f32 %v1231, %v1663
        %v1752 = vadd.f32 %v1236, %v1668
        %v1753 = vadd.f32 %v1241, %v1673
        %v1754 = vadd.f32 %v1246, %v1678
        %v1755 = vadd.f32 %v1251, %v1683
        %v1756 = vadd.f32 %v1256, %v1688
        %v1757 = vadd.f32 %v1261, %v1693
        %v1758 = vadd.f32 %v1266, %v1698
        %v1759 = vadd.f32 %v1271, %v1703
        %v1760 = vadd.f32 %v1276, %v1708
        %v1761 = vld [vmem:[%s1 + $0x18] sm:$0xff]
        %v1764 = vrot.slane %v462, 2
        %v1765 = vsel %vm1292, %v1372, %v1764
        %v1766 = vrot.slane %v463, 2
        %v1767 = vsel %vm1292, %v1764, %v1766
        %v1768 = vsel %vm592, %v1765, 0
        %v1770 = vsel %vm592, %v1767, 0
        %v1772 = vsel %vm592, %v1766, 0
        %1774 = vmatprep.subr.mxu0 0.0
        %1775 = vmatpush1.msra.mxu0 %v1761
        %1776 = vmatprep.subr.mxu0 0.0
        %1777 = vmatpush1.msra.mxu0 0.0
        %1778 = vmatprep.subr.mxu0 0.0
        %1779 = vmatpush1.msra.mxu0 0.0
        %1780 = vmatprep.subr.mxu0 0.0
        %1781 = vmatpush1.msra.mxu0 0.0
        %1782 = vmatprep.subr.mxu0 0.0
        %1783 = vmatpush1.msra.mxu0 0.0
        %1784 = vmatprep.subr.mxu0 0.0
        %1785 = vmatpush1.msra.mxu0 0.0
        %1786 = vmatprep.subr.mxu0 0.0
        %1787 = vmatpush1.msra.mxu0 0.0
        %1788 = vmatprep.subr.mxu0 0.0
        %1789 = vmatpush1.msra.mxu0 0.0
        %1790 = vmatprep.subr.mxu0 0.0
        %1791 = vmatpush1.msra.mxu0 0.0
        %1792 = vmatprep.subr.mxu0 0.0
        %1793 = vmatpush1.msra.mxu0 0.0
        %1794 = vmatprep.subr.mxu0 0.0
        %1795 = vmatpush1.msra.mxu0 0.0
        %1796 = vmatprep.subr.mxu0 0.0
        %1797 = vmatpush1.msra.mxu0 0.0
        %1798 = vmatprep.subr.mxu0 0.0
        %1799 = vmatpush1.msra.mxu0 0.0
        %1800 = vmatprep.subr.mxu0 0.0
        %1801 = vmatpush1.msra.mxu0 0.0
        %1802 = vmatprep.subr.mxu0 0.0
        %1803 = vmatpush1.msra.mxu0 0.0
        %1804 = vmatprep.subr.mxu0 0.0
        %1805 = vmatpush1.msra.mxu0 0.0
        %1806 = vmatprep.subr.mxu0 0.0
        %1807 = vmatpush1.msra.mxu0 0.0
        %1808 = vmatprep.subr.mxu0 0.0
        %1809 = vmatpush1.msra.mxu0 0.0
        %1810 = vmatprep.subr.mxu0 0.0
        %1811 = vmatpush1.msra.mxu0 0.0
        %1812 = vmatprep.subr.mxu0 0.0
        %1813 = vmatpush1.msra.mxu0 0.0
        %1814 = vmatprep.subr.mxu0 0.0
        %1815 = vmatpush1.msra.mxu0 0.0
        %1816 = vmatprep.subr.mxu0 0.0
        %1817 = vmatpush1.msra.mxu0 0.0
        %1818 = vmatprep.subr.mxu0 0.0
        %1819 = vmatpush1.msra.mxu0 0.0
        %1820 = vmatprep.subr.mxu0 0.0
        %1821 = vmatpush1.msra.mxu0 0.0
        %1822 = vmatprep.subr.mxu0 0.0
        %1823 = vmatpush1.msra.mxu0 0.0
        %1824 = vmatprep.subr.mxu0 0.0
        %1825 = vmatpush1.msra.mxu0 0.0
        %1826 = vmatprep.subr.mxu0 0.0
        %1827 = vmatpush1.msra.mxu0 0.0
        %1828 = vmatprep.subr.mxu0 0.0
        %1829 = vmatpush1.msra.mxu0 0.0
        %1830 = vmatprep.subr.mxu0 0.0
        %1831 = vmatpush1.msra.mxu0 0.0
        %1832 = vmatprep.subr.mxu0 0.0
        %1833 = vmatpush1.msra.mxu0 0.0
        %1834 = vmatprep.subr.mxu0 0.0
        %1835 = vmatpush1.msra.mxu0 0.0
        %1836 = vmatprep.subr.mxu0 0.0
        %1837 = vmatpush1.msra.mxu0 0.0
        %1838 = vmatprep.mubr.f32.mxu0 0.0
        %1839 = vmatmul.mubr.f32.gmra.mrb[0].mxu0 %v1378
        %v1840 = vpop.f32.mrb[0].mxu0
        %v1841 = vadd.f32 0.0, %v1840
        %v1842 = vpop.f32.mrb[0].mxu0
        %1843 = vmatprep.mubr.f32.mxu0 0.0
        %1844 = vmatmul.mubr.f32.gmra.mrb[0].mxu0 %v1380
        %v1845 = vpop.f32.mrb[0].mxu0
        %v1846 = vadd.f32 0.0, %v1845
        %v1847 = vpop.f32.mrb[0].mxu0
        %1848 = vmatprep.mubr.f32.mxu0 0.0
        %1849 = vmatmul.mubr.f32.gmra.mrb[0].mxu0 %v1382
        %v1850 = vpop.f32.mrb[0].mxu0
        %v1851 = vadd.f32 0.0, %v1850
        %v1852 = vpop.f32.mrb[0].mxu0
        %1853 = vmatprep.mubr.f32.mxu0 0.0
        %1854 = vmatmul.mubr.f32.gmra.mrb[0].mxu0 %v1384
        %v1855 = vpop.f32.mrb[0].mxu0
        %v1856 = vadd.f32 0.0, %v1855
        %v1857 = vpop.f32.mrb[0].mxu0
        %1858 = vmatprep.mubr.f32.mxu0 0.0
        %1859 = vmatmul.mubr.f32.gmra.mrb[0].mxu0 %v1386
        %v1860 = vpop.f32.mrb[0].mxu0
        %v1861 = vadd.f32 0.0, %v1860
        %v1862 = vpop.f32.mrb[0].mxu0
        %1863 = vmatprep.mubr.f32.mxu0 0.0
        %1864 = vmatmul.mubr.f32.gmra.mrb[0].mxu0 %v1388
        %v1865 = vpop.f32.mrb[0].mxu0
        %v1866 = vadd.f32 0.0, %v1865
        %v1867 = vpop.f32.mrb[0].mxu0
        %1868 = vmatprep.mubr.f32.mxu0 0.0
        %1869 = vmatmul.mubr.f32.gmra.mrb[0].mxu0 %v1390
        %v1870 = vpop.f32.mrb[0].mxu0
        %v1871 = vadd.f32 0.0, %v1870
        %v1872 = vpop.f32.mrb[0].mxu0
        %1873 = vmatprep.mubr.f32.mxu0 0.0
        %1874 = vmatmul.mubr.f32.gmra.mrb[0].mxu0 %v1392
        %v1875 = vpop.f32.mrb[0].mxu0
        %v1876 = vadd.f32 0.0, %v1875
        %v1877 = vpop.f32.mrb[0].mxu0
        %1878 = vmatprep.mubr.f32.mxu0 0.0
        %1879 = vmatmul.mubr.f32.gmra.mrb[0].mxu0 %v1394
        %v1880 = vpop.f32.mrb[0].mxu0
        %v1881 = vadd.f32 0.0, %v1880
        %v1882 = vpop.f32.mrb[0].mxu0
        %1883 = vmatprep.mubr.f32.mxu0 0.0
        %1884 = vmatmul.mubr.f32.gmra.mrb[0].mxu0 %v1396
        %v1885 = vpop.f32.mrb[0].mxu0
        %v1886 = vadd.f32 0.0, %v1885
        %v1887 = vpop.f32.mrb[0].mxu0
        %1888 = vmatprep.mubr.f32.mxu0 0.0
        %1889 = vmatmul.mubr.f32.gmra.mrb[0].mxu0 %v1398
        %v1890 = vpop.f32.mrb[0].mxu0
        %v1891 = vadd.f32 0.0, %v1890
        %v1892 = vpop.f32.mrb[0].mxu0
        %1893 = vmatprep.mubr.f32.mxu0 0.0
        %1894 = vmatmul.mubr.f32.gmra.mrb[0].mxu0 %v1400
        %v1895 = vpop.f32.mrb[0].mxu0
        %v1896 = vadd.f32 0.0, %v1895
        %v1897 = vpop.f32.mrb[0].mxu0
        %1898 = vmatprep.mubr.f32.mxu0 0.0
        %1899 = vmatmul.mubr.f32.gmra.mrb[0].mxu0 %v1402
        %v1900 = vpop.f32.mrb[0].mxu0
        %v1901 = vadd.f32 0.0, %v1900
        %v1902 = vpop.f32.mrb[0].mxu0
        %1903 = vmatprep.mubr.f32.mxu0 0.0
        %1904 = vmatmul.mubr.f32.gmra.mrb[0].mxu0 %v1404
        %v1905 = vpop.f32.mrb[0].mxu0
        %v1906 = vadd.f32 0.0, %v1905
        %v1907 = vpop.f32.mrb[0].mxu0
        %1908 = vmatprep.mubr.f32.mxu0 0.0
        %1909 = vmatmul.mubr.f32.gmra.mrb[0].mxu0 %v1406
        %v1910 = vpop.f32.mrb[0].mxu0
        %v1911 = vadd.f32 0.0, %v1910
        %v1912 = vpop.f32.mrb[0].mxu0
        %1913 = vmatprep.mubr.f32.mxu0 0.0
        %1914 = vmatmul.mubr.f32.gmra.mrb[0].mxu0 %v1408
        %v1915 = vpop.f32.mrb[0].mxu0
        %v1916 = vadd.f32 0.0, %v1915
        %v1917 = vpop.f32.mrb[0].mxu0
        %1918 = vmatprep.mubr.f32.mxu0 0.0
        %1919 = vmatmul.mubr.f32.gmra.mrb[0].mxu0 %v1410
        %v1920 = vpop.f32.mrb[0].mxu0
        %v1921 = vadd.f32 0.0, %v1920
        %v1922 = vpop.f32.mrb[0].mxu0
        %1923 = vmatprep.mubr.f32.mxu0 0.0
        %1924 = vmatmul.mubr.f32.gmra.mrb[0].mxu0 %v1412
        %v1925 = vpop.f32.mrb[0].mxu0
        %v1926 = vadd.f32 0.0, %v1925
        %v1927 = vpop.f32.mrb[0].mxu0
        %1928 = vmatprep.mubr.f32.mxu0 0.0
        %1929 = vmatmul.mubr.f32.gmra.mrb[0].mxu0 %v1414
        %v1930 = vpop.f32.mrb[0].mxu0
        %v1931 = vadd.f32 0.0, %v1930
        %v1932 = vpop.f32.mrb[0].mxu0
        %1933 = vmatprep.mubr.f32.mxu0 0.0
        %1934 = vmatmul.mubr.f32.gmra.mrb[0].mxu0 %v1416
        %v1935 = vpop.f32.mrb[0].mxu0
        %v1936 = vadd.f32 0.0, %v1935
        %v1937 = vpop.f32.mrb[0].mxu0
        %1938 = vmatprep.mubr.f32.mxu0 0.0
        %1939 = vmatmul.mubr.f32.gmra.mrb[0].mxu0 %v1418
        %v1940 = vpop.f32.mrb[0].mxu0
        %v1941 = vadd.f32 0.0, %v1940
        %v1942 = vpop.f32.mrb[0].mxu0
        %1943 = vmatprep.mubr.f32.mxu0 0.0
        %1944 = vmatmul.mubr.f32.gmra.mrb[0].mxu0 %v1420
        %v1945 = vpop.f32.mrb[0].mxu0
        %v1946 = vadd.f32 0.0, %v1945
        %v1947 = vpop.f32.mrb[0].mxu0
        %1948 = vmatprep.mubr.f32.mxu0 0.0
        %1949 = vmatmul.mubr.f32.gmra.mrb[0].mxu0 %v1422
        %v1950 = vpop.f32.mrb[0].mxu0
        %v1951 = vadd.f32 0.0, %v1950
        %v1952 = vpop.f32.mrb[0].mxu0
        %1953 = vmatprep.mubr.f32.mxu0 0.0
        %1954 = vmatmul.mubr.f32.gmra.mrb[0].mxu0 %v1424
        %v1955 = vpop.f32.mrb[0].mxu0
        %v1956 = vadd.f32 0.0, %v1955
        %v1957 = vpop.f32.mrb[0].mxu0
        %1958 = vmatprep.mubr.f32.mxu0 0.0
        %1959 = vmatmul.mubr.f32.gmra.mrb[0].mxu0 %v1426
        %v1960 = vpop.f32.mrb[0].mxu0
        %v1961 = vadd.f32 0.0, %v1960
        %v1962 = vpop.f32.mrb[0].mxu0
        %1963 = vmatprep.mubr.f32.mxu0 0.0
        %1964 = vmatmul.mubr.f32.gmra.mrb[0].mxu0 %v1428
        %v1965 = vpop.f32.mrb[0].mxu0
        %v1966 = vadd.f32 0.0, %v1965
        %v1967 = vpop.f32.mrb[0].mxu0
        %1968 = vmatprep.mubr.f32.mxu0 0.0
        %1969 = vmatmul.mubr.f32.gmra.mrb[0].mxu0 %v1430
        %v1970 = vpop.f32.mrb[0].mxu0
        %v1971 = vadd.f32 0.0, %v1970
        %v1972 = vpop.f32.mrb[0].mxu0
        %1973 = vmatprep.mubr.f32.mxu0 0.0
        %1974 = vmatmul.mubr.f32.gmra.mrb[0].mxu0 %v1432
        %v1975 = vpop.f32.mrb[0].mxu0
        %v1976 = vadd.f32 0.0, %v1975
        %v1977 = vpop.f32.mrb[0].mxu0
        %1978 = vmatprep.mubr.f32.mxu0 0.0
        %1979 = vmatmul.mubr.f32.gmra.mrb[0].mxu0 %v1434
        %v1980 = vpop.f32.mrb[0].mxu0
        %v1981 = vadd.f32 0.0, %v1980
        %v1982 = vpop.f32.mrb[0].mxu0
        %1983 = vmatprep.mubr.f32.mxu0 0.0
        %1984 = vmatmul.mubr.f32.gmra.mrb[0].mxu0 %v1436
        %v1985 = vpop.f32.mrb[0].mxu0
        %v1986 = vadd.f32 0.0, %v1985
        %v1987 = vpop.f32.mrb[0].mxu0
        %1988 = vmatprep.mubr.f32.mxu0 0.0
        %1989 = vmatmul.mubr.f32.gmra.mrb[0].mxu0 %v1438
        %v1990 = vpop.f32.mrb[0].mxu0
        %v1991 = vadd.f32 0.0, %v1990
        %v1992 = vpop.f32.mrb[0].mxu0
        %1993 = vmatprep.mubr.f32.mxu0 0.0
        %1994 = vmatmul.mubr.f32.gmra.mrb[0].mxu0 %v1440
        %v1995 = vpop.f32.mrb[0].mxu0
        %v1996 = vadd.f32 0.0, %v1995
        %v1997 = vpop.f32.mrb[0].mxu0
        %1998 = vmatprep.mubr.f32.mxu0 0.0
        %1999 = vmatmul.mubr.f32.gmra.mrb[0].mxu0 %v1442
        %v2000 = vpop.f32.mrb[0].mxu0
        %v2001 = vadd.f32 0.0, %v2000
        %v2002 = vpop.f32.mrb[0].mxu0
        %2003 = vmatprep.mubr.f32.mxu0 0.0
        %2004 = vmatmul.mubr.f32.gmra.mrb[0].mxu0 %v1444
        %v2005 = vpop.f32.mrb[0].mxu0
        %v2006 = vadd.f32 0.0, %v2005
        %v2007 = vpop.f32.mrb[0].mxu0
        %2008 = vmatprep.mubr.f32.mxu0 0.0
        %2009 = vmatmul.mubr.f32.gmra.mrb[0].mxu0 %v1446
        %v2010 = vpop.f32.mrb[0].mxu0
        %v2011 = vadd.f32 0.0, %v2010
        %v2012 = vpop.f32.mrb[0].mxu0
        %2013 = vmatprep.mubr.f32.mxu0 0.0
        %2014 = vmatmul.mubr.f32.gmra.mrb[0].mxu0 %v1448
        %v2015 = vpop.f32.mrb[0].mxu0
        %v2016 = vadd.f32 0.0, %v2015
        %v2017 = vpop.f32.mrb[0].mxu0
        %2018 = vmatprep.mubr.f32.mxu0 0.0
        %2019 = vmatmul.mubr.f32.gmra.mrb[0].mxu0 %v1450
        %v2020 = vpop.f32.mrb[0].mxu0
        %v2021 = vadd.f32 0.0, %v2020
        %v2022 = vpop.f32.mrb[0].mxu0
        %2023 = vmatprep.mubr.f32.mxu0 0.0
        %2024 = vmatmul.mubr.f32.gmra.mrb[0].mxu0 %v1452
        %v2025 = vpop.f32.mrb[0].mxu0
        %v2026 = vadd.f32 0.0, %v2025
        %v2027 = vpop.f32.mrb[0].mxu0
        %2028 = vmatprep.mubr.f32.mxu0 0.0
        %2029 = vmatmul.mubr.f32.gmra.mrb[0].mxu0 %v1768
        %v2030 = vpop.f32.mrb[0].mxu0
        %v2031 = vpop.f32.mrb[0].mxu0
        %2032 = vmatprep.mubr.f32.mxu0 0.0
        %2033 = vmatmul.mubr.f32.gmra.mrb[0].mxu0 %v1770
        %v2034 = vpop.f32.mrb[0].mxu0
        %v2035 = vpop.f32.mrb[0].mxu0
        %2036 = vmatprep.mubr.f32.mxu0 0.0
        %2037 = vmatmul.mubr.f32.gmra.mrb[0].mxu0 %v1772
        %v2038 = vpop.f32.mrb[0].mxu0
        %v2039 = vpop.f32.mrb[0].mxu0
        %2040 = vdwg.mxu0
        %v2041 = vadd.f32 %v1723, %v1841
        %v2042 = vadd.f32 %v1724, %v1846
        %v2043 = vadd.f32 %v1725, %v1851
        %v2044 = vadd.f32 %v1726, %v1856
        %v2045 = vadd.f32 %v1727, %v1861
        %v2046 = vadd.f32 %v1728, %v1866
        %v2047 = vadd.f32 %v1729, %v1871
        %v2048 = vadd.f32 %v1730, %v1876
        %v2049 = vadd.f32 %v1731, %v1881
        %v2050 = vadd.f32 %v1732, %v1886
        %v2051 = vadd.f32 %v1733, %v1891
        %v2052 = vadd.f32 %v1734, %v1896
        %v2053 = vadd.f32 %v1735, %v1901
        %v2054 = vadd.f32 %v1736, %v1906
        %v2055 = vadd.f32 %v1737, %v1911
        %v2056 = vadd.f32 %v1738, %v1916
        %v2057 = vadd.f32 %v1739, %v1921
        %v2058 = vadd.f32 %v1740, %v1926
        %v2059 = vadd.f32 %v1741, %v1931
        %v2060 = vadd.f32 %v1742, %v1936
        %v2061 = vadd.f32 %v1743, %v1941
        %v2062 = vadd.f32 %v1744, %v1946
        %v2063 = vadd.f32 %v1745, %v1951
        %v2064 = vadd.f32 %v1746, %v1956
        %v2065 = vadd.f32 %v1747, %v1961
        %v2066 = vadd.f32 %v1748, %v1966
        %v2067 = vadd.f32 %v1749, %v1971
        %v2068 = vadd.f32 %v1750, %v1976
        %v2069 = vadd.f32 %v1751, %v1981
        %v2070 = vadd.f32 %v1752, %v1986
        %v2071 = vadd.f32 %v1753, %v1991
        %v2072 = vadd.f32 %v1754, %v1996
        %v2073 = vadd.f32 %v1755, %v2001
        %v2074 = vadd.f32 %v1756, %v2006
        %v2075 = vadd.f32 %v1757, %v2011
        %v2076 = vadd.f32 %v1758, %v2016
        %v2077 = vadd.f32 %v1759, %v2021
        %v2078 = vadd.f32 %v1760, %v2026
        %v2079 = vld [vmem:[%s1 + $0x20] sm:$0xff]
        %vm2080 = vcmask 1044480
        %v2081 = vrot.slane %v423, 3
        %v2082 = vrot.slane %v424, 3
        %v2083 = vsel %vm2080, %v2081, %v2082
        %v2084 = vrot.slane %v425, 3
        %v2085 = vsel %vm2080, %v2082, %v2084
        %v2086 = vrot.slane %v426, 3
        %v2087 = vsel %vm2080, %v2084, %v2086
        %v2088 = vrot.slane %v427, 3
        %v2089 = vsel %vm2080, %v2086, %v2088
        %v2090 = vrot.slane %v428, 3
        %v2091 = vsel %vm2080, %v2088, %v2090
        %v2092 = vrot.slane %v429, 3
        %v2093 = vsel %vm2080, %v2090, %v2092
        %v2094 = vrot.slane %v430, 3
        %v2095 = vsel %vm2080, %v2092, %v2094
        %v2096 = vrot.slane %v431, 3
        %v2097 = vsel %vm2080, %v2094, %v2096
        %v2098 = vrot.slane %v432, 3
        %v2099 = vsel %vm2080, %v2096, %v2098
        %v2100 = vrot.slane %v433, 3
        %v2101 = vsel %vm2080, %v2098, %v2100
        %v2102 = vrot.slane %v434, 3
        %v2103 = vsel %vm2080, %v2100, %v2102
        %v2104 = vrot.slane %v435, 3
        %v2105 = vsel %vm2080, %v2102, %v2104
        %v2106 = vrot.slane %v436, 3
        %v2107 = vsel %vm2080, %v2104, %v2106
        %v2108 = vrot.slane %v437, 3
        %v2109 = vsel %vm2080, %v2106, %v2108
        %v2110 = vrot.slane %v438, 3
        %v2111 = vsel %vm2080, %v2108, %v2110
        %v2112 = vrot.slane %v439, 3
        %v2113 = vsel %vm2080, %v2110, %v2112
        %v2114 = vrot.slane %v440, 3
        %v2115 = vsel %vm2080, %v2112, %v2114
        %v2116 = vrot.slane %v441, 3
        %v2117 = vsel %vm2080, %v2114, %v2116
        %v2118 = vrot.slane %v442, 3
        %v2119 = vsel %vm2080, %v2116, %v2118
        %v2120 = vrot.slane %v443, 3
        %v2121 = vsel %vm2080, %v2118, %v2120
        %v2122 = vrot.slane %v444, 3
        %v2123 = vsel %vm2080, %v2120, %v2122
        %v2124 = vrot.slane %v445, 3
        %v2125 = vsel %vm2080, %v2122, %v2124
        %v2126 = vrot.slane %v446, 3
        %v2127 = vsel %vm2080, %v2124, %v2126
        %v2128 = vrot.slane %v447, 3
        %v2129 = vsel %vm2080, %v2126, %v2128
        %v2130 = vrot.slane %v448, 3
        %v2131 = vsel %vm2080, %v2128, %v2130
        %v2132 = vrot.slane %v449, 3
        %v2133 = vsel %vm2080, %v2130, %v2132
        %v2134 = vrot.slane %v450, 3
        %v2135 = vsel %vm2080, %v2132, %v2134
        %v2136 = vrot.slane %v451, 3
        %v2137 = vsel %vm2080, %v2134, %v2136
        %v2138 = vrot.slane %v452, 3
        %v2139 = vsel %vm2080, %v2136, %v2138
        %v2140 = vrot.slane %v453, 3
        %v2141 = vsel %vm2080, %v2138, %v2140
        %v2142 = vrot.slane %v454, 3
        %v2143 = vsel %vm2080, %v2140, %v2142
        %v2144 = vrot.slane %v455, 3
        %v2145 = vsel %vm2080, %v2142, %v2144
        %v2146 = vrot.slane %v456, 3
        %v2147 = vsel %vm2080, %v2144, %v2146
        %v2148 = vrot.slane %v457, 3
        %v2149 = vsel %vm2080, %v2146, %v2148
        %v2150 = vrot.slane %v458, 3
        %v2151 = vsel %vm2080, %v2148, %v2150
        %v2152 = vrot.slane %v459, 3
        %v2153 = vsel %vm2080, %v2150, %v2152
        %v2154 = vrot.slane %v460, 3
        %v2155 = vsel %vm2080, %v2152, %v2154
        %v2156 = vrot.slane %v461, 3
        %v2157 = vsel %vm2080, %v2154, %v2156
        %v2158 = vrot.slane %v462, 3
        %v2159 = vsel %vm2080, %v2156, %v2158
        %v2160 = vrot.slane %v463, 3
        %v2161 = vsel %vm2080, %v2158, %v2160
        %v2162 = vsel %vm592, %v2083, 0
        %v2164 = vsel %vm592, %v2085, 0
        %v2166 = vsel %vm592, %v2087, 0
        %v2168 = vsel %vm592, %v2089, 0
        %v2170 = vsel %vm592, %v2091, 0
        %v2172 = vsel %vm592, %v2093, 0
        %v2174 = vsel %vm592, %v2095, 0
        %v2176 = vsel %vm592, %v2097, 0
        %v2178 = vsel %vm592, %v2099, 0
        %v2180 = vsel %vm592, %v2101, 0
        %v2182 = vsel %vm592, %v2103, 0
        %v2184 = vsel %vm592, %v2105, 0
        %v2186 = vsel %vm592, %v2107, 0
        %v2188 = vsel %vm592, %v2109, 0
        %v2190 = vsel %vm592, %v2111, 0
        %v2192 = vsel %vm592, %v2113, 0
        %v2194 = vsel %vm592, %v2115, 0
        %v2196 = vsel %vm592, %v2117, 0
        %v2198 = vsel %vm592, %v2119, 0
        %v2200 = vsel %vm592, %v2121, 0
        %v2202 = vsel %vm592, %v2123, 0
        %v2204 = vsel %vm592, %v2125, 0
        %v2206 = vsel %vm592, %v2127, 0
        %v2208 = vsel %vm592, %v2129, 0
        %v2210 = vsel %vm592, %v2131, 0
        %v2212 = vsel %vm592, %v2133, 0
        %v2214 = vsel %vm592, %v2135, 0
        %v2216 = vsel %vm592, %v2137, 0
        %v2218 = vsel %vm592, %v2139, 0
        %v2220 = vsel %vm592, %v2141, 0
        %v2222 = vsel %vm592, %v2143, 0
        %v2224 = vsel %vm592, %v2145, 0
        %v2226 = vsel %vm592, %v2147, 0
        %v2228 = vsel %vm592, %v2149, 0
        %v2230 = vsel %vm592, %v2151, 0
        %v2232 = vsel %vm592, %v2153, 0
        %v2234 = vsel %vm592, %v2155, 0
        %v2236 = vsel %vm592, %v2157, 0
        %v2238 = vsel %vm592, %v2159, 0
        %v2240 = vsel %vm592, %v2161, 0
        %v2242 = vsel %vm592, %v2160, 0
        %2244 = vmatprep.subr.mxu0 0.0
        %2245 = vmatpush1.msra.mxu0 %v2079
        %2246 = vmatprep.subr.mxu0 0.0
        %2247 = vmatpush1.msra.mxu0 0.0
        %2248 = vmatprep.subr.mxu0 0.0
        %2249 = vmatpush1.msra.mxu0 0.0
        %2250 = vmatprep.subr.mxu0 0.0
        %2251 = vmatpush1.msra.mxu0 0.0
        %2252 = vmatprep.subr.mxu0 0.0
        %2253 = vmatpush1.msra.mxu0 0.0
        %2254 = vmatprep.subr.mxu0 0.0
        %2255 = vmatpush1.msra.mxu0 0.0
        %2256 = vmatprep.subr.mxu0 0.0
        %2257 = vmatpush1.msra.mxu0 0.0
        %2258 = vmatprep.subr.mxu0 0.0
        %2259 = vmatpush1.msra.mxu0 0.0
        %2260 = vmatprep.subr.mxu0 0.0
        %2261 = vmatpush1.msra.mxu0 0.0
        %2262 = vmatprep.subr.mxu0 0.0
        %2263 = vmatpush1.msra.mxu0 0.0
        %2264 = vmatprep.subr.mxu0 0.0
        %2265 = vmatpush1.msra.mxu0 0.0
        %2266 = vmatprep.subr.mxu0 0.0
        %2267 = vmatpush1.msra.mxu0 0.0
        %2268 = vmatprep.subr.mxu0 0.0
        %2269 = vmatpush1.msra.mxu0 0.0
        %2270 = vmatprep.subr.mxu0 0.0
        %2271 = vmatpush1.msra.mxu0 0.0
        %2272 = vmatprep.subr.mxu0 0.0
        %2273 = vmatpush1.msra.mxu0 0.0
        %2274 = vmatprep.subr.mxu0 0.0
        %2275 = vmatpush1.msra.mxu0 0.0
        %2276 = vmatprep.subr.mxu0 0.0
        %2277 = vmatpush1.msra.mxu0 0.0
        %2278 = vmatprep.subr.mxu0 0.0
        %2279 = vmatpush1.msra.mxu0 0.0
        %2280 = vmatprep.subr.mxu0 0.0
        %2281 = vmatpush1.msra.mxu0 0.0
        %2282 = vmatprep.subr.mxu0 0.0
        %2283 = vmatpush1.msra.mxu0 0.0
        %2284 = vmatprep.subr.mxu0 0.0
        %2285 = vmatpush1.msra.mxu0 0.0
        %2286 = vmatprep.subr.mxu0 0.0
        %2287 = vmatpush1.msra.mxu0 0.0
        %2288 = vmatprep.subr.mxu0 0.0
        %2289 = vmatpush1.msra.mxu0 0.0
        %2290 = vmatprep.subr.mxu0 0.0
        %2291 = vmatpush1.msra.mxu0 0.0
        %2292 = vmatprep.subr.mxu0 0.0
        %2293 = vmatpush1.msra.mxu0 0.0
        %2294 = vmatprep.subr.mxu0 0.0
        %2295 = vmatpush1.msra.mxu0 0.0
        %2296 = vmatprep.subr.mxu0 0.0
        %2297 = vmatpush1.msra.mxu0 0.0
        %2298 = vmatprep.subr.mxu0 0.0
        %2299 = vmatpush1.msra.mxu0 0.0
        %2300 = vmatprep.subr.mxu0 0.0
        %2301 = vmatpush1.msra.mxu0 0.0
        %2302 = vmatprep.subr.mxu0 0.0
        %2303 = vmatpush1.msra.mxu0 0.0
        %2304 = vmatprep.subr.mxu0 0.0
        %2305 = vmatpush1.msra.mxu0 0.0
        %2306 = vmatprep.subr.mxu0 0.0
        %2307 = vmatpush1.msra.mxu0 0.0
        %2308 = vmatprep.mubr.f32.mxu0 0.0
        %2309 = vmatmul.mubr.f32.gmra.mrb[0].mxu0 %v2162
        %v2310 = vpop.f32.mrb[0].mxu0
        %v2311 = vadd.f32 0.0, %v2310
        %v2312 = vpop.f32.mrb[0].mxu0
        %2313 = vmatprep.mubr.f32.mxu0 0.0
        %2314 = vmatmul.mubr.f32.gmra.mrb[0].mxu0 %v2164
        %v2315 = vpop.f32.mrb[0].mxu0
        %v2316 = vadd.f32 0.0, %v2315
        %v2317 = vpop.f32.mrb[0].mxu0
        %2318 = vmatprep.mubr.f32.mxu0 0.0
        %2319 = vmatmul.mubr.f32.gmra.mrb[0].mxu0 %v2166
        %v2320 = vpop.f32.mrb[0].mxu0
        %v2321 = vadd.f32 0.0, %v2320
        %v2322 = vpop.f32.mrb[0].mxu0
        %2323 = vmatprep.mubr.f32.mxu0 0.0
        %2324 = vmatmul.mubr.f32.gmra.mrb[0].mxu0 %v2168
        %v2325 = vpop.f32.mrb[0].mxu0
        %v2326 = vadd.f32 0.0, %v2325
        %v2327 = vpop.f32.mrb[0].mxu0
        %2328 = vmatprep.mubr.f32.mxu0 0.0
        %2329 = vmatmul.mubr.f32.gmra.mrb[0].mxu0 %v2170
        %v2330 = vpop.f32.mrb[0].mxu0
        %v2331 = vadd.f32 0.0, %v2330
        %v2332 = vpop.f32.mrb[0].mxu0
        %2333 = vmatprep.mubr.f32.mxu0 0.0
        %2334 = vmatmul.mubr.f32.gmra.mrb[0].mxu0 %v2172
        %v2335 = vpop.f32.mrb[0].mxu0
        %v2336 = vadd.f32 0.0, %v2335
        %v2337 = vpop.f32.mrb[0].mxu0
        %2338 = vmatprep.mubr.f32.mxu0 0.0
        %2339 = vmatmul.mubr.f32.gmra.mrb[0].mxu0 %v2174
        %v2340 = vpop.f32.mrb[0].mxu0
        %v2341 = vadd.f32 0.0, %v2340
        %v2342 = vpop.f32.mrb[0].mxu0
        %2343 = vmatprep.mubr.f32.mxu0 0.0
        %2344 = vmatmul.mubr.f32.gmra.mrb[0].mxu0 %v2176
        %v2345 = vpop.f32.mrb[0].mxu0
        %v2346 = vadd.f32 0.0, %v2345
        %v2347 = vpop.f32.mrb[0].mxu0
        %2348 = vmatprep.mubr.f32.mxu0 0.0
        %2349 = vmatmul.mubr.f32.gmra.mrb[0].mxu0 %v2178
        %v2350 = vpop.f32.mrb[0].mxu0
        %v2351 = vadd.f32 0.0, %v2350
        %v2352 = vpop.f32.mrb[0].mxu0
        %2353 = vmatprep.mubr.f32.mxu0 0.0
        %2354 = vmatmul.mubr.f32.gmra.mrb[0].mxu0 %v2180
        %v2355 = vpop.f32.mrb[0].mxu0
        %v2356 = vadd.f32 0.0, %v2355
        %v2357 = vpop.f32.mrb[0].mxu0
        %2358 = vmatprep.mubr.f32.mxu0 0.0
        %2359 = vmatmul.mubr.f32.gmra.mrb[0].mxu0 %v2182
        %v2360 = vpop.f32.mrb[0].mxu0
        %v2361 = vadd.f32 0.0, %v2360
        %v2362 = vpop.f32.mrb[0].mxu0
        %2363 = vmatprep.mubr.f32.mxu0 0.0
        %2364 = vmatmul.mubr.f32.gmra.mrb[0].mxu0 %v2184
        %v2365 = vpop.f32.mrb[0].mxu0
        %v2366 = vadd.f32 0.0, %v2365
        %v2367 = vpop.f32.mrb[0].mxu0
        %2368 = vmatprep.mubr.f32.mxu0 0.0
        %2369 = vmatmul.mubr.f32.gmra.mrb[0].mxu0 %v2186
        %v2370 = vpop.f32.mrb[0].mxu0
        %v2371 = vadd.f32 0.0, %v2370
        %v2372 = vpop.f32.mrb[0].mxu0
        %2373 = vmatprep.mubr.f32.mxu0 0.0
        %2374 = vmatmul.mubr.f32.gmra.mrb[0].mxu0 %v2188
        %v2375 = vpop.f32.mrb[0].mxu0
        %v2376 = vadd.f32 0.0, %v2375
        %v2377 = vpop.f32.mrb[0].mxu0
        %2378 = vmatprep.mubr.f32.mxu0 0.0
        %2379 = vmatmul.mubr.f32.gmra.mrb[0].mxu0 %v2190
        %v2380 = vpop.f32.mrb[0].mxu0
        %v2381 = vadd.f32 0.0, %v2380
        %v2382 = vpop.f32.mrb[0].mxu0
        %2383 = vmatprep.mubr.f32.mxu0 0.0
        %2384 = vmatmul.mubr.f32.gmra.mrb[0].mxu0 %v2192
        %v2385 = vpop.f32.mrb[0].mxu0
        %v2386 = vadd.f32 0.0, %v2385
        %v2387 = vpop.f32.mrb[0].mxu0
        %2388 = vmatprep.mubr.f32.mxu0 0.0
        %2389 = vmatmul.mubr.f32.gmra.mrb[0].mxu0 %v2194
        %v2390 = vpop.f32.mrb[0].mxu0
        %v2391 = vadd.f32 0.0, %v2390
        %v2392 = vpop.f32.mrb[0].mxu0
        %2393 = vmatprep.mubr.f32.mxu0 0.0
        %2394 = vmatmul.mubr.f32.gmra.mrb[0].mxu0 %v2196
        %v2395 = vpop.f32.mrb[0].mxu0
        %v2396 = vadd.f32 0.0, %v2395
        %v2397 = vpop.f32.mrb[0].mxu0
        %2398 = vmatprep.mubr.f32.mxu0 0.0
        %2399 = vmatmul.mubr.f32.gmra.mrb[0].mxu0 %v2198
        %v2400 = vpop.f32.mrb[0].mxu0
        %v2401 = vadd.f32 0.0, %v2400
        %v2402 = vpop.f32.mrb[0].mxu0
        %2403 = vmatprep.mubr.f32.mxu0 0.0
        %2404 = vmatmul.mubr.f32.gmra.mrb[0].mxu0 %v2200
        %v2405 = vpop.f32.mrb[0].mxu0
        %v2406 = vadd.f32 0.0, %v2405
        %v2407 = vpop.f32.mrb[0].mxu0
        %2408 = vmatprep.mubr.f32.mxu0 0.0
        %2409 = vmatmul.mubr.f32.gmra.mrb[0].mxu0 %v2202
        %v2410 = vpop.f32.mrb[0].mxu0
        %v2411 = vadd.f32 0.0, %v2410
        %v2412 = vpop.f32.mrb[0].mxu0
        %2413 = vmatprep.mubr.f32.mxu0 0.0
        %2414 = vmatmul.mubr.f32.gmra.mrb[0].mxu0 %v2204
        %v2415 = vpop.f32.mrb[0].mxu0
        %v2416 = vadd.f32 0.0, %v2415
        %v2417 = vpop.f32.mrb[0].mxu0
        %2418 = vmatprep.mubr.f32.mxu0 0.0
        %2419 = vmatmul.mubr.f32.gmra.mrb[0].mxu0 %v2206
        %v2420 = vpop.f32.mrb[0].mxu0
        %v2421 = vadd.f32 0.0, %v2420
        %v2422 = vpop.f32.mrb[0].mxu0
        %2423 = vmatprep.mubr.f32.mxu0 0.0
        %2424 = vmatmul.mubr.f32.gmra.mrb[0].mxu0 %v2208
        %v2425 = vpop.f32.mrb[0].mxu0
        %v2426 = vadd.f32 0.0, %v2425
        %v2427 = vpop.f32.mrb[0].mxu0
        %2428 = vmatprep.mubr.f32.mxu0 0.0
        %2429 = vmatmul.mubr.f32.gmra.mrb[0].mxu0 %v2210
        %v2430 = vpop.f32.mrb[0].mxu0
        %v2431 = vadd.f32 0.0, %v2430
        %v2432 = vpop.f32.mrb[0].mxu0
        %2433 = vmatprep.mubr.f32.mxu0 0.0
        %2434 = vmatmul.mubr.f32.gmra.mrb[0].mxu0 %v2212
        %v2435 = vpop.f32.mrb[0].mxu0
        %v2436 = vadd.f32 0.0, %v2435
        %v2437 = vpop.f32.mrb[0].mxu0
        %2438 = vmatprep.mubr.f32.mxu0 0.0
        %2439 = vmatmul.mubr.f32.gmra.mrb[0].mxu0 %v2214
        %v2440 = vpop.f32.mrb[0].mxu0
        %v2441 = vadd.f32 0.0, %v2440
        %v2442 = vpop.f32.mrb[0].mxu0
        %2443 = vmatprep.mubr.f32.mxu0 0.0
        %2444 = vmatmul.mubr.f32.gmra.mrb[0].mxu0 %v2216
        %v2445 = vpop.f32.mrb[0].mxu0
        %v2446 = vadd.f32 0.0, %v2445
        %v2447 = vpop.f32.mrb[0].mxu0
        %2448 = vmatprep.mubr.f32.mxu0 0.0
        %2449 = vmatmul.mubr.f32.gmra.mrb[0].mxu0 %v2218
        %v2450 = vpop.f32.mrb[0].mxu0
        %v2451 = vadd.f32 0.0, %v2450
        %v2452 = vpop.f32.mrb[0].mxu0
        %2453 = vmatprep.mubr.f32.mxu0 0.0
        %2454 = vmatmul.mubr.f32.gmra.mrb[0].mxu0 %v2220
        %v2455 = vpop.f32.mrb[0].mxu0
        %v2456 = vadd.f32 0.0, %v2455
        %v2457 = vpop.f32.mrb[0].mxu0
        %2458 = vmatprep.mubr.f32.mxu0 0.0
        %2459 = vmatmul.mubr.f32.gmra.mrb[0].mxu0 %v2222
        %v2460 = vpop.f32.mrb[0].mxu0
        %v2461 = vadd.f32 0.0, %v2460
        %v2462 = vpop.f32.mrb[0].mxu0
        %2463 = vmatprep.mubr.f32.mxu0 0.0
        %2464 = vmatmul.mubr.f32.gmra.mrb[0].mxu0 %v2224
        %v2465 = vpop.f32.mrb[0].mxu0
        %v2466 = vadd.f32 0.0, %v2465
        %v2467 = vpop.f32.mrb[0].mxu0
        %2468 = vmatprep.mubr.f32.mxu0 0.0
        %2469 = vmatmul.mubr.f32.gmra.mrb[0].mxu0 %v2226
        %v2470 = vpop.f32.mrb[0].mxu0
        %v2471 = vadd.f32 0.0, %v2470
        %v2472 = vpop.f32.mrb[0].mxu0
        %2473 = vmatprep.mubr.f32.mxu0 0.0
        %2474 = vmatmul.mubr.f32.gmra.mrb[0].mxu0 %v2228
        %v2475 = vpop.f32.mrb[0].mxu0
        %v2476 = vadd.f32 0.0, %v2475
        %v2477 = vpop.f32.mrb[0].mxu0
        %2478 = vmatprep.mubr.f32.mxu0 0.0
        %2479 = vmatmul.mubr.f32.gmra.mrb[0].mxu0 %v2230
        %v2480 = vpop.f32.mrb[0].mxu0
        %v2481 = vadd.f32 0.0, %v2480
        %v2482 = vpop.f32.mrb[0].mxu0
        %2483 = vmatprep.mubr.f32.mxu0 0.0
        %2484 = vmatmul.mubr.f32.gmra.mrb[0].mxu0 %v2232
        %v2485 = vpop.f32.mrb[0].mxu0
        %v2486 = vadd.f32 0.0, %v2485
        %v2487 = vpop.f32.mrb[0].mxu0
        %2488 = vmatprep.mubr.f32.mxu0 0.0
        %2489 = vmatmul.mubr.f32.gmra.mrb[0].mxu0 %v2234
        %v2490 = vpop.f32.mrb[0].mxu0
        %v2491 = vadd.f32 0.0, %v2490
        %v2492 = vpop.f32.mrb[0].mxu0
        %2493 = vmatprep.mubr.f32.mxu0 0.0
        %2494 = vmatmul.mubr.f32.gmra.mrb[0].mxu0 %v2236
        %v2495 = vpop.f32.mrb[0].mxu0
        %v2496 = vadd.f32 0.0, %v2495
        %v2497 = vpop.f32.mrb[0].mxu0
        %2498 = vmatprep.mubr.f32.mxu0 0.0
        %2499 = vmatmul.mubr.f32.gmra.mrb[0].mxu0 %v2238
        %v2500 = vpop.f32.mrb[0].mxu0
        %v2501 = vpop.f32.mrb[0].mxu0
        %2502 = vmatprep.mubr.f32.mxu0 0.0
        %2503 = vmatmul.mubr.f32.gmra.mrb[0].mxu0 %v2240
        %v2504 = vpop.f32.mrb[0].mxu0
        %v2505 = vpop.f32.mrb[0].mxu0
        %2506 = vmatprep.mubr.f32.mxu0 0.0
        %2507 = vmatmul.mubr.f32.gmra.mrb[0].mxu0 %v2242
        %v2508 = vpop.f32.mrb[0].mxu0
        %v2509 = vpop.f32.mrb[0].mxu0
        %2510 = vdwg.mxu0
        %v2511 = vadd.f32 %v2041, %v2311
        %v2512 = vadd.f32 %v2042, %v2316
        %v2513 = vadd.f32 %v2043, %v2321
        %v2514 = vadd.f32 %v2044, %v2326
        %v2515 = vadd.f32 %v2045, %v2331
        %v2516 = vadd.f32 %v2046, %v2336
        %v2517 = vadd.f32 %v2047, %v2341
        %v2518 = vadd.f32 %v2048, %v2346
        %v2519 = vadd.f32 %v2049, %v2351
        %v2520 = vadd.f32 %v2050, %v2356
        %v2521 = vadd.f32 %v2051, %v2361
        %v2522 = vadd.f32 %v2052, %v2366
        %v2523 = vadd.f32 %v2053, %v2371
        %v2524 = vadd.f32 %v2054, %v2376
        %v2525 = vadd.f32 %v2055, %v2381
        %v2526 = vadd.f32 %v2056, %v2386
        %v2527 = vadd.f32 %v2057, %v2391
        %v2528 = vadd.f32 %v2058, %v2396
        %v2529 = vadd.f32 %v2059, %v2401
        %v2530 = vadd.f32 %v2060, %v2406
        %v2531 = vadd.f32 %v2061, %v2411
        %v2532 = vadd.f32 %v2062, %v2416
        %v2533 = vadd.f32 %v2063, %v2421
        %v2534 = vadd.f32 %v2064, %v2426
        %v2535 = vadd.f32 %v2065, %v2431
        %v2536 = vadd.f32 %v2066, %v2436
        %v2537 = vadd.f32 %v2067, %v2441
        %v2538 = vadd.f32 %v2068, %v2446
        %v2539 = vadd.f32 %v2069, %v2451
        %v2540 = vadd.f32 %v2070, %v2456
        %v2541 = vadd.f32 %v2071, %v2461
        %v2542 = vadd.f32 %v2072, %v2466
        %v2543 = vadd.f32 %v2073, %v2471
        %v2544 = vadd.f32 %v2074, %v2476
        %v2545 = vadd.f32 %v2075, %v2481
        %v2546 = vadd.f32 %v2076, %v2486
        %v2547 = vadd.f32 %v2077, %v2491
        %v2548 = vadd.f32 %v2078, %v2496
        %v2549 = vld [vmem:[%s1 + $0x28] sm:$0xff]
        %vm2550 = vcmask 1043456
        %v2551 = vrot.slane %v423, 4
        %v2552 = vrot.slane %v424, 4
        %v2553 = vsel %vm2550, %v2551, %v2552
        %v2554 = vrot.slane %v425, 4
        %v2555 = vsel %vm2550, %v2552, %v2554
        %v2556 = vrot.slane %v426, 4
        %v2557 = vsel %vm2550, %v2554, %v2556
        %v2558 = vrot.slane %v427, 4
        %v2559 = vsel %vm2550, %v2556, %v2558
        %v2560 = vrot.slane %v428, 4
        %v2561 = vsel %vm2550, %v2558, %v2560
        %v2562 = vrot.slane %v429, 4
        %v2563 = vsel %vm2550, %v2560, %v2562
        %v2564 = vrot.slane %v430, 4
        %v2565 = vsel %vm2550, %v2562, %v2564
        %v2566 = vrot.slane %v431, 4
        %v2567 = vsel %vm2550, %v2564, %v2566
        %v2568 = vrot.slane %v432, 4
        %v2569 = vsel %vm2550, %v2566, %v2568
        %v2570 = vrot.slane %v433, 4
        %v2571 = vsel %vm2550, %v2568, %v2570
        %v2572 = vrot.slane %v434, 4
        %v2573 = vsel %vm2550, %v2570, %v2572
        %v2574 = vrot.slane %v435, 4
        %v2575 = vsel %vm2550, %v2572, %v2574
        %v2576 = vrot.slane %v436, 4
        %v2577 = vsel %vm2550, %v2574, %v2576
        %v2578 = vrot.slane %v437, 4
        %v2579 = vsel %vm2550, %v2576, %v2578
        %v2580 = vrot.slane %v438, 4
        %v2581 = vsel %vm2550, %v2578, %v2580
        %v2582 = vrot.slane %v439, 4
        %v2583 = vsel %vm2550, %v2580, %v2582
        %v2584 = vrot.slane %v440, 4
        %v2585 = vsel %vm2550, %v2582, %v2584
        %v2586 = vrot.slane %v441, 4
        %v2587 = vsel %vm2550, %v2584, %v2586
        %v2588 = vrot.slane %v442, 4
        %v2589 = vsel %vm2550, %v2586, %v2588
        %v2590 = vrot.slane %v443, 4
        %v2591 = vsel %vm2550, %v2588, %v2590
        %v2592 = vrot.slane %v444, 4
        %v2593 = vsel %vm2550, %v2590, %v2592
        %v2594 = vrot.slane %v445, 4
        %v2595 = vsel %vm2550, %v2592, %v2594
        %v2596 = vrot.slane %v446, 4
        %v2597 = vsel %vm2550, %v2594, %v2596
        %v2598 = vrot.slane %v447, 4
        %v2599 = vsel %vm2550, %v2596, %v2598
        %v2600 = vrot.slane %v448, 4
        %v2601 = vsel %vm2550, %v2598, %v2600
        %v2602 = vrot.slane %v449, 4
        %v2603 = vsel %vm2550, %v2600, %v2602
        %v2604 = vrot.slane %v450, 4
        %v2605 = vsel %vm2550, %v2602, %v2604
        %v2606 = vrot.slane %v451, 4
        %v2607 = vsel %vm2550, %v2604, %v2606
        %v2608 = vrot.slane %v452, 4
        %v2609 = vsel %vm2550, %v2606, %v2608
        %v2610 = vrot.slane %v453, 4
        %v2611 = vsel %vm2550, %v2608, %v2610
        %v2612 = vrot.slane %v454, 4
        %v2613 = vsel %vm2550, %v2610, %v2612
        %v2614 = vrot.slane %v455, 4
        %v2615 = vsel %vm2550, %v2612, %v2614
        %v2616 = vrot.slane %v456, 4
        %v2617 = vsel %vm2550, %v2614, %v2616
        %v2618 = vrot.slane %v457, 4
        %v2619 = vsel %vm2550, %v2616, %v2618
        %v2620 = vrot.slane %v458, 4
        %v2621 = vsel %vm2550, %v2618, %v2620
        %v2622 = vrot.slane %v459, 4
        %v2623 = vsel %vm2550, %v2620, %v2622
        %v2624 = vrot.slane %v460, 4
        %v2625 = vsel %vm2550, %v2622, %v2624
        %v2626 = vrot.slane %v461, 4
        %v2627 = vsel %vm2550, %v2624, %v2626
        %v2628 = vrot.slane %v462, 4
        %v2629 = vsel %vm2550, %v2626, %v2628
        %v2630 = vrot.slane %v463, 4
        %v2631 = vsel %vm2550, %v2628, %v2630
        %v2632 = vsel %vm592, %v2553, 0
        %v2634 = vsel %vm592, %v2555, 0
        %v2636 = vsel %vm592, %v2557, 0
        %v2638 = vsel %vm592, %v2559, 0
        %v2640 = vsel %vm592, %v2561, 0
        %v2642 = vsel %vm592, %v2563, 0
        %v2644 = vsel %vm592, %v2565, 0
        %v2646 = vsel %vm592, %v2567, 0
        %v2648 = vsel %vm592, %v2569, 0
        %v2650 = vsel %vm592, %v2571, 0
        %v2652 = vsel %vm592, %v2573, 0
        %v2654 = vsel %vm592, %v2575, 0
        %v2656 = vsel %vm592, %v2577, 0
        %v2658 = vsel %vm592, %v2579, 0
        %v2660 = vsel %vm592, %v2581, 0
        %v2662 = vsel %vm592, %v2583, 0
        %v2664 = vsel %vm592, %v2585, 0
        %v2666 = vsel %vm592, %v2587, 0
        %v2668 = vsel %vm592, %v2589, 0
        %v2670 = vsel %vm592, %v2591, 0
        %v2672 = vsel %vm592, %v2593, 0
        %v2674 = vsel %vm592, %v2595, 0
        %v2676 = vsel %vm592, %v2597, 0
        %v2678 = vsel %vm592, %v2599, 0
        %v2680 = vsel %vm592, %v2601, 0
        %v2682 = vsel %vm592, %v2603, 0
        %v2684 = vsel %vm592, %v2605, 0
        %v2686 = vsel %vm592, %v2607, 0
        %v2688 = vsel %vm592, %v2609, 0
        %v2690 = vsel %vm592, %v2611, 0
        %v2692 = vsel %vm592, %v2613, 0
        %v2694 = vsel %vm592, %v2615, 0
        %v2696 = vsel %vm592, %v2617, 0
        %v2698 = vsel %vm592, %v2619, 0
        %v2700 = vsel %vm592, %v2621, 0
        %v2702 = vsel %vm592, %v2623, 0
        %v2704 = vsel %vm592, %v2625, 0
        %v2706 = vsel %vm592, %v2627, 0
        %v2708 = vsel %vm592, %v2629, 0
        %v2710 = vsel %vm592, %v2631, 0
        %v2712 = vsel %vm592, %v2630, 0
        %2714 = vmatprep.subr.mxu0 0.0
        %2715 = vmatpush1.msra.mxu0 %v2549
        %2716 = vmatprep.subr.mxu0 0.0
        %2717 = vmatpush1.msra.mxu0 0.0
        %2718 = vmatprep.subr.mxu0 0.0
        %2719 = vmatpush1.msra.mxu0 0.0
        %2720 = vmatprep.subr.mxu0 0.0
        %2721 = vmatpush1.msra.mxu0 0.0
        %2722 = vmatprep.subr.mxu0 0.0
        %2723 = vmatpush1.msra.mxu0 0.0
        %2724 = vmatprep.subr.mxu0 0.0
        %2725 = vmatpush1.msra.mxu0 0.0
        %2726 = vmatprep.subr.mxu0 0.0
        %2727 = vmatpush1.msra.mxu0 0.0
        %2728 = vmatprep.subr.mxu0 0.0
        %2729 = vmatpush1.msra.mxu0 0.0
        %2730 = vmatprep.subr.mxu0 0.0
        %2731 = vmatpush1.msra.mxu0 0.0
        %2732 = vmatprep.subr.mxu0 0.0
        %2733 = vmatpush1.msra.mxu0 0.0
        %2734 = vmatprep.subr.mxu0 0.0
        %2735 = vmatpush1.msra.mxu0 0.0
        %2736 = vmatprep.subr.mxu0 0.0
        %2737 = vmatpush1.msra.mxu0 0.0
        %2738 = vmatprep.subr.mxu0 0.0
        %2739 = vmatpush1.msra.mxu0 0.0
        %2740 = vmatprep.subr.mxu0 0.0
        %2741 = vmatpush1.msra.mxu0 0.0
        %2742 = vmatprep.subr.mxu0 0.0
        %2743 = vmatpush1.msra.mxu0 0.0
        %2744 = vmatprep.subr.mxu0 0.0
        %2745 = vmatpush1.msra.mxu0 0.0
        %2746 = vmatprep.subr.mxu0 0.0
        %2747 = vmatpush1.msra.mxu0 0.0
        %2748 = vmatprep.subr.mxu0 0.0
        %2749 = vmatpush1.msra.mxu0 0.0
        %2750 = vmatprep.subr.mxu0 0.0
        %2751 = vmatpush1.msra.mxu0 0.0
        %2752 = vmatprep.subr.mxu0 0.0
        %2753 = vmatpush1.msra.mxu0 0.0
        %2754 = vmatprep.subr.mxu0 0.0
        %2755 = vmatpush1.msra.mxu0 0.0
        %2756 = vmatprep.subr.mxu0 0.0
        %2757 = vmatpush1.msra.mxu0 0.0
        %2758 = vmatprep.subr.mxu0 0.0
        %2759 = vmatpush1.msra.mxu0 0.0
        %2760 = vmatprep.subr.mxu0 0.0
        %2761 = vmatpush1.msra.mxu0 0.0
        %2762 = vmatprep.subr.mxu0 0.0
        %2763 = vmatpush1.msra.mxu0 0.0
        %2764 = vmatprep.subr.mxu0 0.0
        %2765 = vmatpush1.msra.mxu0 0.0
        %2766 = vmatprep.subr.mxu0 0.0
        %2767 = vmatpush1.msra.mxu0 0.0
        %2768 = vmatprep.subr.mxu0 0.0
        %2769 = vmatpush1.msra.mxu0 0.0
        %2770 = vmatprep.subr.mxu0 0.0
        %2771 = vmatpush1.msra.mxu0 0.0
        %2772 = vmatprep.subr.mxu0 0.0
        %2773 = vmatpush1.msra.mxu0 0.0
        %2774 = vmatprep.subr.mxu0 0.0
        %2775 = vmatpush1.msra.mxu0 0.0
        %2776 = vmatprep.subr.mxu0 0.0
        %2777 = vmatpush1.msra.mxu0 0.0
        %2778 = vmatprep.mubr.f32.mxu0 0.0
        %2779 = vmatmul.mubr.f32.gmra.mrb[0].mxu0 %v2632
        %v2780 = vpop.f32.mrb[0].mxu0
        %v2781 = vadd.f32 0.0, %v2780
        %v2782 = vpop.f32.mrb[0].mxu0
        %2783 = vmatprep.mubr.f32.mxu0 0.0
        %2784 = vmatmul.mubr.f32.gmra.mrb[0].mxu0 %v2634
        %v2785 = vpop.f32.mrb[0].mxu0
        %v2786 = vadd.f32 0.0, %v2785
        %v2787 = vpop.f32.mrb[0].mxu0
        %2788 = vmatprep.mubr.f32.mxu0 0.0
        %2789 = vmatmul.mubr.f32.gmra.mrb[0].mxu0 %v2636
        %v2790 = vpop.f32.mrb[0].mxu0
        %v2791 = vadd.f32 0.0, %v2790
        %v2792 = vpop.f32.mrb[0].mxu0
        %2793 = vmatprep.mubr.f32.mxu0 0.0
        %2794 = vmatmul.mubr.f32.gmra.mrb[0].mxu0 %v2638
        %v2795 = vpop.f32.mrb[0].mxu0
        %v2796 = vadd.f32 0.0, %v2795
        %v2797 = vpop.f32.mrb[0].mxu0
        %2798 = vmatprep.mubr.f32.mxu0 0.0
        %2799 = vmatmul.mubr.f32.gmra.mrb[0].mxu0 %v2640
        %v2800 = vpop.f32.mrb[0].mxu0
        %v2801 = vadd.f32 0.0, %v2800
        %v2802 = vpop.f32.mrb[0].mxu0
        %2803 = vmatprep.mubr.f32.mxu0 0.0
        %2804 = vmatmul.mubr.f32.gmra.mrb[0].mxu0 %v2642
        %v2805 = vpop.f32.mrb[0].mxu0
        %v2806 = vadd.f32 0.0, %v2805
        %v2807 = vpop.f32.mrb[0].mxu0
        %2808 = vmatprep.mubr.f32.mxu0 0.0
        %2809 = vmatmul.mubr.f32.gmra.mrb[0].mxu0 %v2644
        %v2810 = vpop.f32.mrb[0].mxu0
        %v2811 = vadd.f32 0.0, %v2810
        %v2812 = vpop.f32.mrb[0].mxu0
        %2813 = vmatprep.mubr.f32.mxu0 0.0
        %2814 = vmatmul.mubr.f32.gmra.mrb[0].mxu0 %v2646
        %v2815 = vpop.f32.mrb[0].mxu0
        %v2816 = vadd.f32 0.0, %v2815
        %v2817 = vpop.f32.mrb[0].mxu0
        %2818 = vmatprep.mubr.f32.mxu0 0.0
        %2819 = vmatmul.mubr.f32.gmra.mrb[0].mxu0 %v2648
        %v2820 = vpop.f32.mrb[0].mxu0
        %v2821 = vadd.f32 0.0, %v2820
        %v2822 = vpop.f32.mrb[0].mxu0
        %2823 = vmatprep.mubr.f32.mxu0 0.0
        %2824 = vmatmul.mubr.f32.gmra.mrb[0].mxu0 %v2650
        %v2825 = vpop.f32.mrb[0].mxu0
        %v2826 = vadd.f32 0.0, %v2825
        %v2827 = vpop.f32.mrb[0].mxu0
        %2828 = vmatprep.mubr.f32.mxu0 0.0
        %2829 = vmatmul.mubr.f32.gmra.mrb[0].mxu0 %v2652
        %v2830 = vpop.f32.mrb[0].mxu0
        %v2831 = vadd.f32 0.0, %v2830
        %v2832 = vpop.f32.mrb[0].mxu0
        %2833 = vmatprep.mubr.f32.mxu0 0.0
        %2834 = vmatmul.mubr.f32.gmra.mrb[0].mxu0 %v2654
        %v2835 = vpop.f32.mrb[0].mxu0
        %v2836 = vadd.f32 0.0, %v2835
        %v2837 = vpop.f32.mrb[0].mxu0
        %2838 = vmatprep.mubr.f32.mxu0 0.0
        %2839 = vmatmul.mubr.f32.gmra.mrb[0].mxu0 %v2656
        %v2840 = vpop.f32.mrb[0].mxu0
        %v2841 = vadd.f32 0.0, %v2840
        %v2842 = vpop.f32.mrb[0].mxu0
        %2843 = vmatprep.mubr.f32.mxu0 0.0
        %2844 = vmatmul.mubr.f32.gmra.mrb[0].mxu0 %v2658
        %v2845 = vpop.f32.mrb[0].mxu0
        %v2846 = vadd.f32 0.0, %v2845
        %v2847 = vpop.f32.mrb[0].mxu0
        %2848 = vmatprep.mubr.f32.mxu0 0.0
        %2849 = vmatmul.mubr.f32.gmra.mrb[0].mxu0 %v2660
        %v2850 = vpop.f32.mrb[0].mxu0
        %v2851 = vadd.f32 0.0, %v2850
        %v2852 = vpop.f32.mrb[0].mxu0
        %2853 = vmatprep.mubr.f32.mxu0 0.0
        %2854 = vmatmul.mubr.f32.gmra.mrb[0].mxu0 %v2662
        %v2855 = vpop.f32.mrb[0].mxu0
        %v2856 = vadd.f32 0.0, %v2855
        %v2857 = vpop.f32.mrb[0].mxu0
        %2858 = vmatprep.mubr.f32.mxu0 0.0
        %2859 = vmatmul.mubr.f32.gmra.mrb[0].mxu0 %v2664
        %v2860 = vpop.f32.mrb[0].mxu0
        %v2861 = vadd.f32 0.0, %v2860
        %v2862 = vpop.f32.mrb[0].mxu0
        %2863 = vmatprep.mubr.f32.mxu0 0.0
        %2864 = vmatmul.mubr.f32.gmra.mrb[0].mxu0 %v2666
        %v2865 = vpop.f32.mrb[0].mxu0
        %v2866 = vadd.f32 0.0, %v2865
        %v2867 = vpop.f32.mrb[0].mxu0
        %2868 = vmatprep.mubr.f32.mxu0 0.0
        %2869 = vmatmul.mubr.f32.gmra.mrb[0].mxu0 %v2668
        %v2870 = vpop.f32.mrb[0].mxu0
        %v2871 = vadd.f32 0.0, %v2870
        %v2872 = vpop.f32.mrb[0].mxu0
        %2873 = vmatprep.mubr.f32.mxu0 0.0
        %2874 = vmatmul.mubr.f32.gmra.mrb[0].mxu0 %v2670
        %v2875 = vpop.f32.mrb[0].mxu0
        %v2876 = vadd.f32 0.0, %v2875
        %v2877 = vpop.f32.mrb[0].mxu0
        %2878 = vmatprep.mubr.f32.mxu0 0.0
        %2879 = vmatmul.mubr.f32.gmra.mrb[0].mxu0 %v2672
        %v2880 = vpop.f32.mrb[0].mxu0
        %v2881 = vadd.f32 0.0, %v2880
        %v2882 = vpop.f32.mrb[0].mxu0
        %2883 = vmatprep.mubr.f32.mxu0 0.0
        %2884 = vmatmul.mubr.f32.gmra.mrb[0].mxu0 %v2674
        %v2885 = vpop.f32.mrb[0].mxu0
        %v2886 = vadd.f32 0.0, %v2885
        %v2887 = vpop.f32.mrb[0].mxu0
        %2888 = vmatprep.mubr.f32.mxu0 0.0
        %2889 = vmatmul.mubr.f32.gmra.mrb[0].mxu0 %v2676
        %v2890 = vpop.f32.mrb[0].mxu0
        %v2891 = vadd.f32 0.0, %v2890
        %v2892 = vpop.f32.mrb[0].mxu0
        %2893 = vmatprep.mubr.f32.mxu0 0.0
        %2894 = vmatmul.mubr.f32.gmra.mrb[0].mxu0 %v2678
        %v2895 = vpop.f32.mrb[0].mxu0
        %v2896 = vadd.f32 0.0, %v2895
        %v2897 = vpop.f32.mrb[0].mxu0
        %2898 = vmatprep.mubr.f32.mxu0 0.0
        %2899 = vmatmul.mubr.f32.gmra.mrb[0].mxu0 %v2680
        %v2900 = vpop.f32.mrb[0].mxu0
        %v2901 = vadd.f32 0.0, %v2900
        %v2902 = vpop.f32.mrb[0].mxu0
        %2903 = vmatprep.mubr.f32.mxu0 0.0
        %2904 = vmatmul.mubr.f32.gmra.mrb[0].mxu0 %v2682
        %v2905 = vpop.f32.mrb[0].mxu0
        %v2906 = vadd.f32 0.0, %v2905
        %v2907 = vpop.f32.mrb[0].mxu0
        %2908 = vmatprep.mubr.f32.mxu0 0.0
        %2909 = vmatmul.mubr.f32.gmra.mrb[0].mxu0 %v2684
        %v2910 = vpop.f32.mrb[0].mxu0
        %v2911 = vadd.f32 0.0, %v2910
        %v2912 = vpop.f32.mrb[0].mxu0
        %2913 = vmatprep.mubr.f32.mxu0 0.0
        %2914 = vmatmul.mubr.f32.gmra.mrb[0].mxu0 %v2686
        %v2915 = vpop.f32.mrb[0].mxu0
        %v2916 = vadd.f32 0.0, %v2915
        %v2917 = vpop.f32.mrb[0].mxu0
        %2918 = vmatprep.mubr.f32.mxu0 0.0
        %2919 = vmatmul.mubr.f32.gmra.mrb[0].mxu0 %v2688
        %v2920 = vpop.f32.mrb[0].mxu0
        %v2921 = vadd.f32 0.0, %v2920
        %v2922 = vpop.f32.mrb[0].mxu0
        %2923 = vmatprep.mubr.f32.mxu0 0.0
        %2924 = vmatmul.mubr.f32.gmra.mrb[0].mxu0 %v2690
        %v2925 = vpop.f32.mrb[0].mxu0
        %v2926 = vadd.f32 0.0, %v2925
        %v2927 = vpop.f32.mrb[0].mxu0
        %2928 = vmatprep.mubr.f32.mxu0 0.0
        %2929 = vmatmul.mubr.f32.gmra.mrb[0].mxu0 %v2692
        %v2930 = vpop.f32.mrb[0].mxu0
        %v2931 = vadd.f32 0.0, %v2930
        %v2932 = vpop.f32.mrb[0].mxu0
        %2933 = vmatprep.mubr.f32.mxu0 0.0
        %2934 = vmatmul.mubr.f32.gmra.mrb[0].mxu0 %v2694
        %v2935 = vpop.f32.mrb[0].mxu0
        %v2936 = vadd.f32 0.0, %v2935
        %v2937 = vpop.f32.mrb[0].mxu0
        %2938 = vmatprep.mubr.f32.mxu0 0.0
        %2939 = vmatmul.mubr.f32.gmra.mrb[0].mxu0 %v2696
        %v2940 = vpop.f32.mrb[0].mxu0
        %v2941 = vadd.f32 0.0, %v2940
        %v2942 = vpop.f32.mrb[0].mxu0
        %2943 = vmatprep.mubr.f32.mxu0 0.0
        %2944 = vmatmul.mubr.f32.gmra.mrb[0].mxu0 %v2698
        %v2945 = vpop.f32.mrb[0].mxu0
        %v2946 = vadd.f32 0.0, %v2945
        %v2947 = vpop.f32.mrb[0].mxu0
        %2948 = vmatprep.mubr.f32.mxu0 0.0
        %2949 = vmatmul.mubr.f32.gmra.mrb[0].mxu0 %v2700
        %v2950 = vpop.f32.mrb[0].mxu0
        %v2951 = vadd.f32 0.0, %v2950
        %v2952 = vpop.f32.mrb[0].mxu0
        %2953 = vmatprep.mubr.f32.mxu0 0.0
        %2954 = vmatmul.mubr.f32.gmra.mrb[0].mxu0 %v2702
        %v2955 = vpop.f32.mrb[0].mxu0
        %v2956 = vadd.f32 0.0, %v2955
        %v2957 = vpop.f32.mrb[0].mxu0
        %2958 = vmatprep.mubr.f32.mxu0 0.0
        %2959 = vmatmul.mubr.f32.gmra.mrb[0].mxu0 %v2704
        %v2960 = vpop.f32.mrb[0].mxu0
        %v2961 = vadd.f32 0.0, %v2960
        %v2962 = vpop.f32.mrb[0].mxu0
        %2963 = vmatprep.mubr.f32.mxu0 0.0
        %2964 = vmatmul.mubr.f32.gmra.mrb[0].mxu0 %v2706
        %v2965 = vpop.f32.mrb[0].mxu0
        %v2966 = vadd.f32 0.0, %v2965
        %v2967 = vpop.f32.mrb[0].mxu0
        %2968 = vmatprep.mubr.f32.mxu0 0.0
        %2969 = vmatmul.mubr.f32.gmra.mrb[0].mxu0 %v2708
        %v2970 = vpop.f32.mrb[0].mxu0
        %v2971 = vpop.f32.mrb[0].mxu0
        %2972 = vmatprep.mubr.f32.mxu0 0.0
        %2973 = vmatmul.mubr.f32.gmra.mrb[0].mxu0 %v2710
        %v2974 = vpop.f32.mrb[0].mxu0
        %v2975 = vpop.f32.mrb[0].mxu0
        %2976 = vmatprep.mubr.f32.mxu0 0.0
        %2977 = vmatmul.mubr.f32.gmra.mrb[0].mxu0 %v2712
        %v2978 = vpop.f32.mrb[0].mxu0
        %v2979 = vpop.f32.mrb[0].mxu0
        %2980 = vdwg.mxu0
        %v2981 = vadd.f32 %v2511, %v2781
        %v2982 = vadd.f32 %v2512, %v2786
        %v2983 = vadd.f32 %v2513, %v2791
        %v2984 = vadd.f32 %v2514, %v2796
        %v2985 = vadd.f32 %v2515, %v2801
        %v2986 = vadd.f32 %v2516, %v2806
        %v2987 = vadd.f32 %v2517, %v2811
        %v2988 = vadd.f32 %v2518, %v2816
        %v2989 = vadd.f32 %v2519, %v2821
        %v2990 = vadd.f32 %v2520, %v2826
        %v2991 = vadd.f32 %v2521, %v2831
        %v2992 = vadd.f32 %v2522, %v2836
        %v2993 = vadd.f32 %v2523, %v2841
        %v2994 = vadd.f32 %v2524, %v2846
        %v2995 = vadd.f32 %v2525, %v2851
        %v2996 = vadd.f32 %v2526, %v2856
        %v2997 = vadd.f32 %v2527, %v2861
        %v2998 = vadd.f32 %v2528, %v2866
        %v2999 = vadd.f32 %v2529, %v2871
        %v3000 = vadd.f32 %v2530, %v2876
        %v3001 = vadd.f32 %v2531, %v2881
        %v3002 = vadd.f32 %v2532, %v2886
        %v3003 = vadd.f32 %v2533, %v2891
        %v3004 = vadd.f32 %v2534, %v2896
        %v3005 = vadd.f32 %v2535, %v2901
        %v3006 = vadd.f32 %v2536, %v2906
        %v3007 = vadd.f32 %v2537, %v2911
        %v3008 = vadd.f32 %v2538, %v2916
        %v3009 = vadd.f32 %v2539, %v2921
        %v3010 = vadd.f32 %v2540, %v2926
        %v3011 = vadd.f32 %v2541, %v2931
        %v3012 = vadd.f32 %v2542, %v2936
        %v3013 = vadd.f32 %v2543, %v2941
        %v3014 = vadd.f32 %v2544, %v2946
        %v3015 = vadd.f32 %v2545, %v2951
        %v3016 = vadd.f32 %v2546, %v2956
        %v3017 = vadd.f32 %v2547, %v2961
        %v3018 = vadd.f32 %v2548, %v2966
        %v3019 = vld [vmem:[%s1 + $0x30] sm:$0xff]
        %v3022 = vrot.slane %v464, 4
        %v3023 = vsel %vm2550, %v2630, %v3022
        %v3024 = vrot.slane %v465, 4
        %v3025 = vsel %vm2550, %v3022, %v3024
        %v3026 = vsel %vm592, %v3023, 0
        %v3028 = vsel %vm592, %v3025, 0
        %v3030 = vsel %vm592, %v3024, 0
        %3032 = vmatprep.subr.mxu0 0.0
        %3033 = vmatpush1.msra.mxu0 %v3019
        %3034 = vmatprep.subr.mxu0 0.0
        %3035 = vmatpush1.msra.mxu0 0.0
        %3036 = vmatprep.subr.mxu0 0.0
        %3037 = vmatpush1.msra.mxu0 0.0
        %3038 = vmatprep.subr.mxu0 0.0
        %3039 = vmatpush1.msra.mxu0 0.0
        %3040 = vmatprep.subr.mxu0 0.0
        %3041 = vmatpush1.msra.mxu0 0.0
        %3042 = vmatprep.subr.mxu0 0.0
        %3043 = vmatpush1.msra.mxu0 0.0
        %3044 = vmatprep.subr.mxu0 0.0
        %3045 = vmatpush1.msra.mxu0 0.0
        %3046 = vmatprep.subr.mxu0 0.0
        %3047 = vmatpush1.msra.mxu0 0.0
        %3048 = vmatprep.subr.mxu0 0.0
        %3049 = vmatpush1.msra.mxu0 0.0
        %3050 = vmatprep.subr.mxu0 0.0
        %3051 = vmatpush1.msra.mxu0 0.0
        %3052 = vmatprep.subr.mxu0 0.0
        %3053 = vmatpush1.msra.mxu0 0.0
        %3054 = vmatprep.subr.mxu0 0.0
        %3055 = vmatpush1.msra.mxu0 0.0
        %3056 = vmatprep.subr.mxu0 0.0
        %3057 = vmatpush1.msra.mxu0 0.0
        %3058 = vmatprep.subr.mxu0 0.0
        %3059 = vmatpush1.msra.mxu0 0.0
        %3060 = vmatprep.subr.mxu0 0.0
        %3061 = vmatpush1.msra.mxu0 0.0
        %3062 = vmatprep.subr.mxu0 0.0
        %3063 = vmatpush1.msra.mxu0 0.0
        %3064 = vmatprep.subr.mxu0 0.0
        %3065 = vmatpush1.msra.mxu0 0.0
        %3066 = vmatprep.subr.mxu0 0.0
        %3067 = vmatpush1.msra.mxu0 0.0
        %3068 = vmatprep.subr.mxu0 0.0
        %3069 = vmatpush1.msra.mxu0 0.0
        %3070 = vmatprep.subr.mxu0 0.0
        %3071 = vmatpush1.msra.mxu0 0.0
        %3072 = vmatprep.subr.mxu0 0.0
        %3073 = vmatpush1.msra.mxu0 0.0
        %3074 = vmatprep.subr.mxu0 0.0
        %3075 = vmatpush1.msra.mxu0 0.0
        %3076 = vmatprep.subr.mxu0 0.0
        %3077 = vmatpush1.msra.mxu0 0.0
        %3078 = vmatprep.subr.mxu0 0.0
        %3079 = vmatpush1.msra.mxu0 0.0
        %3080 = vmatprep.subr.mxu0 0.0
        %3081 = vmatpush1.msra.mxu0 0.0
        %3082 = vmatprep.subr.mxu0 0.0
        %3083 = vmatpush1.msra.mxu0 0.0
        %3084 = vmatprep.subr.mxu0 0.0
        %3085 = vmatpush1.msra.mxu0 0.0
        %3086 = vmatprep.subr.mxu0 0.0
        %3087 = vmatpush1.msra.mxu0 0.0
        %3088 = vmatprep.subr.mxu0 0.0
        %3089 = vmatpush1.msra.mxu0 0.0
        %3090 = vmatprep.subr.mxu0 0.0
        %3091 = vmatpush1.msra.mxu0 0.0
        %3092 = vmatprep.subr.mxu0 0.0
        %3093 = vmatpush1.msra.mxu0 0.0
        %3094 = vmatprep.subr.mxu0 0.0
        %3095 = vmatpush1.msra.mxu0 0.0
        %3096 = vmatprep.mubr.f32.mxu0 0.0
        %3097 = vmatmul.mubr.f32.gmra.mrb[0].mxu0 %v2636
        %v3098 = vpop.f32.mrb[0].mxu0
        %v3099 = vadd.f32 0.0, %v3098
        %v3100 = vpop.f32.mrb[0].mxu0
        %3101 = vmatprep.mubr.f32.mxu0 0.0
        %3102 = vmatmul.mubr.f32.gmra.mrb[0].mxu0 %v2638
        %v3103 = vpop.f32.mrb[0].mxu0
        %v3104 = vadd.f32 0.0, %v3103
        %v3105 = vpop.f32.mrb[0].mxu0
        %3106 = vmatprep.mubr.f32.mxu0 0.0
        %3107 = vmatmul.mubr.f32.gmra.mrb[0].mxu0 %v2640
        %v3108 = vpop.f32.mrb[0].mxu0
        %v3109 = vadd.f32 0.0, %v3108
        %v3110 = vpop.f32.mrb[0].mxu0
        %3111 = vmatprep.mubr.f32.mxu0 0.0
        %3112 = vmatmul.mubr.f32.gmra.mrb[0].mxu0 %v2642
        %v3113 = vpop.f32.mrb[0].mxu0
        %v3114 = vadd.f32 0.0, %v3113
        %v3115 = vpop.f32.mrb[0].mxu0
        %3116 = vmatprep.mubr.f32.mxu0 0.0
        %3117 = vmatmul.mubr.f32.gmra.mrb[0].mxu0 %v2644
        %v3118 = vpop.f32.mrb[0].mxu0
        %v3119 = vadd.f32 0.0, %v3118
        %v3120 = vpop.f32.mrb[0].mxu0
        %3121 = vmatprep.mubr.f32.mxu0 0.0
        %3122 = vmatmul.mubr.f32.gmra.mrb[0].mxu0 %v2646
        %v3123 = vpop.f32.mrb[0].mxu0
        %v3124 = vadd.f32 0.0, %v3123
        %v3125 = vpop.f32.mrb[0].mxu0
        %3126 = vmatprep.mubr.f32.mxu0 0.0
        %3127 = vmatmul.mubr.f32.gmra.mrb[0].mxu0 %v2648
        %v3128 = vpop.f32.mrb[0].mxu0
        %v3129 = vadd.f32 0.0, %v3128
        %v3130 = vpop.f32.mrb[0].mxu0
        %3131 = vmatprep.mubr.f32.mxu0 0.0
        %3132 = vmatmul.mubr.f32.gmra.mrb[0].mxu0 %v2650
        %v3133 = vpop.f32.mrb[0].mxu0
        %v3134 = vadd.f32 0.0, %v3133
        %v3135 = vpop.f32.mrb[0].mxu0
        %3136 = vmatprep.mubr.f32.mxu0 0.0
        %3137 = vmatmul.mubr.f32.gmra.mrb[0].mxu0 %v2652
        %v3138 = vpop.f32.mrb[0].mxu0
        %v3139 = vadd.f32 0.0, %v3138
        %v3140 = vpop.f32.mrb[0].mxu0
        %3141 = vmatprep.mubr.f32.mxu0 0.0
        %3142 = vmatmul.mubr.f32.gmra.mrb[0].mxu0 %v2654
        %v3143 = vpop.f32.mrb[0].mxu0
        %v3144 = vadd.f32 0.0, %v3143
        %v3145 = vpop.f32.mrb[0].mxu0
        %3146 = vmatprep.mubr.f32.mxu0 0.0
        %3147 = vmatmul.mubr.f32.gmra.mrb[0].mxu0 %v2656
        %v3148 = vpop.f32.mrb[0].mxu0
        %v3149 = vadd.f32 0.0, %v3148
        %v3150 = vpop.f32.mrb[0].mxu0
        %3151 = vmatprep.mubr.f32.mxu0 0.0
        %3152 = vmatmul.mubr.f32.gmra.mrb[0].mxu0 %v2658
        %v3153 = vpop.f32.mrb[0].mxu0
        %v3154 = vadd.f32 0.0, %v3153
        %v3155 = vpop.f32.mrb[0].mxu0
        %3156 = vmatprep.mubr.f32.mxu0 0.0
        %3157 = vmatmul.mubr.f32.gmra.mrb[0].mxu0 %v2660
        %v3158 = vpop.f32.mrb[0].mxu0
        %v3159 = vadd.f32 0.0, %v3158
        %v3160 = vpop.f32.mrb[0].mxu0
        %3161 = vmatprep.mubr.f32.mxu0 0.0
        %3162 = vmatmul.mubr.f32.gmra.mrb[0].mxu0 %v2662
        %v3163 = vpop.f32.mrb[0].mxu0
        %v3164 = vadd.f32 0.0, %v3163
        %v3165 = vpop.f32.mrb[0].mxu0
        %3166 = vmatprep.mubr.f32.mxu0 0.0
        %3167 = vmatmul.mubr.f32.gmra.mrb[0].mxu0 %v2664
        %v3168 = vpop.f32.mrb[0].mxu0
        %v3169 = vadd.f32 0.0, %v3168
        %v3170 = vpop.f32.mrb[0].mxu0
        %3171 = vmatprep.mubr.f32.mxu0 0.0
        %3172 = vmatmul.mubr.f32.gmra.mrb[0].mxu0 %v2666
        %v3173 = vpop.f32.mrb[0].mxu0
        %v3174 = vadd.f32 0.0, %v3173
        %v3175 = vpop.f32.mrb[0].mxu0
        %3176 = vmatprep.mubr.f32.mxu0 0.0
        %3177 = vmatmul.mubr.f32.gmra.mrb[0].mxu0 %v2668
        %v3178 = vpop.f32.mrb[0].mxu0
        %v3179 = vadd.f32 0.0, %v3178
        %v3180 = vpop.f32.mrb[0].mxu0
        %3181 = vmatprep.mubr.f32.mxu0 0.0
        %3182 = vmatmul.mubr.f32.gmra.mrb[0].mxu0 %v2670
        %v3183 = vpop.f32.mrb[0].mxu0
        %v3184 = vadd.f32 0.0, %v3183
        %v3185 = vpop.f32.mrb[0].mxu0
        %3186 = vmatprep.mubr.f32.mxu0 0.0
        %3187 = vmatmul.mubr.f32.gmra.mrb[0].mxu0 %v2672
        %v3188 = vpop.f32.mrb[0].mxu0
        %v3189 = vadd.f32 0.0, %v3188
        %v3190 = vpop.f32.mrb[0].mxu0
        %3191 = vmatprep.mubr.f32.mxu0 0.0
        %3192 = vmatmul.mubr.f32.gmra.mrb[0].mxu0 %v2674
        %v3193 = vpop.f32.mrb[0].mxu0
        %v3194 = vadd.f32 0.0, %v3193
        %v3195 = vpop.f32.mrb[0].mxu0
        %3196 = vmatprep.mubr.f32.mxu0 0.0
        %3197 = vmatmul.mubr.f32.gmra.mrb[0].mxu0 %v2676
        %v3198 = vpop.f32.mrb[0].mxu0
        %v3199 = vadd.f32 0.0, %v3198
        %v3200 = vpop.f32.mrb[0].mxu0
        %3201 = vmatprep.mubr.f32.mxu0 0.0
        %3202 = vmatmul.mubr.f32.gmra.mrb[0].mxu0 %v2678
        %v3203 = vpop.f32.mrb[0].mxu0
        %v3204 = vadd.f32 0.0, %v3203
        %v3205 = vpop.f32.mrb[0].mxu0
        %3206 = vmatprep.mubr.f32.mxu0 0.0
        %3207 = vmatmul.mubr.f32.gmra.mrb[0].mxu0 %v2680
        %v3208 = vpop.f32.mrb[0].mxu0
        %v3209 = vadd.f32 0.0, %v3208
        %v3210 = vpop.f32.mrb[0].mxu0
        %3211 = vmatprep.mubr.f32.mxu0 0.0
        %3212 = vmatmul.mubr.f32.gmra.mrb[0].mxu0 %v2682
        %v3213 = vpop.f32.mrb[0].mxu0
        %v3214 = vadd.f32 0.0, %v3213
        %v3215 = vpop.f32.mrb[0].mxu0
        %3216 = vmatprep.mubr.f32.mxu0 0.0
        %3217 = vmatmul.mubr.f32.gmra.mrb[0].mxu0 %v2684
        %v3218 = vpop.f32.mrb[0].mxu0
        %v3219 = vadd.f32 0.0, %v3218
        %v3220 = vpop.f32.mrb[0].mxu0
        %3221 = vmatprep.mubr.f32.mxu0 0.0
        %3222 = vmatmul.mubr.f32.gmra.mrb[0].mxu0 %v2686
        %v3223 = vpop.f32.mrb[0].mxu0
        %v3224 = vadd.f32 0.0, %v3223
        %v3225 = vpop.f32.mrb[0].mxu0
        %3226 = vmatprep.mubr.f32.mxu0 0.0
        %3227 = vmatmul.mubr.f32.gmra.mrb[0].mxu0 %v2688
        %v3228 = vpop.f32.mrb[0].mxu0
        %v3229 = vadd.f32 0.0, %v3228
        %v3230 = vpop.f32.mrb[0].mxu0
        %3231 = vmatprep.mubr.f32.mxu0 0.0
        %3232 = vmatmul.mubr.f32.gmra.mrb[0].mxu0 %v2690
        %v3233 = vpop.f32.mrb[0].mxu0
        %v3234 = vadd.f32 0.0, %v3233
        %v3235 = vpop.f32.mrb[0].mxu0
        %3236 = vmatprep.mubr.f32.mxu0 0.0
        %3237 = vmatmul.mubr.f32.gmra.mrb[0].mxu0 %v2692
        %v3238 = vpop.f32.mrb[0].mxu0
        %v3239 = vadd.f32 0.0, %v3238
        %v3240 = vpop.f32.mrb[0].mxu0
        %3241 = vmatprep.mubr.f32.mxu0 0.0
        %3242 = vmatmul.mubr.f32.gmra.mrb[0].mxu0 %v2694
        %v3243 = vpop.f32.mrb[0].mxu0
        %v3244 = vadd.f32 0.0, %v3243
        %v3245 = vpop.f32.mrb[0].mxu0
        %3246 = vmatprep.mubr.f32.mxu0 0.0
        %3247 = vmatmul.mubr.f32.gmra.mrb[0].mxu0 %v2696
        %v3248 = vpop.f32.mrb[0].mxu0
        %v3249 = vadd.f32 0.0, %v3248
        %v3250 = vpop.f32.mrb[0].mxu0
        %3251 = vmatprep.mubr.f32.mxu0 0.0
        %3252 = vmatmul.mubr.f32.gmra.mrb[0].mxu0 %v2698
        %v3253 = vpop.f32.mrb[0].mxu0
        %v3254 = vadd.f32 0.0, %v3253
        %v3255 = vpop.f32.mrb[0].mxu0
        %3256 = vmatprep.mubr.f32.mxu0 0.0
        %3257 = vmatmul.mubr.f32.gmra.mrb[0].mxu0 %v2700
        %v3258 = vpop.f32.mrb[0].mxu0
        %v3259 = vadd.f32 0.0, %v3258
        %v3260 = vpop.f32.mrb[0].mxu0
        %3261 = vmatprep.mubr.f32.mxu0 0.0
        %3262 = vmatmul.mubr.f32.gmra.mrb[0].mxu0 %v2702
        %v3263 = vpop.f32.mrb[0].mxu0
        %v3264 = vadd.f32 0.0, %v3263
        %v3265 = vpop.f32.mrb[0].mxu0
        %3266 = vmatprep.mubr.f32.mxu0 0.0
        %3267 = vmatmul.mubr.f32.gmra.mrb[0].mxu0 %v2704
        %v3268 = vpop.f32.mrb[0].mxu0
        %v3269 = vadd.f32 0.0, %v3268
        %v3270 = vpop.f32.mrb[0].mxu0
        %3271 = vmatprep.mubr.f32.mxu0 0.0
        %3272 = vmatmul.mubr.f32.gmra.mrb[0].mxu0 %v2706
        %v3273 = vpop.f32.mrb[0].mxu0
        %v3274 = vadd.f32 0.0, %v3273
        %v3275 = vpop.f32.mrb[0].mxu0
        %3276 = vmatprep.mubr.f32.mxu0 0.0
        %3277 = vmatmul.mubr.f32.gmra.mrb[0].mxu0 %v2708
        %v3278 = vpop.f32.mrb[0].mxu0
        %v3279 = vadd.f32 0.0, %v3278
        %v3280 = vpop.f32.mrb[0].mxu0
        %3281 = vmatprep.mubr.f32.mxu0 0.0
        %3282 = vmatmul.mubr.f32.gmra.mrb[0].mxu0 %v2710
        %v3283 = vpop.f32.mrb[0].mxu0
        %v3284 = vadd.f32 0.0, %v3283
        %v3285 = vpop.f32.mrb[0].mxu0
        %3286 = vmatprep.mubr.f32.mxu0 0.0
        %3287 = vmatmul.mubr.f32.gmra.mrb[0].mxu0 %v3026
        %v3288 = vpop.f32.mrb[0].mxu0
        %v3289 = vpop.f32.mrb[0].mxu0
        %3290 = vmatprep.mubr.f32.mxu0 0.0
        %3291 = vmatmul.mubr.f32.gmra.mrb[0].mxu0 %v3028
        %v3292 = vpop.f32.mrb[0].mxu0
        %v3293 = vpop.f32.mrb[0].mxu0
        %3294 = vmatprep.mubr.f32.mxu0 0.0
        %3295 = vmatmul.mubr.f32.gmra.mrb[0].mxu0 %v3030
        %v3296 = vpop.f32.mrb[0].mxu0
        %v3297 = vpop.f32.mrb[0].mxu0
        %3298 = vdwg.mxu0
        %v3299 = vadd.f32 %v2981, %v3099
        %v3300 = vadd.f32 %v2982, %v3104
        %v3301 = vadd.f32 %v2983, %v3109
        %v3302 = vadd.f32 %v2984, %v3114
        %v3303 = vadd.f32 %v2985, %v3119
        %v3304 = vadd.f32 %v2986, %v3124
        %v3305 = vadd.f32 %v2987, %v3129
        %v3306 = vadd.f32 %v2988, %v3134
        %v3307 = vadd.f32 %v2989, %v3139
        %v3308 = vadd.f32 %v2990, %v3144
        %v3309 = vadd.f32 %v2991, %v3149
        %v3310 = vadd.f32 %v2992, %v3154
        %v3311 = vadd.f32 %v2993, %v3159
        %v3312 = vadd.f32 %v2994, %v3164
        %v3313 = vadd.f32 %v2995, %v3169
        %v3314 = vadd.f32 %v2996, %v3174
        %v3315 = vadd.f32 %v2997, %v3179
        %v3316 = vadd.f32 %v2998, %v3184
        %v3317 = vadd.f32 %v2999, %v3189
        %v3318 = vadd.f32 %v3000, %v3194
        %v3319 = vadd.f32 %v3001, %v3199
        %v3320 = vadd.f32 %v3002, %v3204
        %v3321 = vadd.f32 %v3003, %v3209
        %v3322 = vadd.f32 %v3004, %v3214
        %v3323 = vadd.f32 %v3005, %v3219
        %v3324 = vadd.f32 %v3006, %v3224
        %v3325 = vadd.f32 %v3007, %v3229
        %v3326 = vadd.f32 %v3008, %v3234
        %v3327 = vadd.f32 %v3009, %v3239
        %v3328 = vadd.f32 %v3010, %v3244
        %v3329 = vadd.f32 %v3011, %v3249
        %v3330 = vadd.f32 %v3012, %v3254
        %v3331 = vadd.f32 %v3013, %v3259
        %v3332 = vadd.f32 %v3014, %v3264
        %v3333 = vadd.f32 %v3015, %v3269
        %v3334 = vadd.f32 %v3016, %v3274
        %v3335 = vadd.f32 %v3017, %v3279
        %v3336 = vadd.f32 %v3018, %v3284
        %v3337 = vld [vmem:[%s1 + $0x38] sm:$0xff]
        %vm3339 = vcmask 1042432
        %v3340 = vrot.slane %v425, 5
        %v3341 = vrot.slane %v426, 5
        %v3342 = vsel %vm3339, %v3340, %v3341
        %v3343 = vrot.slane %v427, 5
        %v3344 = vsel %vm3339, %v3341, %v3343
        %v3345 = vrot.slane %v428, 5
        %v3346 = vsel %vm3339, %v3343, %v3345
        %v3347 = vrot.slane %v429, 5
        %v3348 = vsel %vm3339, %v3345, %v3347
        %v3349 = vrot.slane %v430, 5
        %v3350 = vsel %vm3339, %v3347, %v3349
        %v3351 = vrot.slane %v431, 5
        %v3352 = vsel %vm3339, %v3349, %v3351
        %v3353 = vrot.slane %v432, 5
        %v3354 = vsel %vm3339, %v3351, %v3353
        %v3355 = vrot.slane %v433, 5
        %v3356 = vsel %vm3339, %v3353, %v3355
        %v3357 = vrot.slane %v434, 5
        %v3358 = vsel %vm3339, %v3355, %v3357
        %v3359 = vrot.slane %v435, 5
        %v3360 = vsel %vm3339, %v3357, %v3359
        %v3361 = vrot.slane %v436, 5
        %v3362 = vsel %vm3339, %v3359, %v3361
        %v3363 = vrot.slane %v437, 5
        %v3364 = vsel %vm3339, %v3361, %v3363
        %v3365 = vrot.slane %v438, 5
        %v3366 = vsel %vm3339, %v3363, %v3365
        %v3367 = vrot.slane %v439, 5
        %v3368 = vsel %vm3339, %v3365, %v3367
        %v3369 = vrot.slane %v440, 5
        %v3370 = vsel %vm3339, %v3367, %v3369
        %v3371 = vrot.slane %v441, 5
        %v3372 = vsel %vm3339, %v3369, %v3371
        %v3373 = vrot.slane %v442, 5
        %v3374 = vsel %vm3339, %v3371, %v3373
        %v3375 = vrot.slane %v443, 5
        %v3376 = vsel %vm3339, %v3373, %v3375
        %v3377 = vrot.slane %v444, 5
        %v3378 = vsel %vm3339, %v3375, %v3377
        %v3379 = vrot.slane %v445, 5
        %v3380 = vsel %vm3339, %v3377, %v3379
        %v3381 = vrot.slane %v446, 5
        %v3382 = vsel %vm3339, %v3379, %v3381
        %v3383 = vrot.slane %v447, 5
        %v3384 = vsel %vm3339, %v3381, %v3383
        %v3385 = vrot.slane %v448, 5
        %v3386 = vsel %vm3339, %v3383, %v3385
        %v3387 = vrot.slane %v449, 5
        %v3388 = vsel %vm3339, %v3385, %v3387
        %v3389 = vrot.slane %v450, 5
        %v3390 = vsel %vm3339, %v3387, %v3389
        %v3391 = vrot.slane %v451, 5
        %v3392 = vsel %vm3339, %v3389, %v3391
        %v3393 = vrot.slane %v452, 5
        %v3394 = vsel %vm3339, %v3391, %v3393
        %v3395 = vrot.slane %v453, 5
        %v3396 = vsel %vm3339, %v3393, %v3395
        %v3397 = vrot.slane %v454, 5
        %v3398 = vsel %vm3339, %v3395, %v3397
        %v3399 = vrot.slane %v455, 5
        %v3400 = vsel %vm3339, %v3397, %v3399
        %v3401 = vrot.slane %v456, 5
        %v3402 = vsel %vm3339, %v3399, %v3401
        %v3403 = vrot.slane %v457, 5
        %v3404 = vsel %vm3339, %v3401, %v3403
        %v3405 = vrot.slane %v458, 5
        %v3406 = vsel %vm3339, %v3403, %v3405
        %v3407 = vrot.slane %v459, 5
        %v3408 = vsel %vm3339, %v3405, %v3407
        %v3409 = vrot.slane %v460, 5
        %v3410 = vsel %vm3339, %v3407, %v3409
        %v3411 = vrot.slane %v461, 5
        %v3412 = vsel %vm3339, %v3409, %v3411
        %v3413 = vrot.slane %v462, 5
        %v3414 = vsel %vm3339, %v3411, %v3413
        %v3415 = vrot.slane %v463, 5
        %v3416 = vsel %vm3339, %v3413, %v3415
        %v3417 = vrot.slane %v464, 5
        %v3418 = vsel %vm3339, %v3415, %v3417
        %v3419 = vrot.slane %v465, 5
        %v3420 = vsel %vm3339, %v3417, %v3419
        %v3421 = vrot.slane %v466, 5
        %v3422 = vsel %vm3339, %v3419, %v3421
        %v3423 = vsel %vm592, %v3342, 0
        %v3425 = vsel %vm592, %v3344, 0
        %v3427 = vsel %vm592, %v3346, 0
        %v3429 = vsel %vm592, %v3348, 0
        %v3431 = vsel %vm592, %v3350, 0
        %v3433 = vsel %vm592, %v3352, 0
        %v3435 = vsel %vm592, %v3354, 0
        %v3437 = vsel %vm592, %v3356, 0
        %v3439 = vsel %vm592, %v3358, 0
        %v3441 = vsel %vm592, %v3360, 0
        %v3443 = vsel %vm592, %v3362, 0
        %v3445 = vsel %vm592, %v3364, 0
        %v3447 = vsel %vm592, %v3366, 0
        %v3449 = vsel %vm592, %v3368, 0
        %v3451 = vsel %vm592, %v3370, 0
        %v3453 = vsel %vm592, %v3372, 0
        %v3455 = vsel %vm592, %v3374, 0
        %v3457 = vsel %vm592, %v3376, 0
        %v3459 = vsel %vm592, %v3378, 0
        %v3461 = vsel %vm592, %v3380, 0
        %v3463 = vsel %vm592, %v3382, 0
        %v3465 = vsel %vm592, %v3384, 0
        %v3467 = vsel %vm592, %v3386, 0
        %v3469 = vsel %vm592, %v3388, 0
        %v3471 = vsel %vm592, %v3390, 0
        %v3473 = vsel %vm592, %v3392, 0
        %v3475 = vsel %vm592, %v3394, 0
        %v3477 = vsel %vm592, %v3396, 0
        %v3479 = vsel %vm592, %v3398, 0
        %v3481 = vsel %vm592, %v3400, 0
        %v3483 = vsel %vm592, %v3402, 0
        %v3485 = vsel %vm592, %v3404, 0
        %v3487 = vsel %vm592, %v3406, 0
        %v3489 = vsel %vm592, %v3408, 0
        %v3491 = vsel %vm592, %v3410, 0
        %v3493 = vsel %vm592, %v3412, 0
        %v3495 = vsel %vm592, %v3414, 0
        %v3497 = vsel %vm592, %v3416, 0
        %v3499 = vsel %vm592, %v3418, 0
        %v3501 = vsel %vm592, %v3420, 0
        %v3503 = vsel %vm592, %v3422, 0
        %3505 = vmatprep.subr.mxu0 0.0
        %3506 = vmatpush1.msra.mxu0 %v3337
        %3507 = vmatprep.subr.mxu0 0.0
        %3508 = vmatpush1.msra.mxu0 0.0
        %3509 = vmatprep.subr.mxu0 0.0
        %3510 = vmatpush1.msra.mxu0 0.0
        %3511 = vmatprep.subr.mxu0 0.0
        %3512 = vmatpush1.msra.mxu0 0.0
        %3513 = vmatprep.subr.mxu0 0.0
        %3514 = vmatpush1.msra.mxu0 0.0
        %3515 = vmatprep.subr.mxu0 0.0
        %3516 = vmatpush1.msra.mxu0 0.0
        %3517 = vmatprep.subr.mxu0 0.0
        %3518 = vmatpush1.msra.mxu0 0.0
        %3519 = vmatprep.subr.mxu0 0.0
        %3520 = vmatpush1.msra.mxu0 0.0
        %3521 = vmatprep.subr.mxu0 0.0
        %3522 = vmatpush1.msra.mxu0 0.0
        %3523 = vmatprep.subr.mxu0 0.0
        %3524 = vmatpush1.msra.mxu0 0.0
        %3525 = vmatprep.subr.mxu0 0.0
        %3526 = vmatpush1.msra.mxu0 0.0
        %3527 = vmatprep.subr.mxu0 0.0
        %3528 = vmatpush1.msra.mxu0 0.0
        %3529 = vmatprep.subr.mxu0 0.0
        %3530 = vmatpush1.msra.mxu0 0.0
        %3531 = vmatprep.subr.mxu0 0.0
        %3532 = vmatpush1.msra.mxu0 0.0
        %3533 = vmatprep.subr.mxu0 0.0
        %3534 = vmatpush1.msra.mxu0 0.0
        %3535 = vmatprep.subr.mxu0 0.0
        %3536 = vmatpush1.msra.mxu0 0.0
        %3537 = vmatprep.subr.mxu0 0.0
        %3538 = vmatpush1.msra.mxu0 0.0
        %3539 = vmatprep.subr.mxu0 0.0
        %3540 = vmatpush1.msra.mxu0 0.0
        %3541 = vmatprep.subr.mxu0 0.0
        %3542 = vmatpush1.msra.mxu0 0.0
        %3543 = vmatprep.subr.mxu0 0.0
        %3544 = vmatpush1.msra.mxu0 0.0
        %3545 = vmatprep.subr.mxu0 0.0
        %3546 = vmatpush1.msra.mxu0 0.0
        %3547 = vmatprep.subr.mxu0 0.0
        %3548 = vmatpush1.msra.mxu0 0.0
        %3549 = vmatprep.subr.mxu0 0.0
        %3550 = vmatpush1.msra.mxu0 0.0
        %3551 = vmatprep.subr.mxu0 0.0
        %3552 = vmatpush1.msra.mxu0 0.0
        %3553 = vmatprep.subr.mxu0 0.0
        %3554 = vmatpush1.msra.mxu0 0.0
        %3555 = vmatprep.subr.mxu0 0.0
        %3556 = vmatpush1.msra.mxu0 0.0
        %3557 = vmatprep.subr.mxu0 0.0
        %3558 = vmatpush1.msra.mxu0 0.0
        %3559 = vmatprep.subr.mxu0 0.0
        %3560 = vmatpush1.msra.mxu0 0.0
        %3561 = vmatprep.subr.mxu0 0.0
        %3562 = vmatpush1.msra.mxu0 0.0
        %3563 = vmatprep.subr.mxu0 0.0
        %3564 = vmatpush1.msra.mxu0 0.0
        %3565 = vmatprep.subr.mxu0 0.0
        %3566 = vmatpush1.msra.mxu0 0.0
        %3567 = vmatprep.subr.mxu0 0.0
        %3568 = vmatpush1.msra.mxu0 0.0
        %3569 = vmatprep.mubr.f32.mxu0 0.0
        %3570 = vmatmul.mubr.f32.gmra.mrb[0].mxu0 %v3423
        %v3571 = vpop.f32.mrb[0].mxu0
        %v3572 = vadd.f32 0.0, %v3571
        %v3573 = vpop.f32.mrb[0].mxu0
        %3574 = vmatprep.mubr.f32.mxu0 0.0
        %3575 = vmatmul.mubr.f32.gmra.mrb[0].mxu0 %v3425
        %v3576 = vpop.f32.mrb[0].mxu0
        %v3577 = vadd.f32 0.0, %v3576
        %v3578 = vpop.f32.mrb[0].mxu0
        %3579 = vmatprep.mubr.f32.mxu0 0.0
        %3580 = vmatmul.mubr.f32.gmra.mrb[0].mxu0 %v3427
        %v3581 = vpop.f32.mrb[0].mxu0
        %v3582 = vadd.f32 0.0, %v3581
        %v3583 = vpop.f32.mrb[0].mxu0
        %3584 = vmatprep.mubr.f32.mxu0 0.0
        %3585 = vmatmul.mubr.f32.gmra.mrb[0].mxu0 %v3429
        %v3586 = vpop.f32.mrb[0].mxu0
        %v3587 = vadd.f32 0.0, %v3586
        %v3588 = vpop.f32.mrb[0].mxu0
        %3589 = vmatprep.mubr.f32.mxu0 0.0
        %3590 = vmatmul.mubr.f32.gmra.mrb[0].mxu0 %v3431
        %v3591 = vpop.f32.mrb[0].mxu0
        %v3592 = vadd.f32 0.0, %v3591
        %v3593 = vpop.f32.mrb[0].mxu0
        %3594 = vmatprep.mubr.f32.mxu0 0.0
        %3595 = vmatmul.mubr.f32.gmra.mrb[0].mxu0 %v3433
        %v3596 = vpop.f32.mrb[0].mxu0
        %v3597 = vadd.f32 0.0, %v3596
        %v3598 = vpop.f32.mrb[0].mxu0
        %3599 = vmatprep.mubr.f32.mxu0 0.0
        %3600 = vmatmul.mubr.f32.gmra.mrb[0].mxu0 %v3435
        %v3601 = vpop.f32.mrb[0].mxu0
        %v3602 = vadd.f32 0.0, %v3601
        %v3603 = vpop.f32.mrb[0].mxu0
        %3604 = vmatprep.mubr.f32.mxu0 0.0
        %3605 = vmatmul.mubr.f32.gmra.mrb[0].mxu0 %v3437
        %v3606 = vpop.f32.mrb[0].mxu0
        %v3607 = vadd.f32 0.0, %v3606
        %v3608 = vpop.f32.mrb[0].mxu0
        %3609 = vmatprep.mubr.f32.mxu0 0.0
        %3610 = vmatmul.mubr.f32.gmra.mrb[0].mxu0 %v3439
        %v3611 = vpop.f32.mrb[0].mxu0
        %v3612 = vadd.f32 0.0, %v3611
        %v3613 = vpop.f32.mrb[0].mxu0
        %3614 = vmatprep.mubr.f32.mxu0 0.0
        %3615 = vmatmul.mubr.f32.gmra.mrb[0].mxu0 %v3441
        %v3616 = vpop.f32.mrb[0].mxu0
        %v3617 = vadd.f32 0.0, %v3616
        %v3618 = vpop.f32.mrb[0].mxu0
        %3619 = vmatprep.mubr.f32.mxu0 0.0
        %3620 = vmatmul.mubr.f32.gmra.mrb[0].mxu0 %v3443
        %v3621 = vpop.f32.mrb[0].mxu0
        %v3622 = vadd.f32 0.0, %v3621
        %v3623 = vpop.f32.mrb[0].mxu0
        %3624 = vmatprep.mubr.f32.mxu0 0.0
        %3625 = vmatmul.mubr.f32.gmra.mrb[0].mxu0 %v3445
        %v3626 = vpop.f32.mrb[0].mxu0
        %v3627 = vadd.f32 0.0, %v3626
        %v3628 = vpop.f32.mrb[0].mxu0
        %3629 = vmatprep.mubr.f32.mxu0 0.0
        %3630 = vmatmul.mubr.f32.gmra.mrb[0].mxu0 %v3447
        %v3631 = vpop.f32.mrb[0].mxu0
        %v3632 = vadd.f32 0.0, %v3631
        %v3633 = vpop.f32.mrb[0].mxu0
        %3634 = vmatprep.mubr.f32.mxu0 0.0
        %3635 = vmatmul.mubr.f32.gmra.mrb[0].mxu0 %v3449
        %v3636 = vpop.f32.mrb[0].mxu0
        %v3637 = vadd.f32 0.0, %v3636
        %v3638 = vpop.f32.mrb[0].mxu0
        %3639 = vmatprep.mubr.f32.mxu0 0.0
        %3640 = vmatmul.mubr.f32.gmra.mrb[0].mxu0 %v3451
        %v3641 = vpop.f32.mrb[0].mxu0
        %v3642 = vadd.f32 0.0, %v3641
        %v3643 = vpop.f32.mrb[0].mxu0
        %3644 = vmatprep.mubr.f32.mxu0 0.0
        %3645 = vmatmul.mubr.f32.gmra.mrb[0].mxu0 %v3453
        %v3646 = vpop.f32.mrb[0].mxu0
        %v3647 = vadd.f32 0.0, %v3646
        %v3648 = vpop.f32.mrb[0].mxu0
        %3649 = vmatprep.mubr.f32.mxu0 0.0
        %3650 = vmatmul.mubr.f32.gmra.mrb[0].mxu0 %v3455
        %v3651 = vpop.f32.mrb[0].mxu0
        %v3652 = vadd.f32 0.0, %v3651
        %v3653 = vpop.f32.mrb[0].mxu0
        %3654 = vmatprep.mubr.f32.mxu0 0.0
        %3655 = vmatmul.mubr.f32.gmra.mrb[0].mxu0 %v3457
        %v3656 = vpop.f32.mrb[0].mxu0
        %v3657 = vadd.f32 0.0, %v3656
        %v3658 = vpop.f32.mrb[0].mxu0
        %3659 = vmatprep.mubr.f32.mxu0 0.0
        %3660 = vmatmul.mubr.f32.gmra.mrb[0].mxu0 %v3459
        %v3661 = vpop.f32.mrb[0].mxu0
        %v3662 = vadd.f32 0.0, %v3661
        %v3663 = vpop.f32.mrb[0].mxu0
        %3664 = vmatprep.mubr.f32.mxu0 0.0
        %3665 = vmatmul.mubr.f32.gmra.mrb[0].mxu0 %v3461
        %v3666 = vpop.f32.mrb[0].mxu0
        %v3667 = vadd.f32 0.0, %v3666
        %v3668 = vpop.f32.mrb[0].mxu0
        %3669 = vmatprep.mubr.f32.mxu0 0.0
        %3670 = vmatmul.mubr.f32.gmra.mrb[0].mxu0 %v3463
        %v3671 = vpop.f32.mrb[0].mxu0
        %v3672 = vadd.f32 0.0, %v3671
        %v3673 = vpop.f32.mrb[0].mxu0
        %3674 = vmatprep.mubr.f32.mxu0 0.0
        %3675 = vmatmul.mubr.f32.gmra.mrb[0].mxu0 %v3465
        %v3676 = vpop.f32.mrb[0].mxu0
        %v3677 = vadd.f32 0.0, %v3676
        %v3678 = vpop.f32.mrb[0].mxu0
        %3679 = vmatprep.mubr.f32.mxu0 0.0
        %3680 = vmatmul.mubr.f32.gmra.mrb[0].mxu0 %v3467
        %v3681 = vpop.f32.mrb[0].mxu0
        %v3682 = vadd.f32 0.0, %v3681
        %v3683 = vpop.f32.mrb[0].mxu0
        %3684 = vmatprep.mubr.f32.mxu0 0.0
        %3685 = vmatmul.mubr.f32.gmra.mrb[0].mxu0 %v3469
        %v3686 = vpop.f32.mrb[0].mxu0
        %v3687 = vadd.f32 0.0, %v3686
        %v3688 = vpop.f32.mrb[0].mxu0
        %3689 = vmatprep.mubr.f32.mxu0 0.0
        %3690 = vmatmul.mubr.f32.gmra.mrb[0].mxu0 %v3471
        %v3691 = vpop.f32.mrb[0].mxu0
        %v3692 = vadd.f32 0.0, %v3691
        %v3693 = vpop.f32.mrb[0].mxu0
        %3694 = vmatprep.mubr.f32.mxu0 0.0
        %3695 = vmatmul.mubr.f32.gmra.mrb[0].mxu0 %v3473
        %v3696 = vpop.f32.mrb[0].mxu0
        %v3697 = vadd.f32 0.0, %v3696
        %v3698 = vpop.f32.mrb[0].mxu0
        %3699 = vmatprep.mubr.f32.mxu0 0.0
        %3700 = vmatmul.mubr.f32.gmra.mrb[0].mxu0 %v3475
        %v3701 = vpop.f32.mrb[0].mxu0
        %v3702 = vadd.f32 0.0, %v3701
        %v3703 = vpop.f32.mrb[0].mxu0
        %3704 = vmatprep.mubr.f32.mxu0 0.0
        %3705 = vmatmul.mubr.f32.gmra.mrb[0].mxu0 %v3477
        %v3706 = vpop.f32.mrb[0].mxu0
        %v3707 = vadd.f32 0.0, %v3706
        %v3708 = vpop.f32.mrb[0].mxu0
        %3709 = vmatprep.mubr.f32.mxu0 0.0
        %3710 = vmatmul.mubr.f32.gmra.mrb[0].mxu0 %v3479
        %v3711 = vpop.f32.mrb[0].mxu0
        %v3712 = vadd.f32 0.0, %v3711
        %v3713 = vpop.f32.mrb[0].mxu0
        %3714 = vmatprep.mubr.f32.mxu0 0.0
        %3715 = vmatmul.mubr.f32.gmra.mrb[0].mxu0 %v3481
        %v3716 = vpop.f32.mrb[0].mxu0
        %v3717 = vadd.f32 0.0, %v3716
        %v3718 = vpop.f32.mrb[0].mxu0
        %3719 = vmatprep.mubr.f32.mxu0 0.0
        %3720 = vmatmul.mubr.f32.gmra.mrb[0].mxu0 %v3483
        %v3721 = vpop.f32.mrb[0].mxu0
        %v3722 = vadd.f32 0.0, %v3721
        %v3723 = vpop.f32.mrb[0].mxu0
        %3724 = vmatprep.mubr.f32.mxu0 0.0
        %3725 = vmatmul.mubr.f32.gmra.mrb[0].mxu0 %v3485
        %v3726 = vpop.f32.mrb[0].mxu0
        %v3727 = vadd.f32 0.0, %v3726
        %v3728 = vpop.f32.mrb[0].mxu0
        %3729 = vmatprep.mubr.f32.mxu0 0.0
        %3730 = vmatmul.mubr.f32.gmra.mrb[0].mxu0 %v3487
        %v3731 = vpop.f32.mrb[0].mxu0
        %v3732 = vadd.f32 0.0, %v3731
        %v3733 = vpop.f32.mrb[0].mxu0
        %3734 = vmatprep.mubr.f32.mxu0 0.0
        %3735 = vmatmul.mubr.f32.gmra.mrb[0].mxu0 %v3489
        %v3736 = vpop.f32.mrb[0].mxu0
        %v3737 = vadd.f32 0.0, %v3736
        %v3738 = vpop.f32.mrb[0].mxu0
        %3739 = vmatprep.mubr.f32.mxu0 0.0
        %3740 = vmatmul.mubr.f32.gmra.mrb[0].mxu0 %v3491
        %v3741 = vpop.f32.mrb[0].mxu0
        %v3742 = vadd.f32 0.0, %v3741
        %v3743 = vpop.f32.mrb[0].mxu0
        %3744 = vmatprep.mubr.f32.mxu0 0.0
        %3745 = vmatmul.mubr.f32.gmra.mrb[0].mxu0 %v3493
        %v3746 = vpop.f32.mrb[0].mxu0
        %v3747 = vadd.f32 0.0, %v3746
        %v3748 = vpop.f32.mrb[0].mxu0
        %3749 = vmatprep.mubr.f32.mxu0 0.0
        %3750 = vmatmul.mubr.f32.gmra.mrb[0].mxu0 %v3495
        %v3751 = vpop.f32.mrb[0].mxu0
        %v3752 = vadd.f32 0.0, %v3751
        %v3753 = vpop.f32.mrb[0].mxu0
        %3754 = vmatprep.mubr.f32.mxu0 0.0
        %3755 = vmatmul.mubr.f32.gmra.mrb[0].mxu0 %v3497
        %v3756 = vpop.f32.mrb[0].mxu0
        %v3757 = vadd.f32 0.0, %v3756
        %v3758 = vpop.f32.mrb[0].mxu0
        %3759 = vmatprep.mubr.f32.mxu0 0.0
        %3760 = vmatmul.mubr.f32.gmra.mrb[0].mxu0 %v3499
        %v3761 = vpop.f32.mrb[0].mxu0
        %v3762 = vpop.f32.mrb[0].mxu0
        %3763 = vmatprep.mubr.f32.mxu0 0.0
        %3764 = vmatmul.mubr.f32.gmra.mrb[0].mxu0 %v3501
        %v3765 = vpop.f32.mrb[0].mxu0
        %v3766 = vpop.f32.mrb[0].mxu0
        %3767 = vmatprep.mubr.f32.mxu0 0.0
        %3768 = vmatmul.mubr.f32.gmra.mrb[0].mxu0 %v3503
        %v3769 = vpop.f32.mrb[0].mxu0
        %v3770 = vpop.f32.mrb[0].mxu0
        %3771 = vdwg.mxu0
        %v3772 = vadd.f32 %v3299, %v3572
        %v3773 = vadd.f32 %v3300, %v3577
        %v3774 = vadd.f32 %v3301, %v3582
        %v3775 = vadd.f32 %v3302, %v3587
        %v3776 = vadd.f32 %v3303, %v3592
        %v3777 = vadd.f32 %v3304, %v3597
        %v3778 = vadd.f32 %v3305, %v3602
        %v3779 = vadd.f32 %v3306, %v3607
        %v3780 = vadd.f32 %v3307, %v3612
        %v3781 = vadd.f32 %v3308, %v3617
        %v3782 = vadd.f32 %v3309, %v3622
        %v3783 = vadd.f32 %v3310, %v3627
        %v3784 = vadd.f32 %v3311, %v3632
        %v3785 = vadd.f32 %v3312, %v3637
        %v3786 = vadd.f32 %v3313, %v3642
        %v3787 = vadd.f32 %v3314, %v3647
        %v3788 = vadd.f32 %v3315, %v3652
        %v3789 = vadd.f32 %v3316, %v3657
        %v3790 = vadd.f32 %v3317, %v3662
        %v3791 = vadd.f32 %v3318, %v3667
        %v3792 = vadd.f32 %v3319, %v3672
        %v3793 = vadd.f32 %v3320, %v3677
        %v3794 = vadd.f32 %v3321, %v3682
        %v3795 = vadd.f32 %v3322, %v3687
        %v3796 = vadd.f32 %v3323, %v3692
        %v3797 = vadd.f32 %v3324, %v3697
        %v3798 = vadd.f32 %v3325, %v3702
        %v3799 = vadd.f32 %v3326, %v3707
        %v3800 = vadd.f32 %v3327, %v3712
        %v3801 = vadd.f32 %v3328, %v3717
        %v3802 = vadd.f32 %v3329, %v3722
        %v3803 = vadd.f32 %v3330, %v3727
        %v3804 = vadd.f32 %v3331, %v3732
        %v3805 = vadd.f32 %v3332, %v3737
        %v3806 = vadd.f32 %v3333, %v3742
        %v3807 = vadd.f32 %v3334, %v3747
        %v3808 = vadd.f32 %v3335, %v3752
        %v3809 = vadd.f32 %v3336, %v3757
        %v3810 = vld [vmem:[%s1 + $0x40] sm:$0xff]
        %vm3811 = vcmask 1041408
        %v3812 = vrot.slane %v425, 6
        %v3813 = vrot.slane %v426, 6
        %v3814 = vsel %vm3811, %v3812, %v3813
        %v3815 = vrot.slane %v427, 6
        %v3816 = vsel %vm3811, %v3813, %v3815
        %v3817 = vrot.slane %v428, 6
        %v3818 = vsel %vm3811, %v3815, %v3817
        %v3819 = vrot.slane %v429, 6
        %v3820 = vsel %vm3811, %v3817, %v3819
        %v3821 = vrot.slane %v430, 6
        %v3822 = vsel %vm3811, %v3819, %v3821
        %v3823 = vrot.slane %v431, 6
        %v3824 = vsel %vm3811, %v3821, %v3823
        %v3825 = vrot.slane %v432, 6
        %v3826 = vsel %vm3811, %v3823, %v3825
        %v3827 = vrot.slane %v433, 6
        %v3828 = vsel %vm3811, %v3825, %v3827
        %v3829 = vrot.slane %v434, 6
        %v3830 = vsel %vm3811, %v3827, %v3829
        %v3831 = vrot.slane %v435, 6
        %v3832 = vsel %vm3811, %v3829, %v3831
        %v3833 = vrot.slane %v436, 6
        %v3834 = vsel %vm3811, %v3831, %v3833
        %v3835 = vrot.slane %v437, 6
        %v3836 = vsel %vm3811, %v3833, %v3835
        %v3837 = vrot.slane %v438, 6
        %v3838 = vsel %vm3811, %v3835, %v3837
        %v3839 = vrot.slane %v439, 6
        %v3840 = vsel %vm3811, %v3837, %v3839
        %v3841 = vrot.slane %v440, 6
        %v3842 = vsel %vm3811, %v3839, %v3841
        %v3843 = vrot.slane %v441, 6
        %v3844 = vsel %vm3811, %v3841, %v3843
        %v3845 = vrot.slane %v442, 6
        %v3846 = vsel %vm3811, %v3843, %v3845
        %v3847 = vrot.slane %v443, 6
        %v3848 = vsel %vm3811, %v3845, %v3847
        %v3849 = vrot.slane %v444, 6
        %v3850 = vsel %vm3811, %v3847, %v3849
        %v3851 = vrot.slane %v445, 6
        %v3852 = vsel %vm3811, %v3849, %v3851
        %v3853 = vrot.slane %v446, 6
        %v3854 = vsel %vm3811, %v3851, %v3853
        %v3855 = vrot.slane %v447, 6
        %v3856 = vsel %vm3811, %v3853, %v3855
        %v3857 = vrot.slane %v448, 6
        %v3858 = vsel %vm3811, %v3855, %v3857
        %v3859 = vrot.slane %v449, 6
        %v3860 = vsel %vm3811, %v3857, %v3859
        %v3861 = vrot.slane %v450, 6
        %v3862 = vsel %vm3811, %v3859, %v3861
        %v3863 = vrot.slane %v451, 6
        %v3864 = vsel %vm3811, %v3861, %v3863
        %v3865 = vrot.slane %v452, 6
        %v3866 = vsel %vm3811, %v3863, %v3865
        %v3867 = vrot.slane %v453, 6
        %v3868 = vsel %vm3811, %v3865, %v3867
        %v3869 = vrot.slane %v454, 6
        %v3870 = vsel %vm3811, %v3867, %v3869
        %v3871 = vrot.slane %v455, 6
        %v3872 = vsel %vm3811, %v3869, %v3871
        %v3873 = vrot.slane %v456, 6
        %v3874 = vsel %vm3811, %v3871, %v3873
        %v3875 = vrot.slane %v457, 6
        %v3876 = vsel %vm3811, %v3873, %v3875
        %v3877 = vrot.slane %v458, 6
        %v3878 = vsel %vm3811, %v3875, %v3877
        %v3879 = vrot.slane %v459, 6
        %v3880 = vsel %vm3811, %v3877, %v3879
        %v3881 = vrot.slane %v460, 6
        %v3882 = vsel %vm3811, %v3879, %v3881
        %v3883 = vrot.slane %v461, 6
        %v3884 = vsel %vm3811, %v3881, %v3883
        %v3885 = vrot.slane %v462, 6
        %v3886 = vsel %vm3811, %v3883, %v3885
        %v3887 = vrot.slane %v463, 6
        %v3888 = vsel %vm3811, %v3885, %v3887
        %v3889 = vrot.slane %v464, 6
        %v3890 = vsel %vm3811, %v3887, %v3889
        %v3891 = vrot.slane %v465, 6
        %v3892 = vsel %vm3811, %v3889, %v3891
        %v3893 = vrot.slane %v466, 6
        %v3894 = vsel %vm3811, %v3891, %v3893
        %v3895 = vsel %vm592, %v3814, 0
        %v3897 = vsel %vm592, %v3816, 0
        %v3899 = vsel %vm592, %v3818, 0
        %v3901 = vsel %vm592, %v3820, 0
        %v3903 = vsel %vm592, %v3822, 0
        %v3905 = vsel %vm592, %v3824, 0
        %v3907 = vsel %vm592, %v3826, 0
        %v3909 = vsel %vm592, %v3828, 0
        %v3911 = vsel %vm592, %v3830, 0
        %v3913 = vsel %vm592, %v3832, 0
        %v3915 = vsel %vm592, %v3834, 0
        %v3917 = vsel %vm592, %v3836, 0
        %v3919 = vsel %vm592, %v3838, 0
        %v3921 = vsel %vm592, %v3840, 0
        %v3923 = vsel %vm592, %v3842, 0
        %v3925 = vsel %vm592, %v3844, 0
        %v3927 = vsel %vm592, %v3846, 0
        %v3929 = vsel %vm592, %v3848, 0
        %v3931 = vsel %vm592, %v3850, 0
        %v3933 = vsel %vm592, %v3852, 0
        %v3935 = vsel %vm592, %v3854, 0
        %v3937 = vsel %vm592, %v3856, 0
        %v3939 = vsel %vm592, %v3858, 0
        %v3941 = vsel %vm592, %v3860, 0
        %v3943 = vsel %vm592, %v3862, 0
        %v3945 = vsel %vm592, %v3864, 0
        %v3947 = vsel %vm592, %v3866, 0
        %v3949 = vsel %vm592, %v3868, 0
        %v3951 = vsel %vm592, %v3870, 0
        %v3953 = vsel %vm592, %v3872, 0
        %v3955 = vsel %vm592, %v3874, 0
        %v3957 = vsel %vm592, %v3876, 0
        %v3959 = vsel %vm592, %v3878, 0
        %v3961 = vsel %vm592, %v3880, 0
        %v3963 = vsel %vm592, %v3882, 0
        %v3965 = vsel %vm592, %v3884, 0
        %v3967 = vsel %vm592, %v3886, 0
        %v3969 = vsel %vm592, %v3888, 0
        %v3971 = vsel %vm592, %v3890, 0
        %v3973 = vsel %vm592, %v3892, 0
        %v3975 = vsel %vm592, %v3894, 0
        %3977 = vmatprep.subr.mxu0 0.0
        %3978 = vmatpush1.msra.mxu0 %v3810
        %3979 = vmatprep.subr.mxu0 0.0
        %3980 = vmatpush1.msra.mxu0 0.0
        %3981 = vmatprep.subr.mxu0 0.0
        %3982 = vmatpush1.msra.mxu0 0.0
        %3983 = vmatprep.subr.mxu0 0.0
        %3984 = vmatpush1.msra.mxu0 0.0
        %3985 = vmatprep.subr.mxu0 0.0
        %3986 = vmatpush1.msra.mxu0 0.0
        %3987 = vmatprep.subr.mxu0 0.0
        %3988 = vmatpush1.msra.mxu0 0.0
        %3989 = vmatprep.subr.mxu0 0.0
        %3990 = vmatpush1.msra.mxu0 0.0
        %3991 = vmatprep.subr.mxu0 0.0
        %3992 = vmatpush1.msra.mxu0 0.0
        %3993 = vmatprep.subr.mxu0 0.0
        %3994 = vmatpush1.msra.mxu0 0.0
        %3995 = vmatprep.subr.mxu0 0.0
        %3996 = vmatpush1.msra.mxu0 0.0
        %3997 = vmatprep.subr.mxu0 0.0
        %3998 = vmatpush1.msra.mxu0 0.0
        %3999 = vmatprep.subr.mxu0 0.0
        %4000 = vmatpush1.msra.mxu0 0.0
        %4001 = vmatprep.subr.mxu0 0.0
        %4002 = vmatpush1.msra.mxu0 0.0
        %4003 = vmatprep.subr.mxu0 0.0
        %4004 = vmatpush1.msra.mxu0 0.0
        %4005 = vmatprep.subr.mxu0 0.0
        %4006 = vmatpush1.msra.mxu0 0.0
        %4007 = vmatprep.subr.mxu0 0.0
        %4008 = vmatpush1.msra.mxu0 0.0
        %4009 = vmatprep.subr.mxu0 0.0
        %4010 = vmatpush1.msra.mxu0 0.0
        %4011 = vmatprep.subr.mxu0 0.0
        %4012 = vmatpush1.msra.mxu0 0.0
        %4013 = vmatprep.subr.mxu0 0.0
        %4014 = vmatpush1.msra.mxu0 0.0
        %4015 = vmatprep.subr.mxu0 0.0
        %4016 = vmatpush1.msra.mxu0 0.0
        %4017 = vmatprep.subr.mxu0 0.0
        %4018 = vmatpush1.msra.mxu0 0.0
        %4019 = vmatprep.subr.mxu0 0.0
        %4020 = vmatpush1.msra.mxu0 0.0
        %4021 = vmatprep.subr.mxu0 0.0
        %4022 = vmatpush1.msra.mxu0 0.0
        %4023 = vmatprep.subr.mxu0 0.0
        %4024 = vmatpush1.msra.mxu0 0.0
        %4025 = vmatprep.subr.mxu0 0.0
        %4026 = vmatpush1.msra.mxu0 0.0
        %4027 = vmatprep.subr.mxu0 0.0
        %4028 = vmatpush1.msra.mxu0 0.0
        %4029 = vmatprep.subr.mxu0 0.0
        %4030 = vmatpush1.msra.mxu0 0.0
        %4031 = vmatprep.subr.mxu0 0.0
        %4032 = vmatpush1.msra.mxu0 0.0
        %4033 = vmatprep.subr.mxu0 0.0
        %4034 = vmatpush1.msra.mxu0 0.0
        %4035 = vmatprep.subr.mxu0 0.0
        %4036 = vmatpush1.msra.mxu0 0.0
        %4037 = vmatprep.subr.mxu0 0.0
        %4038 = vmatpush1.msra.mxu0 0.0
        %4039 = vmatprep.subr.mxu0 0.0
        %4040 = vmatpush1.msra.mxu0 0.0
        %4041 = vmatprep.mubr.f32.mxu0 0.0
        %4042 = vmatmul.mubr.f32.gmra.mrb[0].mxu0 %v3895
        %v4043 = vpop.f32.mrb[0].mxu0
        %v4044 = vadd.f32 0.0, %v4043
        %v4045 = vpop.f32.mrb[0].mxu0
        %4046 = vmatprep.mubr.f32.mxu0 0.0
        %4047 = vmatmul.mubr.f32.gmra.mrb[0].mxu0 %v3897
        %v4048 = vpop.f32.mrb[0].mxu0
        %v4049 = vadd.f32 0.0, %v4048
        %v4050 = vpop.f32.mrb[0].mxu0
        %4051 = vmatprep.mubr.f32.mxu0 0.0
        %4052 = vmatmul.mubr.f32.gmra.mrb[0].mxu0 %v3899
        %v4053 = vpop.f32.mrb[0].mxu0
        %v4054 = vadd.f32 0.0, %v4053
        %v4055 = vpop.f32.mrb[0].mxu0
        %4056 = vmatprep.mubr.f32.mxu0 0.0
        %4057 = vmatmul.mubr.f32.gmra.mrb[0].mxu0 %v3901
        %v4058 = vpop.f32.mrb[0].mxu0
        %v4059 = vadd.f32 0.0, %v4058
        %v4060 = vpop.f32.mrb[0].mxu0
        %4061 = vmatprep.mubr.f32.mxu0 0.0
        %4062 = vmatmul.mubr.f32.gmra.mrb[0].mxu0 %v3903
        %v4063 = vpop.f32.mrb[0].mxu0
        %v4064 = vadd.f32 0.0, %v4063
        %v4065 = vpop.f32.mrb[0].mxu0
        %4066 = vmatprep.mubr.f32.mxu0 0.0
        %4067 = vmatmul.mubr.f32.gmra.mrb[0].mxu0 %v3905
        %v4068 = vpop.f32.mrb[0].mxu0
        %v4069 = vadd.f32 0.0, %v4068
        %v4070 = vpop.f32.mrb[0].mxu0
        %4071 = vmatprep.mubr.f32.mxu0 0.0
        %4072 = vmatmul.mubr.f32.gmra.mrb[0].mxu0 %v3907
        %v4073 = vpop.f32.mrb[0].mxu0
        %v4074 = vadd.f32 0.0, %v4073
        %v4075 = vpop.f32.mrb[0].mxu0
        %4076 = vmatprep.mubr.f32.mxu0 0.0
        %4077 = vmatmul.mubr.f32.gmra.mrb[0].mxu0 %v3909
        %v4078 = vpop.f32.mrb[0].mxu0
        %v4079 = vadd.f32 0.0, %v4078
        %v4080 = vpop.f32.mrb[0].mxu0
        %4081 = vmatprep.mubr.f32.mxu0 0.0
        %4082 = vmatmul.mubr.f32.gmra.mrb[0].mxu0 %v3911
        %v4083 = vpop.f32.mrb[0].mxu0
        %v4084 = vadd.f32 0.0, %v4083
        %v4085 = vpop.f32.mrb[0].mxu0
        %4086 = vmatprep.mubr.f32.mxu0 0.0
        %4087 = vmatmul.mubr.f32.gmra.mrb[0].mxu0 %v3913
        %v4088 = vpop.f32.mrb[0].mxu0
        %v4089 = vadd.f32 0.0, %v4088
        %v4090 = vpop.f32.mrb[0].mxu0
        %4091 = vmatprep.mubr.f32.mxu0 0.0
        %4092 = vmatmul.mubr.f32.gmra.mrb[0].mxu0 %v3915
        %v4093 = vpop.f32.mrb[0].mxu0
        %v4094 = vadd.f32 0.0, %v4093
        %v4095 = vpop.f32.mrb[0].mxu0
        %4096 = vmatprep.mubr.f32.mxu0 0.0
        %4097 = vmatmul.mubr.f32.gmra.mrb[0].mxu0 %v3917
        %v4098 = vpop.f32.mrb[0].mxu0
        %v4099 = vadd.f32 0.0, %v4098
        %v4100 = vpop.f32.mrb[0].mxu0
        %4101 = vmatprep.mubr.f32.mxu0 0.0
        %4102 = vmatmul.mubr.f32.gmra.mrb[0].mxu0 %v3919
        %v4103 = vpop.f32.mrb[0].mxu0
        %v4104 = vadd.f32 0.0, %v4103
        %v4105 = vpop.f32.mrb[0].mxu0
        %4106 = vmatprep.mubr.f32.mxu0 0.0
        %4107 = vmatmul.mubr.f32.gmra.mrb[0].mxu0 %v3921
        %v4108 = vpop.f32.mrb[0].mxu0
        %v4109 = vadd.f32 0.0, %v4108
        %v4110 = vpop.f32.mrb[0].mxu0
        %4111 = vmatprep.mubr.f32.mxu0 0.0
        %4112 = vmatmul.mubr.f32.gmra.mrb[0].mxu0 %v3923
        %v4113 = vpop.f32.mrb[0].mxu0
        %v4114 = vadd.f32 0.0, %v4113
        %v4115 = vpop.f32.mrb[0].mxu0
        %4116 = vmatprep.mubr.f32.mxu0 0.0
        %4117 = vmatmul.mubr.f32.gmra.mrb[0].mxu0 %v3925
        %v4118 = vpop.f32.mrb[0].mxu0
        %v4119 = vadd.f32 0.0, %v4118
        %v4120 = vpop.f32.mrb[0].mxu0
        %4121 = vmatprep.mubr.f32.mxu0 0.0
        %4122 = vmatmul.mubr.f32.gmra.mrb[0].mxu0 %v3927
        %v4123 = vpop.f32.mrb[0].mxu0
        %v4124 = vadd.f32 0.0, %v4123
        %v4125 = vpop.f32.mrb[0].mxu0
        %4126 = vmatprep.mubr.f32.mxu0 0.0
        %4127 = vmatmul.mubr.f32.gmra.mrb[0].mxu0 %v3929
        %v4128 = vpop.f32.mrb[0].mxu0
        %v4129 = vadd.f32 0.0, %v4128
        %v4130 = vpop.f32.mrb[0].mxu0
        %4131 = vmatprep.mubr.f32.mxu0 0.0
        %4132 = vmatmul.mubr.f32.gmra.mrb[0].mxu0 %v3931
        %v4133 = vpop.f32.mrb[0].mxu0
        %v4134 = vadd.f32 0.0, %v4133
        %v4135 = vpop.f32.mrb[0].mxu0
        %4136 = vmatprep.mubr.f32.mxu0 0.0
        %4137 = vmatmul.mubr.f32.gmra.mrb[0].mxu0 %v3933
        %v4138 = vpop.f32.mrb[0].mxu0
        %v4139 = vadd.f32 0.0, %v4138
        %v4140 = vpop.f32.mrb[0].mxu0
        %4141 = vmatprep.mubr.f32.mxu0 0.0
        %4142 = vmatmul.mubr.f32.gmra.mrb[0].mxu0 %v3935
        %v4143 = vpop.f32.mrb[0].mxu0
        %v4144 = vadd.f32 0.0, %v4143
        %v4145 = vpop.f32.mrb[0].mxu0
        %4146 = vmatprep.mubr.f32.mxu0 0.0
        %4147 = vmatmul.mubr.f32.gmra.mrb[0].mxu0 %v3937
        %v4148 = vpop.f32.mrb[0].mxu0
        %v4149 = vadd.f32 0.0, %v4148
        %v4150 = vpop.f32.mrb[0].mxu0
        %4151 = vmatprep.mubr.f32.mxu0 0.0
        %4152 = vmatmul.mubr.f32.gmra.mrb[0].mxu0 %v3939
        %v4153 = vpop.f32.mrb[0].mxu0
        %v4154 = vadd.f32 0.0, %v4153
        %v4155 = vpop.f32.mrb[0].mxu0
        %4156 = vmatprep.mubr.f32.mxu0 0.0
        %4157 = vmatmul.mubr.f32.gmra.mrb[0].mxu0 %v3941
        %v4158 = vpop.f32.mrb[0].mxu0
        %v4159 = vadd.f32 0.0, %v4158
        %v4160 = vpop.f32.mrb[0].mxu0
        %4161 = vmatprep.mubr.f32.mxu0 0.0
        %4162 = vmatmul.mubr.f32.gmra.mrb[0].mxu0 %v3943
        %v4163 = vpop.f32.mrb[0].mxu0
        %v4164 = vadd.f32 0.0, %v4163
        %v4165 = vpop.f32.mrb[0].mxu0
        %4166 = vmatprep.mubr.f32.mxu0 0.0
        %4167 = vmatmul.mubr.f32.gmra.mrb[0].mxu0 %v3945
        %v4168 = vpop.f32.mrb[0].mxu0
        %v4169 = vadd.f32 0.0, %v4168
        %v4170 = vpop.f32.mrb[0].mxu0
        %4171 = vmatprep.mubr.f32.mxu0 0.0
        %4172 = vmatmul.mubr.f32.gmra.mrb[0].mxu0 %v3947
        %v4173 = vpop.f32.mrb[0].mxu0
        %v4174 = vadd.f32 0.0, %v4173
        %v4175 = vpop.f32.mrb[0].mxu0
        %4176 = vmatprep.mubr.f32.mxu0 0.0
        %4177 = vmatmul.mubr.f32.gmra.mrb[0].mxu0 %v3949
        %v4178 = vpop.f32.mrb[0].mxu0
        %v4179 = vadd.f32 0.0, %v4178
        %v4180 = vpop.f32.mrb[0].mxu0
        %4181 = vmatprep.mubr.f32.mxu0 0.0
        %4182 = vmatmul.mubr.f32.gmra.mrb[0].mxu0 %v3951
        %v4183 = vpop.f32.mrb[0].mxu0
        %v4184 = vadd.f32 0.0, %v4183
        %v4185 = vpop.f32.mrb[0].mxu0
        %4186 = vmatprep.mubr.f32.mxu0 0.0
        %4187 = vmatmul.mubr.f32.gmra.mrb[0].mxu0 %v3953
        %v4188 = vpop.f32.mrb[0].mxu0
        %v4189 = vadd.f32 0.0, %v4188
        %v4190 = vpop.f32.mrb[0].mxu0
        %4191 = vmatprep.mubr.f32.mxu0 0.0
        %4192 = vmatmul.mubr.f32.gmra.mrb[0].mxu0 %v3955
        %v4193 = vpop.f32.mrb[0].mxu0
        %v4194 = vadd.f32 0.0, %v4193
        %v4195 = vpop.f32.mrb[0].mxu0
        %4196 = vmatprep.mubr.f32.mxu0 0.0
        %4197 = vmatmul.mubr.f32.gmra.mrb[0].mxu0 %v3957
        %v4198 = vpop.f32.mrb[0].mxu0
        %v4199 = vadd.f32 0.0, %v4198
        %v4200 = vpop.f32.mrb[0].mxu0
        %4201 = vmatprep.mubr.f32.mxu0 0.0
        %4202 = vmatmul.mubr.f32.gmra.mrb[0].mxu0 %v3959
        %v4203 = vpop.f32.mrb[0].mxu0
        %v4204 = vadd.f32 0.0, %v4203
        %v4205 = vpop.f32.mrb[0].mxu0
        %4206 = vmatprep.mubr.f32.mxu0 0.0
        %4207 = vmatmul.mubr.f32.gmra.mrb[0].mxu0 %v3961
        %v4208 = vpop.f32.mrb[0].mxu0
        %v4209 = vadd.f32 0.0, %v4208
        %v4210 = vpop.f32.mrb[0].mxu0
        %4211 = vmatprep.mubr.f32.mxu0 0.0
        %4212 = vmatmul.mubr.f32.gmra.mrb[0].mxu0 %v3963
        %v4213 = vpop.f32.mrb[0].mxu0
        %v4214 = vadd.f32 0.0, %v4213
        %v4215 = vpop.f32.mrb[0].mxu0
        %4216 = vmatprep.mubr.f32.mxu0 0.0
        %4217 = vmatmul.mubr.f32.gmra.mrb[0].mxu0 %v3965
        %v4218 = vpop.f32.mrb[0].mxu0
        %v4219 = vadd.f32 0.0, %v4218
        %v4220 = vpop.f32.mrb[0].mxu0
        %4221 = vmatprep.mubr.f32.mxu0 0.0
        %4222 = vmatmul.mubr.f32.gmra.mrb[0].mxu0 %v3967
        %v4223 = vpop.f32.mrb[0].mxu0
        %v4224 = vadd.f32 0.0, %v4223
        %v4225 = vpop.f32.mrb[0].mxu0
        %4226 = vmatprep.mubr.f32.mxu0 0.0
        %4227 = vmatmul.mubr.f32.gmra.mrb[0].mxu0 %v3969
        %v4228 = vpop.f32.mrb[0].mxu0
        %v4229 = vadd.f32 0.0, %v4228
        %v4230 = vpop.f32.mrb[0].mxu0
        %4231 = vmatprep.mubr.f32.mxu0 0.0
        %4232 = vmatmul.mubr.f32.gmra.mrb[0].mxu0 %v3971
        %v4233 = vpop.f32.mrb[0].mxu0
        %v4234 = vpop.f32.mrb[0].mxu0
        %4235 = vmatprep.mubr.f32.mxu0 0.0
        %4236 = vmatmul.mubr.f32.gmra.mrb[0].mxu0 %v3973
        %v4237 = vpop.f32.mrb[0].mxu0
        %v4238 = vpop.f32.mrb[0].mxu0
        %4239 = vmatprep.mubr.f32.mxu0 0.0
        %4240 = vmatmul.mubr.f32.gmra.mrb[0].mxu0 %v3975
        %v4241 = vpop.f32.mrb[0].mxu0
        %v4242 = vpop.f32.mrb[0].mxu0
        %4243 = vdwg.mxu0
        %v4244 = vadd.f32 %v3772, %v4044
        %v4245 = vadd.f32 %v3773, %v4049
        %v4246 = vadd.f32 %v3774, %v4054
        %v4247 = vadd.f32 %v3775, %v4059
        %v4248 = vadd.f32 %v3776, %v4064
        %v4249 = vadd.f32 %v3777, %v4069
        %v4250 = vadd.f32 %v3778, %v4074
        %v4251 = vadd.f32 %v3779, %v4079
        %v4252 = vadd.f32 %v3780, %v4084
        %v4253 = vadd.f32 %v3781, %v4089
        %v4254 = vadd.f32 %v3782, %v4094
        %v4255 = vadd.f32 %v3783, %v4099
        %v4256 = vadd.f32 %v3784, %v4104
        %v4257 = vadd.f32 %v3785, %v4109
        %v4258 = vadd.f32 %v3786, %v4114
        %v4259 = vadd.f32 %v3787, %v4119
        %v4260 = vadd.f32 %v3788, %v4124
        %v4261 = vadd.f32 %v3789, %v4129
        %v4262 = vadd.f32 %v3790, %v4134
        %v4263 = vadd.f32 %v3791, %v4139
        %v4264 = vadd.f32 %v3792, %v4144
        %v4265 = vadd.f32 %v3793, %v4149
        %v4266 = vadd.f32 %v3794, %v4154
        %v4267 = vadd.f32 %v3795, %v4159
        %v4268 = vadd.f32 %v3796, %v4164
        %v4269 = vadd.f32 %v3797, %v4169
        %v4270 = vadd.f32 %v3798, %v4174
        %v4271 = vadd.f32 %v3799, %v4179
        %v4272 = vadd.f32 %v3800, %v4184
        %v4273 = vadd.f32 %v3801, %v4189
        %v4274 = vadd.f32 %v3802, %v4194
        %v4275 = vadd.f32 %v3803, %v4199
        %v4276 = vadd.f32 %v3804, %v4204
        %v4277 = vadd.f32 %v3805, %v4209
        %v4278 = vadd.f32 %v3806, %v4214
        %v4279 = vadd.f32 %v3807, %v4219
        %v4280 = vadd.f32 %v3808, %v4224
        %v4281 = vadd.f32 %v3809, %v4229
        %v4282 = vld [vmem:[%s2] sm:$0x1]
        %v4284 = vlaneseq
        %v4285 = vshrl.u32 %v4284, 7
        %v4286 = vsub.s32 0, %v4285
        %v4287 = vrot.slane %v4282, %v4286
        %v4289 = vadd.f32 %v4244, %v4287
        %v4290 = vadd.f32 %v4245, %v4287
        %v4291 = vadd.f32 %v4246, %v4287
        %v4292 = vadd.f32 %v4247, %v4287
        %v4293 = vadd.f32 %v4248, %v4287
        %v4294 = vadd.f32 %v4249, %v4287
        %v4295 = vadd.f32 %v4250, %v4287
        %v4296 = vadd.f32 %v4251, %v4287
        %v4297 = vadd.f32 %v4252, %v4287
        %v4298 = vadd.f32 %v4253, %v4287
        %v4299 = vadd.f32 %v4254, %v4287
        %v4300 = vadd.f32 %v4255, %v4287
        %v4301 = vadd.f32 %v4256, %v4287
        %v4302 = vadd.f32 %v4257, %v4287
        %v4303 = vadd.f32 %v4258, %v4287
        %v4304 = vadd.f32 %v4259, %v4287
        %v4305 = vadd.f32 %v4260, %v4287
        %v4306 = vadd.f32 %v4261, %v4287
        %v4307 = vadd.f32 %v4262, %v4287
        %v4308 = vadd.f32 %v4263, %v4287
        %v4309 = vadd.f32 %v4264, %v4287
        %v4310 = vadd.f32 %v4265, %v4287
        %v4311 = vadd.f32 %v4266, %v4287
        %v4312 = vadd.f32 %v4267, %v4287
        %v4313 = vadd.f32 %v4268, %v4287
        %v4314 = vadd.f32 %v4269, %v4287
        %v4315 = vadd.f32 %v4270, %v4287
        %v4316 = vadd.f32 %v4271, %v4287
        %v4317 = vadd.f32 %v4272, %v4287
        %v4318 = vadd.f32 %v4273, %v4287
        %v4319 = vadd.f32 %v4274, %v4287
        %v4320 = vadd.f32 %v4275, %v4287
        %v4321 = vadd.f32 %v4276, %v4287
        %v4322 = vadd.f32 %v4277, %v4287
        %v4323 = vadd.f32 %v4278, %v4287
        %v4324 = vadd.f32 %v4279, %v4287
        %v4325 = vadd.f32 %v4280, %v4287
        %v4326 = vadd.f32 %v4281, %v4287
        %v4355 = vrot.slane %v4289, 1
        %v4356 = vrot.slane %v4290, 1
        %v4357 = vsel %vm510, %v4355, %v4356
        %v4358 = vrot.slane %v4291, 1
        %v4359 = vsel %vm510, %v4356, %v4358
        %v4360 = vrot.slane %v4293, 1
        %v4361 = vrot.slane %v4294, 1
        %v4362 = vsel %vm510, %v4360, %v4361
        %v4363 = vrot.slane %v4295, 1
        %v4364 = vsel %vm510, %v4361, %v4363
        %v4365 = vrot.slane %v4296, 1
        %v4366 = vsel %vm510, %v4363, %v4365
        %v4367 = vrot.slane %v4298, 1
        %v4368 = vrot.slane %v4299, 1
        %v4369 = vsel %vm510, %v4367, %v4368
        %v4370 = vrot.slane %v4300, 1
        %v4371 = vsel %vm510, %v4368, %v4370
        %v4372 = vrot.slane %v4302, 1
        %v4373 = vrot.slane %v4303, 1
        %v4374 = vsel %vm510, %v4372, %v4373
        %v4375 = vrot.slane %v4304, 1
        %v4376 = vsel %vm510, %v4373, %v4375
        %v4377 = vrot.slane %v4305, 1
        %v4378 = vsel %vm510, %v4375, %v4377
        %v4379 = vrot.slane %v4307, 1
        %v4380 = vrot.slane %v4308, 1
        %v4381 = vsel %vm510, %v4379, %v4380
        %v4382 = vrot.slane %v4309, 1
        %v4383 = vsel %vm510, %v4380, %v4382
        %v4384 = vrot.slane %v4311, 1
        %v4385 = vrot.slane %v4312, 1
        %v4386 = vsel %vm510, %v4384, %v4385
        %v4387 = vrot.slane %v4313, 1
        %v4388 = vsel %vm510, %v4385, %v4387
        %v4389 = vrot.slane %v4314, 1
        %v4390 = vsel %vm510, %v4387, %v4389
        %v4391 = vrot.slane %v4316, 1
        %v4392 = vrot.slane %v4317, 1
        %v4393 = vsel %vm510, %v4391, %v4392
        %v4394 = vrot.slane %v4318, 1
        %v4395 = vsel %vm510, %v4392, %v4394
        %v4396 = vrot.slane %v4320, 1
        %v4397 = vrot.slane %v4321, 1
        %v4398 = vsel %vm510, %v4396, %v4397
        %v4399 = vrot.slane %v4322, 1
        %v4400 = vsel %vm510, %v4397, %v4399
        %v4401 = vrot.slane %v4323, 1
        %v4402 = vsel %vm510, %v4399, %v4401
        %v4423 = vmax.f32 %v4289, %v4357
        %v4424 = vmax.f32 %v4290, %v4359
        %v4425 = vmax.f32 %v4293, %v4362
        %v4426 = vmax.f32 %v4294, %v4364
        %v4427 = vmax.f32 %v4295, %v4366
        %v4428 = vmax.f32 %v4298, %v4369
        %v4429 = vmax.f32 %v4299, %v4371
        %v4430 = vmax.f32 %v4302, %v4374
        %v4431 = vmax.f32 %v4303, %v4376
        %v4432 = vmax.f32 %v4304, %v4378
        %v4433 = vmax.f32 %v4307, %v4381
        %v4434 = vmax.f32 %v4308, %v4383
        %v4435 = vmax.f32 %v4311, %v4386
        %v4436 = vmax.f32 %v4312, %v4388
        %v4437 = vmax.f32 %v4313, %v4390
        %v4438 = vmax.f32 %v4316, %v4393
        %v4439 = vmax.f32 %v4317, %v4395
        %v4440 = vmax.f32 %v4320, %v4398
        %v4441 = vmax.f32 %v4321, %v4400
        %v4442 = vmax.f32 %v4322, %v4402
        %v4453 = vrot.slane %v4292, 1
        %v4454 = vsel %vm510, %v4358, %v4453
        %v4455 = vsel %vm510, %v4453, %v4360
        %v4456 = vrot.slane %v4297, 1
        %v4457 = vsel %vm510, %v4365, %v4456
        %v4458 = vsel %vm510, %v4456, %v4367
        %v4459 = vrot.slane %v4301, 1
        %v4460 = vsel %vm510, %v4370, %v4459
        %v4461 = vsel %vm510, %v4459, %v4372
        %v4462 = vrot.slane %v4306, 1
        %v4463 = vsel %vm510, %v4377, %v4462
        %v4464 = vsel %vm510, %v4462, %v4379
        %v4465 = vrot.slane %v4310, 1
        %v4466 = vsel %vm510, %v4382, %v4465
        %v4467 = vsel %vm510, %v4465, %v4384
        %v4468 = vrot.slane %v4315, 1
        %v4469 = vsel %vm510, %v4389, %v4468
        %v4470 = vsel %vm510, %v4468, %v4391
        %v4471 = vrot.slane %v4319, 1
        %v4472 = vsel %vm510, %v4394, %v4471
        %v4473 = vsel %vm510, %v4471, %v4396
        %v4474 = vrot.slane %v4324, 1
        %v4475 = vsel %vm510, %v4401, %v4474
        %v4476 = vrot.slane %v4325, 1
        %v4477 = vsel %vm510, %v4474, %v4476
        %v4478 = vrot.slane %v4326, 1
        %v4479 = vsel %vm510, %v4476, %v4478
        %v4497 = vmax.f32 %v4291, %v4454
        %v4498 = vmax.f32 %v4292, %v4455
        %v4499 = vmax.f32 %v4296, %v4457
        %v4500 = vmax.f32 %v4297, %v4458
        %v4501 = vmax.f32 %v4300, %v4460
        %v4502 = vmax.f32 %v4301, %v4461
        %v4503 = vmax.f32 %v4305, %v4463
        %v4504 = vmax.f32 %v4306, %v4464
        %v4505 = vmax.f32 %v4309, %v4466
        %v4506 = vmax.f32 %v4310, %v4467
        %v4507 = vmax.f32 %v4314, %v4469
        %v4508 = vmax.f32 %v4315, %v4470
        %v4509 = vmax.f32 %v4318, %v4472
        %v4510 = vmax.f32 %v4319, %v4473
        %v4511 = vmax.f32 %v4323, %v4475
        %v4512 = vmax.f32 %v4324, %v4477
        %v4513 = vmax.f32 %v4325, %v4479
        %v4542 = vrot.slane %v4497, 2
        %v4543 = vrot.slane %v4498, 2
        %v4544 = vsel %vm1292, %v4542, %v4543
        %v4545 = vrot.slane %v4425, 2
        %v4546 = vsel %vm1292, %v4543, %v4545
        %v4547 = vrot.slane %v4427, 2
        %v4548 = vrot.slane %v4499, 2
        %v4549 = vsel %vm1292, %v4547, %v4548
        %v4550 = vrot.slane %v4500, 2
        %v4551 = vsel %vm1292, %v4548, %v4550
        %v4552 = vrot.slane %v4428, 2
        %v4553 = vsel %vm1292, %v4550, %v4552
        %v4554 = vrot.slane %v4501, 2
        %v4555 = vrot.slane %v4502, 2
        %v4556 = vsel %vm1292, %v4554, %v4555
        %v4557 = vrot.slane %v4430, 2
        %v4558 = vsel %vm1292, %v4555, %v4557
        %v4559 = vrot.slane %v4432, 2
        %v4560 = vrot.slane %v4503, 2
        %v4561 = vsel %vm1292, %v4559, %v4560
        %v4562 = vrot.slane %v4504, 2
        %v4563 = vsel %vm1292, %v4560, %v4562
        %v4564 = vrot.slane %v4433, 2
        %v4565 = vsel %vm1292, %v4562, %v4564
        %v4566 = vrot.slane %v4505, 2
        %v4567 = vrot.slane %v4506, 2
        %v4568 = vsel %vm1292, %v4566, %v4567
        %v4569 = vrot.slane %v4435, 2
        %v4570 = vsel %vm1292, %v4567, %v4569
        %v4571 = vrot.slane %v4437, 2
        %v4572 = vrot.slane %v4507, 2
        %v4573 = vsel %vm1292, %v4571, %v4572
        %v4574 = vrot.slane %v4508, 2
        %v4575 = vsel %vm1292, %v4572, %v4574
        %v4576 = vrot.slane %v4438, 2
        %v4577 = vsel %vm1292, %v4574, %v4576
        %v4578 = vrot.slane %v4509, 2
        %v4579 = vrot.slane %v4510, 2
        %v4580 = vsel %vm1292, %v4578, %v4579
        %v4581 = vrot.slane %v4440, 2
        %v4582 = vsel %vm1292, %v4579, %v4581
        %v4583 = vrot.slane %v4442, 2
        %v4584 = vrot.slane %v4511, 2
        %v4585 = vsel %vm1292, %v4583, %v4584
        %v4586 = vrot.slane %v4512, 2
        %v4587 = vsel %vm1292, %v4584, %v4586
        %v4588 = vrot.slane %v4513, 2
        %v4589 = vsel %vm1292, %v4586, %v4588
        %v4610 = vmax.f32 %v4423, %v4544
        %v4611 = vmax.f32 %v4424, %v4546
        %v4612 = vmax.f32 %v4425, %v4549
        %v4613 = vmax.f32 %v4426, %v4551
        %v4614 = vmax.f32 %v4427, %v4553
        %v4615 = vmax.f32 %v4428, %v4556
        %v4616 = vmax.f32 %v4429, %v4558
        %v4617 = vmax.f32 %v4430, %v4561
        %v4618 = vmax.f32 %v4431, %v4563
        %v4619 = vmax.f32 %v4432, %v4565
        %v4620 = vmax.f32 %v4433, %v4568
        %v4621 = vmax.f32 %v4434, %v4570
        %v4622 = vmax.f32 %v4435, %v4573
        %v4623 = vmax.f32 %v4436, %v4575
        %v4624 = vmax.f32 %v4437, %v4577
        %v4625 = vmax.f32 %v4438, %v4580
        %v4626 = vmax.f32 %v4439, %v4582
        %v4627 = vmax.f32 %v4440, %v4585
        %v4628 = vmax.f32 %v4441, %v4587
        %v4629 = vmax.f32 %v4442, %v4589
        %vm4630 = vcmask 122880
        %4631 = vst.msk [vmem:[#allocation2 + $0xb] sm:$0x1] %vm4630, %v4610
        %vm4632 = vcmask 124930
        %4633 = vst.msk [vmem:[#allocation2 + $0xa] sm:$0x4] %vm4632, %v4610
        %vm4634 = vcmask 126980
        %4635 = vst.msk [vmem:[#allocation2 + $0x9] sm:$0x10] %vm4634, %v4610
        %vm4636 = vcmask 129030
        %4637 = vst.msk [vmem:[#allocation2 + $0x8] sm:$0x40] %vm4636, %v4610
        %4638 = vst.msk [vmem:[#allocation2 + $0xf] sm:$0x1] %vm4630, %v4611
        %4639 = vst.msk [vmem:[#allocation2 + $0xe] sm:$0x4] %vm4632, %v4611
        %4640 = vst.msk [vmem:[#allocation2 + $0xd] sm:$0x10] %vm4634, %v4611
        %4641 = vst.msk [vmem:[#allocation2 + $0xc] sm:$0x40] %vm4636, %v4611
        %4642 = vst.msk [vmem:[#allocation2 + $0x11] sm:$0x10] %vm4634, %v4612
        %4643 = vst.msk [vmem:[#allocation2 + $0x10] sm:$0x40] %vm4636, %v4612
        %4644 = vst.msk [vmem:[#allocation2 + $0x17] sm:$0x1] %vm4630, %v4613
        %4645 = vst.msk [vmem:[#allocation2 + $0x16] sm:$0x4] %vm4632, %v4613
        %4646 = vst.msk [vmem:[#allocation2 + $0x15] sm:$0x10] %vm4634, %v4613
        %4647 = vst.msk [vmem:[#allocation2 + $0x14] sm:$0x40] %vm4636, %v4613
        %4648 = vst.msk [vmem:[#allocation2 + $0x1b] sm:$0x1] %vm4630, %v4614
        %4649 = vst.msk [vmem:[#allocation2 + $0x1a] sm:$0x4] %vm4632, %v4614
        %4650 = vst.msk [vmem:[#allocation2 + $0x1f] sm:$0x1] %vm4630, %v4615
        %4651 = vst.msk [vmem:[#allocation2 + $0x1e] sm:$0x4] %vm4632, %v4615
        %4652 = vst.msk [vmem:[#allocation2 + $0x1d] sm:$0x10] %vm4634, %v4615
        %4653 = vst.msk [vmem:[#allocation2 + $0x1c] sm:$0x40] %vm4636, %v4615
        %4654 = vst.msk [vmem:[#allocation2 + $0x23] sm:$0x1] %vm4630, %v4616
        %4655 = vst.msk [vmem:[#allocation2 + $0x22] sm:$0x4] %vm4632, %v4616
        %4656 = vst.msk [vmem:[#allocation2 + $0x21] sm:$0x10] %vm4634, %v4616
        %4657 = vst.msk [vmem:[#allocation2 + $0x20] sm:$0x40] %vm4636, %v4616
        %4658 = vst.msk [vmem:[#allocation2 + $0x25] sm:$0x10] %vm4634, %v4617
        %4659 = vst.msk [vmem:[#allocation2 + $0x24] sm:$0x40] %vm4636, %v4617
        %4660 = vst.msk [vmem:[#allocation2 + $0x2b] sm:$0x1] %vm4630, %v4618
        %4661 = vst.msk [vmem:[#allocation2 + $0x2a] sm:$0x4] %vm4632, %v4618
        %4662 = vst.msk [vmem:[#allocation2 + $0x29] sm:$0x10] %vm4634, %v4618
        %4663 = vst.msk [vmem:[#allocation2 + $0x28] sm:$0x40] %vm4636, %v4618
        %4664 = vst.msk [vmem:[#allocation2 + $0x2f] sm:$0x1] %vm4630, %v4619
        %4665 = vst.msk [vmem:[#allocation2 + $0x2e] sm:$0x4] %vm4632, %v4619
        %4666 = vst.msk [vmem:[#allocation2 + $0x33] sm:$0x1] %vm4630, %v4620
        %4667 = vst.msk [vmem:[#allocation2 + $0x32] sm:$0x4] %vm4632, %v4620
        %4668 = vst.msk [vmem:[#allocation2 + $0x31] sm:$0x10] %vm4634, %v4620
        %4669 = vst.msk [vmem:[#allocation2 + $0x30] sm:$0x40] %vm4636, %v4620
        %4670 = vst.msk [vmem:[#allocation2 + $0x37] sm:$0x1] %vm4630, %v4621
        %4671 = vst.msk [vmem:[#allocation2 + $0x36] sm:$0x4] %vm4632, %v4621
        %4672 = vst.msk [vmem:[#allocation2 + $0x35] sm:$0x10] %vm4634, %v4621
        %4673 = vst.msk [vmem:[#allocation2 + $0x34] sm:$0x40] %vm4636, %v4621
        %4674 = vst.msk [vmem:[#allocation2 + $0x39] sm:$0x10] %vm4634, %v4622
        %4675 = vst.msk [vmem:[#allocation2 + $0x38] sm:$0x40] %vm4636, %v4622
        %4676 = vst.msk [vmem:[#allocation2 + $0x3f] sm:$0x1] %vm4630, %v4623
        %4677 = vst.msk [vmem:[#allocation2 + $0x3e] sm:$0x4] %vm4632, %v4623
        %4678 = vst.msk [vmem:[#allocation2 + $0x3d] sm:$0x10] %vm4634, %v4623
        %4679 = vst.msk [vmem:[#allocation2 + $0x3c] sm:$0x40] %vm4636, %v4623
        %4680 = vst.msk [vmem:[#allocation2 + $0x43] sm:$0x1] %vm4630, %v4624
        %4681 = vst.msk [vmem:[#allocation2 + $0x42] sm:$0x4] %vm4632, %v4624
        %4682 = vst.msk [vmem:[#allocation2 + $0x47] sm:$0x1] %vm4630, %v4625
        %4683 = vst.msk [vmem:[#allocation2 + $0x46] sm:$0x4] %vm4632, %v4625
        %4684 = vst.msk [vmem:[#allocation2 + $0x45] sm:$0x10] %vm4634, %v4625
        %4685 = vst.msk [vmem:[#allocation2 + $0x44] sm:$0x40] %vm4636, %v4625
        %4686 = vst.msk [vmem:[#allocation2 + $0x4b] sm:$0x1] %vm4630, %v4626
        %4687 = vst.msk [vmem:[#allocation2 + $0x4a] sm:$0x4] %vm4632, %v4626
        %4688 = vst.msk [vmem:[#allocation2 + $0x49] sm:$0x10] %vm4634, %v4626
        %4689 = vst.msk [vmem:[#allocation2 + $0x48] sm:$0x40] %vm4636, %v4626
        %4690 = vst.msk [vmem:[#allocation2 + $0x4d] sm:$0x10] %vm4634, %v4627
        %4691 = vst.msk [vmem:[#allocation2 + $0x4c] sm:$0x40] %vm4636, %v4627
        %4692 = vst.msk [vmem:[#allocation2 + $0x53] sm:$0x1] %vm4630, %v4628
        %4693 = vst.msk [vmem:[#allocation2 + $0x52] sm:$0x4] %vm4632, %v4628
        %4694 = vst.msk [vmem:[#allocation2 + $0x51] sm:$0x10] %vm4634, %v4628
        %4695 = vst.msk [vmem:[#allocation2 + $0x50] sm:$0x40] %vm4636, %v4628
        %4696 = vst.msk [vmem:[#allocation2 + $0x57] sm:$0x1] %vm4630, %v4629
        %4697 = vst.msk [vmem:[#allocation2 + $0x56] sm:$0x4] %vm4632, %v4629
        %v4698 = vld [vmem:[#allocation2] sm:$0xff]
        %v4699 = vld [vmem:[#allocation2 + $0x8] sm:$0xff]
        %v4700 = vld [vmem:[#allocation2 + $0x10] sm:$0xff]
        %v4701 = vld [vmem:[#allocation2 + $0x18] sm:$0xff]
        %v4702 = vld [vmem:[#allocation2 + $0x20] sm:$0xff]
        %v4703 = vld [vmem:[#allocation2 + $0x28] sm:$0xff]
        %v4704 = vld [vmem:[#allocation2 + $0x30] sm:$0xff]
        %v4705 = vld [vmem:[#allocation2 + $0x38] sm:$0xff]
        %v4706 = vld [vmem:[#allocation2 + $0x40] sm:$0xff]
        %v4707 = vld [vmem:[#allocation2 + $0x48] sm:$0xff]
        %v4708 = vld [vmem:[#allocation2 + $0x50] sm:$0xff]
        %v4709 = vld [vmem:[#allocation2 + $0x58] sm:$0xff]
        %v4710 = vld [vmem:[#allocation2 + $0x60] sm:$0xff]
        %v4711 = vld [vmem:[#allocation2 + $0x68] sm:$0xff]
        %v4712 = vld [vmem:[#allocation2 + $0x70] sm:$0xff]
        %v4713 = vld [vmem:[#allocation2 + $0x78] sm:$0x3]
        %v4724 = vrot.slane %v4699, 1
        %v4725 = vrot.slane %v4700, 1
        %v4726 = vsel %vm510, %v4724, %v4725
        %v4727 = vrot.slane %v4701, 1
        %v4728 = vsel %vm510, %v4725, %v4727
        %v4729 = vrot.slane %v4702, 1
        %v4730 = vsel %vm510, %v4727, %v4729
        %v4731 = vrot.slane %v4703, 1
        %v4732 = vsel %vm510, %v4729, %v4731
        %v4733 = vrot.slane %v4704, 1
        %v4734 = vrot.slane %v4705, 1
        %v4735 = vsel %vm510, %v4733, %v4734
        %v4736 = vrot.slane %v4706, 1
        %v4737 = vsel %vm510, %v4734, %v4736
        %v4738 = vrot.slane %v4707, 1
        %v4739 = vsel %vm510, %v4736, %v4738
        %v4740 = vrot.slane %v4708, 1
        %v4741 = vsel %vm510, %v4738, %v4740
        %v4750 = vmax.f32 %v4699, %v4726
        %v4751 = vmax.f32 %v4700, %v4728
        %v4752 = vmax.f32 %v4701, %v4730
        %v4753 = vmax.f32 %v4702, %v4732
        %v4754 = vmax.f32 %v4704, %v4735
        %v4755 = vmax.f32 %v4705, %v4737
        %v4756 = vmax.f32 %v4706, %v4739
        %v4757 = vmax.f32 %v4707, %v4741
        %v4760 = vsel %vm510, %v4731, %v4733
        %v4761 = vrot.slane %v4709, 1
        %v4762 = vsel %vm510, %v4740, %v4761
        %v4763 = vrot.slane %v4710, 1
        %v4764 = vsel %vm510, %v4761, %v4763
        %v4768 = vmax.f32 %v4703, %v4760
        %v4769 = vmax.f32 %v4708, %v4762
        %v4770 = vmax.f32 %v4709, %v4764
        %v4781 = vrot.slane %v4751, 2
        %v4782 = vrot.slane %v4752, 2
        %v4783 = vsel %vm1292, %v4781, %v4782
        %v4784 = vrot.slane %v4753, 2
        %v4785 = vsel %vm1292, %v4782, %v4784
        %v4786 = vrot.slane %v4768, 2
        %v4787 = vsel %vm1292, %v4784, %v4786
        %v4788 = vrot.slane %v4754, 2
        %v4789 = vsel %vm1292, %v4786, %v4788
        %v4790 = vrot.slane %v4755, 2
        %v4791 = vrot.slane %v4756, 2
        %v4792 = vsel %vm1292, %v4790, %v4791
        %v4793 = vrot.slane %v4757, 2
        %v4794 = vsel %vm1292, %v4791, %v4793
        %v4795 = vrot.slane %v4769, 2
        %v4796 = vsel %vm1292, %v4793, %v4795
        %v4797 = vrot.slane %v4770, 2
        %v4798 = vsel %vm1292, %v4795, %v4797
        %v4807 = vmax.f32 %v4750, %v4783
        %v4808 = vmax.f32 %v4751, %v4785
        %v4809 = vmax.f32 %v4752, %v4787
        %v4810 = vmax.f32 %v4753, %v4789
        %v4811 = vmax.f32 %v4754, %v4792
        %v4812 = vmax.f32 %v4755, %v4794
        %v4813 = vmax.f32 %v4756, %v4796
        %v4814 = vmax.f32 %v4757, %v4798
        %vm4815 = vcmask 125955
        %4816 = vst.msk [vmem:[#allocation3 + $0x4] sm:$0x8] %vm4815, %v4807
        %vm4817 = vcmask 128005
        %4818 = vst.msk [vmem:[#allocation3 + $0x3] sm:$0x20] %vm4817, %v4807
        %vm4819 = vcmask 130055
        %4820 = vst.msk [vmem:[#allocation3 + $0x2] sm:$0x80] %vm4819, %v4807
        %vm4821 = vcmask 123905
        %4822 = vst.msk [vmem:[#allocation3 + $0x9] sm:$0x2] %vm4821, %v4808
        %4823 = vst.msk [vmem:[#allocation3 + $0x6] sm:$0x80] %vm4819, %v4809
        %4824 = vst.msk [vmem:[#allocation3 + $0xd] sm:$0x2] %vm4821, %v4810
        %4825 = vst.msk [vmem:[#allocation3 + $0xc] sm:$0x8] %vm4815, %v4810
        %4826 = vst.msk [vmem:[#allocation3 + $0xb] sm:$0x20] %vm4817, %v4810
        %4827 = vst.msk [vmem:[#allocation3 + $0x10] sm:$0x8] %vm4815, %v4811
        %4828 = vst.msk [vmem:[#allocation3 + $0xf] sm:$0x20] %vm4817, %v4811
        %4829 = vst.msk [vmem:[#allocation3 + $0xe] sm:$0x80] %vm4819, %v4811
        %4830 = vst.msk [vmem:[#allocation3 + $0x15] sm:$0x2] %vm4821, %v4812
        %4831 = vst.msk [vmem:[#allocation3 + $0x12] sm:$0x80] %vm4819, %v4813
        %4832 = vst.msk [vmem:[#allocation3 + $0x19] sm:$0x2] %vm4821, %v4814
        %4833 = vst.msk [vmem:[#allocation3 + $0x18] sm:$0x8] %vm4815, %v4814
        %4834 = vst.msk [vmem:[#allocation3 + $0x17] sm:$0x20] %vm4817, %v4814
        %v4835 = vld [vmem:[%s3] sm:$0xff]
        %v4836 = vld [vmem:[%s3 + $0x8] sm:$0xff]
        %v4837 = vld [vmem:[%s3 + $0x10] sm:$0xff]
        %v4838 = vld [vmem:[%s3 + $0x18] sm:$0xff]
        %v4840 = vrot.slane %v4698, 1
        %v4841 = vsel %vm510, %v4840, %v4724
        %v4842 = vsel %vm385, %v4841, 0
        %v4844 = vsel %vm385, %v4726, 0
        %v4846 = vsel %vm385, %v4728, 0
        %v4848 = vsel %vm385, %v4730, 0
        %v4850 = vsel %vm385, %v4732, 0
        %v4852 = vsel %vm385, %v4760, 0
        %v4854 = vsel %vm385, %v4735, 0
        %v4856 = vsel %vm385, %v4737, 0
        %v4858 = vsel %vm385, %v4739, 0
        %v4860 = vsel %vm385, %v4741, 0
        %v4862 = vsel %vm385, %v4762, 0
        %v4864 = vsel %vm385, %v4764, 0
        %v4866 = vsel %vm385, %v4763, 0
        %4868 = vmatprep.subr.mxu0 0.0
        %4869 = vmatpush1.msra.mxu0 %v4837
        %4870 = vmatprep.subr.mxu0 0.0
        %4871 = vmatpush1.msra.mxu0 %v4838
        %4872 = vmatprep.subr.mxu0 0.0
        %4873 = vmatpush1.msra.mxu0 0.0
        %4874 = vmatprep.subr.mxu0 0.0
        %4875 = vmatpush1.msra.mxu0 0.0
        %4876 = vmatprep.subr.mxu0 0.0
        %4877 = vmatpush1.msra.mxu0 0.0
        %4878 = vmatprep.subr.mxu0 0.0
        %4879 = vmatpush1.msra.mxu0 0.0
        %4880 = vmatprep.subr.mxu0 0.0
        %4881 = vmatpush1.msra.mxu0 0.0
        %4882 = vmatprep.subr.mxu0 0.0
        %4883 = vmatpush1.msra.mxu0 0.0
        %4884 = vmatprep.subr.mxu0 0.0
        %4885 = vmatpush1.msra.mxu0 0.0
        %4886 = vmatprep.subr.mxu0 0.0
        %4887 = vmatpush1.msra.mxu0 0.0
        %4888 = vmatprep.subr.mxu0 0.0
        %4889 = vmatpush1.msra.mxu0 0.0
        %4890 = vmatprep.subr.mxu0 0.0
        %4891 = vmatpush1.msra.mxu0 0.0
        %4892 = vmatprep.subr.mxu0 0.0
        %4893 = vmatpush1.msra.mxu0 0.0
        %4894 = vmatprep.subr.mxu0 0.0
        %4895 = vmatpush1.msra.mxu0 0.0
        %4896 = vmatprep.subr.mxu0 0.0
        %4897 = vmatpush1.msra.mxu0 0.0
        %4898 = vmatprep.subr.mxu0 0.0
        %4899 = vmatpush1.msra.mxu0 0.0
        %4900 = vmatprep.subr.mxu0 0.0
        %4901 = vmatpush1.msra.mxu0 0.0
        %4902 = vmatprep.subr.mxu0 0.0
        %4903 = vmatpush1.msra.mxu0 0.0
        %4904 = vmatprep.subr.mxu0 0.0
        %4905 = vmatpush1.msra.mxu0 0.0
        %4906 = vmatprep.subr.mxu0 0.0
        %4907 = vmatpush1.msra.mxu0 0.0
        %4908 = vmatprep.subr.mxu0 0.0
        %4909 = vmatpush1.msra.mxu0 0.0
        %4910 = vmatprep.subr.mxu0 0.0
        %4911 = vmatpush1.msra.mxu0 0.0
        %4912 = vmatprep.subr.mxu0 0.0
        %4913 = vmatpush1.msra.mxu0 0.0
        %4914 = vmatprep.subr.mxu0 0.0
        %4915 = vmatpush1.msra.mxu0 0.0
        %4916 = vmatprep.subr.mxu0 0.0
        %4917 = vmatpush1.msra.mxu0 0.0
        %4918 = vmatprep.subr.mxu0 0.0
        %4919 = vmatpush1.msra.mxu0 0.0
        %4920 = vmatprep.subr.mxu0 0.0
        %4921 = vmatpush1.msra.mxu0 0.0
        %4922 = vmatprep.subr.mxu0 0.0
        %4923 = vmatpush1.msra.mxu0 0.0
        %4924 = vmatprep.subr.mxu0 0.0
        %4925 = vmatpush1.msra.mxu0 0.0
        %4926 = vmatprep.subr.mxu0 0.0
        %4927 = vmatpush1.msra.mxu0 0.0
        %4928 = vmatprep.subr.mxu0 0.0
        %4929 = vmatpush1.msra.mxu0 0.0
        %4930 = vmatprep.subr.mxu0 0.0
        %4931 = vmatpush1.msra.mxu0 0.0
        %4932 = vmatprep.mubr.f32.mxu0 0.0
        %4933 = vmatmul.mubr.f32.gmra.mrb[0].mxu0 %v4842
        %v4934 = vpop.f32.mrb[0].mxu0
        %v4935 = vadd.f32 0.0, %v4934
        %v4936 = vpop.f32.mrb[0].mxu0
        %4937 = vmatprep.mubr.f32.mxu0 0.0
        %4938 = vmatmul.mubr.f32.gmra.mrb[0].mxu0 %v4844
        %v4939 = vpop.f32.mrb[0].mxu0
        %v4940 = vpop.f32.mrb[0].mxu0
        %4941 = vmatprep.mubr.f32.mxu0 0.0
        %4942 = vmatmul.mubr.f32.gmra.mrb[0].mxu0 %v4846
        %v4943 = vpop.f32.mrb[0].mxu0
        %v4944 = vadd.f32 0.0, %v4943
        %v4945 = vpop.f32.mrb[0].mxu0
        %4946 = vmatprep.mubr.f32.mxu0 0.0
        %4947 = vmatmul.mubr.f32.gmra.mrb[0].mxu0 %v4848
        %v4948 = vpop.f32.mrb[0].mxu0
        %v4949 = vadd.f32 0.0, %v4948
        %v4950 = vpop.f32.mrb[0].mxu0
        %4951 = vmatprep.mubr.f32.mxu0 0.0
        %4952 = vmatmul.mubr.f32.gmra.mrb[0].mxu0 %v4850
        %v4953 = vpop.f32.mrb[0].mxu0
        %v4954 = vpop.f32.mrb[0].mxu0
        %4955 = vmatprep.mubr.f32.mxu0 0.0
        %4956 = vmatmul.mubr.f32.gmra.mrb[0].mxu0 %v4852
        %v4957 = vpop.f32.mrb[0].mxu0
        %v4958 = vadd.f32 0.0, %v4957
        %v4959 = vpop.f32.mrb[0].mxu0
        %4960 = vmatprep.mubr.f32.mxu0 0.0
        %4961 = vmatmul.mubr.f32.gmra.mrb[0].mxu0 %v4854
        %v4962 = vpop.f32.mrb[0].mxu0
        %v4963 = vpop.f32.mrb[0].mxu0
        %4964 = vmatprep.mubr.f32.mxu0 0.0
        %4965 = vmatmul.mubr.f32.gmra.mrb[0].mxu0 %v4856
        %v4966 = vpop.f32.mrb[0].mxu0
        %v4967 = vadd.f32 0.0, %v4966
        %v4968 = vpop.f32.mrb[0].mxu0
        %4969 = vmatprep.mubr.f32.mxu0 0.0
        %4970 = vmatmul.mubr.f32.gmra.mrb[0].mxu0 %v4858
        %v4971 = vpop.f32.mrb[0].mxu0
        %v4972 = vadd.f32 0.0, %v4971
        %v4973 = vpop.f32.mrb[0].mxu0
        %4974 = vmatprep.mubr.f32.mxu0 0.0
        %4975 = vmatmul.mubr.f32.gmra.mrb[0].mxu0 %v4860
        %v4976 = vpop.f32.mrb[0].mxu0
        %v4977 = vpop.f32.mrb[0].mxu0
        %4978 = vmatprep.mubr.f32.mxu0 0.0
        %4979 = vmatmul.mubr.f32.gmra.mrb[0].mxu0 %v4862
        %v4980 = vpop.f32.mrb[0].mxu0
        %v4981 = vpop.f32.mrb[0].mxu0
        %4982 = vmatprep.mubr.f32.mxu0 0.0
        %4983 = vmatmul.mubr.f32.gmra.mrb[0].mxu0 %v4864
        %v4984 = vpop.f32.mrb[0].mxu0
        %v4985 = vpop.f32.mrb[0].mxu0
        %4986 = vmatprep.mubr.f32.mxu0 0.0
        %4987 = vmatmul.mubr.f32.gmra.mrb[0].mxu0 %v4866
        %v4988 = vpop.f32.mrb[0].mxu0
        %v4989 = vpop.f32.mrb[0].mxu0
        %4990 = vdwg.mxu0
        %v4991 = vsel %vm385, %v4698, 0
        %v4993 = vsel %vm385, %v4699, 0
        %v4995 = vsel %vm385, %v4700, 0
        %v4997 = vsel %vm385, %v4701, 0
        %v4999 = vsel %vm385, %v4702, 0
        %v5001 = vsel %vm385, %v4703, 0
        %v5003 = vsel %vm385, %v4704, 0
        %v5005 = vsel %vm385, %v4705, 0
        %v5007 = vsel %vm385, %v4706, 0
        %v5009 = vsel %vm385, %v4707, 0
        %v5011 = vsel %vm385, %v4708, 0
        %v5013 = vsel %vm385, %v4709, 0
        %v5015 = vsel %vm385, %v4710, 0
        %5017 = vmatprep.subr.mxu0 0.0
        %5018 = vmatpush1.msra.mxu0 %v4835
        %5019 = vmatprep.subr.mxu0 0.0
        %5020 = vmatpush1.msra.mxu0 %v4836
        %5021 = vmatprep.subr.mxu0 0.0
        %5022 = vmatpush1.msra.mxu0 0.0
        %5023 = vmatprep.subr.mxu0 0.0
        %5024 = vmatpush1.msra.mxu0 0.0
        %5025 = vmatprep.subr.mxu0 0.0
        %5026 = vmatpush1.msra.mxu0 0.0
        %5027 = vmatprep.subr.mxu0 0.0
        %5028 = vmatpush1.msra.mxu0 0.0
        %5029 = vmatprep.subr.mxu0 0.0
        %5030 = vmatpush1.msra.mxu0 0.0
        %5031 = vmatprep.subr.mxu0 0.0
        %5032 = vmatpush1.msra.mxu0 0.0
        %5033 = vmatprep.subr.mxu0 0.0
        %5034 = vmatpush1.msra.mxu0 0.0
        %5035 = vmatprep.subr.mxu0 0.0
        %5036 = vmatpush1.msra.mxu0 0.0
        %5037 = vmatprep.subr.mxu0 0.0
        %5038 = vmatpush1.msra.mxu0 0.0
        %5039 = vmatprep.subr.mxu0 0.0
        %5040 = vmatpush1.msra.mxu0 0.0
        %5041 = vmatprep.subr.mxu0 0.0
        %5042 = vmatpush1.msra.mxu0 0.0
        %5043 = vmatprep.subr.mxu0 0.0
        %5044 = vmatpush1.msra.mxu0 0.0
        %5045 = vmatprep.subr.mxu0 0.0
        %5046 = vmatpush1.msra.mxu0 0.0
        %5047 = vmatprep.subr.mxu0 0.0
        %5048 = vmatpush1.msra.mxu0 0.0
        %5049 = vmatprep.subr.mxu0 0.0
        %5050 = vmatpush1.msra.mxu0 0.0
        %5051 = vmatprep.subr.mxu0 0.0
        %5052 = vmatpush1.msra.mxu0 0.0
        %5053 = vmatprep.subr.mxu0 0.0
        %5054 = vmatpush1.msra.mxu0 0.0
        %5055 = vmatprep.subr.mxu0 0.0
        %5056 = vmatpush1.msra.mxu0 0.0
        %5057 = vmatprep.subr.mxu0 0.0
        %5058 = vmatpush1.msra.mxu0 0.0
        %5059 = vmatprep.subr.mxu0 0.0
        %5060 = vmatpush1.msra.mxu0 0.0
        %5061 = vmatprep.subr.mxu0 0.0
        %5062 = vmatpush1.msra.mxu0 0.0
        %5063 = vmatprep.subr.mxu0 0.0
        %5064 = vmatpush1.msra.mxu0 0.0
        %5065 = vmatprep.subr.mxu0 0.0
        %5066 = vmatpush1.msra.mxu0 0.0
        %5067 = vmatprep.subr.mxu0 0.0
        %5068 = vmatpush1.msra.mxu0 0.0
        %5069 = vmatprep.subr.mxu0 0.0
        %5070 = vmatpush1.msra.mxu0 0.0
        %5071 = vmatprep.subr.mxu0 0.0
        %5072 = vmatpush1.msra.mxu0 0.0
        %5073 = vmatprep.subr.mxu0 0.0
        %5074 = vmatpush1.msra.mxu0 0.0
        %5075 = vmatprep.subr.mxu0 0.0
        %5076 = vmatpush1.msra.mxu0 0.0
        %5077 = vmatprep.subr.mxu0 0.0
        %5078 = vmatpush1.msra.mxu0 0.0
        %5079 = vmatprep.subr.mxu0 0.0
        %5080 = vmatpush1.msra.mxu0 0.0
        %5081 = vmatprep.mubr.f32.mxu0 0.0
        %5082 = vmatmul.mubr.f32.gmra.mrb[0].mxu0 %v4991
        %v5083 = vpop.f32.mrb[0].mxu0
        %v5084 = vadd.f32 %v4935, %v5083
        %v5085 = vpop.f32.mrb[0].mxu0
        %5086 = vmatprep.mubr.f32.mxu0 0.0
        %5087 = vmatmul.mubr.f32.gmra.mrb[0].mxu0 %v4993
        %v5088 = vpop.f32.mrb[0].mxu0
        %v5089 = vpop.f32.mrb[0].mxu0
        %5090 = vmatprep.mubr.f32.mxu0 0.0
        %5091 = vmatmul.mubr.f32.gmra.mrb[0].mxu0 %v4995
        %v5092 = vpop.f32.mrb[0].mxu0
        %v5093 = vadd.f32 %v4944, %v5092
        %v5094 = vpop.f32.mrb[0].mxu0
        %5095 = vmatprep.mubr.f32.mxu0 0.0
        %5096 = vmatmul.mubr.f32.gmra.mrb[0].mxu0 %v4997
        %v5097 = vpop.f32.mrb[0].mxu0
        %v5098 = vadd.f32 %v4949, %v5097
        %v5099 = vpop.f32.mrb[0].mxu0
        %5100 = vmatprep.mubr.f32.mxu0 0.0
        %5101 = vmatmul.mubr.f32.gmra.mrb[0].mxu0 %v4999
        %v5102 = vpop.f32.mrb[0].mxu0
        %v5103 = vpop.f32.mrb[0].mxu0
        %5104 = vmatprep.mubr.f32.mxu0 0.0
        %5105 = vmatmul.mubr.f32.gmra.mrb[0].mxu0 %v5001
        %v5106 = vpop.f32.mrb[0].mxu0
        %v5107 = vadd.f32 %v4958, %v5106
        %v5108 = vpop.f32.mrb[0].mxu0
        %5109 = vmatprep.mubr.f32.mxu0 0.0
        %5110 = vmatmul.mubr.f32.gmra.mrb[0].mxu0 %v5003
        %v5111 = vpop.f32.mrb[0].mxu0
        %v5112 = vpop.f32.mrb[0].mxu0
        %5113 = vmatprep.mubr.f32.mxu0 0.0
        %5114 = vmatmul.mubr.f32.gmra.mrb[0].mxu0 %v5005
        %v5115 = vpop.f32.mrb[0].mxu0
        %v5116 = vadd.f32 %v4967, %v5115
        %v5117 = vpop.f32.mrb[0].mxu0
        %5118 = vmatprep.mubr.f32.mxu0 0.0
        %5119 = vmatmul.mubr.f32.gmra.mrb[0].mxu0 %v5007
        %v5120 = vpop.f32.mrb[0].mxu0
        %v5121 = vadd.f32 %v4972, %v5120
        %v5122 = vpop.f32.mrb[0].mxu0
        %5123 = vmatprep.mubr.f32.mxu0 0.0
        %5124 = vmatmul.mubr.f32.gmra.mrb[0].mxu0 %v5009
        %v5125 = vpop.f32.mrb[0].mxu0
        %v5126 = vpop.f32.mrb[0].mxu0
        %5127 = vmatprep.mubr.f32.mxu0 0.0
        %5128 = vmatmul.mubr.f32.gmra.mrb[0].mxu0 %v5011
        %v5129 = vpop.f32.mrb[0].mxu0
        %v5130 = vpop.f32.mrb[0].mxu0
        %5131 = vmatprep.mubr.f32.mxu0 0.0
        %5132 = vmatmul.mubr.f32.gmra.mrb[0].mxu0 %v5013
        %v5133 = vpop.f32.mrb[0].mxu0
        %v5134 = vpop.f32.mrb[0].mxu0
        %5135 = vmatprep.mubr.f32.mxu0 0.0
        %5136 = vmatmul.mubr.f32.gmra.mrb[0].mxu0 %v5015
        %v5137 = vpop.f32.mrb[0].mxu0
        %v5138 = vpop.f32.mrb[0].mxu0
        %5139 = vdwg.mxu0
        %v5140 = vld [vmem:[%s3 + $0x20] sm:$0xff]
        %v5141 = vld [vmem:[%s3 + $0x28] sm:$0xff]
        %v5142 = vrot.slane %v4698, 2
        %v5143 = vrot.slane %v4699, 2
        %v5144 = vsel %vm1292, %v5142, %v5143
        %v5145 = vrot.slane %v4700, 2
        %v5146 = vsel %vm1292, %v5143, %v5145
        %v5147 = vrot.slane %v4701, 2
        %v5148 = vsel %vm1292, %v5145, %v5147
        %v5149 = vrot.slane %v4702, 2
        %v5150 = vsel %vm1292, %v5147, %v5149
        %v5151 = vrot.slane %v4703, 2
        %v5152 = vsel %vm1292, %v5149, %v5151
        %v5153 = vrot.slane %v4704, 2
        %v5154 = vsel %vm1292, %v5151, %v5153
        %v5155 = vrot.slane %v4705, 2
        %v5156 = vsel %vm1292, %v5153, %v5155
        %v5157 = vrot.slane %v4706, 2
        %v5158 = vsel %vm1292, %v5155, %v5157
        %v5159 = vrot.slane %v4707, 2
        %v5160 = vsel %vm1292, %v5157, %v5159
        %v5161 = vrot.slane %v4708, 2
        %v5162 = vsel %vm1292, %v5159, %v5161
        %v5163 = vrot.slane %v4709, 2
        %v5164 = vsel %vm1292, %v5161, %v5163
        %v5165 = vrot.slane %v4710, 2
        %v5166 = vsel %vm1292, %v5163, %v5165
        %v5167 = vsel %vm385, %v5144, 0
        %v5169 = vsel %vm385, %v5146, 0
        %v5171 = vsel %vm385, %v5148, 0
        %v5173 = vsel %vm385, %v5150, 0
        %v5175 = vsel %vm385, %v5152, 0
        %v5177 = vsel %vm385, %v5154, 0
        %v5179 = vsel %vm385, %v5156, 0
        %v5181 = vsel %vm385, %v5158, 0
        %v5183 = vsel %vm385, %v5160, 0
        %v5185 = vsel %vm385, %v5162, 0
        %v5187 = vsel %vm385, %v5164, 0
        %v5189 = vsel %vm385, %v5166, 0
        %v5191 = vsel %vm385, %v5165, 0
        %5193 = vmatprep.subr.mxu0 0.0
        %5194 = vmatpush1.msra.mxu0 %v5140
        %5195 = vmatprep.subr.mxu0 0.0
        %5196 = vmatpush1.msra.mxu0 %v5141
        %5197 = vmatprep.subr.mxu0 0.0
        %5198 = vmatpush1.msra.mxu0 0.0
        %5199 = vmatprep.subr.mxu0 0.0
        %5200 = vmatpush1.msra.mxu0 0.0
        %5201 = vmatprep.subr.mxu0 0.0
        %5202 = vmatpush1.msra.mxu0 0.0
        %5203 = vmatprep.subr.mxu0 0.0
        %5204 = vmatpush1.msra.mxu0 0.0
        %5205 = vmatprep.subr.mxu0 0.0
        %5206 = vmatpush1.msra.mxu0 0.0
        %5207 = vmatprep.subr.mxu0 0.0
        %5208 = vmatpush1.msra.mxu0 0.0
        %5209 = vmatprep.subr.mxu0 0.0
        %5210 = vmatpush1.msra.mxu0 0.0
        %5211 = vmatprep.subr.mxu0 0.0
        %5212 = vmatpush1.msra.mxu0 0.0
        %5213 = vmatprep.subr.mxu0 0.0
        %5214 = vmatpush1.msra.mxu0 0.0
        %5215 = vmatprep.subr.mxu0 0.0
        %5216 = vmatpush1.msra.mxu0 0.0
        %5217 = vmatprep.subr.mxu0 0.0
        %5218 = vmatpush1.msra.mxu0 0.0
        %5219 = vmatprep.subr.mxu0 0.0
        %5220 = vmatpush1.msra.mxu0 0.0
        %5221 = vmatprep.subr.mxu0 0.0
        %5222 = vmatpush1.msra.mxu0 0.0
        %5223 = vmatprep.subr.mxu0 0.0
        %5224 = vmatpush1.msra.mxu0 0.0
        %5225 = vmatprep.subr.mxu0 0.0
        %5226 = vmatpush1.msra.mxu0 0.0
        %5227 = vmatprep.subr.mxu0 0.0
        %5228 = vmatpush1.msra.mxu0 0.0
        %5229 = vmatprep.subr.mxu0 0.0
        %5230 = vmatpush1.msra.mxu0 0.0
        %5231 = vmatprep.subr.mxu0 0.0
        %5232 = vmatpush1.msra.mxu0 0.0
        %5233 = vmatprep.subr.mxu0 0.0
        %5234 = vmatpush1.msra.mxu0 0.0
        %5235 = vmatprep.subr.mxu0 0.0
        %5236 = vmatpush1.msra.mxu0 0.0
        %5237 = vmatprep.subr.mxu0 0.0
        %5238 = vmatpush1.msra.mxu0 0.0
        %5239 = vmatprep.subr.mxu0 0.0
        %5240 = vmatpush1.msra.mxu0 0.0
        %5241 = vmatprep.subr.mxu0 0.0
        %5242 = vmatpush1.msra.mxu0 0.0
        %5243 = vmatprep.subr.mxu0 0.0
        %5244 = vmatpush1.msra.mxu0 0.0
        %5245 = vmatprep.subr.mxu0 0.0
        %5246 = vmatpush1.msra.mxu0 0.0
        %5247 = vmatprep.subr.mxu0 0.0
        %5248 = vmatpush1.msra.mxu0 0.0
        %5249 = vmatprep.subr.mxu0 0.0
        %5250 = vmatpush1.msra.mxu0 0.0
        %5251 = vmatprep.subr.mxu0 0.0
        %5252 = vmatpush1.msra.mxu0 0.0
        %5253 = vmatprep.subr.mxu0 0.0
        %5254 = vmatpush1.msra.mxu0 0.0
        %5255 = vmatprep.subr.mxu0 0.0
        %5256 = vmatpush1.msra.mxu0 0.0
        %5257 = vmatprep.mubr.f32.mxu0 0.0
        %5258 = vmatmul.mubr.f32.gmra.mrb[0].mxu0 %v5167
        %v5259 = vpop.f32.mrb[0].mxu0
        %v5260 = vadd.f32 0.0, %v5259
        %v5261 = vpop.f32.mrb[0].mxu0
        %5262 = vmatprep.mubr.f32.mxu0 0.0
        %5263 = vmatmul.mubr.f32.gmra.mrb[0].mxu0 %v5169
        %v5264 = vpop.f32.mrb[0].mxu0
        %v5265 = vpop.f32.mrb[0].mxu0
        %5266 = vmatprep.mubr.f32.mxu0 0.0
        %5267 = vmatmul.mubr.f32.gmra.mrb[0].mxu0 %v5171
        %v5268 = vpop.f32.mrb[0].mxu0
        %v5269 = vadd.f32 0.0, %v5268
        %v5270 = vpop.f32.mrb[0].mxu0
        %5271 = vmatprep.mubr.f32.mxu0 0.0
        %5272 = vmatmul.mubr.f32.gmra.mrb[0].mxu0 %v5173
        %v5273 = vpop.f32.mrb[0].mxu0
        %v5274 = vadd.f32 0.0, %v5273
        %v5275 = vpop.f32.mrb[0].mxu0
        %5276 = vmatprep.mubr.f32.mxu0 0.0
        %5277 = vmatmul.mubr.f32.gmra.mrb[0].mxu0 %v5175
        %v5278 = vpop.f32.mrb[0].mxu0
        %v5279 = vpop.f32.mrb[0].mxu0
        %5280 = vmatprep.mubr.f32.mxu0 0.0
        %5281 = vmatmul.mubr.f32.gmra.mrb[0].mxu0 %v5177
        %v5282 = vpop.f32.mrb[0].mxu0
        %v5283 = vadd.f32 0.0, %v5282
        %v5284 = vpop.f32.mrb[0].mxu0
        %5285 = vmatprep.mubr.f32.mxu0 0.0
        %5286 = vmatmul.mubr.f32.gmra.mrb[0].mxu0 %v5179
        %v5287 = vpop.f32.mrb[0].mxu0
        %v5288 = vpop.f32.mrb[0].mxu0
        %5289 = vmatprep.mubr.f32.mxu0 0.0
        %5290 = vmatmul.mubr.f32.gmra.mrb[0].mxu0 %v5181
        %v5291 = vpop.f32.mrb[0].mxu0
        %v5292 = vadd.f32 0.0, %v5291
        %v5293 = vpop.f32.mrb[0].mxu0
        %5294 = vmatprep.mubr.f32.mxu0 0.0
        %5295 = vmatmul.mubr.f32.gmra.mrb[0].mxu0 %v5183
        %v5296 = vpop.f32.mrb[0].mxu0
        %v5297 = vadd.f32 0.0, %v5296
        %v5298 = vpop.f32.mrb[0].mxu0
        %5299 = vmatprep.mubr.f32.mxu0 0.0
        %5300 = vmatmul.mubr.f32.gmra.mrb[0].mxu0 %v5185
        %v5301 = vpop.f32.mrb[0].mxu0
        %v5302 = vpop.f32.mrb[0].mxu0
        %5303 = vmatprep.mubr.f32.mxu0 0.0
        %5304 = vmatmul.mubr.f32.gmra.mrb[0].mxu0 %v5187
        %v5305 = vpop.f32.mrb[0].mxu0
        %v5306 = vpop.f32.mrb[0].mxu0
        %5307 = vmatprep.mubr.f32.mxu0 0.0
        %5308 = vmatmul.mubr.f32.gmra.mrb[0].mxu0 %v5189
        %v5309 = vpop.f32.mrb[0].mxu0
        %v5310 = vpop.f32.mrb[0].mxu0
        %5311 = vmatprep.mubr.f32.mxu0 0.0
        %5312 = vmatmul.mubr.f32.gmra.mrb[0].mxu0 %v5191
        %v5313 = vpop.f32.mrb[0].mxu0
        %v5314 = vpop.f32.mrb[0].mxu0
        %5315 = vdwg.mxu0
        %v5316 = vadd.f32 %v5084, %v5260
        %v5317 = vadd.f32 %v5093, %v5269
        %v5318 = vadd.f32 %v5098, %v5274
        %v5319 = vadd.f32 %v5107, %v5283
        %v5320 = vadd.f32 %v5116, %v5292
        %v5321 = vadd.f32 %v5121, %v5297
        %v5322 = vld [vmem:[%s3 + $0x30] sm:$0xff]
        %v5323 = vld [vmem:[%s3 + $0x38] sm:$0xff]
        %v5325 = vrot.slane %v4711, 2
        %v5326 = vsel %vm1292, %v5165, %v5325
        %v5327 = vsel %vm385, %v5326, 0
        %v5329 = vsel %vm385, %v5325, 0
        %5331 = vmatprep.subr.mxu0 0.0
        %5332 = vmatpush1.msra.mxu0 %v5322
        %5333 = vmatprep.subr.mxu0 0.0
        %5334 = vmatpush1.msra.mxu0 %v5323
        %5335 = vmatprep.subr.mxu0 0.0
        %5336 = vmatpush1.msra.mxu0 0.0
        %5337 = vmatprep.subr.mxu0 0.0
        %5338 = vmatpush1.msra.mxu0 0.0
        %5339 = vmatprep.subr.mxu0 0.0
        %5340 = vmatpush1.msra.mxu0 0.0
        %5341 = vmatprep.subr.mxu0 0.0
        %5342 = vmatpush1.msra.mxu0 0.0
        %5343 = vmatprep.subr.mxu0 0.0
        %5344 = vmatpush1.msra.mxu0 0.0
        %5345 = vmatprep.subr.mxu0 0.0
        %5346 = vmatpush1.msra.mxu0 0.0
        %5347 = vmatprep.subr.mxu0 0.0
        %5348 = vmatpush1.msra.mxu0 0.0
        %5349 = vmatprep.subr.mxu0 0.0
        %5350 = vmatpush1.msra.mxu0 0.0
        %5351 = vmatprep.subr.mxu0 0.0
        %5352 = vmatpush1.msra.mxu0 0.0
        %5353 = vmatprep.subr.mxu0 0.0
        %5354 = vmatpush1.msra.mxu0 0.0
        %5355 = vmatprep.subr.mxu0 0.0
        %5356 = vmatpush1.msra.mxu0 0.0
        %5357 = vmatprep.subr.mxu0 0.0
        %5358 = vmatpush1.msra.mxu0 0.0
        %5359 = vmatprep.subr.mxu0 0.0
        %5360 = vmatpush1.msra.mxu0 0.0
        %5361 = vmatprep.subr.mxu0 0.0
        %5362 = vmatpush1.msra.mxu0 0.0
        %5363 = vmatprep.subr.mxu0 0.0
        %5364 = vmatpush1.msra.mxu0 0.0
        %5365 = vmatprep.subr.mxu0 0.0
        %5366 = vmatpush1.msra.mxu0 0.0
        %5367 = vmatprep.subr.mxu0 0.0
        %5368 = vmatpush1.msra.mxu0 0.0
        %5369 = vmatprep.subr.mxu0 0.0
        %5370 = vmatpush1.msra.mxu0 0.0
        %5371 = vmatprep.subr.mxu0 0.0
        %5372 = vmatpush1.msra.mxu0 0.0
        %5373 = vmatprep.subr.mxu0 0.0
        %5374 = vmatpush1.msra.mxu0 0.0
        %5375 = vmatprep.subr.mxu0 0.0
        %5376 = vmatpush1.msra.mxu0 0.0
        %5377 = vmatprep.subr.mxu0 0.0
        %5378 = vmatpush1.msra.mxu0 0.0
        %5379 = vmatprep.subr.mxu0 0.0
        %5380 = vmatpush1.msra.mxu0 0.0
        %5381 = vmatprep.subr.mxu0 0.0
        %5382 = vmatpush1.msra.mxu0 0.0
        %5383 = vmatprep.subr.mxu0 0.0
        %5384 = vmatpush1.msra.mxu0 0.0
        %5385 = vmatprep.subr.mxu0 0.0
        %5386 = vmatpush1.msra.mxu0 0.0
        %5387 = vmatprep.subr.mxu0 0.0
        %5388 = vmatpush1.msra.mxu0 0.0
        %5389 = vmatprep.subr.mxu0 0.0
        %5390 = vmatpush1.msra.mxu0 0.0
        %5391 = vmatprep.subr.mxu0 0.0
        %5392 = vmatpush1.msra.mxu0 0.0
        %5393 = vmatprep.subr.mxu0 0.0
        %5394 = vmatpush1.msra.mxu0 0.0
        %5395 = vmatprep.mubr.f32.mxu0 0.0
        %5396 = vmatmul.mubr.f32.gmra.mrb[0].mxu0 %v5169
        %v5397 = vpop.f32.mrb[0].mxu0
        %v5398 = vadd.f32 0.0, %v5397
        %v5399 = vpop.f32.mrb[0].mxu0
        %5400 = vmatprep.mubr.f32.mxu0 0.0
        %5401 = vmatmul.mubr.f32.gmra.mrb[0].mxu0 %v5171
        %v5402 = vpop.f32.mrb[0].mxu0
        %v5403 = vpop.f32.mrb[0].mxu0
        %5404 = vmatprep.mubr.f32.mxu0 0.0
        %5405 = vmatmul.mubr.f32.gmra.mrb[0].mxu0 %v5173
        %v5406 = vpop.f32.mrb[0].mxu0
        %v5407 = vadd.f32 0.0, %v5406
        %v5408 = vpop.f32.mrb[0].mxu0
        %5409 = vmatprep.mubr.f32.mxu0 0.0
        %5410 = vmatmul.mubr.f32.gmra.mrb[0].mxu0 %v5175
        %v5411 = vpop.f32.mrb[0].mxu0
        %v5412 = vadd.f32 0.0, %v5411
        %v5413 = vpop.f32.mrb[0].mxu0
        %5414 = vmatprep.mubr.f32.mxu0 0.0
        %5415 = vmatmul.mubr.f32.gmra.mrb[0].mxu0 %v5177
        %v5416 = vpop.f32.mrb[0].mxu0
        %v5417 = vpop.f32.mrb[0].mxu0
        %5418 = vmatprep.mubr.f32.mxu0 0.0
        %5419 = vmatmul.mubr.f32.gmra.mrb[0].mxu0 %v5179
        %v5420 = vpop.f32.mrb[0].mxu0
        %v5421 = vadd.f32 0.0, %v5420
        %v5422 = vpop.f32.mrb[0].mxu0
        %5423 = vmatprep.mubr.f32.mxu0 0.0
        %5424 = vmatmul.mubr.f32.gmra.mrb[0].mxu0 %v5181
        %v5425 = vpop.f32.mrb[0].mxu0
        %v5426 = vpop.f32.mrb[0].mxu0
        %5427 = vmatprep.mubr.f32.mxu0 0.0
        %5428 = vmatmul.mubr.f32.gmra.mrb[0].mxu0 %v5183
        %v5429 = vpop.f32.mrb[0].mxu0
        %v5430 = vadd.f32 0.0, %v5429
        %v5431 = vpop.f32.mrb[0].mxu0
        %5432 = vmatprep.mubr.f32.mxu0 0.0
        %5433 = vmatmul.mubr.f32.gmra.mrb[0].mxu0 %v5185
        %v5434 = vpop.f32.mrb[0].mxu0
        %v5435 = vadd.f32 0.0, %v5434
        %v5436 = vpop.f32.mrb[0].mxu0
        %5437 = vmatprep.mubr.f32.mxu0 0.0
        %5438 = vmatmul.mubr.f32.gmra.mrb[0].mxu0 %v5187
        %v5439 = vpop.f32.mrb[0].mxu0
        %v5440 = vpop.f32.mrb[0].mxu0
        %5441 = vmatprep.mubr.f32.mxu0 0.0
        %5442 = vmatmul.mubr.f32.gmra.mrb[0].mxu0 %v5189
        %v5443 = vpop.f32.mrb[0].mxu0
        %v5444 = vpop.f32.mrb[0].mxu0
        %5445 = vmatprep.mubr.f32.mxu0 0.0
        %5446 = vmatmul.mubr.f32.gmra.mrb[0].mxu0 %v5327
        %v5447 = vpop.f32.mrb[0].mxu0
        %v5448 = vpop.f32.mrb[0].mxu0
        %5449 = vmatprep.mubr.f32.mxu0 0.0
        %5450 = vmatmul.mubr.f32.gmra.mrb[0].mxu0 %v5329
        %v5451 = vpop.f32.mrb[0].mxu0
        %v5452 = vpop.f32.mrb[0].mxu0
        %5453 = vdwg.mxu0
        %v5454 = vadd.f32 %v5316, %v5398
        %v5455 = vadd.f32 %v5317, %v5407
        %v5456 = vadd.f32 %v5318, %v5412
        %v5457 = vadd.f32 %v5319, %v5421
        %v5458 = vadd.f32 %v5320, %v5430
        %v5459 = vadd.f32 %v5321, %v5435
        %v5460 = vld [vmem:[%s3 + $0x40] sm:$0xff]
        %v5461 = vld [vmem:[%s3 + $0x48] sm:$0xff]
        %v5462 = vrot.slane %v4699, 3
        %v5463 = vrot.slane %v4700, 3
        %v5464 = vsel %vm2080, %v5462, %v5463
        %v5465 = vrot.slane %v4701, 3
        %v5466 = vsel %vm2080, %v5463, %v5465
        %v5467 = vrot.slane %v4702, 3
        %v5468 = vsel %vm2080, %v5465, %v5467
        %v5469 = vrot.slane %v4703, 3
        %v5470 = vsel %vm2080, %v5467, %v5469
        %v5471 = vrot.slane %v4704, 3
        %v5472 = vsel %vm2080, %v5469, %v5471
        %v5473 = vrot.slane %v4705, 3
        %v5474 = vsel %vm2080, %v5471, %v5473
        %v5475 = vrot.slane %v4706, 3
        %v5476 = vsel %vm2080, %v5473, %v5475
        %v5477 = vrot.slane %v4707, 3
        %v5478 = vsel %vm2080, %v5475, %v5477
        %v5479 = vrot.slane %v4708, 3
        %v5480 = vsel %vm2080, %v5477, %v5479
        %v5481 = vrot.slane %v4709, 3
        %v5482 = vsel %vm2080, %v5479, %v5481
        %v5483 = vrot.slane %v4710, 3
        %v5484 = vsel %vm2080, %v5481, %v5483
        %v5485 = vrot.slane %v4711, 3
        %v5486 = vsel %vm2080, %v5483, %v5485
        %v5487 = vsel %vm385, %v5464, 0
        %v5489 = vsel %vm385, %v5466, 0
        %v5491 = vsel %vm385, %v5468, 0
        %v5493 = vsel %vm385, %v5470, 0
        %v5495 = vsel %vm385, %v5472, 0
        %v5497 = vsel %vm385, %v5474, 0
        %v5499 = vsel %vm385, %v5476, 0
        %v5501 = vsel %vm385, %v5478, 0
        %v5503 = vsel %vm385, %v5480, 0
        %v5505 = vsel %vm385, %v5482, 0
        %v5507 = vsel %vm385, %v5484, 0
        %v5509 = vsel %vm385, %v5486, 0
        %v5511 = vsel %vm385, %v5485, 0
        %5513 = vmatprep.subr.mxu0 0.0
        %5514 = vmatpush1.msra.mxu0 %v5460
        %5515 = vmatprep.subr.mxu0 0.0
        %5516 = vmatpush1.msra.mxu0 %v5461
        %5517 = vmatprep.subr.mxu0 0.0
        %5518 = vmatpush1.msra.mxu0 0.0
        %5519 = vmatprep.subr.mxu0 0.0
        %5520 = vmatpush1.msra.mxu0 0.0
        %5521 = vmatprep.subr.mxu0 0.0
        %5522 = vmatpush1.msra.mxu0 0.0
        %5523 = vmatprep.subr.mxu0 0.0
        %5524 = vmatpush1.msra.mxu0 0.0
        %5525 = vmatprep.subr.mxu0 0.0
        %5526 = vmatpush1.msra.mxu0 0.0
        %5527 = vmatprep.subr.mxu0 0.0
        %5528 = vmatpush1.msra.mxu0 0.0
        %5529 = vmatprep.subr.mxu0 0.0
        %5530 = vmatpush1.msra.mxu0 0.0
        %5531 = vmatprep.subr.mxu0 0.0
        %5532 = vmatpush1.msra.mxu0 0.0
        %5533 = vmatprep.subr.mxu0 0.0
        %5534 = vmatpush1.msra.mxu0 0.0
        %5535 = vmatprep.subr.mxu0 0.0
        %5536 = vmatpush1.msra.mxu0 0.0
        %5537 = vmatprep.subr.mxu0 0.0
        %5538 = vmatpush1.msra.mxu0 0.0
        %5539 = vmatprep.subr.mxu0 0.0
        %5540 = vmatpush1.msra.mxu0 0.0
        %5541 = vmatprep.subr.mxu0 0.0
        %5542 = vmatpush1.msra.mxu0 0.0
        %5543 = vmatprep.subr.mxu0 0.0
        %5544 = vmatpush1.msra.mxu0 0.0
        %5545 = vmatprep.subr.mxu0 0.0
        %5546 = vmatpush1.msra.mxu0 0.0
        %5547 = vmatprep.subr.mxu0 0.0
        %5548 = vmatpush1.msra.mxu0 0.0
        %5549 = vmatprep.subr.mxu0 0.0
        %5550 = vmatpush1.msra.mxu0 0.0
        %5551 = vmatprep.subr.mxu0 0.0
        %5552 = vmatpush1.msra.mxu0 0.0
        %5553 = vmatprep.subr.mxu0 0.0
        %5554 = vmatpush1.msra.mxu0 0.0
        %5555 = vmatprep.subr.mxu0 0.0
        %5556 = vmatpush1.msra.mxu0 0.0
        %5557 = vmatprep.subr.mxu0 0.0
        %5558 = vmatpush1.msra.mxu0 0.0
        %5559 = vmatprep.subr.mxu0 0.0
        %5560 = vmatpush1.msra.mxu0 0.0
        %5561 = vmatprep.subr.mxu0 0.0
        %5562 = vmatpush1.msra.mxu0 0.0
        %5563 = vmatprep.subr.mxu0 0.0
        %5564 = vmatpush1.msra.mxu0 0.0
        %5565 = vmatprep.subr.mxu0 0.0
        %5566 = vmatpush1.msra.mxu0 0.0
        %5567 = vmatprep.subr.mxu0 0.0
        %5568 = vmatpush1.msra.mxu0 0.0
        %5569 = vmatprep.subr.mxu0 0.0
        %5570 = vmatpush1.msra.mxu0 0.0
        %5571 = vmatprep.subr.mxu0 0.0
        %5572 = vmatpush1.msra.mxu0 0.0
        %5573 = vmatprep.subr.mxu0 0.0
        %5574 = vmatpush1.msra.mxu0 0.0
        %5575 = vmatprep.subr.mxu0 0.0
        %5576 = vmatpush1.msra.mxu0 0.0
        %5577 = vmatprep.mubr.f32.mxu0 0.0
        %5578 = vmatmul.mubr.f32.gmra.mrb[0].mxu0 %v5487
        %v5579 = vpop.f32.mrb[0].mxu0
        %v5580 = vadd.f32 0.0, %v5579
        %v5581 = vpop.f32.mrb[0].mxu0
        %5582 = vmatprep.mubr.f32.mxu0 0.0
        %5583 = vmatmul.mubr.f32.gmra.mrb[0].mxu0 %v5489
        %v5584 = vpop.f32.mrb[0].mxu0
        %v5585 = vpop.f32.mrb[0].mxu0
        %5586 = vmatprep.mubr.f32.mxu0 0.0
        %5587 = vmatmul.mubr.f32.gmra.mrb[0].mxu0 %v5491
        %v5588 = vpop.f32.mrb[0].mxu0
        %v5589 = vadd.f32 0.0, %v5588
        %v5590 = vpop.f32.mrb[0].mxu0
        %5591 = vmatprep.mubr.f32.mxu0 0.0
        %5592 = vmatmul.mubr.f32.gmra.mrb[0].mxu0 %v5493
        %v5593 = vpop.f32.mrb[0].mxu0
        %v5594 = vadd.f32 0.0, %v5593
        %v5595 = vpop.f32.mrb[0].mxu0
        %5596 = vmatprep.mubr.f32.mxu0 0.0
        %5597 = vmatmul.mubr.f32.gmra.mrb[0].mxu0 %v5495
        %v5598 = vpop.f32.mrb[0].mxu0
        %v5599 = vpop.f32.mrb[0].mxu0
        %5600 = vmatprep.mubr.f32.mxu0 0.0
        %5601 = vmatmul.mubr.f32.gmra.mrb[0].mxu0 %v5497
        %v5602 = vpop.f32.mrb[0].mxu0
        %v5603 = vadd.f32 0.0, %v5602
        %v5604 = vpop.f32.mrb[0].mxu0
        %5605 = vmatprep.mubr.f32.mxu0 0.0
        %5606 = vmatmul.mubr.f32.gmra.mrb[0].mxu0 %v5499
        %v5607 = vpop.f32.mrb[0].mxu0
        %v5608 = vpop.f32.mrb[0].mxu0
        %5609 = vmatprep.mubr.f32.mxu0 0.0
        %5610 = vmatmul.mubr.f32.gmra.mrb[0].mxu0 %v5501
        %v5611 = vpop.f32.mrb[0].mxu0
        %v5612 = vadd.f32 0.0, %v5611
        %v5613 = vpop.f32.mrb[0].mxu0
        %5614 = vmatprep.mubr.f32.mxu0 0.0
        %5615 = vmatmul.mubr.f32.gmra.mrb[0].mxu0 %v5503
        %v5616 = vpop.f32.mrb[0].mxu0
        %v5617 = vadd.f32 0.0, %v5616
        %v5618 = vpop.f32.mrb[0].mxu0
        %5619 = vmatprep.mubr.f32.mxu0 0.0
        %5620 = vmatmul.mubr.f32.gmra.mrb[0].mxu0 %v5505
        %v5621 = vpop.f32.mrb[0].mxu0
        %v5622 = vpop.f32.mrb[0].mxu0
        %5623 = vmatprep.mubr.f32.mxu0 0.0
        %5624 = vmatmul.mubr.f32.gmra.mrb[0].mxu0 %v5507
        %v5625 = vpop.f32.mrb[0].mxu0
        %v5626 = vpop.f32.mrb[0].mxu0
        %5627 = vmatprep.mubr.f32.mxu0 0.0
        %5628 = vmatmul.mubr.f32.gmra.mrb[0].mxu0 %v5509
        %v5629 = vpop.f32.mrb[0].mxu0
        %v5630 = vpop.f32.mrb[0].mxu0
        %5631 = vmatprep.mubr.f32.mxu0 0.0
        %5632 = vmatmul.mubr.f32.gmra.mrb[0].mxu0 %v5511
        %v5633 = vpop.f32.mrb[0].mxu0
        %v5634 = vpop.f32.mrb[0].mxu0
        %5635 = vdwg.mxu0
        %v5636 = vadd.f32 %v5454, %v5580
        %v5637 = vadd.f32 %v5455, %v5589
        %v5638 = vadd.f32 %v5456, %v5594
        %v5639 = vadd.f32 %v5457, %v5603
        %v5640 = vadd.f32 %v5458, %v5612
        %v5641 = vadd.f32 %v5459, %v5617
        %v5642 = vld [vmem:[%s3 + $0x50] sm:$0xff]
        %v5643 = vld [vmem:[%s3 + $0x58] sm:$0xff]
        %v5644 = vrot.slane %v4699, 4
        %v5645 = vrot.slane %v4700, 4
        %v5646 = vsel %vm2550, %v5644, %v5645
        %v5647 = vrot.slane %v4701, 4
        %v5648 = vsel %vm2550, %v5645, %v5647
        %v5649 = vrot.slane %v4702, 4
        %v5650 = vsel %vm2550, %v5647, %v5649
        %v5651 = vrot.slane %v4703, 4
        %v5652 = vsel %vm2550, %v5649, %v5651
        %v5653 = vrot.slane %v4704, 4
        %v5654 = vsel %vm2550, %v5651, %v5653
        %v5655 = vrot.slane %v4705, 4
        %v5656 = vsel %vm2550, %v5653, %v5655
        %v5657 = vrot.slane %v4706, 4
        %v5658 = vsel %vm2550, %v5655, %v5657
        %v5659 = vrot.slane %v4707, 4
        %v5660 = vsel %vm2550, %v5657, %v5659
        %v5661 = vrot.slane %v4708, 4
        %v5662 = vsel %vm2550, %v5659, %v5661
        %v5663 = vrot.slane %v4709, 4
        %v5664 = vsel %vm2550, %v5661, %v5663
        %v5665 = vrot.slane %v4710, 4
        %v5666 = vsel %vm2550, %v5663, %v5665
        %v5667 = vrot.slane %v4711, 4
        %v5668 = vsel %vm2550, %v5665, %v5667
        %v5669 = vsel %vm385, %v5646, 0
        %v5671 = vsel %vm385, %v5648, 0
        %v5673 = vsel %vm385, %v5650, 0
        %v5675 = vsel %vm385, %v5652, 0
        %v5677 = vsel %vm385, %v5654, 0
        %v5679 = vsel %vm385, %v5656, 0
        %v5681 = vsel %vm385, %v5658, 0
        %v5683 = vsel %vm385, %v5660, 0
        %v5685 = vsel %vm385, %v5662, 0
        %v5687 = vsel %vm385, %v5664, 0
        %v5689 = vsel %vm385, %v5666, 0
        %v5691 = vsel %vm385, %v5668, 0
        %v5693 = vsel %vm385, %v5667, 0
        %5695 = vmatprep.subr.mxu0 0.0
        %5696 = vmatpush1.msra.mxu0 %v5642
        %5697 = vmatprep.subr.mxu0 0.0
        %5698 = vmatpush1.msra.mxu0 %v5643
        %5699 = vmatprep.subr.mxu0 0.0
        %5700 = vmatpush1.msra.mxu0 0.0
        %5701 = vmatprep.subr.mxu0 0.0
        %5702 = vmatpush1.msra.mxu0 0.0
        %5703 = vmatprep.subr.mxu0 0.0
        %5704 = vmatpush1.msra.mxu0 0.0
        %5705 = vmatprep.subr.mxu0 0.0
        %5706 = vmatpush1.msra.mxu0 0.0
        %5707 = vmatprep.subr.mxu0 0.0
        %5708 = vmatpush1.msra.mxu0 0.0
        %5709 = vmatprep.subr.mxu0 0.0
        %5710 = vmatpush1.msra.mxu0 0.0
        %5711 = vmatprep.subr.mxu0 0.0
        %5712 = vmatpush1.msra.mxu0 0.0
        %5713 = vmatprep.subr.mxu0 0.0
        %5714 = vmatpush1.msra.mxu0 0.0
        %5715 = vmatprep.subr.mxu0 0.0
        %5716 = vmatpush1.msra.mxu0 0.0
        %5717 = vmatprep.subr.mxu0 0.0
        %5718 = vmatpush1.msra.mxu0 0.0
        %5719 = vmatprep.subr.mxu0 0.0
        %5720 = vmatpush1.msra.mxu0 0.0
        %5721 = vmatprep.subr.mxu0 0.0
        %5722 = vmatpush1.msra.mxu0 0.0
        %5723 = vmatprep.subr.mxu0 0.0
        %5724 = vmatpush1.msra.mxu0 0.0
        %5725 = vmatprep.subr.mxu0 0.0
        %5726 = vmatpush1.msra.mxu0 0.0
        %5727 = vmatprep.subr.mxu0 0.0
        %5728 = vmatpush1.msra.mxu0 0.0
        %5729 = vmatprep.subr.mxu0 0.0
        %5730 = vmatpush1.msra.mxu0 0.0
        %5731 = vmatprep.subr.mxu0 0.0
        %5732 = vmatpush1.msra.mxu0 0.0
        %5733 = vmatprep.subr.mxu0 0.0
        %5734 = vmatpush1.msra.mxu0 0.0
        %5735 = vmatprep.subr.mxu0 0.0
        %5736 = vmatpush1.msra.mxu0 0.0
        %5737 = vmatprep.subr.mxu0 0.0
        %5738 = vmatpush1.msra.mxu0 0.0
        %5739 = vmatprep.subr.mxu0 0.0
        %5740 = vmatpush1.msra.mxu0 0.0
        %5741 = vmatprep.subr.mxu0 0.0
        %5742 = vmatpush1.msra.mxu0 0.0
        %5743 = vmatprep.subr.mxu0 0.0
        %5744 = vmatpush1.msra.mxu0 0.0
        %5745 = vmatprep.subr.mxu0 0.0
        %5746 = vmatpush1.msra.mxu0 0.0
        %5747 = vmatprep.subr.mxu0 0.0
        %5748 = vmatpush1.msra.mxu0 0.0
        %5749 = vmatprep.subr.mxu0 0.0
        %5750 = vmatpush1.msra.mxu0 0.0
        %5751 = vmatprep.subr.mxu0 0.0
        %5752 = vmatpush1.msra.mxu0 0.0
        %5753 = vmatprep.subr.mxu0 0.0
        %5754 = vmatpush1.msra.mxu0 0.0
        %5755 = vmatprep.subr.mxu0 0.0
        %5756 = vmatpush1.msra.mxu0 0.0
        %5757 = vmatprep.subr.mxu0 0.0
        %5758 = vmatpush1.msra.mxu0 0.0
        %5759 = vmatprep.mubr.f32.mxu0 0.0
        %5760 = vmatmul.mubr.f32.gmra.mrb[0].mxu0 %v5669
        %v5761 = vpop.f32.mrb[0].mxu0
        %v5762 = vadd.f32 0.0, %v5761
        %v5763 = vpop.f32.mrb[0].mxu0
        %5764 = vmatprep.mubr.f32.mxu0 0.0
        %5765 = vmatmul.mubr.f32.gmra.mrb[0].mxu0 %v5671
        %v5766 = vpop.f32.mrb[0].mxu0
        %v5767 = vpop.f32.mrb[0].mxu0
        %5768 = vmatprep.mubr.f32.mxu0 0.0
        %5769 = vmatmul.mubr.f32.gmra.mrb[0].mxu0 %v5673
        %v5770 = vpop.f32.mrb[0].mxu0
        %v5771 = vadd.f32 0.0, %v5770
        %v5772 = vpop.f32.mrb[0].mxu0
        %5773 = vmatprep.mubr.f32.mxu0 0.0
        %5774 = vmatmul.mubr.f32.gmra.mrb[0].mxu0 %v5675
        %v5775 = vpop.f32.mrb[0].mxu0
        %v5776 = vadd.f32 0.0, %v5775
        %v5777 = vpop.f32.mrb[0].mxu0
        %5778 = vmatprep.mubr.f32.mxu0 0.0
        %5779 = vmatmul.mubr.f32.gmra.mrb[0].mxu0 %v5677
        %v5780 = vpop.f32.mrb[0].mxu0
        %v5781 = vpop.f32.mrb[0].mxu0
        %5782 = vmatprep.mubr.f32.mxu0 0.0
        %5783 = vmatmul.mubr.f32.gmra.mrb[0].mxu0 %v5679
        %v5784 = vpop.f32.mrb[0].mxu0
        %v5785 = vadd.f32 0.0, %v5784
        %v5786 = vpop.f32.mrb[0].mxu0
        %5787 = vmatprep.mubr.f32.mxu0 0.0
        %5788 = vmatmul.mubr.f32.gmra.mrb[0].mxu0 %v5681
        %v5789 = vpop.f32.mrb[0].mxu0
        %v5790 = vpop.f32.mrb[0].mxu0
        %5791 = vmatprep.mubr.f32.mxu0 0.0
        %5792 = vmatmul.mubr.f32.gmra.mrb[0].mxu0 %v5683
        %v5793 = vpop.f32.mrb[0].mxu0
        %v5794 = vadd.f32 0.0, %v5793
        %v5795 = vpop.f32.mrb[0].mxu0
        %5796 = vmatprep.mubr.f32.mxu0 0.0
        %5797 = vmatmul.mubr.f32.gmra.mrb[0].mxu0 %v5685
        %v5798 = vpop.f32.mrb[0].mxu0
        %v5799 = vadd.f32 0.0, %v5798
        %v5800 = vpop.f32.mrb[0].mxu0
        %5801 = vmatprep.mubr.f32.mxu0 0.0
        %5802 = vmatmul.mubr.f32.gmra.mrb[0].mxu0 %v5687
        %v5803 = vpop.f32.mrb[0].mxu0
        %v5804 = vpop.f32.mrb[0].mxu0
        %5805 = vmatprep.mubr.f32.mxu0 0.0
        %5806 = vmatmul.mubr.f32.gmra.mrb[0].mxu0 %v5689
        %v5807 = vpop.f32.mrb[0].mxu0
        %v5808 = vpop.f32.mrb[0].mxu0
        %5809 = vmatprep.mubr.f32.mxu0 0.0
        %5810 = vmatmul.mubr.f32.gmra.mrb[0].mxu0 %v5691
        %v5811 = vpop.f32.mrb[0].mxu0
        %v5812 = vpop.f32.mrb[0].mxu0
        %5813 = vmatprep.mubr.f32.mxu0 0.0
        %5814 = vmatmul.mubr.f32.gmra.mrb[0].mxu0 %v5693
        %v5815 = vpop.f32.mrb[0].mxu0
        %v5816 = vpop.f32.mrb[0].mxu0
        %5817 = vdwg.mxu0
        %v5818 = vadd.f32 %v5636, %v5762
        %v5819 = vadd.f32 %v5637, %v5771
        %v5820 = vadd.f32 %v5638, %v5776
        %v5821 = vadd.f32 %v5639, %v5785
        %v5822 = vadd.f32 %v5640, %v5794
        %v5823 = vadd.f32 %v5641, %v5799
        %v5824 = vld [vmem:[%s3 + $0x60] sm:$0xff]
        %v5825 = vld [vmem:[%s3 + $0x68] sm:$0xff]
        %v5827 = vrot.slane %v4712, 4
        %v5828 = vsel %vm2550, %v5667, %v5827
        %v5829 = vsel %vm385, %v5828, 0
        %v5831 = vsel %vm385, %v5827, 0
        %5833 = vmatprep.subr.mxu0 0.0
        %5834 = vmatpush1.msra.mxu0 %v5824
        %5835 = vmatprep.subr.mxu0 0.0
        %5836 = vmatpush1.msra.mxu0 %v5825
        %5837 = vmatprep.subr.mxu0 0.0
        %5838 = vmatpush1.msra.mxu0 0.0
        %5839 = vmatprep.subr.mxu0 0.0
        %5840 = vmatpush1.msra.mxu0 0.0
        %5841 = vmatprep.subr.mxu0 0.0
        %5842 = vmatpush1.msra.mxu0 0.0
        %5843 = vmatprep.subr.mxu0 0.0
        %5844 = vmatpush1.msra.mxu0 0.0
        %5845 = vmatprep.subr.mxu0 0.0
        %5846 = vmatpush1.msra.mxu0 0.0
        %5847 = vmatprep.subr.mxu0 0.0
        %5848 = vmatpush1.msra.mxu0 0.0
        %5849 = vmatprep.subr.mxu0 0.0
        %5850 = vmatpush1.msra.mxu0 0.0
        %5851 = vmatprep.subr.mxu0 0.0
        %5852 = vmatpush1.msra.mxu0 0.0
        %5853 = vmatprep.subr.mxu0 0.0
        %5854 = vmatpush1.msra.mxu0 0.0
        %5855 = vmatprep.subr.mxu0 0.0
        %5856 = vmatpush1.msra.mxu0 0.0
        %5857 = vmatprep.subr.mxu0 0.0
        %5858 = vmatpush1.msra.mxu0 0.0
        %5859 = vmatprep.subr.mxu0 0.0
        %5860 = vmatpush1.msra.mxu0 0.0
        %5861 = vmatprep.subr.mxu0 0.0
        %5862 = vmatpush1.msra.mxu0 0.0
        %5863 = vmatprep.subr.mxu0 0.0
        %5864 = vmatpush1.msra.mxu0 0.0
        %5865 = vmatprep.subr.mxu0 0.0
        %5866 = vmatpush1.msra.mxu0 0.0
        %5867 = vmatprep.subr.mxu0 0.0
        %5868 = vmatpush1.msra.mxu0 0.0
        %5869 = vmatprep.subr.mxu0 0.0
        %5870 = vmatpush1.msra.mxu0 0.0
        %5871 = vmatprep.subr.mxu0 0.0
        %5872 = vmatpush1.msra.mxu0 0.0
        %5873 = vmatprep.subr.mxu0 0.0
        %5874 = vmatpush1.msra.mxu0 0.0
        %5875 = vmatprep.subr.mxu0 0.0
        %5876 = vmatpush1.msra.mxu0 0.0
        %5877 = vmatprep.subr.mxu0 0.0
        %5878 = vmatpush1.msra.mxu0 0.0
        %5879 = vmatprep.subr.mxu0 0.0
        %5880 = vmatpush1.msra.mxu0 0.0
        %5881 = vmatprep.subr.mxu0 0.0
        %5882 = vmatpush1.msra.mxu0 0.0
        %5883 = vmatprep.subr.mxu0 0.0
        %5884 = vmatpush1.msra.mxu0 0.0
        %5885 = vmatprep.subr.mxu0 0.0
        %5886 = vmatpush1.msra.mxu0 0.0
        %5887 = vmatprep.subr.mxu0 0.0
        %5888 = vmatpush1.msra.mxu0 0.0
        %5889 = vmatprep.subr.mxu0 0.0
        %5890 = vmatpush1.msra.mxu0 0.0
        %5891 = vmatprep.subr.mxu0 0.0
        %5892 = vmatpush1.msra.mxu0 0.0
        %5893 = vmatprep.subr.mxu0 0.0
        %5894 = vmatpush1.msra.mxu0 0.0
        %5895 = vmatprep.subr.mxu0 0.0
        %5896 = vmatpush1.msra.mxu0 0.0
        %5897 = vmatprep.mubr.f32.mxu0 0.0
        %5898 = vmatmul.mubr.f32.gmra.mrb[0].mxu0 %v5671
        %v5899 = vpop.f32.mrb[0].mxu0
        %v5900 = vadd.f32 0.0, %v5899
        %v5901 = vpop.f32.mrb[0].mxu0
        %5902 = vmatprep.mubr.f32.mxu0 0.0
        %5903 = vmatmul.mubr.f32.gmra.mrb[0].mxu0 %v5673
        %v5904 = vpop.f32.mrb[0].mxu0
        %v5905 = vpop.f32.mrb[0].mxu0
        %5906 = vmatprep.mubr.f32.mxu0 0.0
        %5907 = vmatmul.mubr.f32.gmra.mrb[0].mxu0 %v5675
        %v5908 = vpop.f32.mrb[0].mxu0
        %v5909 = vadd.f32 0.0, %v5908
        %v5910 = vpop.f32.mrb[0].mxu0
        %5911 = vmatprep.mubr.f32.mxu0 0.0
        %5912 = vmatmul.mubr.f32.gmra.mrb[0].mxu0 %v5677
        %v5913 = vpop.f32.mrb[0].mxu0
        %v5914 = vadd.f32 0.0, %v5913
        %v5915 = vpop.f32.mrb[0].mxu0
        %5916 = vmatprep.mubr.f32.mxu0 0.0
        %5917 = vmatmul.mubr.f32.gmra.mrb[0].mxu0 %v5679
        %v5918 = vpop.f32.mrb[0].mxu0
        %v5919 = vpop.f32.mrb[0].mxu0
        %5920 = vmatprep.mubr.f32.mxu0 0.0
        %5921 = vmatmul.mubr.f32.gmra.mrb[0].mxu0 %v5681
        %v5922 = vpop.f32.mrb[0].mxu0
        %v5923 = vadd.f32 0.0, %v5922
        %v5924 = vpop.f32.mrb[0].mxu0
        %5925 = vmatprep.mubr.f32.mxu0 0.0
        %5926 = vmatmul.mubr.f32.gmra.mrb[0].mxu0 %v5683
        %v5927 = vpop.f32.mrb[0].mxu0
        %v5928 = vpop.f32.mrb[0].mxu0
        %5929 = vmatprep.mubr.f32.mxu0 0.0
        %5930 = vmatmul.mubr.f32.gmra.mrb[0].mxu0 %v5685
        %v5931 = vpop.f32.mrb[0].mxu0
        %v5932 = vadd.f32 0.0, %v5931
        %v5933 = vpop.f32.mrb[0].mxu0
        %5934 = vmatprep.mubr.f32.mxu0 0.0
        %5935 = vmatmul.mubr.f32.gmra.mrb[0].mxu0 %v5687
        %v5936 = vpop.f32.mrb[0].mxu0
        %v5937 = vadd.f32 0.0, %v5936
        %v5938 = vpop.f32.mrb[0].mxu0
        %5939 = vmatprep.mubr.f32.mxu0 0.0
        %5940 = vmatmul.mubr.f32.gmra.mrb[0].mxu0 %v5689
        %v5941 = vpop.f32.mrb[0].mxu0
        %v5942 = vpop.f32.mrb[0].mxu0
        %5943 = vmatprep.mubr.f32.mxu0 0.0
        %5944 = vmatmul.mubr.f32.gmra.mrb[0].mxu0 %v5691
        %v5945 = vpop.f32.mrb[0].mxu0
        %v5946 = vpop.f32.mrb[0].mxu0
        %5947 = vmatprep.mubr.f32.mxu0 0.0
        %5948 = vmatmul.mubr.f32.gmra.mrb[0].mxu0 %v5829
        %v5949 = vpop.f32.mrb[0].mxu0
        %v5950 = vpop.f32.mrb[0].mxu0
        %5951 = vmatprep.mubr.f32.mxu0 0.0
        %5952 = vmatmul.mubr.f32.gmra.mrb[0].mxu0 %v5831
        %v5953 = vpop.f32.mrb[0].mxu0
        %v5954 = vpop.f32.mrb[0].mxu0
        %5955 = vdwg.mxu0
        %v5956 = vadd.f32 %v5818, %v5900
        %v5957 = vadd.f32 %v5819, %v5909
        %v5958 = vadd.f32 %v5820, %v5914
        %v5959 = vadd.f32 %v5821, %v5923
        %v5960 = vadd.f32 %v5822, %v5932
        %v5961 = vadd.f32 %v5823, %v5937
        %v5962 = vld [vmem:[%s3 + $0x70] sm:$0xff]
        %v5963 = vld [vmem:[%s3 + $0x78] sm:$0xff]
        %v5965 = vrot.slane %v4700, 5
        %v5966 = vrot.slane %v4701, 5
        %v5967 = vsel %vm3339, %v5965, %v5966
        %v5968 = vrot.slane %v4702, 5
        %v5969 = vsel %vm3339, %v5966, %v5968
        %v5970 = vrot.slane %v4703, 5
        %v5971 = vsel %vm3339, %v5968, %v5970
        %v5972 = vrot.slane %v4704, 5
        %v5973 = vsel %vm3339, %v5970, %v5972
        %v5974 = vrot.slane %v4705, 5
        %v5975 = vsel %vm3339, %v5972, %v5974
        %v5976 = vrot.slane %v4706, 5
        %v5977 = vsel %vm3339, %v5974, %v5976
        %v5978 = vrot.slane %v4707, 5
        %v5979 = vsel %vm3339, %v5976, %v5978
        %v5980 = vrot.slane %v4708, 5
        %v5981 = vsel %vm3339, %v5978, %v5980
        %v5982 = vrot.slane %v4709, 5
        %v5983 = vsel %vm3339, %v5980, %v5982
        %v5984 = vrot.slane %v4710, 5
        %v5985 = vsel %vm3339, %v5982, %v5984
        %v5986 = vrot.slane %v4711, 5
        %v5987 = vsel %vm3339, %v5984, %v5986
        %v5988 = vrot.slane %v4712, 5
        %v5989 = vsel %vm3339, %v5986, %v5988
        %v5990 = vrot.slane %v4713, 5
        %v5991 = vsel %vm3339, %v5988, %v5990
        %v5992 = vsel %vm385, %v5967, 0
        %v5994 = vsel %vm385, %v5969, 0
        %v5996 = vsel %vm385, %v5971, 0
        %v5998 = vsel %vm385, %v5973, 0
        %v6000 = vsel %vm385, %v5975, 0
        %v6002 = vsel %vm385, %v5977, 0
        %v6004 = vsel %vm385, %v5979, 0
        %v6006 = vsel %vm385, %v5981, 0
        %v6008 = vsel %vm385, %v5983, 0
        %v6010 = vsel %vm385, %v5985, 0
        %v6012 = vsel %vm385, %v5987, 0
        %v6014 = vsel %vm385, %v5989, 0
        %v6016 = vsel %vm385, %v5991, 0
        %6018 = vmatprep.subr.mxu0 0.0
        %6019 = vmatpush1.msra.mxu0 %v5962
        %6020 = vmatprep.subr.mxu0 0.0
        %6021 = vmatpush1.msra.mxu0 %v5963
        %6022 = vmatprep.subr.mxu0 0.0
        %6023 = vmatpush1.msra.mxu0 0.0
        %6024 = vmatprep.subr.mxu0 0.0
        %6025 = vmatpush1.msra.mxu0 0.0
        %6026 = vmatprep.subr.mxu0 0.0
        %6027 = vmatpush1.msra.mxu0 0.0
        %6028 = vmatprep.subr.mxu0 0.0
        %6029 = vmatpush1.msra.mxu0 0.0
        %6030 = vmatprep.subr.mxu0 0.0
        %6031 = vmatpush1.msra.mxu0 0.0
        %6032 = vmatprep.subr.mxu0 0.0
        %6033 = vmatpush1.msra.mxu0 0.0
        %6034 = vmatprep.subr.mxu0 0.0
        %6035 = vmatpush1.msra.mxu0 0.0
        %6036 = vmatprep.subr.mxu0 0.0
        %6037 = vmatpush1.msra.mxu0 0.0
        %6038 = vmatprep.subr.mxu0 0.0
        %6039 = vmatpush1.msra.mxu0 0.0
        %6040 = vmatprep.subr.mxu0 0.0
        %6041 = vmatpush1.msra.mxu0 0.0
        %6042 = vmatprep.subr.mxu0 0.0
        %6043 = vmatpush1.msra.mxu0 0.0
        %6044 = vmatprep.subr.mxu0 0.0
        %6045 = vmatpush1.msra.mxu0 0.0
        %6046 = vmatprep.subr.mxu0 0.0
        %6047 = vmatpush1.msra.mxu0 0.0
        %6048 = vmatprep.subr.mxu0 0.0
        %6049 = vmatpush1.msra.mxu0 0.0
        %6050 = vmatprep.subr.mxu0 0.0
        %6051 = vmatpush1.msra.mxu0 0.0
        %6052 = vmatprep.subr.mxu0 0.0
        %6053 = vmatpush1.msra.mxu0 0.0
        %6054 = vmatprep.subr.mxu0 0.0
        %6055 = vmatpush1.msra.mxu0 0.0
        %6056 = vmatprep.subr.mxu0 0.0
        %6057 = vmatpush1.msra.mxu0 0.0
        %6058 = vmatprep.subr.mxu0 0.0
        %6059 = vmatpush1.msra.mxu0 0.0
        %6060 = vmatprep.subr.mxu0 0.0
        %6061 = vmatpush1.msra.mxu0 0.0
        %6062 = vmatprep.subr.mxu0 0.0
        %6063 = vmatpush1.msra.mxu0 0.0
        %6064 = vmatprep.subr.mxu0 0.0
        %6065 = vmatpush1.msra.mxu0 0.0
        %6066 = vmatprep.subr.mxu0 0.0
        %6067 = vmatpush1.msra.mxu0 0.0
        %6068 = vmatprep.subr.mxu0 0.0
        %6069 = vmatpush1.msra.mxu0 0.0
        %6070 = vmatprep.subr.mxu0 0.0
        %6071 = vmatpush1.msra.mxu0 0.0
        %6072 = vmatprep.subr.mxu0 0.0
        %6073 = vmatpush1.msra.mxu0 0.0
        %6074 = vmatprep.subr.mxu0 0.0
        %6075 = vmatpush1.msra.mxu0 0.0
        %6076 = vmatprep.subr.mxu0 0.0
        %6077 = vmatpush1.msra.mxu0 0.0
        %6078 = vmatprep.subr.mxu0 0.0
        %6079 = vmatpush1.msra.mxu0 0.0
        %6080 = vmatprep.subr.mxu0 0.0
        %6081 = vmatpush1.msra.mxu0 0.0
        %6082 = vmatprep.mubr.f32.mxu0 0.0
        %6083 = vmatmul.mubr.f32.gmra.mrb[0].mxu0 %v5992
        %v6084 = vpop.f32.mrb[0].mxu0
        %v6085 = vadd.f32 0.0, %v6084
        %v6086 = vpop.f32.mrb[0].mxu0
        %6087 = vmatprep.mubr.f32.mxu0 0.0
        %6088 = vmatmul.mubr.f32.gmra.mrb[0].mxu0 %v5994
        %v6089 = vpop.f32.mrb[0].mxu0
        %v6090 = vpop.f32.mrb[0].mxu0
        %6091 = vmatprep.mubr.f32.mxu0 0.0
        %6092 = vmatmul.mubr.f32.gmra.mrb[0].mxu0 %v5996
        %v6093 = vpop.f32.mrb[0].mxu0
        %v6094 = vadd.f32 0.0, %v6093
        %v6095 = vpop.f32.mrb[0].mxu0
        %6096 = vmatprep.mubr.f32.mxu0 0.0
        %6097 = vmatmul.mubr.f32.gmra.mrb[0].mxu0 %v5998
        %v6098 = vpop.f32.mrb[0].mxu0
        %v6099 = vadd.f32 0.0, %v6098
        %v6100 = vpop.f32.mrb[0].mxu0
        %6101 = vmatprep.mubr.f32.mxu0 0.0
        %6102 = vmatmul.mubr.f32.gmra.mrb[0].mxu0 %v6000
        %v6103 = vpop.f32.mrb[0].mxu0
        %v6104 = vpop.f32.mrb[0].mxu0
        %6105 = vmatprep.mubr.f32.mxu0 0.0
        %6106 = vmatmul.mubr.f32.gmra.mrb[0].mxu0 %v6002
        %v6107 = vpop.f32.mrb[0].mxu0
        %v6108 = vadd.f32 0.0, %v6107
        %v6109 = vpop.f32.mrb[0].mxu0
        %6110 = vmatprep.mubr.f32.mxu0 0.0
        %6111 = vmatmul.mubr.f32.gmra.mrb[0].mxu0 %v6004
        %v6112 = vpop.f32.mrb[0].mxu0
        %v6113 = vpop.f32.mrb[0].mxu0
        %6114 = vmatprep.mubr.f32.mxu0 0.0
        %6115 = vmatmul.mubr.f32.gmra.mrb[0].mxu0 %v6006
        %v6116 = vpop.f32.mrb[0].mxu0
        %v6117 = vadd.f32 0.0, %v6116
        %v6118 = vpop.f32.mrb[0].mxu0
        %6119 = vmatprep.mubr.f32.mxu0 0.0
        %6120 = vmatmul.mubr.f32.gmra.mrb[0].mxu0 %v6008
        %v6121 = vpop.f32.mrb[0].mxu0
        %v6122 = vadd.f32 0.0, %v6121
        %v6123 = vpop.f32.mrb[0].mxu0
        %6124 = vmatprep.mubr.f32.mxu0 0.0
        %6125 = vmatmul.mubr.f32.gmra.mrb[0].mxu0 %v6010
        %v6126 = vpop.f32.mrb[0].mxu0
        %v6127 = vpop.f32.mrb[0].mxu0
        %6128 = vmatprep.mubr.f32.mxu0 0.0
        %6129 = vmatmul.mubr.f32.gmra.mrb[0].mxu0 %v6012
        %v6130 = vpop.f32.mrb[0].mxu0
        %v6131 = vpop.f32.mrb[0].mxu0
        %6132 = vmatprep.mubr.f32.mxu0 0.0
        %6133 = vmatmul.mubr.f32.gmra.mrb[0].mxu0 %v6014
        %v6134 = vpop.f32.mrb[0].mxu0
        %v6135 = vpop.f32.mrb[0].mxu0
        %6136 = vmatprep.mubr.f32.mxu0 0.0
        %6137 = vmatmul.mubr.f32.gmra.mrb[0].mxu0 %v6016
        %v6138 = vpop.f32.mrb[0].mxu0
        %v6139 = vpop.f32.mrb[0].mxu0
        %6140 = vdwg.mxu0
        %v6141 = vadd.f32 %v5956, %v6085
        %v6142 = vadd.f32 %v5957, %v6094
        %v6143 = vadd.f32 %v5958, %v6099
        %v6144 = vadd.f32 %v5959, %v6108
        %v6145 = vadd.f32 %v5960, %v6117
        %v6146 = vadd.f32 %v5961, %v6122
        %v6147 = vld [vmem:[%s3 + $0x80] sm:$0xff]
        %v6148 = vld [vmem:[%s3 + $0x88] sm:$0xff]
        %v6149 = vrot.slane %v4700, 6
        %v6150 = vrot.slane %v4701, 6
        %v6151 = vsel %vm3811, %v6149, %v6150
        %v6152 = vrot.slane %v4702, 6
        %v6153 = vsel %vm3811, %v6150, %v6152
        %v6154 = vrot.slane %v4703, 6
        %v6155 = vsel %vm3811, %v6152, %v6154
        %v6156 = vrot.slane %v4704, 6
        %v6157 = vsel %vm3811, %v6154, %v6156
        %v6158 = vrot.slane %v4705, 6
        %v6159 = vsel %vm3811, %v6156, %v6158
        %v6160 = vrot.slane %v4706, 6
        %v6161 = vsel %vm3811, %v6158, %v6160
        %v6162 = vrot.slane %v4707, 6
        %v6163 = vsel %vm3811, %v6160, %v6162
        %v6164 = vrot.slane %v4708, 6
        %v6165 = vsel %vm3811, %v6162, %v6164
        %v6166 = vrot.slane %v4709, 6
        %v6167 = vsel %vm3811, %v6164, %v6166
        %v6168 = vrot.slane %v4710, 6
        %v6169 = vsel %vm3811, %v6166, %v6168
        %v6170 = vrot.slane %v4711, 6
        %v6171 = vsel %vm3811, %v6168, %v6170
        %v6172 = vrot.slane %v4712, 6
        %v6173 = vsel %vm3811, %v6170, %v6172
        %v6174 = vrot.slane %v4713, 6
        %v6175 = vsel %vm3811, %v6172, %v6174
        %v6176 = vsel %vm385, %v6151, 0
        %v6178 = vsel %vm385, %v6153, 0
        %v6180 = vsel %vm385, %v6155, 0
        %v6182 = vsel %vm385, %v6157, 0
        %v6184 = vsel %vm385, %v6159, 0
        %v6186 = vsel %vm385, %v6161, 0
        %v6188 = vsel %vm385, %v6163, 0
        %v6190 = vsel %vm385, %v6165, 0
        %v6192 = vsel %vm385, %v6167, 0
        %v6194 = vsel %vm385, %v6169, 0
        %v6196 = vsel %vm385, %v6171, 0
        %v6198 = vsel %vm385, %v6173, 0
        %v6200 = vsel %vm385, %v6175, 0
        %6202 = vmatprep.subr.mxu0 0.0
        %6203 = vmatpush1.msra.mxu0 %v6147
        %6204 = vmatprep.subr.mxu0 0.0
        %6205 = vmatpush1.msra.mxu0 %v6148
        %6206 = vmatprep.subr.mxu0 0.0
        %6207 = vmatpush1.msra.mxu0 0.0
        %6208 = vmatprep.subr.mxu0 0.0
        %6209 = vmatpush1.msra.mxu0 0.0
        %6210 = vmatprep.subr.mxu0 0.0
        %6211 = vmatpush1.msra.mxu0 0.0
        %6212 = vmatprep.subr.mxu0 0.0
        %6213 = vmatpush1.msra.mxu0 0.0
        %6214 = vmatprep.subr.mxu0 0.0
        %6215 = vmatpush1.msra.mxu0 0.0
        %6216 = vmatprep.subr.mxu0 0.0
        %6217 = vmatpush1.msra.mxu0 0.0
        %6218 = vmatprep.subr.mxu0 0.0
        %6219 = vmatpush1.msra.mxu0 0.0
        %6220 = vmatprep.subr.mxu0 0.0
        %6221 = vmatpush1.msra.mxu0 0.0
        %6222 = vmatprep.subr.mxu0 0.0
        %6223 = vmatpush1.msra.mxu0 0.0
        %6224 = vmatprep.subr.mxu0 0.0
        %6225 = vmatpush1.msra.mxu0 0.0
        %6226 = vmatprep.subr.mxu0 0.0
        %6227 = vmatpush1.msra.mxu0 0.0
        %6228 = vmatprep.subr.mxu0 0.0
        %6229 = vmatpush1.msra.mxu0 0.0
        %6230 = vmatprep.subr.mxu0 0.0
        %6231 = vmatpush1.msra.mxu0 0.0
        %6232 = vmatprep.subr.mxu0 0.0
        %6233 = vmatpush1.msra.mxu0 0.0
        %6234 = vmatprep.subr.mxu0 0.0
        %6235 = vmatpush1.msra.mxu0 0.0
        %6236 = vmatprep.subr.mxu0 0.0
        %6237 = vmatpush1.msra.mxu0 0.0
        %6238 = vmatprep.subr.mxu0 0.0
        %6239 = vmatpush1.msra.mxu0 0.0
        %6240 = vmatprep.subr.mxu0 0.0
        %6241 = vmatpush1.msra.mxu0 0.0
        %6242 = vmatprep.subr.mxu0 0.0
        %6243 = vmatpush1.msra.mxu0 0.0
        %6244 = vmatprep.subr.mxu0 0.0
        %6245 = vmatpush1.msra.mxu0 0.0
        %6246 = vmatprep.subr.mxu0 0.0
        %6247 = vmatpush1.msra.mxu0 0.0
        %6248 = vmatprep.subr.mxu0 0.0
        %6249 = vmatpush1.msra.mxu0 0.0
        %6250 = vmatprep.subr.mxu0 0.0
        %6251 = vmatpush1.msra.mxu0 0.0
        %6252 = vmatprep.subr.mxu0 0.0
        %6253 = vmatpush1.msra.mxu0 0.0
        %6254 = vmatprep.subr.mxu0 0.0
        %6255 = vmatpush1.msra.mxu0 0.0
        %6256 = vmatprep.subr.mxu0 0.0
        %6257 = vmatpush1.msra.mxu0 0.0
        %6258 = vmatprep.subr.mxu0 0.0
        %6259 = vmatpush1.msra.mxu0 0.0
        %6260 = vmatprep.subr.mxu0 0.0
        %6261 = vmatpush1.msra.mxu0 0.0
        %6262 = vmatprep.subr.mxu0 0.0
        %6263 = vmatpush1.msra.mxu0 0.0
        %6264 = vmatprep.subr.mxu0 0.0
        %6265 = vmatpush1.msra.mxu0 0.0
        %6266 = vmatprep.mubr.f32.mxu0 0.0
        %6267 = vmatmul.mubr.f32.gmra.mrb[0].mxu0 %v6176
        %v6268 = vpop.f32.mrb[0].mxu0
        %v6269 = vadd.f32 0.0, %v6268
        %v6270 = vpop.f32.mrb[0].mxu0
        %6271 = vmatprep.mubr.f32.mxu0 0.0
        %6272 = vmatmul.mubr.f32.gmra.mrb[0].mxu0 %v6178
        %v6273 = vpop.f32.mrb[0].mxu0
        %v6274 = vpop.f32.mrb[0].mxu0
        %6275 = vmatprep.mubr.f32.mxu0 0.0
        %6276 = vmatmul.mubr.f32.gmra.mrb[0].mxu0 %v6180
        %v6277 = vpop.f32.mrb[0].mxu0
        %v6278 = vadd.f32 0.0, %v6277
        %v6279 = vpop.f32.mrb[0].mxu0
        %6280 = vmatprep.mubr.f32.mxu0 0.0
        %6281 = vmatmul.mubr.f32.gmra.mrb[0].mxu0 %v6182
        %v6282 = vpop.f32.mrb[0].mxu0
        %v6283 = vadd.f32 0.0, %v6282
        %v6284 = vpop.f32.mrb[0].mxu0
        %6285 = vmatprep.mubr.f32.mxu0 0.0
        %6286 = vmatmul.mubr.f32.gmra.mrb[0].mxu0 %v6184
        %v6287 = vpop.f32.mrb[0].mxu0
        %v6288 = vpop.f32.mrb[0].mxu0
        %6289 = vmatprep.mubr.f32.mxu0 0.0
        %6290 = vmatmul.mubr.f32.gmra.mrb[0].mxu0 %v6186
        %v6291 = vpop.f32.mrb[0].mxu0
        %v6292 = vadd.f32 0.0, %v6291
        %v6293 = vpop.f32.mrb[0].mxu0
        %6294 = vmatprep.mubr.f32.mxu0 0.0
        %6295 = vmatmul.mubr.f32.gmra.mrb[0].mxu0 %v6188
        %v6296 = vpop.f32.mrb[0].mxu0
        %v6297 = vpop.f32.mrb[0].mxu0
        %6298 = vmatprep.mubr.f32.mxu0 0.0
        %6299 = vmatmul.mubr.f32.gmra.mrb[0].mxu0 %v6190
        %v6300 = vpop.f32.mrb[0].mxu0
        %v6301 = vadd.f32 0.0, %v6300
        %v6302 = vpop.f32.mrb[0].mxu0
        %6303 = vmatprep.mubr.f32.mxu0 0.0
        %6304 = vmatmul.mubr.f32.gmra.mrb[0].mxu0 %v6192
        %v6305 = vpop.f32.mrb[0].mxu0
        %v6306 = vadd.f32 0.0, %v6305
        %v6307 = vpop.f32.mrb[0].mxu0
        %6308 = vmatprep.mubr.f32.mxu0 0.0
        %6309 = vmatmul.mubr.f32.gmra.mrb[0].mxu0 %v6194
        %v6310 = vpop.f32.mrb[0].mxu0
        %v6311 = vpop.f32.mrb[0].mxu0
        %6312 = vmatprep.mubr.f32.mxu0 0.0
        %6313 = vmatmul.mubr.f32.gmra.mrb[0].mxu0 %v6196
        %v6314 = vpop.f32.mrb[0].mxu0
        %v6315 = vpop.f32.mrb[0].mxu0
        %6316 = vmatprep.mubr.f32.mxu0 0.0
        %6317 = vmatmul.mubr.f32.gmra.mrb[0].mxu0 %v6198
        %v6318 = vpop.f32.mrb[0].mxu0
        %v6319 = vpop.f32.mrb[0].mxu0
        %6320 = vmatprep.mubr.f32.mxu0 0.0
        %6321 = vmatmul.mubr.f32.gmra.mrb[0].mxu0 %v6200
        %v6322 = vpop.f32.mrb[0].mxu0
        %v6323 = vpop.f32.mrb[0].mxu0
        %6324 = vdwg.mxu0
        %v6325 = vadd.f32 %v6141, %v6269
        %v6326 = vadd.f32 %v6142, %v6278
        %v6327 = vadd.f32 %v6143, %v6283
        %v6328 = vadd.f32 %v6144, %v6292
        %v6329 = vadd.f32 %v6145, %v6301
        %v6330 = vadd.f32 %v6146, %v6306
        %v6331 = vld [vmem:[%s4] sm:$0x1]
        %v6333 = vlaneseq
        %v6334 = vshrl.u32 %v6333, 7
        %v6335 = vsub.s32 0, %v6334
        %v6336 = vrot.slane %v6331, %v6335
        %v6338 = vadd.f32 %v6325, %v6336
        %v6339 = vadd.f32 %v6326, %v6336
        %v6340 = vadd.f32 %v6327, %v6336
        %v6341 = vadd.f32 %v6328, %v6336
        %v6342 = vadd.f32 %v6329, %v6336
        %v6343 = vadd.f32 %v6330, %v6336
        %6345 = vrot.lane.b32.xlu0 %v6338, 16
        %v6346 = vpop.permute.xlu0 %6345
        %vm6348 = vcmask 516224
        %6349 = vst.msk [vmem:[#allocation3 + $0x7] sm:$0x1] %vm6348, %v6346
        %vm6350 = vcmask 518274
        %6351 = vst.msk [vmem:[#allocation3 + $0x6] sm:$0x4] %vm6350, %v6346
        %vm6352 = vcmask 520324
        %6353 = vst.msk [vmem:[#allocation3 + $0x5] sm:$0x10] %vm6352, %v6346
        %vm6354 = vcmask 522374
        %6355 = vst.msk [vmem:[#allocation3 + $0x4] sm:$0x40] %vm6354, %v6346
        %6357 = vrot.lane.b32.xlu0 %v6339, 16
        %v6358 = vpop.permute.xlu0 %6357
        %6360 = vst.msk [vmem:[#allocation3 + $0x9] sm:$0x10] %vm6352, %v6358
        %6361 = vst.msk [vmem:[#allocation3 + $0x8] sm:$0x40] %vm6354, %v6358
        %6363 = vrot.lane.b32.xlu0 %v6340, 16
        %v6364 = vpop.permute.xlu0 %6363
        %6366 = vst.msk [vmem:[#allocation3 + $0xf] sm:$0x1] %vm6348, %v6364
        %6367 = vst.msk [vmem:[#allocation3 + $0xe] sm:$0x4] %vm6350, %v6364
        %6369 = vrot.lane.b32.xlu0 %v6341, 16
        %v6370 = vpop.permute.xlu0 %6369
        %6372 = vst.msk [vmem:[#allocation3 + $0x13] sm:$0x1] %vm6348, %v6370
        %6373 = vst.msk [vmem:[#allocation3 + $0x12] sm:$0x4] %vm6350, %v6370
        %6374 = vst.msk [vmem:[#allocation3 + $0x11] sm:$0x10] %vm6352, %v6370
        %6375 = vst.msk [vmem:[#allocation3 + $0x10] sm:$0x40] %vm6354, %v6370
        %6377 = vrot.lane.b32.xlu0 %v6342, 16
        %v6378 = vpop.permute.xlu0 %6377
        %6380 = vst.msk [vmem:[#allocation3 + $0x15] sm:$0x10] %vm6352, %v6378
        %6381 = vst.msk [vmem:[#allocation3 + $0x14] sm:$0x40] %vm6354, %v6378
        %6383 = vrot.lane.b32.xlu0 %v6343, 16
        %v6384 = vpop.permute.xlu0 %6383
        %6386 = vst.msk [vmem:[#allocation3 + $0x1b] sm:$0x1] %vm6348, %v6384
        %6387 = vst.msk [vmem:[#allocation3 + $0x1a] sm:$0x4] %vm6350, %v6384
        %v6388 = vld [vmem:[#allocation3] sm:$0xff]
        %v6389 = vld [vmem:[#allocation3 + $0x8] sm:$0xff]
        %v6390 = vld [vmem:[#allocation3 + $0x10] sm:$0xff]
        %v6391 = vld [vmem:[#allocation3 + $0x18] sm:$0xff]
        %v6392 = vld [vmem:[#allocation3 + $0x20] sm:$0xff]
        %v6393 = vld [vmem:[#allocation3 + $0x28] sm:$0xff]
        %v6394 = vld [vmem:[#allocation3 + $0x30] sm:$0x3]
        %v6395 = vld [vmem:[%s5] sm:$0xff]
        %v6396 = vld [vmem:[%s5 + $0x8] sm:$0xff]
        %v6397 = vld [vmem:[%s5 + $0x10] sm:$0xff]
        %v6398 = vld [vmem:[%s5 + $0x18] sm:$0xff]
        %v6399 = vld [vmem:[%s5 + $0x20] sm:$0xff]
        %v6400 = vld [vmem:[%s5 + $0x28] sm:$0xff]
        %v6401 = vld [vmem:[%s5 + $0x30] sm:$0xff]
        %v6402 = vld [vmem:[%s5 + $0x38] sm:$0xff]
        %v6403 = vld [vmem:[%s5 + $0x40] sm:$0xff]
        %v6404 = vld [vmem:[%s5 + $0x48] sm:$0xff]
        %v6405 = vld [vmem:[%s5 + $0x50] sm:$0xff]
        %v6406 = vld [vmem:[%s5 + $0x58] sm:$0xff]
        %v6407 = vld [vmem:[%s5 + $0x60] sm:$0xff]
        %v6408 = vld [vmem:[%s5 + $0x68] sm:$0xff]
        %v6409 = vld [vmem:[%s5 + $0x70] sm:$0xff]
        %v6410 = vld [vmem:[%s5 + $0x78] sm:$0xff]
        %v6416 = vrot.slane %v6388, 1
        %v6417 = vrot.slane %v6389, 1
        %v6418 = vsel %vm510, %v6416, %v6417
        %v6419 = vrot.slane %v6390, 1
        %v6420 = vsel %vm510, %v6417, %v6419
        %v6421 = vrot.slane %v6391, 1
        %v6422 = vsel %vm510, %v6419, %v6421
        %v6423 = vrot.slane %v6392, 1
        %v6424 = vsel %vm510, %v6421, %v6423
        %v6425 = vsel %vm403, %v6418, 0
        %v6427 = vsel %vm403, %v6420, 0
        %v6429 = vsel %vm403, %v6422, 0
        %v6431 = vsel %vm403, %v6424, 0
        %v6433 = vsel %vm403, %v6423, 0
        %6435 = vmatprep.subr.mxu0 0.0
        %6436 = vmatpush1.msra.mxu0 %v6403
        %6437 = vmatprep.subr.mxu0 0.0
        %6438 = vmatpush1.msra.mxu0 %v6404
        %6439 = vmatprep.subr.mxu0 0.0
        %6440 = vmatpush1.msra.mxu0 %v6405
        %6441 = vmatprep.subr.mxu0 0.0
        %6442 = vmatpush1.msra.mxu0 %v6406
        %6443 = vmatprep.subr.mxu0 0.0
        %6444 = vmatpush1.msra.mxu0 %v6407
        %6445 = vmatprep.subr.mxu0 0.0
        %6446 = vmatpush1.msra.mxu0 %v6408
        %6447 = vmatprep.subr.mxu0 0.0
        %6448 = vmatpush1.msra.mxu0 %v6409
        %6449 = vmatprep.subr.mxu0 0.0
        %6450 = vmatpush1.msra.mxu0 %v6410
        %6451 = vmatprep.subr.mxu0 0.0
        %6452 = vmatpush1.msra.mxu0 0.0
        %6453 = vmatprep.subr.mxu0 0.0
        %6454 = vmatpush1.msra.mxu0 0.0
        %6455 = vmatprep.subr.mxu0 0.0
        %6456 = vmatpush1.msra.mxu0 0.0
        %6457 = vmatprep.subr.mxu0 0.0
        %6458 = vmatpush1.msra.mxu0 0.0
        %6459 = vmatprep.subr.mxu0 0.0
        %6460 = vmatpush1.msra.mxu0 0.0
        %6461 = vmatprep.subr.mxu0 0.0
        %6462 = vmatpush1.msra.mxu0 0.0
        %6463 = vmatprep.subr.mxu0 0.0
        %6464 = vmatpush1.msra.mxu0 0.0
        %6465 = vmatprep.subr.mxu0 0.0
        %6466 = vmatpush1.msra.mxu0 0.0
        %6467 = vmatprep.subr.mxu0 0.0
        %6468 = vmatpush1.msra.mxu0 0.0
        %6469 = vmatprep.subr.mxu0 0.0
        %6470 = vmatpush1.msra.mxu0 0.0
        %6471 = vmatprep.subr.mxu0 0.0
        %6472 = vmatpush1.msra.mxu0 0.0
        %6473 = vmatprep.subr.mxu0 0.0
        %6474 = vmatpush1.msra.mxu0 0.0
        %6475 = vmatprep.subr.mxu0 0.0
        %6476 = vmatpush1.msra.mxu0 0.0
        %6477 = vmatprep.subr.mxu0 0.0
        %6478 = vmatpush1.msra.mxu0 0.0
        %6479 = vmatprep.subr.mxu0 0.0
        %6480 = vmatpush1.msra.mxu0 0.0
        %6481 = vmatprep.subr.mxu0 0.0
        %6482 = vmatpush1.msra.mxu0 0.0
        %6483 = vmatprep.subr.mxu0 0.0
        %6484 = vmatpush1.msra.mxu0 0.0
        %6485 = vmatprep.subr.mxu0 0.0
        %6486 = vmatpush1.msra.mxu0 0.0
        %6487 = vmatprep.subr.mxu0 0.0
        %6488 = vmatpush1.msra.mxu0 0.0
        %6489 = vmatprep.subr.mxu0 0.0
        %6490 = vmatpush1.msra.mxu0 0.0
        %6491 = vmatprep.subr.mxu0 0.0
        %6492 = vmatpush1.msra.mxu0 0.0
        %6493 = vmatprep.subr.mxu0 0.0
        %6494 = vmatpush1.msra.mxu0 0.0
        %6495 = vmatprep.subr.mxu0 0.0
        %6496 = vmatpush1.msra.mxu0 0.0
        %6497 = vmatprep.subr.mxu0 0.0
        %6498 = vmatpush1.msra.mxu0 0.0
        %6499 = vmatprep.mubr.f32.mxu0 0.0
        %6500 = vmatmul.mubr.f32.gmra.mrb[0].mxu0 %v6425
        %v6501 = vpop.f32.mrb[0].mxu0
        %v6502 = vadd.f32 0.0, %v6501
        %v6503 = vpop.f32.mrb[0].mxu0
        %6504 = vmatprep.mubr.f32.mxu0 0.0
        %6505 = vmatmul.mubr.f32.gmra.mrb[0].mxu0 %v6427
        %v6506 = vpop.f32.mrb[0].mxu0
        %v6507 = vadd.f32 0.0, %v6506
        %v6508 = vpop.f32.mrb[0].mxu0
        %6509 = vmatprep.mubr.f32.mxu0 0.0
        %6510 = vmatmul.mubr.f32.gmra.mrb[0].mxu0 %v6429
        %v6511 = vpop.f32.mrb[0].mxu0
        %v6512 = vadd.f32 0.0, %v6511
        %v6513 = vpop.f32.mrb[0].mxu0
        %6514 = vmatprep.mubr.f32.mxu0 0.0
        %6515 = vmatmul.mubr.f32.gmra.mrb[0].mxu0 %v6431
        %v6516 = vpop.f32.mrb[0].mxu0
        %v6517 = vpop.f32.mrb[0].mxu0
        %6518 = vmatprep.mubr.f32.mxu0 0.0
        %6519 = vmatmul.mubr.f32.gmra.mrb[0].mxu0 %v6433
        %v6520 = vpop.f32.mrb[0].mxu0
        %v6521 = vpop.f32.mrb[0].mxu0
        %6522 = vdwg.mxu0
        %v6523 = vsel %vm403, %v6388, 0
        %v6525 = vsel %vm403, %v6389, 0
        %v6527 = vsel %vm403, %v6390, 0
        %v6529 = vsel %vm403, %v6391, 0
        %v6531 = vsel %vm403, %v6392, 0
        %6533 = vmatprep.subr.mxu0 0.0
        %6534 = vmatpush1.msra.mxu0 %v6395
        %6535 = vmatprep.subr.mxu0 0.0
        %6536 = vmatpush1.msra.mxu0 %v6396
        %6537 = vmatprep.subr.mxu0 0.0
        %6538 = vmatpush1.msra.mxu0 %v6397
        %6539 = vmatprep.subr.mxu0 0.0
        %6540 = vmatpush1.msra.mxu0 %v6398
        %6541 = vmatprep.subr.mxu0 0.0
        %6542 = vmatpush1.msra.mxu0 %v6399
        %6543 = vmatprep.subr.mxu0 0.0
        %6544 = vmatpush1.msra.mxu0 %v6400
        %6545 = vmatprep.subr.mxu0 0.0
        %6546 = vmatpush1.msra.mxu0 %v6401
        %6547 = vmatprep.subr.mxu0 0.0
        %6548 = vmatpush1.msra.mxu0 %v6402
        %6549 = vmatprep.subr.mxu0 0.0
        %6550 = vmatpush1.msra.mxu0 0.0
        %6551 = vmatprep.subr.mxu0 0.0
        %6552 = vmatpush1.msra.mxu0 0.0
        %6553 = vmatprep.subr.mxu0 0.0
        %6554 = vmatpush1.msra.mxu0 0.0
        %6555 = vmatprep.subr.mxu0 0.0
        %6556 = vmatpush1.msra.mxu0 0.0
        %6557 = vmatprep.subr.mxu0 0.0
        %6558 = vmatpush1.msra.mxu0 0.0
        %6559 = vmatprep.subr.mxu0 0.0
        %6560 = vmatpush1.msra.mxu0 0.0
        %6561 = vmatprep.subr.mxu0 0.0
        %6562 = vmatpush1.msra.mxu0 0.0
        %6563 = vmatprep.subr.mxu0 0.0
        %6564 = vmatpush1.msra.mxu0 0.0
        %6565 = vmatprep.subr.mxu0 0.0
        %6566 = vmatpush1.msra.mxu0 0.0
        %6567 = vmatprep.subr.mxu0 0.0
        %6568 = vmatpush1.msra.mxu0 0.0
        %6569 = vmatprep.subr.mxu0 0.0
        %6570 = vmatpush1.msra.mxu0 0.0
        %6571 = vmatprep.subr.mxu0 0.0
        %6572 = vmatpush1.msra.mxu0 0.0
        %6573 = vmatprep.subr.mxu0 0.0
        %6574 = vmatpush1.msra.mxu0 0.0
        %6575 = vmatprep.subr.mxu0 0.0
        %6576 = vmatpush1.msra.mxu0 0.0
        %6577 = vmatprep.subr.mxu0 0.0
        %6578 = vmatpush1.msra.mxu0 0.0
        %6579 = vmatprep.subr.mxu0 0.0
        %6580 = vmatpush1.msra.mxu0 0.0
        %6581 = vmatprep.subr.mxu0 0.0
        %6582 = vmatpush1.msra.mxu0 0.0
        %6583 = vmatprep.subr.mxu0 0.0
        %6584 = vmatpush1.msra.mxu0 0.0
        %6585 = vmatprep.subr.mxu0 0.0
        %6586 = vmatpush1.msra.mxu0 0.0
        %6587 = vmatprep.subr.mxu0 0.0
        %6588 = vmatpush1.msra.mxu0 0.0
        %6589 = vmatprep.subr.mxu0 0.0
        %6590 = vmatpush1.msra.mxu0 0.0
        %6591 = vmatprep.subr.mxu0 0.0
        %6592 = vmatpush1.msra.mxu0 0.0
        %6593 = vmatprep.subr.mxu0 0.0
        %6594 = vmatpush1.msra.mxu0 0.0
        %6595 = vmatprep.subr.mxu0 0.0
        %6596 = vmatpush1.msra.mxu0 0.0
        %6597 = vmatprep.mubr.f32.mxu0 0.0
        %6598 = vmatmul.mubr.f32.gmra.mrb[0].mxu0 %v6523
        %v6599 = vpop.f32.mrb[0].mxu0
        %v6600 = vadd.f32 %v6502, %v6599
        %v6601 = vpop.f32.mrb[0].mxu0
        %6602 = vmatprep.mubr.f32.mxu0 0.0
        %6603 = vmatmul.mubr.f32.gmra.mrb[0].mxu0 %v6525
        %v6604 = vpop.f32.mrb[0].mxu0
        %v6605 = vadd.f32 %v6507, %v6604
        %v6606 = vpop.f32.mrb[0].mxu0
        %6607 = vmatprep.mubr.f32.mxu0 0.0
        %6608 = vmatmul.mubr.f32.gmra.mrb[0].mxu0 %v6527
        %v6609 = vpop.f32.mrb[0].mxu0
        %v6610 = vadd.f32 %v6512, %v6609
        %v6611 = vpop.f32.mrb[0].mxu0
        %6612 = vmatprep.mubr.f32.mxu0 0.0
        %6613 = vmatmul.mubr.f32.gmra.mrb[0].mxu0 %v6529
        %v6614 = vpop.f32.mrb[0].mxu0
        %v6615 = vpop.f32.mrb[0].mxu0
        %6616 = vmatprep.mubr.f32.mxu0 0.0
        %6617 = vmatmul.mubr.f32.gmra.mrb[0].mxu0 %v6531
        %v6618 = vpop.f32.mrb[0].mxu0
        %v6619 = vpop.f32.mrb[0].mxu0
        %6620 = vdwg.mxu0
        %v6621 = vld [vmem:[%s5 + $0x80] sm:$0xff]
        %v6622 = vld [vmem:[%s5 + $0x88] sm:$0xff]
        %v6623 = vld [vmem:[%s5 + $0x90] sm:$0xff]
        %v6624 = vld [vmem:[%s5 + $0x98] sm:$0xff]
        %v6625 = vld [vmem:[%s5 + $0xa0] sm:$0xff]
        %v6626 = vld [vmem:[%s5 + $0xa8] sm:$0xff]
        %v6627 = vld [vmem:[%s5 + $0xb0] sm:$0xff]
        %v6628 = vld [vmem:[%s5 + $0xb8] sm:$0xff]
        %v6629 = vrot.slane %v6388, 2
        %v6630 = vrot.slane %v6389, 2
        %v6631 = vsel %vm1292, %v6629, %v6630
        %v6632 = vrot.slane %v6390, 2
        %v6633 = vsel %vm1292, %v6630, %v6632
        %v6634 = vrot.slane %v6391, 2
        %v6635 = vsel %vm1292, %v6632, %v6634
        %v6636 = vrot.slane %v6392, 2
        %v6637 = vsel %vm1292, %v6634, %v6636
        %v6638 = vsel %vm403, %v6631, 0
        %v6640 = vsel %vm403, %v6633, 0
        %v6642 = vsel %vm403, %v6635, 0
        %v6644 = vsel %vm403, %v6637, 0
        %v6646 = vsel %vm403, %v6636, 0
        %6648 = vmatprep.subr.mxu0 0.0
        %6649 = vmatpush1.msra.mxu0 %v6621
        %6650 = vmatprep.subr.mxu0 0.0
        %6651 = vmatpush1.msra.mxu0 %v6622
        %6652 = vmatprep.subr.mxu0 0.0
        %6653 = vmatpush1.msra.mxu0 %v6623
        %6654 = vmatprep.subr.mxu0 0.0
        %6655 = vmatpush1.msra.mxu0 %v6624
        %6656 = vmatprep.subr.mxu0 0.0
        %6657 = vmatpush1.msra.mxu0 %v6625
        %6658 = vmatprep.subr.mxu0 0.0
        %6659 = vmatpush1.msra.mxu0 %v6626
        %6660 = vmatprep.subr.mxu0 0.0
        %6661 = vmatpush1.msra.mxu0 %v6627
        %6662 = vmatprep.subr.mxu0 0.0
        %6663 = vmatpush1.msra.mxu0 %v6628
        %6664 = vmatprep.subr.mxu0 0.0
        %6665 = vmatpush1.msra.mxu0 0.0
        %6666 = vmatprep.subr.mxu0 0.0
        %6667 = vmatpush1.msra.mxu0 0.0
        %6668 = vmatprep.subr.mxu0 0.0
        %6669 = vmatpush1.msra.mxu0 0.0
        %6670 = vmatprep.subr.mxu0 0.0
        %6671 = vmatpush1.msra.mxu0 0.0
        %6672 = vmatprep.subr.mxu0 0.0
        %6673 = vmatpush1.msra.mxu0 0.0
        %6674 = vmatprep.subr.mxu0 0.0
        %6675 = vmatpush1.msra.mxu0 0.0
        %6676 = vmatprep.subr.mxu0 0.0
        %6677 = vmatpush1.msra.mxu0 0.0
        %6678 = vmatprep.subr.mxu0 0.0
        %6679 = vmatpush1.msra.mxu0 0.0
        %6680 = vmatprep.subr.mxu0 0.0
        %6681 = vmatpush1.msra.mxu0 0.0
        %6682 = vmatprep.subr.mxu0 0.0
        %6683 = vmatpush1.msra.mxu0 0.0
        %6684 = vmatprep.subr.mxu0 0.0
        %6685 = vmatpush1.msra.mxu0 0.0
        %6686 = vmatprep.subr.mxu0 0.0
        %6687 = vmatpush1.msra.mxu0 0.0
        %6688 = vmatprep.subr.mxu0 0.0
        %6689 = vmatpush1.msra.mxu0 0.0
        %6690 = vmatprep.subr.mxu0 0.0
        %6691 = vmatpush1.msra.mxu0 0.0
        %6692 = vmatprep.subr.mxu0 0.0
        %6693 = vmatpush1.msra.mxu0 0.0
        %6694 = vmatprep.subr.mxu0 0.0
        %6695 = vmatpush1.msra.mxu0 0.0
        %6696 = vmatprep.subr.mxu0 0.0
        %6697 = vmatpush1.msra.mxu0 0.0
        %6698 = vmatprep.subr.mxu0 0.0
        %6699 = vmatpush1.msra.mxu0 0.0
        %6700 = vmatprep.subr.mxu0 0.0
        %6701 = vmatpush1.msra.mxu0 0.0
        %6702 = vmatprep.subr.mxu0 0.0
        %6703 = vmatpush1.msra.mxu0 0.0
        %6704 = vmatprep.subr.mxu0 0.0
        %6705 = vmatpush1.msra.mxu0 0.0
        %6706 = vmatprep.subr.mxu0 0.0
        %6707 = vmatpush1.msra.mxu0 0.0
        %6708 = vmatprep.subr.mxu0 0.0
        %6709 = vmatpush1.msra.mxu0 0.0
        %6710 = vmatprep.subr.mxu0 0.0
        %6711 = vmatpush1.msra.mxu0 0.0
        %6712 = vmatprep.mubr.f32.mxu0 0.0
        %6713 = vmatmul.mubr.f32.gmra.mrb[0].mxu0 %v6638
        %v6714 = vpop.f32.mrb[0].mxu0
        %v6715 = vadd.f32 0.0, %v6714
        %v6716 = vpop.f32.mrb[0].mxu0
        %6717 = vmatprep.mubr.f32.mxu0 0.0
        %6718 = vmatmul.mubr.f32.gmra.mrb[0].mxu0 %v6640
        %v6719 = vpop.f32.mrb[0].mxu0
        %v6720 = vadd.f32 0.0, %v6719
        %v6721 = vpop.f32.mrb[0].mxu0
        %6722 = vmatprep.mubr.f32.mxu0 0.0
        %6723 = vmatmul.mubr.f32.gmra.mrb[0].mxu0 %v6642
        %v6724 = vpop.f32.mrb[0].mxu0
        %v6725 = vadd.f32 0.0, %v6724
        %v6726 = vpop.f32.mrb[0].mxu0
        %6727 = vmatprep.mubr.f32.mxu0 0.0
        %6728 = vmatmul.mubr.f32.gmra.mrb[0].mxu0 %v6644
        %v6729 = vpop.f32.mrb[0].mxu0
        %v6730 = vpop.f32.mrb[0].mxu0
        %6731 = vmatprep.mubr.f32.mxu0 0.0
        %6732 = vmatmul.mubr.f32.gmra.mrb[0].mxu0 %v6646
        %v6733 = vpop.f32.mrb[0].mxu0
        %v6734 = vpop.f32.mrb[0].mxu0
        %6735 = vdwg.mxu0
        %v6736 = vadd.f32 %v6600, %v6715
        %v6737 = vadd.f32 %v6605, %v6720
        %v6738 = vadd.f32 %v6610, %v6725
        %v6739 = vld [vmem:[%s5 + $0xc0] sm:$0xff]
        %v6740 = vld [vmem:[%s5 + $0xc8] sm:$0xff]
        %v6741 = vld [vmem:[%s5 + $0xd0] sm:$0xff]
        %v6742 = vld [vmem:[%s5 + $0xd8] sm:$0xff]
        %v6743 = vld [vmem:[%s5 + $0xe0] sm:$0xff]
        %v6744 = vld [vmem:[%s5 + $0xe8] sm:$0xff]
        %v6745 = vld [vmem:[%s5 + $0xf0] sm:$0xff]
        %v6746 = vld [vmem:[%s5 + $0xf8] sm:$0xff]
        %v6748 = vrot.slane %v6388, 6
        %v6749 = vrot.slane %v6389, 6
        %v6750 = vsel %vm3811, %v6748, %v6749
        %v6751 = vrot.slane %v6390, 6
        %v6752 = vsel %vm3811, %v6749, %v6751
        %v6753 = vrot.slane %v6391, 6
        %v6754 = vsel %vm3811, %v6751, %v6753
        %v6755 = vrot.slane %v6392, 6
        %v6756 = vsel %vm3811, %v6753, %v6755
        %v6757 = vrot.slane %v6393, 6
        %v6758 = vsel %vm3811, %v6755, %v6757
        %v6759 = vsel %vm403, %v6750, 0
        %v6761 = vsel %vm403, %v6752, 0
        %v6763 = vsel %vm403, %v6754, 0
        %v6765 = vsel %vm403, %v6756, 0
        %v6767 = vsel %vm403, %v6758, 0
        %6769 = vmatprep.subr.mxu0 0.0
        %6770 = vmatpush1.msra.mxu0 %v6739
        %6771 = vmatprep.subr.mxu0 0.0
        %6772 = vmatpush1.msra.mxu0 %v6740
        %6773 = vmatprep.subr.mxu0 0.0
        %6774 = vmatpush1.msra.mxu0 %v6741
        %6775 = vmatprep.subr.mxu0 0.0
        %6776 = vmatpush1.msra.mxu0 %v6742
        %6777 = vmatprep.subr.mxu0 0.0
        %6778 = vmatpush1.msra.mxu0 %v6743
        %6779 = vmatprep.subr.mxu0 0.0
        %6780 = vmatpush1.msra.mxu0 %v6744
        %6781 = vmatprep.subr.mxu0 0.0
        %6782 = vmatpush1.msra.mxu0 %v6745
        %6783 = vmatprep.subr.mxu0 0.0
        %6784 = vmatpush1.msra.mxu0 %v6746
        %6785 = vmatprep.subr.mxu0 0.0
        %6786 = vmatpush1.msra.mxu0 0.0
        %6787 = vmatprep.subr.mxu0 0.0
        %6788 = vmatpush1.msra.mxu0 0.0
        %6789 = vmatprep.subr.mxu0 0.0
        %6790 = vmatpush1.msra.mxu0 0.0
        %6791 = vmatprep.subr.mxu0 0.0
        %6792 = vmatpush1.msra.mxu0 0.0
        %6793 = vmatprep.subr.mxu0 0.0
        %6794 = vmatpush1.msra.mxu0 0.0
        %6795 = vmatprep.subr.mxu0 0.0
        %6796 = vmatpush1.msra.mxu0 0.0
        %6797 = vmatprep.subr.mxu0 0.0
        %6798 = vmatpush1.msra.mxu0 0.0
        %6799 = vmatprep.subr.mxu0 0.0
        %6800 = vmatpush1.msra.mxu0 0.0
        %6801 = vmatprep.subr.mxu0 0.0
        %6802 = vmatpush1.msra.mxu0 0.0
        %6803 = vmatprep.subr.mxu0 0.0
        %6804 = vmatpush1.msra.mxu0 0.0
        %6805 = vmatprep.subr.mxu0 0.0
        %6806 = vmatpush1.msra.mxu0 0.0
        %6807 = vmatprep.subr.mxu0 0.0
        %6808 = vmatpush1.msra.mxu0 0.0
        %6809 = vmatprep.subr.mxu0 0.0
        %6810 = vmatpush1.msra.mxu0 0.0
        %6811 = vmatprep.subr.mxu0 0.0
        %6812 = vmatpush1.msra.mxu0 0.0
        %6813 = vmatprep.subr.mxu0 0.0
        %6814 = vmatpush1.msra.mxu0 0.0
        %6815 = vmatprep.subr.mxu0 0.0
        %6816 = vmatpush1.msra.mxu0 0.0
        %6817 = vmatprep.subr.mxu0 0.0
        %6818 = vmatpush1.msra.mxu0 0.0
        %6819 = vmatprep.subr.mxu0 0.0
        %6820 = vmatpush1.msra.mxu0 0.0
        %6821 = vmatprep.subr.mxu0 0.0
        %6822 = vmatpush1.msra.mxu0 0.0
        %6823 = vmatprep.subr.mxu0 0.0
        %6824 = vmatpush1.msra.mxu0 0.0
        %6825 = vmatprep.subr.mxu0 0.0
        %6826 = vmatpush1.msra.mxu0 0.0
        %6827 = vmatprep.subr.mxu0 0.0
        %6828 = vmatpush1.msra.mxu0 0.0
        %6829 = vmatprep.subr.mxu0 0.0
        %6830 = vmatpush1.msra.mxu0 0.0
        %6831 = vmatprep.subr.mxu0 0.0
        %6832 = vmatpush1.msra.mxu0 0.0
        %6833 = vmatprep.mubr.f32.mxu0 0.0
        %6834 = vmatmul.mubr.f32.gmra.mrb[0].mxu0 %v6759
        %v6835 = vpop.f32.mrb[0].mxu0
        %v6836 = vadd.f32 0.0, %v6835
        %v6837 = vpop.f32.mrb[0].mxu0
        %6838 = vmatprep.mubr.f32.mxu0 0.0
        %6839 = vmatmul.mubr.f32.gmra.mrb[0].mxu0 %v6761
        %v6840 = vpop.f32.mrb[0].mxu0
        %v6841 = vadd.f32 0.0, %v6840
        %v6842 = vpop.f32.mrb[0].mxu0
        %6843 = vmatprep.mubr.f32.mxu0 0.0
        %6844 = vmatmul.mubr.f32.gmra.mrb[0].mxu0 %v6763
        %v6845 = vpop.f32.mrb[0].mxu0
        %v6846 = vadd.f32 0.0, %v6845
        %v6847 = vpop.f32.mrb[0].mxu0
        %6848 = vmatprep.mubr.f32.mxu0 0.0
        %6849 = vmatmul.mubr.f32.gmra.mrb[0].mxu0 %v6765
        %v6850 = vpop.f32.mrb[0].mxu0
        %v6851 = vpop.f32.mrb[0].mxu0
        %6852 = vmatprep.mubr.f32.mxu0 0.0
        %6853 = vmatmul.mubr.f32.gmra.mrb[0].mxu0 %v6767
        %v6854 = vpop.f32.mrb[0].mxu0
        %v6855 = vpop.f32.mrb[0].mxu0
        %6856 = vdwg.mxu0
        %v6857 = vadd.f32 %v6736, %v6836
        %v6858 = vadd.f32 %v6737, %v6841
        %v6859 = vadd.f32 %v6738, %v6846
        %v6860 = vld [vmem:[%s5 + $0x100] sm:$0xff]
        %v6861 = vld [vmem:[%s5 + $0x108] sm:$0xff]
        %v6862 = vld [vmem:[%s5 + $0x110] sm:$0xff]
        %v6863 = vld [vmem:[%s5 + $0x118] sm:$0xff]
        %v6864 = vld [vmem:[%s5 + $0x120] sm:$0xff]
        %v6865 = vld [vmem:[%s5 + $0x128] sm:$0xff]
        %v6866 = vld [vmem:[%s5 + $0x130] sm:$0xff]
        %v6867 = vld [vmem:[%s5 + $0x138] sm:$0xff]
        %vm6868 = vcmask 1040384
        %v6869 = vrot.slane %v6388, 7
        %v6870 = vrot.slane %v6389, 7
        %v6871 = vsel %vm6868, %v6869, %v6870
        %v6872 = vrot.slane %v6390, 7
        %v6873 = vsel %vm6868, %v6870, %v6872
        %v6874 = vrot.slane %v6391, 7
        %v6875 = vsel %vm6868, %v6872, %v6874
        %v6876 = vrot.slane %v6392, 7
        %v6877 = vsel %vm6868, %v6874, %v6876
        %v6878 = vrot.slane %v6393, 7
        %v6879 = vsel %vm6868, %v6876, %v6878
        %v6880 = vsel %vm403, %v6871, 0
        %v6882 = vsel %vm403, %v6873, 0
        %v6884 = vsel %vm403, %v6875, 0
        %v6886 = vsel %vm403, %v6877, 0
        %v6888 = vsel %vm403, %v6879, 0
        %6890 = vmatprep.subr.mxu0 0.0
        %6891 = vmatpush1.msra.mxu0 %v6860
        %6892 = vmatprep.subr.mxu0 0.0
        %6893 = vmatpush1.msra.mxu0 %v6861
        %6894 = vmatprep.subr.mxu0 0.0
        %6895 = vmatpush1.msra.mxu0 %v6862
        %6896 = vmatprep.subr.mxu0 0.0
        %6897 = vmatpush1.msra.mxu0 %v6863
        %6898 = vmatprep.subr.mxu0 0.0
        %6899 = vmatpush1.msra.mxu0 %v6864
        %6900 = vmatprep.subr.mxu0 0.0
        %6901 = vmatpush1.msra.mxu0 %v6865
        %6902 = vmatprep.subr.mxu0 0.0
        %6903 = vmatpush1.msra.mxu0 %v6866
        %6904 = vmatprep.subr.mxu0 0.0
        %6905 = vmatpush1.msra.mxu0 %v6867
        %6906 = vmatprep.subr.mxu0 0.0
        %6907 = vmatpush1.msra.mxu0 0.0
        %6908 = vmatprep.subr.mxu0 0.0
        %6909 = vmatpush1.msra.mxu0 0.0
        %6910 = vmatprep.subr.mxu0 0.0
        %6911 = vmatpush1.msra.mxu0 0.0
        %6912 = vmatprep.subr.mxu0 0.0
        %6913 = vmatpush1.msra.mxu0 0.0
        %6914 = vmatprep.subr.mxu0 0.0
        %6915 = vmatpush1.msra.mxu0 0.0
        %6916 = vmatprep.subr.mxu0 0.0
        %6917 = vmatpush1.msra.mxu0 0.0
        %6918 = vmatprep.subr.mxu0 0.0
        %6919 = vmatpush1.msra.mxu0 0.0
        %6920 = vmatprep.subr.mxu0 0.0
        %6921 = vmatpush1.msra.mxu0 0.0
        %6922 = vmatprep.subr.mxu0 0.0
        %6923 = vmatpush1.msra.mxu0 0.0
        %6924 = vmatprep.subr.mxu0 0.0
        %6925 = vmatpush1.msra.mxu0 0.0
        %6926 = vmatprep.subr.mxu0 0.0
        %6927 = vmatpush1.msra.mxu0 0.0
        %6928 = vmatprep.subr.mxu0 0.0
        %6929 = vmatpush1.msra.mxu0 0.0
        %6930 = vmatprep.subr.mxu0 0.0
        %6931 = vmatpush1.msra.mxu0 0.0
        %6932 = vmatprep.subr.mxu0 0.0
        %6933 = vmatpush1.msra.mxu0 0.0
        %6934 = vmatprep.subr.mxu0 0.0
        %6935 = vmatpush1.msra.mxu0 0.0
        %6936 = vmatprep.subr.mxu0 0.0
        %6937 = vmatpush1.msra.mxu0 0.0
        %6938 = vmatprep.subr.mxu0 0.0
        %6939 = vmatpush1.msra.mxu0 0.0
        %6940 = vmatprep.subr.mxu0 0.0
        %6941 = vmatpush1.msra.mxu0 0.0
        %6942 = vmatprep.subr.mxu0 0.0
        %6943 = vmatpush1.msra.mxu0 0.0
        %6944 = vmatprep.subr.mxu0 0.0
        %6945 = vmatpush1.msra.mxu0 0.0
        %6946 = vmatprep.subr.mxu0 0.0
        %6947 = vmatpush1.msra.mxu0 0.0
        %6948 = vmatprep.subr.mxu0 0.0
        %6949 = vmatpush1.msra.mxu0 0.0
        %6950 = vmatprep.subr.mxu0 0.0
        %6951 = vmatpush1.msra.mxu0 0.0
        %6952 = vmatprep.subr.mxu0 0.0
        %6953 = vmatpush1.msra.mxu0 0.0
        %6954 = vmatprep.mubr.f32.mxu0 0.0
        %6955 = vmatmul.mubr.f32.gmra.mrb[0].mxu0 %v6880
        %v6956 = vpop.f32.mrb[0].mxu0
        %v6957 = vadd.f32 0.0, %v6956
        %v6958 = vpop.f32.mrb[0].mxu0
        %6959 = vmatprep.mubr.f32.mxu0 0.0
        %6960 = vmatmul.mubr.f32.gmra.mrb[0].mxu0 %v6882
        %v6961 = vpop.f32.mrb[0].mxu0
        %v6962 = vadd.f32 0.0, %v6961
        %v6963 = vpop.f32.mrb[0].mxu0
        %6964 = vmatprep.mubr.f32.mxu0 0.0
        %6965 = vmatmul.mubr.f32.gmra.mrb[0].mxu0 %v6884
        %v6966 = vpop.f32.mrb[0].mxu0
        %v6967 = vadd.f32 0.0, %v6966
        %v6968 = vpop.f32.mrb[0].mxu0
        %6969 = vmatprep.mubr.f32.mxu0 0.0
        %6970 = vmatmul.mubr.f32.gmra.mrb[0].mxu0 %v6886
        %v6971 = vpop.f32.mrb[0].mxu0
        %v6972 = vpop.f32.mrb[0].mxu0
        %6973 = vmatprep.mubr.f32.mxu0 0.0
        %6974 = vmatmul.mubr.f32.gmra.mrb[0].mxu0 %v6888
        %v6975 = vpop.f32.mrb[0].mxu0
        %v6976 = vpop.f32.mrb[0].mxu0
        %6977 = vdwg.mxu0
        %v6978 = vadd.f32 %v6857, %v6957
        %v6979 = vadd.f32 %v6858, %v6962
        %v6980 = vadd.f32 %v6859, %v6967
        %v6981 = vld [vmem:[%s5 + $0x140] sm:$0xff]
        %v6982 = vld [vmem:[%s5 + $0x148] sm:$0xff]
        %v6983 = vld [vmem:[%s5 + $0x150] sm:$0xff]
        %v6984 = vld [vmem:[%s5 + $0x158] sm:$0xff]
        %v6985 = vld [vmem:[%s5 + $0x160] sm:$0xff]
        %v6986 = vld [vmem:[%s5 + $0x168] sm:$0xff]
        %v6987 = vld [vmem:[%s5 + $0x170] sm:$0xff]
        %v6988 = vld [vmem:[%s5 + $0x178] sm:$0xff]
        %v6989 = vsel %vm403, %v6393, 0
        %6991 = vmatprep.subr.mxu0 0.0
        %6992 = vmatpush1.msra.mxu0 %v6981
        %6993 = vmatprep.subr.mxu0 0.0
        %6994 = vmatpush1.msra.mxu0 %v6982
        %6995 = vmatprep.subr.mxu0 0.0
        %6996 = vmatpush1.msra.mxu0 %v6983
        %6997 = vmatprep.subr.mxu0 0.0
        %6998 = vmatpush1.msra.mxu0 %v6984
        %6999 = vmatprep.subr.mxu0 0.0
        %7000 = vmatpush1.msra.mxu0 %v6985
        %7001 = vmatprep.subr.mxu0 0.0
        %7002 = vmatpush1.msra.mxu0 %v6986
        %7003 = vmatprep.subr.mxu0 0.0
        %7004 = vmatpush1.msra.mxu0 %v6987
        %7005 = vmatprep.subr.mxu0 0.0
        %7006 = vmatpush1.msra.mxu0 %v6988
        %7007 = vmatprep.subr.mxu0 0.0
        %7008 = vmatpush1.msra.mxu0 0.0
        %7009 = vmatprep.subr.mxu0 0.0
        %7010 = vmatpush1.msra.mxu0 0.0
        %7011 = vmatprep.subr.mxu0 0.0
        %7012 = vmatpush1.msra.mxu0 0.0
        %7013 = vmatprep.subr.mxu0 0.0
        %7014 = vmatpush1.msra.mxu0 0.0
        %7015 = vmatprep.subr.mxu0 0.0
        %7016 = vmatpush1.msra.mxu0 0.0
        %7017 = vmatprep.subr.mxu0 0.0
        %7018 = vmatpush1.msra.mxu0 0.0
        %7019 = vmatprep.subr.mxu0 0.0
        %7020 = vmatpush1.msra.mxu0 0.0
        %7021 = vmatprep.subr.mxu0 0.0
        %7022 = vmatpush1.msra.mxu0 0.0
        %7023 = vmatprep.subr.mxu0 0.0
        %7024 = vmatpush1.msra.mxu0 0.0
        %7025 = vmatprep.subr.mxu0 0.0
        %7026 = vmatpush1.msra.mxu0 0.0
        %7027 = vmatprep.subr.mxu0 0.0
        %7028 = vmatpush1.msra.mxu0 0.0
        %7029 = vmatprep.subr.mxu0 0.0
        %7030 = vmatpush1.msra.mxu0 0.0
        %7031 = vmatprep.subr.mxu0 0.0
        %7032 = vmatpush1.msra.mxu0 0.0
        %7033 = vmatprep.subr.mxu0 0.0
        %7034 = vmatpush1.msra.mxu0 0.0
        %7035 = vmatprep.subr.mxu0 0.0
        %7036 = vmatpush1.msra.mxu0 0.0
        %7037 = vmatprep.subr.mxu0 0.0
        %7038 = vmatpush1.msra.mxu0 0.0
        %7039 = vmatprep.subr.mxu0 0.0
        %7040 = vmatpush1.msra.mxu0 0.0
        %7041 = vmatprep.subr.mxu0 0.0
        %7042 = vmatpush1.msra.mxu0 0.0
        %7043 = vmatprep.subr.mxu0 0.0
        %7044 = vmatpush1.msra.mxu0 0.0
        %7045 = vmatprep.subr.mxu0 0.0
        %7046 = vmatpush1.msra.mxu0 0.0
        %7047 = vmatprep.subr.mxu0 0.0
        %7048 = vmatpush1.msra.mxu0 0.0
        %7049 = vmatprep.subr.mxu0 0.0
        %7050 = vmatpush1.msra.mxu0 0.0
        %7051 = vmatprep.subr.mxu0 0.0
        %7052 = vmatpush1.msra.mxu0 0.0
        %7053 = vmatprep.subr.mxu0 0.0
        %7054 = vmatpush1.msra.mxu0 0.0
        %7055 = vmatprep.mubr.f32.mxu0 0.0
        %7056 = vmatmul.mubr.f32.gmra.mrb[0].mxu0 %v6525
        %v7057 = vpop.f32.mrb[0].mxu0
        %v7058 = vadd.f32 0.0, %v7057
        %v7059 = vpop.f32.mrb[0].mxu0
        %7060 = vmatprep.mubr.f32.mxu0 0.0
        %7061 = vmatmul.mubr.f32.gmra.mrb[0].mxu0 %v6527
        %v7062 = vpop.f32.mrb[0].mxu0
        %v7063 = vadd.f32 0.0, %v7062
        %v7064 = vpop.f32.mrb[0].mxu0
        %7065 = vmatprep.mubr.f32.mxu0 0.0
        %7066 = vmatmul.mubr.f32.gmra.mrb[0].mxu0 %v6529
        %v7067 = vpop.f32.mrb[0].mxu0
        %v7068 = vadd.f32 0.0, %v7067
        %v7069 = vpop.f32.mrb[0].mxu0
        %7070 = vmatprep.mubr.f32.mxu0 0.0
        %7071 = vmatmul.mubr.f32.gmra.mrb[0].mxu0 %v6531
        %v7072 = vpop.f32.mrb[0].mxu0
        %v7073 = vpop.f32.mrb[0].mxu0
        %7074 = vmatprep.mubr.f32.mxu0 0.0
        %7075 = vmatmul.mubr.f32.gmra.mrb[0].mxu0 %v6989
        %v7076 = vpop.f32.mrb[0].mxu0
        %v7077 = vpop.f32.mrb[0].mxu0
        %7078 = vdwg.mxu0
        %v7079 = vadd.f32 %v6978, %v7058
        %v7080 = vadd.f32 %v6979, %v7063
        %v7081 = vadd.f32 %v6980, %v7068
        %v7082 = vld [vmem:[%s5 + $0x180] sm:$0xff]
        %v7083 = vld [vmem:[%s5 + $0x188] sm:$0xff]
        %v7084 = vld [vmem:[%s5 + $0x190] sm:$0xff]
        %v7085 = vld [vmem:[%s5 + $0x198] sm:$0xff]
        %v7086 = vld [vmem:[%s5 + $0x1a0] sm:$0xff]
        %v7087 = vld [vmem:[%s5 + $0x1a8] sm:$0xff]
        %v7088 = vld [vmem:[%s5 + $0x1b0] sm:$0xff]
        %v7089 = vld [vmem:[%s5 + $0x1b8] sm:$0xff]
        %v7090 = vrot.slane %v6389, 4
        %v7091 = vrot.slane %v6390, 4
        %v7092 = vsel %vm2550, %v7090, %v7091
        %v7093 = vrot.slane %v6391, 4
        %v7094 = vsel %vm2550, %v7091, %v7093
        %v7095 = vrot.slane %v6392, 4
        %v7096 = vsel %vm2550, %v7093, %v7095
        %v7097 = vrot.slane %v6393, 4
        %v7098 = vsel %vm2550, %v7095, %v7097
        %v7099 = vsel %vm403, %v7092, 0
        %v7101 = vsel %vm403, %v7094, 0
        %v7103 = vsel %vm403, %v7096, 0
        %v7105 = vsel %vm403, %v7098, 0
        %v7107 = vsel %vm403, %v7097, 0
        %7109 = vmatprep.subr.mxu0 0.0
        %7110 = vmatpush1.msra.mxu0 %v7082
        %7111 = vmatprep.subr.mxu0 0.0
        %7112 = vmatpush1.msra.mxu0 %v7083
        %7113 = vmatprep.subr.mxu0 0.0
        %7114 = vmatpush1.msra.mxu0 %v7084
        %7115 = vmatprep.subr.mxu0 0.0
        %7116 = vmatpush1.msra.mxu0 %v7085
        %7117 = vmatprep.subr.mxu0 0.0
        %7118 = vmatpush1.msra.mxu0 %v7086
        %7119 = vmatprep.subr.mxu0 0.0
        %7120 = vmatpush1.msra.mxu0 %v7087
        %7121 = vmatprep.subr.mxu0 0.0
        %7122 = vmatpush1.msra.mxu0 %v7088
        %7123 = vmatprep.subr.mxu0 0.0
        %7124 = vmatpush1.msra.mxu0 %v7089
        %7125 = vmatprep.subr.mxu0 0.0
        %7126 = vmatpush1.msra.mxu0 0.0
        %7127 = vmatprep.subr.mxu0 0.0
        %7128 = vmatpush1.msra.mxu0 0.0
        %7129 = vmatprep.subr.mxu0 0.0
        %7130 = vmatpush1.msra.mxu0 0.0
        %7131 = vmatprep.subr.mxu0 0.0
        %7132 = vmatpush1.msra.mxu0 0.0
        %7133 = vmatprep.subr.mxu0 0.0
        %7134 = vmatpush1.msra.mxu0 0.0
        %7135 = vmatprep.subr.mxu0 0.0
        %7136 = vmatpush1.msra.mxu0 0.0
        %7137 = vmatprep.subr.mxu0 0.0
        %7138 = vmatpush1.msra.mxu0 0.0
        %7139 = vmatprep.subr.mxu0 0.0
        %7140 = vmatpush1.msra.mxu0 0.0
        %7141 = vmatprep.subr.mxu0 0.0
        %7142 = vmatpush1.msra.mxu0 0.0
        %7143 = vmatprep.subr.mxu0 0.0
        %7144 = vmatpush1.msra.mxu0 0.0
        %7145 = vmatprep.subr.mxu0 0.0
        %7146 = vmatpush1.msra.mxu0 0.0
        %7147 = vmatprep.subr.mxu0 0.0
        %7148 = vmatpush1.msra.mxu0 0.0
        %7149 = vmatprep.subr.mxu0 0.0
        %7150 = vmatpush1.msra.mxu0 0.0
        %7151 = vmatprep.subr.mxu0 0.0
        %7152 = vmatpush1.msra.mxu0 0.0
        %7153 = vmatprep.subr.mxu0 0.0
        %7154 = vmatpush1.msra.mxu0 0.0
        %7155 = vmatprep.subr.mxu0 0.0
        %7156 = vmatpush1.msra.mxu0 0.0
        %7157 = vmatprep.subr.mxu0 0.0
        %7158 = vmatpush1.msra.mxu0 0.0
        %7159 = vmatprep.subr.mxu0 0.0
        %7160 = vmatpush1.msra.mxu0 0.0
        %7161 = vmatprep.subr.mxu0 0.0
        %7162 = vmatpush1.msra.mxu0 0.0
        %7163 = vmatprep.subr.mxu0 0.0
        %7164 = vmatpush1.msra.mxu0 0.0
        %7165 = vmatprep.subr.mxu0 0.0
        %7166 = vmatpush1.msra.mxu0 0.0
        %7167 = vmatprep.subr.mxu0 0.0
        %7168 = vmatpush1.msra.mxu0 0.0
        %7169 = vmatprep.subr.mxu0 0.0
        %7170 = vmatpush1.msra.mxu0 0.0
        %7171 = vmatprep.subr.mxu0 0.0
        %7172 = vmatpush1.msra.mxu0 0.0
        %7173 = vmatprep.mubr.f32.mxu0 0.0
        %7174 = vmatmul.mubr.f32.gmra.mrb[0].mxu0 %v7099
        %v7175 = vpop.f32.mrb[0].mxu0
        %v7176 = vadd.f32 0.0, %v7175
        %v7177 = vpop.f32.mrb[0].mxu0
        %7178 = vmatprep.mubr.f32.mxu0 0.0
        %7179 = vmatmul.mubr.f32.gmra.mrb[0].mxu0 %v7101
        %v7180 = vpop.f32.mrb[0].mxu0
        %v7181 = vadd.f32 0.0, %v7180
        %v7182 = vpop.f32.mrb[0].mxu0
        %7183 = vmatprep.mubr.f32.mxu0 0.0
        %7184 = vmatmul.mubr.f32.gmra.mrb[0].mxu0 %v7103
        %v7185 = vpop.f32.mrb[0].mxu0
        %v7186 = vadd.f32 0.0, %v7185
        %v7187 = vpop.f32.mrb[0].mxu0
        %7188 = vmatprep.mubr.f32.mxu0 0.0
        %7189 = vmatmul.mubr.f32.gmra.mrb[0].mxu0 %v7105
        %v7190 = vpop.f32.mrb[0].mxu0
        %v7191 = vpop.f32.mrb[0].mxu0
        %7192 = vmatprep.mubr.f32.mxu0 0.0
        %7193 = vmatmul.mubr.f32.gmra.mrb[0].mxu0 %v7107
        %v7194 = vpop.f32.mrb[0].mxu0
        %v7195 = vpop.f32.mrb[0].mxu0
        %7196 = vdwg.mxu0
        %v7197 = vadd.f32 %v7079, %v7176
        %v7198 = vadd.f32 %v7080, %v7181
        %v7199 = vadd.f32 %v7081, %v7186
        %v7200 = vld [vmem:[%s5 + $0x1c0] sm:$0xff]
        %v7201 = vld [vmem:[%s5 + $0x1c8] sm:$0xff]
        %v7202 = vld [vmem:[%s5 + $0x1d0] sm:$0xff]
        %v7203 = vld [vmem:[%s5 + $0x1d8] sm:$0xff]
        %v7204 = vld [vmem:[%s5 + $0x1e0] sm:$0xff]
        %v7205 = vld [vmem:[%s5 + $0x1e8] sm:$0xff]
        %v7206 = vld [vmem:[%s5 + $0x1f0] sm:$0xff]
        %v7207 = vld [vmem:[%s5 + $0x1f8] sm:$0xff]
        %v7209 = vrot.slane %v6389, 5
        %v7210 = vrot.slane %v6390, 5
        %v7211 = vsel %vm3339, %v7209, %v7210
        %v7212 = vrot.slane %v6391, 5
        %v7213 = vsel %vm3339, %v7210, %v7212
        %v7214 = vrot.slane %v6392, 5
        %v7215 = vsel %vm3339, %v7212, %v7214
        %v7216 = vrot.slane %v6393, 5
        %v7217 = vsel %vm3339, %v7214, %v7216
        %v7218 = vrot.slane %v6394, 5
        %v7219 = vsel %vm3339, %v7216, %v7218
        %v7220 = vsel %vm403, %v7211, 0
        %v7222 = vsel %vm403, %v7213, 0
        %v7224 = vsel %vm403, %v7215, 0
        %v7226 = vsel %vm403, %v7217, 0
        %v7228 = vsel %vm403, %v7219, 0
        %7230 = vmatprep.subr.mxu0 0.0
        %7231 = vmatpush1.msra.mxu0 %v7200
        %7232 = vmatprep.subr.mxu0 0.0
        %7233 = vmatpush1.msra.mxu0 %v7201
        %7234 = vmatprep.subr.mxu0 0.0
        %7235 = vmatpush1.msra.mxu0 %v7202
        %7236 = vmatprep.subr.mxu0 0.0
        %7237 = vmatpush1.msra.mxu0 %v7203
        %7238 = vmatprep.subr.mxu0 0.0
        %7239 = vmatpush1.msra.mxu0 %v7204
        %7240 = vmatprep.subr.mxu0 0.0
        %7241 = vmatpush1.msra.mxu0 %v7205
        %7242 = vmatprep.subr.mxu0 0.0
        %7243 = vmatpush1.msra.mxu0 %v7206
        %7244 = vmatprep.subr.mxu0 0.0
        %7245 = vmatpush1.msra.mxu0 %v7207
        %7246 = vmatprep.subr.mxu0 0.0
        %7247 = vmatpush1.msra.mxu0 0.0
        %7248 = vmatprep.subr.mxu0 0.0
        %7249 = vmatpush1.msra.mxu0 0.0
        %7250 = vmatprep.subr.mxu0 0.0
        %7251 = vmatpush1.msra.mxu0 0.0
        %7252 = vmatprep.subr.mxu0 0.0
        %7253 = vmatpush1.msra.mxu0 0.0
        %7254 = vmatprep.subr.mxu0 0.0
        %7255 = vmatpush1.msra.mxu0 0.0
        %7256 = vmatprep.subr.mxu0 0.0
        %7257 = vmatpush1.msra.mxu0 0.0
        %7258 = vmatprep.subr.mxu0 0.0
        %7259 = vmatpush1.msra.mxu0 0.0
        %7260 = vmatprep.subr.mxu0 0.0
        %7261 = vmatpush1.msra.mxu0 0.0
        %7262 = vmatprep.subr.mxu0 0.0
        %7263 = vmatpush1.msra.mxu0 0.0
        %7264 = vmatprep.subr.mxu0 0.0
        %7265 = vmatpush1.msra.mxu0 0.0
        %7266 = vmatprep.subr.mxu0 0.0
        %7267 = vmatpush1.msra.mxu0 0.0
        %7268 = vmatprep.subr.mxu0 0.0
        %7269 = vmatpush1.msra.mxu0 0.0
        %7270 = vmatprep.subr.mxu0 0.0
        %7271 = vmatpush1.msra.mxu0 0.0
        %7272 = vmatprep.subr.mxu0 0.0
        %7273 = vmatpush1.msra.mxu0 0.0
        %7274 = vmatprep.subr.mxu0 0.0
        %7275 = vmatpush1.msra.mxu0 0.0
        %7276 = vmatprep.subr.mxu0 0.0
        %7277 = vmatpush1.msra.mxu0 0.0
        %7278 = vmatprep.subr.mxu0 0.0
        %7279 = vmatpush1.msra.mxu0 0.0
        %7280 = vmatprep.subr.mxu0 0.0
        %7281 = vmatpush1.msra.mxu0 0.0
        %7282 = vmatprep.subr.mxu0 0.0
        %7283 = vmatpush1.msra.mxu0 0.0
        %7284 = vmatprep.subr.mxu0 0.0
        %7285 = vmatpush1.msra.mxu0 0.0
        %7286 = vmatprep.subr.mxu0 0.0
        %7287 = vmatpush1.msra.mxu0 0.0
        %7288 = vmatprep.subr.mxu0 0.0
        %7289 = vmatpush1.msra.mxu0 0.0
        %7290 = vmatprep.subr.mxu0 0.0
        %7291 = vmatpush1.msra.mxu0 0.0
        %7292 = vmatprep.subr.mxu0 0.0
        %7293 = vmatpush1.msra.mxu0 0.0
        %7294 = vmatprep.mubr.f32.mxu0 0.0
        %7295 = vmatmul.mubr.f32.gmra.mrb[0].mxu0 %v7220
        %v7296 = vpop.f32.mrb[0].mxu0
        %v7297 = vadd.f32 0.0, %v7296
        %v7298 = vpop.f32.mrb[0].mxu0
        %7299 = vmatprep.mubr.f32.mxu0 0.0
        %7300 = vmatmul.mubr.f32.gmra.mrb[0].mxu0 %v7222
        %v7301 = vpop.f32.mrb[0].mxu0
        %v7302 = vadd.f32 0.0, %v7301
        %v7303 = vpop.f32.mrb[0].mxu0
        %7304 = vmatprep.mubr.f32.mxu0 0.0
        %7305 = vmatmul.mubr.f32.gmra.mrb[0].mxu0 %v7224
        %v7306 = vpop.f32.mrb[0].mxu0
        %v7307 = vadd.f32 0.0, %v7306
        %v7308 = vpop.f32.mrb[0].mxu0
        %7309 = vmatprep.mubr.f32.mxu0 0.0
        %7310 = vmatmul.mubr.f32.gmra.mrb[0].mxu0 %v7226
        %v7311 = vpop.f32.mrb[0].mxu0
        %v7312 = vpop.f32.mrb[0].mxu0
        %7313 = vmatprep.mubr.f32.mxu0 0.0
        %7314 = vmatmul.mubr.f32.gmra.mrb[0].mxu0 %v7228
        %v7315 = vpop.f32.mrb[0].mxu0
        %v7316 = vpop.f32.mrb[0].mxu0
        %7317 = vdwg.mxu0
        %v7318 = vadd.f32 %v7197, %v7297
        %v7319 = vadd.f32 %v7198, %v7302
        %v7320 = vadd.f32 %v7199, %v7307
        %v7321 = vld [vmem:[%s5 + $0x200] sm:$0xff]
        %v7322 = vld [vmem:[%s5 + $0x208] sm:$0xff]
        %v7323 = vld [vmem:[%s5 + $0x210] sm:$0xff]
        %v7324 = vld [vmem:[%s5 + $0x218] sm:$0xff]
        %v7325 = vld [vmem:[%s5 + $0x220] sm:$0xff]
        %v7326 = vld [vmem:[%s5 + $0x228] sm:$0xff]
        %v7327 = vld [vmem:[%s5 + $0x230] sm:$0xff]
        %v7328 = vld [vmem:[%s5 + $0x238] sm:$0xff]
        %v7329 = vrot.slane %v6394, 6
        %v7330 = vsel %vm3811, %v6757, %v7329
        %v7331 = vsel %vm403, %v7330, 0
        %7333 = vmatprep.subr.mxu0 0.0
        %7334 = vmatpush1.msra.mxu0 %v7321
        %7335 = vmatprep.subr.mxu0 0.0
        %7336 = vmatpush1.msra.mxu0 %v7322
        %7337 = vmatprep.subr.mxu0 0.0
        %7338 = vmatpush1.msra.mxu0 %v7323
        %7339 = vmatprep.subr.mxu0 0.0
        %7340 = vmatpush1.msra.mxu0 %v7324
        %7341 = vmatprep.subr.mxu0 0.0
        %7342 = vmatpush1.msra.mxu0 %v7325
        %7343 = vmatprep.subr.mxu0 0.0
        %7344 = vmatpush1.msra.mxu0 %v7326
        %7345 = vmatprep.subr.mxu0 0.0
        %7346 = vmatpush1.msra.mxu0 %v7327
        %7347 = vmatprep.subr.mxu0 0.0
        %7348 = vmatpush1.msra.mxu0 %v7328
        %7349 = vmatprep.subr.mxu0 0.0
        %7350 = vmatpush1.msra.mxu0 0.0
        %7351 = vmatprep.subr.mxu0 0.0
        %7352 = vmatpush1.msra.mxu0 0.0
        %7353 = vmatprep.subr.mxu0 0.0
        %7354 = vmatpush1.msra.mxu0 0.0
        %7355 = vmatprep.subr.mxu0 0.0
        %7356 = vmatpush1.msra.mxu0 0.0
        %7357 = vmatprep.subr.mxu0 0.0
        %7358 = vmatpush1.msra.mxu0 0.0
        %7359 = vmatprep.subr.mxu0 0.0
        %7360 = vmatpush1.msra.mxu0 0.0
        %7361 = vmatprep.subr.mxu0 0.0
        %7362 = vmatpush1.msra.mxu0 0.0
        %7363 = vmatprep.subr.mxu0 0.0
        %7364 = vmatpush1.msra.mxu0 0.0
        %7365 = vmatprep.subr.mxu0 0.0
        %7366 = vmatpush1.msra.mxu0 0.0
        %7367 = vmatprep.subr.mxu0 0.0
        %7368 = vmatpush1.msra.mxu0 0.0
        %7369 = vmatprep.subr.mxu0 0.0
        %7370 = vmatpush1.msra.mxu0 0.0
        %7371 = vmatprep.subr.mxu0 0.0
        %7372 = vmatpush1.msra.mxu0 0.0
        %7373 = vmatprep.subr.mxu0 0.0
        %7374 = vmatpush1.msra.mxu0 0.0
        %7375 = vmatprep.subr.mxu0 0.0
        %7376 = vmatpush1.msra.mxu0 0.0
        %7377 = vmatprep.subr.mxu0 0.0
        %7378 = vmatpush1.msra.mxu0 0.0
        %7379 = vmatprep.subr.mxu0 0.0
        %7380 = vmatpush1.msra.mxu0 0.0
        %7381 = vmatprep.subr.mxu0 0.0
        %7382 = vmatpush1.msra.mxu0 0.0
        %7383 = vmatprep.subr.mxu0 0.0
        %7384 = vmatpush1.msra.mxu0 0.0
        %7385 = vmatprep.subr.mxu0 0.0
        %7386 = vmatpush1.msra.mxu0 0.0
        %7387 = vmatprep.subr.mxu0 0.0
        %7388 = vmatpush1.msra.mxu0 0.0
        %7389 = vmatprep.subr.mxu0 0.0
        %7390 = vmatpush1.msra.mxu0 0.0
        %7391 = vmatprep.subr.mxu0 0.0
        %7392 = vmatpush1.msra.mxu0 0.0
        %7393 = vmatprep.subr.mxu0 0.0
        %7394 = vmatpush1.msra.mxu0 0.0
        %7395 = vmatprep.subr.mxu0 0.0
        %7396 = vmatpush1.msra.mxu0 0.0
        %7397 = vmatprep.mubr.f32.mxu0 0.0
        %7398 = vmatmul.mubr.f32.gmra.mrb[0].mxu0 %v6761
        %v7399 = vpop.f32.mrb[0].mxu0
        %v7400 = vadd.f32 0.0, %v7399
        %v7401 = vpop.f32.mrb[0].mxu0
        %7402 = vmatprep.mubr.f32.mxu0 0.0
        %7403 = vmatmul.mubr.f32.gmra.mrb[0].mxu0 %v6763
        %v7404 = vpop.f32.mrb[0].mxu0
        %v7405 = vadd.f32 0.0, %v7404
        %v7406 = vpop.f32.mrb[0].mxu0
        %7407 = vmatprep.mubr.f32.mxu0 0.0
        %7408 = vmatmul.mubr.f32.gmra.mrb[0].mxu0 %v6765
        %v7409 = vpop.f32.mrb[0].mxu0
        %v7410 = vadd.f32 0.0, %v7409
        %v7411 = vpop.f32.mrb[0].mxu0
        %7412 = vmatprep.mubr.f32.mxu0 0.0
        %7413 = vmatmul.mubr.f32.gmra.mrb[0].mxu0 %v6767
        %v7414 = vpop.f32.mrb[0].mxu0
        %v7415 = vpop.f32.mrb[0].mxu0
        %7416 = vmatprep.mubr.f32.mxu0 0.0
        %7417 = vmatmul.mubr.f32.gmra.mrb[0].mxu0 %v7331
        %v7418 = vpop.f32.mrb[0].mxu0
        %v7419 = vpop.f32.mrb[0].mxu0
        %7420 = vdwg.mxu0
        %v7421 = vadd.f32 %v7318, %v7400
        %v7422 = vadd.f32 %v7319, %v7405
        %v7423 = vadd.f32 %v7320, %v7410
        %v7424 = vld [vmem:[%s6] sm:$0x1]
        %v7426 = vlaneseq
        %v7427 = vshrl.u32 %v7426, 7
        %v7428 = vsub.s32 0, %v7427
        %v7429 = vrot.slane %v7424, %v7428
        %v7431 = vadd.f32 %v7421, %v7429
        %v7432 = vadd.f32 %v7422, %v7429
        %v7433 = vadd.f32 %v7423, %v7429
        %vm7434 = vcmask 257024
        %7435 = vst.msk [vmem:[#allocation4 + $0x7] sm:$0xf] %vm7434, %v7431
        %vm7436 = vcmask 261126
        %7437 = vst.msk [vmem:[#allocation4 + $0x7] sm:$0xc0] %vm7436, %v7431
        %7438 = vst.msk [vmem:[#allocation4 + $0xf] sm:$0x3] %vm419, %v7432
        %vm7439 = vcmask 261124
        %7440 = vst.msk [vmem:[#allocation4 + $0xf] sm:$0xf0] %vm7439, %v7432
        %vm7441 = vcmask 259074
        %7442 = vst.msk [vmem:[#allocation4 + $0x17] sm:$0x3c] %vm7441, %v7433
        %v7443 = vld [vmem:[#allocation4] sm:$0xff]
        %v7444 = vld [vmem:[#allocation4 + $0x8] sm:$0xff]
        %v7445 = vld [vmem:[#allocation4 + $0x10] sm:$0xff]
        %v7446 = vld [vmem:[#allocation4 + $0x18] sm:$0xff]
        %v7447 = vld [vmem:[#allocation4 + $0x20] sm:$0xff]
        %v7448 = vld [vmem:[#allocation4 + $0x28] sm:$0xff]
        %v7449 = vld [vmem:[#allocation4 + $0x30] sm:$0x3]
        %v7450 = vld [vmem:[%s7] sm:$0xff]
        %v7451 = vld [vmem:[%s7 + $0x8] sm:$0xff]
        %v7452 = vld [vmem:[%s7 + $0x10] sm:$0xff]
        %v7453 = vld [vmem:[%s7 + $0x18] sm:$0xff]
        %v7454 = vld [vmem:[%s7 + $0x20] sm:$0xff]
        %v7455 = vld [vmem:[%s7 + $0x28] sm:$0xff]
        %v7456 = vld [vmem:[%s7 + $0x30] sm:$0xff]
        %v7457 = vld [vmem:[%s7 + $0x38] sm:$0xff]
        %v7463 = vrot.slane %v7443, 1
        %v7464 = vrot.slane %v7444, 1
        %v7465 = vsel %vm510, %v7463, %v7464
        %v7466 = vrot.slane %v7445, 1
        %v7467 = vsel %vm510, %v7464, %v7466
        %v7468 = vrot.slane %v7446, 1
        %v7469 = vsel %vm510, %v7466, %v7468
        %v7470 = vrot.slane %v7447, 1
        %v7471 = vsel %vm510, %v7468, %v7470
        %v7472 = vsel %vm412, %v7465, 0
        %v7474 = vsel %vm412, %v7467, 0
        %v7476 = vsel %vm412, %v7469, 0
        %v7478 = vsel %vm412, %v7471, 0
        %v7480 = vsel %vm412, %v7470, 0
        %7482 = vmatprep.subr.mxu0 0.0
        %7483 = vmatpush1.msra.mxu0 %v7454
        %7484 = vmatprep.subr.mxu0 0.0
        %7485 = vmatpush1.msra.mxu0 %v7455
        %7486 = vmatprep.subr.mxu0 0.0
        %7487 = vmatpush1.msra.mxu0 %v7456
        %7488 = vmatprep.subr.mxu0 0.0
        %7489 = vmatpush1.msra.mxu0 %v7457
        %7490 = vmatprep.subr.mxu0 0.0
        %7491 = vmatpush1.msra.mxu0 0.0
        %7492 = vmatprep.subr.mxu0 0.0
        %7493 = vmatpush1.msra.mxu0 0.0
        %7494 = vmatprep.subr.mxu0 0.0
        %7495 = vmatpush1.msra.mxu0 0.0
        %7496 = vmatprep.subr.mxu0 0.0
        %7497 = vmatpush1.msra.mxu0 0.0
        %7498 = vmatprep.subr.mxu0 0.0
        %7499 = vmatpush1.msra.mxu0 0.0
        %7500 = vmatprep.subr.mxu0 0.0
        %7501 = vmatpush1.msra.mxu0 0.0
        %7502 = vmatprep.subr.mxu0 0.0
        %7503 = vmatpush1.msra.mxu0 0.0
        %7504 = vmatprep.subr.mxu0 0.0
        %7505 = vmatpush1.msra.mxu0 0.0
        %7506 = vmatprep.subr.mxu0 0.0
        %7507 = vmatpush1.msra.mxu0 0.0
        %7508 = vmatprep.subr.mxu0 0.0
        %7509 = vmatpush1.msra.mxu0 0.0
        %7510 = vmatprep.subr.mxu0 0.0
        %7511 = vmatpush1.msra.mxu0 0.0
        %7512 = vmatprep.subr.mxu0 0.0
        %7513 = vmatpush1.msra.mxu0 0.0
        %7514 = vmatprep.subr.mxu0 0.0
        %7515 = vmatpush1.msra.mxu0 0.0
        %7516 = vmatprep.subr.mxu0 0.0
        %7517 = vmatpush1.msra.mxu0 0.0
        %7518 = vmatprep.subr.mxu0 0.0
        %7519 = vmatpush1.msra.mxu0 0.0
        %7520 = vmatprep.subr.mxu0 0.0
        %7521 = vmatpush1.msra.mxu0 0.0
        %7522 = vmatprep.subr.mxu0 0.0
        %7523 = vmatpush1.msra.mxu0 0.0
        %7524 = vmatprep.subr.mxu0 0.0
        %7525 = vmatpush1.msra.mxu0 0.0
        %7526 = vmatprep.subr.mxu0 0.0
        %7527 = vmatpush1.msra.mxu0 0.0
        %7528 = vmatprep.subr.mxu0 0.0
        %7529 = vmatpush1.msra.mxu0 0.0
        %7530 = vmatprep.subr.mxu0 0.0
        %7531 = vmatpush1.msra.mxu0 0.0
        %7532 = vmatprep.subr.mxu0 0.0
        %7533 = vmatpush1.msra.mxu0 0.0
        %7534 = vmatprep.subr.mxu0 0.0
        %7535 = vmatpush1.msra.mxu0 0.0
        %7536 = vmatprep.subr.mxu0 0.0
        %7537 = vmatpush1.msra.mxu0 0.0
        %7538 = vmatprep.subr.mxu0 0.0
        %7539 = vmatpush1.msra.mxu0 0.0
        %7540 = vmatprep.subr.mxu0 0.0
        %7541 = vmatpush1.msra.mxu0 0.0
        %7542 = vmatprep.subr.mxu0 0.0
        %7543 = vmatpush1.msra.mxu0 0.0
        %7544 = vmatprep.subr.mxu0 0.0
        %7545 = vmatpush1.msra.mxu0 0.0
        %7546 = vmatprep.mubr.f32.mxu0 0.0
        %7547 = vmatmul.mubr.f32.gmra.mrb[0].mxu0 %v7472
        %v7548 = vpop.f32.mrb[0].mxu0
        %v7549 = vadd.f32 0.0, %v7548
        %v7550 = vpop.f32.mrb[0].mxu0
        %7551 = vmatprep.mubr.f32.mxu0 0.0
        %7552 = vmatmul.mubr.f32.gmra.mrb[0].mxu0 %v7474
        %v7553 = vpop.f32.mrb[0].mxu0
        %v7554 = vadd.f32 0.0, %v7553
        %v7555 = vpop.f32.mrb[0].mxu0
        %7556 = vmatprep.mubr.f32.mxu0 0.0
        %7557 = vmatmul.mubr.f32.gmra.mrb[0].mxu0 %v7476
        %v7558 = vpop.f32.mrb[0].mxu0
        %v7559 = vadd.f32 0.0, %v7558
        %v7560 = vpop.f32.mrb[0].mxu0
        %7561 = vmatprep.mubr.f32.mxu0 0.0
        %7562 = vmatmul.mubr.f32.gmra.mrb[0].mxu0 %v7478
        %v7563 = vpop.f32.mrb[0].mxu0
        %v7564 = vadd.f32 0.0, %v7563
        %v7565 = vpop.f32.mrb[0].mxu0
        %7566 = vmatprep.mubr.f32.mxu0 0.0
        %7567 = vmatmul.mubr.f32.gmra.mrb[0].mxu0 %v7480
        %v7568 = vpop.f32.mrb[0].mxu0
        %v7569 = vadd.f32 0.0, %v7568
        %v7570 = vpop.f32.mrb[0].mxu0
        %7571 = vdwg.mxu0
        %v7572 = vsel %vm412, %v7443, 0
        %v7574 = vsel %vm412, %v7444, 0
        %v7576 = vsel %vm412, %v7445, 0
        %v7578 = vsel %vm412, %v7446, 0
        %v7580 = vsel %vm412, %v7447, 0
        %7582 = vmatprep.subr.mxu0 0.0
        %7583 = vmatpush1.msra.mxu0 %v7450
        %7584 = vmatprep.subr.mxu0 0.0
        %7585 = vmatpush1.msra.mxu0 %v7451
        %7586 = vmatprep.subr.mxu0 0.0
        %7587 = vmatpush1.msra.mxu0 %v7452
        %7588 = vmatprep.subr.mxu0 0.0
        %7589 = vmatpush1.msra.mxu0 %v7453
        %7590 = vmatprep.subr.mxu0 0.0
        %7591 = vmatpush1.msra.mxu0 0.0
        %7592 = vmatprep.subr.mxu0 0.0
        %7593 = vmatpush1.msra.mxu0 0.0
        %7594 = vmatprep.subr.mxu0 0.0
        %7595 = vmatpush1.msra.mxu0 0.0
        %7596 = vmatprep.subr.mxu0 0.0
        %7597 = vmatpush1.msra.mxu0 0.0
        %7598 = vmatprep.subr.mxu0 0.0
        %7599 = vmatpush1.msra.mxu0 0.0
        %7600 = vmatprep.subr.mxu0 0.0
        %7601 = vmatpush1.msra.mxu0 0.0
        %7602 = vmatprep.subr.mxu0 0.0
        %7603 = vmatpush1.msra.mxu0 0.0
        %7604 = vmatprep.subr.mxu0 0.0
        %7605 = vmatpush1.msra.mxu0 0.0
        %7606 = vmatprep.subr.mxu0 0.0
        %7607 = vmatpush1.msra.mxu0 0.0
        %7608 = vmatprep.subr.mxu0 0.0
        %7609 = vmatpush1.msra.mxu0 0.0
        %7610 = vmatprep.subr.mxu0 0.0
        %7611 = vmatpush1.msra.mxu0 0.0
        %7612 = vmatprep.subr.mxu0 0.0
        %7613 = vmatpush1.msra.mxu0 0.0
        %7614 = vmatprep.subr.mxu0 0.0
        %7615 = vmatpush1.msra.mxu0 0.0
        %7616 = vmatprep.subr.mxu0 0.0
        %7617 = vmatpush1.msra.mxu0 0.0
        %7618 = vmatprep.subr.mxu0 0.0
        %7619 = vmatpush1.msra.mxu0 0.0
        %7620 = vmatprep.subr.mxu0 0.0
        %7621 = vmatpush1.msra.mxu0 0.0
        %7622 = vmatprep.subr.mxu0 0.0
        %7623 = vmatpush1.msra.mxu0 0.0
        %7624 = vmatprep.subr.mxu0 0.0
        %7625 = vmatpush1.msra.mxu0 0.0
        %7626 = vmatprep.subr.mxu0 0.0
        %7627 = vmatpush1.msra.mxu0 0.0
        %7628 = vmatprep.subr.mxu0 0.0
        %7629 = vmatpush1.msra.mxu0 0.0
        %7630 = vmatprep.subr.mxu0 0.0
        %7631 = vmatpush1.msra.mxu0 0.0
        %7632 = vmatprep.subr.mxu0 0.0
        %7633 = vmatpush1.msra.mxu0 0.0
        %7634 = vmatprep.subr.mxu0 0.0
        %7635 = vmatpush1.msra.mxu0 0.0
        %7636 = vmatprep.subr.mxu0 0.0
        %7637 = vmatpush1.msra.mxu0 0.0
        %7638 = vmatprep.subr.mxu0 0.0
        %7639 = vmatpush1.msra.mxu0 0.0
        %7640 = vmatprep.subr.mxu0 0.0
        %7641 = vmatpush1.msra.mxu0 0.0
        %7642 = vmatprep.subr.mxu0 0.0
        %7643 = vmatpush1.msra.mxu0 0.0
        %7644 = vmatprep.subr.mxu0 0.0
        %7645 = vmatpush1.msra.mxu0 0.0
        %7646 = vmatprep.mubr.f32.mxu0 0.0
        %7647 = vmatmul.mubr.f32.gmra.mrb[0].mxu0 %v7572
        %v7648 = vpop.f32.mrb[0].mxu0
        %v7649 = vadd.f32 %v7549, %v7648
        %v7650 = vpop.f32.mrb[0].mxu0
        %7651 = vmatprep.mubr.f32.mxu0 0.0
        %7652 = vmatmul.mubr.f32.gmra.mrb[0].mxu0 %v7574
        %v7653 = vpop.f32.mrb[0].mxu0
        %v7654 = vadd.f32 %v7554, %v7653
        %v7655 = vpop.f32.mrb[0].mxu0
        %7656 = vmatprep.mubr.f32.mxu0 0.0
        %7657 = vmatmul.mubr.f32.gmra.mrb[0].mxu0 %v7576
        %v7658 = vpop.f32.mrb[0].mxu0
        %v7659 = vadd.f32 %v7559, %v7658
        %v7660 = vpop.f32.mrb[0].mxu0
        %7661 = vmatprep.mubr.f32.mxu0 0.0
        %7662 = vmatmul.mubr.f32.gmra.mrb[0].mxu0 %v7578
        %v7663 = vpop.f32.mrb[0].mxu0
        %v7664 = vadd.f32 %v7564, %v7663
        %v7665 = vpop.f32.mrb[0].mxu0
        %7666 = vmatprep.mubr.f32.mxu0 0.0
        %7667 = vmatmul.mubr.f32.gmra.mrb[0].mxu0 %v7580
        %v7668 = vpop.f32.mrb[0].mxu0
        %v7669 = vadd.f32 %v7569, %v7668
        %v7670 = vpop.f32.mrb[0].mxu0
        %7671 = vdwg.mxu0
        %v7672 = vld [vmem:[%s7 + $0x40] sm:$0xff]
        %v7673 = vld [vmem:[%s7 + $0x48] sm:$0xff]
        %v7674 = vld [vmem:[%s7 + $0x50] sm:$0xff]
        %v7675 = vld [vmem:[%s7 + $0x58] sm:$0xff]
        %v7676 = vrot.slane %v7443, 2
        %v7677 = vrot.slane %v7444, 2
        %v7678 = vsel %vm1292, %v7676, %v7677
        %v7679 = vrot.slane %v7445, 2
        %v7680 = vsel %vm1292, %v7677, %v7679
        %v7681 = vrot.slane %v7446, 2
        %v7682 = vsel %vm1292, %v7679, %v7681
        %v7683 = vrot.slane %v7447, 2
        %v7684 = vsel %vm1292, %v7681, %v7683
        %v7685 = vsel %vm412, %v7678, 0
        %v7687 = vsel %vm412, %v7680, 0
        %v7689 = vsel %vm412, %v7682, 0
        %v7691 = vsel %vm412, %v7684, 0
        %v7693 = vsel %vm412, %v7683, 0
        %7695 = vmatprep.subr.mxu0 0.0
        %7696 = vmatpush1.msra.mxu0 %v7672
        %7697 = vmatprep.subr.mxu0 0.0
        %7698 = vmatpush1.msra.mxu0 %v7673
        %7699 = vmatprep.subr.mxu0 0.0
        %7700 = vmatpush1.msra.mxu0 %v7674
        %7701 = vmatprep.subr.mxu0 0.0
        %7702 = vmatpush1.msra.mxu0 %v7675
        %7703 = vmatprep.subr.mxu0 0.0
        %7704 = vmatpush1.msra.mxu0 0.0
        %7705 = vmatprep.subr.mxu0 0.0
        %7706 = vmatpush1.msra.mxu0 0.0
        %7707 = vmatprep.subr.mxu0 0.0
        %7708 = vmatpush1.msra.mxu0 0.0
        %7709 = vmatprep.subr.mxu0 0.0
        %7710 = vmatpush1.msra.mxu0 0.0
        %7711 = vmatprep.subr.mxu0 0.0
        %7712 = vmatpush1.msra.mxu0 0.0
        %7713 = vmatprep.subr.mxu0 0.0
        %7714 = vmatpush1.msra.mxu0 0.0
        %7715 = vmatprep.subr.mxu0 0.0
        %7716 = vmatpush1.msra.mxu0 0.0
        %7717 = vmatprep.subr.mxu0 0.0
        %7718 = vmatpush1.msra.mxu0 0.0
        %7719 = vmatprep.subr.mxu0 0.0
        %7720 = vmatpush1.msra.mxu0 0.0
        %7721 = vmatprep.subr.mxu0 0.0
        %7722 = vmatpush1.msra.mxu0 0.0
        %7723 = vmatprep.subr.mxu0 0.0
        %7724 = vmatpush1.msra.mxu0 0.0
        %7725 = vmatprep.subr.mxu0 0.0
        %7726 = vmatpush1.msra.mxu0 0.0
        %7727 = vmatprep.subr.mxu0 0.0
        %7728 = vmatpush1.msra.mxu0 0.0
        %7729 = vmatprep.subr.mxu0 0.0
        %7730 = vmatpush1.msra.mxu0 0.0
        %7731 = vmatprep.subr.mxu0 0.0
        %7732 = vmatpush1.msra.mxu0 0.0
        %7733 = vmatprep.subr.mxu0 0.0
        %7734 = vmatpush1.msra.mxu0 0.0
        %7735 = vmatprep.subr.mxu0 0.0
        %7736 = vmatpush1.msra.mxu0 0.0
        %7737 = vmatprep.subr.mxu0 0.0
        %7738 = vmatpush1.msra.mxu0 0.0
        %7739 = vmatprep.subr.mxu0 0.0
        %7740 = vmatpush1.msra.mxu0 0.0
        %7741 = vmatprep.subr.mxu0 0.0
        %7742 = vmatpush1.msra.mxu0 0.0
        %7743 = vmatprep.subr.mxu0 0.0
        %7744 = vmatpush1.msra.mxu0 0.0
        %7745 = vmatprep.subr.mxu0 0.0
        %7746 = vmatpush1.msra.mxu0 0.0
        %7747 = vmatprep.subr.mxu0 0.0
        %7748 = vmatpush1.msra.mxu0 0.0
        %7749 = vmatprep.subr.mxu0 0.0
        %7750 = vmatpush1.msra.mxu0 0.0
        %7751 = vmatprep.subr.mxu0 0.0
        %7752 = vmatpush1.msra.mxu0 0.0
        %7753 = vmatprep.subr.mxu0 0.0
        %7754 = vmatpush1.msra.mxu0 0.0
        %7755 = vmatprep.subr.mxu0 0.0
        %7756 = vmatpush1.msra.mxu0 0.0
        %7757 = vmatprep.subr.mxu0 0.0
        %7758 = vmatpush1.msra.mxu0 0.0
        %7759 = vmatprep.mubr.f32.mxu0 0.0
        %7760 = vmatmul.mubr.f32.gmra.mrb[0].mxu0 %v7685
        %v7761 = vpop.f32.mrb[0].mxu0
        %v7762 = vadd.f32 0.0, %v7761
        %v7763 = vpop.f32.mrb[0].mxu0
        %7764 = vmatprep.mubr.f32.mxu0 0.0
        %7765 = vmatmul.mubr.f32.gmra.mrb[0].mxu0 %v7687
        %v7766 = vpop.f32.mrb[0].mxu0
        %v7767 = vadd.f32 0.0, %v7766
        %v7768 = vpop.f32.mrb[0].mxu0
        %7769 = vmatprep.mubr.f32.mxu0 0.0
        %7770 = vmatmul.mubr.f32.gmra.mrb[0].mxu0 %v7689
        %v7771 = vpop.f32.mrb[0].mxu0
        %v7772 = vadd.f32 0.0, %v7771
        %v7773 = vpop.f32.mrb[0].mxu0
        %7774 = vmatprep.mubr.f32.mxu0 0.0
        %7775 = vmatmul.mubr.f32.gmra.mrb[0].mxu0 %v7691
        %v7776 = vpop.f32.mrb[0].mxu0
        %v7777 = vadd.f32 0.0, %v7776
        %v7778 = vpop.f32.mrb[0].mxu0
        %7779 = vmatprep.mubr.f32.mxu0 0.0
        %7780 = vmatmul.mubr.f32.gmra.mrb[0].mxu0 %v7693
        %v7781 = vpop.f32.mrb[0].mxu0
        %v7782 = vadd.f32 0.0, %v7781
        %v7783 = vpop.f32.mrb[0].mxu0
        %7784 = vdwg.mxu0
        %v7785 = vadd.f32 %v7649, %v7762
        %v7786 = vadd.f32 %v7654, %v7767
        %v7787 = vadd.f32 %v7659, %v7772
        %v7788 = vadd.f32 %v7664, %v7777
        %v7789 = vadd.f32 %v7669, %v7782
        %v7790 = vld [vmem:[%s7 + $0x60] sm:$0xff]
        %v7791 = vld [vmem:[%s7 + $0x68] sm:$0xff]
        %v7792 = vld [vmem:[%s7 + $0x70] sm:$0xff]
        %v7793 = vld [vmem:[%s7 + $0x78] sm:$0xff]
        %v7795 = vrot.slane %v7443, 6
        %v7796 = vrot.slane %v7444, 6
        %v7797 = vsel %vm3811, %v7795, %v7796
        %v7798 = vrot.slane %v7445, 6
        %v7799 = vsel %vm3811, %v7796, %v7798
        %v7800 = vrot.slane %v7446, 6
        %v7801 = vsel %vm3811, %v7798, %v7800
        %v7802 = vrot.slane %v7447, 6
        %v7803 = vsel %vm3811, %v7800, %v7802
        %v7804 = vrot.slane %v7448, 6
        %v7805 = vsel %vm3811, %v7802, %v7804
        %v7806 = vsel %vm412, %v7797, 0
        %v7808 = vsel %vm412, %v7799, 0
        %v7810 = vsel %vm412, %v7801, 0
        %v7812 = vsel %vm412, %v7803, 0
        %v7814 = vsel %vm412, %v7805, 0
        %7816 = vmatprep.subr.mxu0 0.0
        %7817 = vmatpush1.msra.mxu0 %v7790
        %7818 = vmatprep.subr.mxu0 0.0
        %7819 = vmatpush1.msra.mxu0 %v7791
        %7820 = vmatprep.subr.mxu0 0.0
        %7821 = vmatpush1.msra.mxu0 %v7792
        %7822 = vmatprep.subr.mxu0 0.0
        %7823 = vmatpush1.msra.mxu0 %v7793
        %7824 = vmatprep.subr.mxu0 0.0
        %7825 = vmatpush1.msra.mxu0 0.0
        %7826 = vmatprep.subr.mxu0 0.0
        %7827 = vmatpush1.msra.mxu0 0.0
        %7828 = vmatprep.subr.mxu0 0.0
        %7829 = vmatpush1.msra.mxu0 0.0
        %7830 = vmatprep.subr.mxu0 0.0
        %7831 = vmatpush1.msra.mxu0 0.0
        %7832 = vmatprep.subr.mxu0 0.0
        %7833 = vmatpush1.msra.mxu0 0.0
        %7834 = vmatprep.subr.mxu0 0.0
        %7835 = vmatpush1.msra.mxu0 0.0
        %7836 = vmatprep.subr.mxu0 0.0
        %7837 = vmatpush1.msra.mxu0 0.0
        %7838 = vmatprep.subr.mxu0 0.0
        %7839 = vmatpush1.msra.mxu0 0.0
        %7840 = vmatprep.subr.mxu0 0.0
        %7841 = vmatpush1.msra.mxu0 0.0
        %7842 = vmatprep.subr.mxu0 0.0
        %7843 = vmatpush1.msra.mxu0 0.0
        %7844 = vmatprep.subr.mxu0 0.0
        %7845 = vmatpush1.msra.mxu0 0.0
        %7846 = vmatprep.subr.mxu0 0.0
        %7847 = vmatpush1.msra.mxu0 0.0
        %7848 = vmatprep.subr.mxu0 0.0
        %7849 = vmatpush1.msra.mxu0 0.0
        %7850 = vmatprep.subr.mxu0 0.0
        %7851 = vmatpush1.msra.mxu0 0.0
        %7852 = vmatprep.subr.mxu0 0.0
        %7853 = vmatpush1.msra.mxu0 0.0
        %7854 = vmatprep.subr.mxu0 0.0
        %7855 = vmatpush1.msra.mxu0 0.0
        %7856 = vmatprep.subr.mxu0 0.0
        %7857 = vmatpush1.msra.mxu0 0.0
        %7858 = vmatprep.subr.mxu0 0.0
        %7859 = vmatpush1.msra.mxu0 0.0
        %7860 = vmatprep.subr.mxu0 0.0
        %7861 = vmatpush1.msra.mxu0 0.0
        %7862 = vmatprep.subr.mxu0 0.0
        %7863 = vmatpush1.msra.mxu0 0.0
        %7864 = vmatprep.subr.mxu0 0.0
        %7865 = vmatpush1.msra.mxu0 0.0
        %7866 = vmatprep.subr.mxu0 0.0
        %7867 = vmatpush1.msra.mxu0 0.0
        %7868 = vmatprep.subr.mxu0 0.0
        %7869 = vmatpush1.msra.mxu0 0.0
        %7870 = vmatprep.subr.mxu0 0.0
        %7871 = vmatpush1.msra.mxu0 0.0
        %7872 = vmatprep.subr.mxu0 0.0
        %7873 = vmatpush1.msra.mxu0 0.0
        %7874 = vmatprep.subr.mxu0 0.0
        %7875 = vmatpush1.msra.mxu0 0.0
        %7876 = vmatprep.subr.mxu0 0.0
        %7877 = vmatpush1.msra.mxu0 0.0
        %7878 = vmatprep.subr.mxu0 0.0
        %7879 = vmatpush1.msra.mxu0 0.0
        %7880 = vmatprep.mubr.f32.mxu0 0.0
        %7881 = vmatmul.mubr.f32.gmra.mrb[0].mxu0 %v7806
        %v7882 = vpop.f32.mrb[0].mxu0
        %v7883 = vadd.f32 0.0, %v7882
        %v7884 = vpop.f32.mrb[0].mxu0
        %7885 = vmatprep.mubr.f32.mxu0 0.0
        %7886 = vmatmul.mubr.f32.gmra.mrb[0].mxu0 %v7808
        %v7887 = vpop.f32.mrb[0].mxu0
        %v7888 = vadd.f32 0.0, %v7887
        %v7889 = vpop.f32.mrb[0].mxu0
        %7890 = vmatprep.mubr.f32.mxu0 0.0
        %7891 = vmatmul.mubr.f32.gmra.mrb[0].mxu0 %v7810
        %v7892 = vpop.f32.mrb[0].mxu0
        %v7893 = vadd.f32 0.0, %v7892
        %v7894 = vpop.f32.mrb[0].mxu0
        %7895 = vmatprep.mubr.f32.mxu0 0.0
        %7896 = vmatmul.mubr.f32.gmra.mrb[0].mxu0 %v7812
        %v7897 = vpop.f32.mrb[0].mxu0
        %v7898 = vadd.f32 0.0, %v7897
        %v7899 = vpop.f32.mrb[0].mxu0
        %7900 = vmatprep.mubr.f32.mxu0 0.0
        %7901 = vmatmul.mubr.f32.gmra.mrb[0].mxu0 %v7814
        %v7902 = vpop.f32.mrb[0].mxu0
        %v7903 = vadd.f32 0.0, %v7902
        %v7904 = vpop.f32.mrb[0].mxu0
        %7905 = vdwg.mxu0
        %v7906 = vadd.f32 %v7785, %v7883
        %v7907 = vadd.f32 %v7786, %v7888
        %v7908 = vadd.f32 %v7787, %v7893
        %v7909 = vadd.f32 %v7788, %v7898
        %v7910 = vadd.f32 %v7789, %v7903
        %v7911 = vld [vmem:[%s7 + $0x80] sm:$0xff]
        %v7912 = vld [vmem:[%s7 + $0x88] sm:$0xff]
        %v7913 = vld [vmem:[%s7 + $0x90] sm:$0xff]
        %v7914 = vld [vmem:[%s7 + $0x98] sm:$0xff]
        %v7915 = vrot.slane %v7443, 7
        %v7916 = vrot.slane %v7444, 7
        %v7917 = vsel %vm6868, %v7915, %v7916
        %v7918 = vrot.slane %v7445, 7
        %v7919 = vsel %vm6868, %v7916, %v7918
        %v7920 = vrot.slane %v7446, 7
        %v7921 = vsel %vm6868, %v7918, %v7920
        %v7922 = vrot.slane %v7447, 7
        %v7923 = vsel %vm6868, %v7920, %v7922
        %v7924 = vrot.slane %v7448, 7
        %v7925 = vsel %vm6868, %v7922, %v7924
        %v7926 = vsel %vm412, %v7917, 0
        %v7928 = vsel %vm412, %v7919, 0
        %v7930 = vsel %vm412, %v7921, 0
        %v7932 = vsel %vm412, %v7923, 0
        %v7934 = vsel %vm412, %v7925, 0
        %7936 = vmatprep.subr.mxu0 0.0
        %7937 = vmatpush1.msra.mxu0 %v7911
        %7938 = vmatprep.subr.mxu0 0.0
        %7939 = vmatpush1.msra.mxu0 %v7912
        %7940 = vmatprep.subr.mxu0 0.0
        %7941 = vmatpush1.msra.mxu0 %v7913
        %7942 = vmatprep.subr.mxu0 0.0
        %7943 = vmatpush1.msra.mxu0 %v7914
        %7944 = vmatprep.subr.mxu0 0.0
        %7945 = vmatpush1.msra.mxu0 0.0
        %7946 = vmatprep.subr.mxu0 0.0
        %7947 = vmatpush1.msra.mxu0 0.0
        %7948 = vmatprep.subr.mxu0 0.0
        %7949 = vmatpush1.msra.mxu0 0.0
        %7950 = vmatprep.subr.mxu0 0.0
        %7951 = vmatpush1.msra.mxu0 0.0
        %7952 = vmatprep.subr.mxu0 0.0
        %7953 = vmatpush1.msra.mxu0 0.0
        %7954 = vmatprep.subr.mxu0 0.0
        %7955 = vmatpush1.msra.mxu0 0.0
        %7956 = vmatprep.subr.mxu0 0.0
        %7957 = vmatpush1.msra.mxu0 0.0
        %7958 = vmatprep.subr.mxu0 0.0
        %7959 = vmatpush1.msra.mxu0 0.0
        %7960 = vmatprep.subr.mxu0 0.0
        %7961 = vmatpush1.msra.mxu0 0.0
        %7962 = vmatprep.subr.mxu0 0.0
        %7963 = vmatpush1.msra.mxu0 0.0
        %7964 = vmatprep.subr.mxu0 0.0
        %7965 = vmatpush1.msra.mxu0 0.0
        %7966 = vmatprep.subr.mxu0 0.0
        %7967 = vmatpush1.msra.mxu0 0.0
        %7968 = vmatprep.subr.mxu0 0.0
        %7969 = vmatpush1.msra.mxu0 0.0
        %7970 = vmatprep.subr.mxu0 0.0
        %7971 = vmatpush1.msra.mxu0 0.0
        %7972 = vmatprep.subr.mxu0 0.0
        %7973 = vmatpush1.msra.mxu0 0.0
        %7974 = vmatprep.subr.mxu0 0.0
        %7975 = vmatpush1.msra.mxu0 0.0
        %7976 = vmatprep.subr.mxu0 0.0
        %7977 = vmatpush1.msra.mxu0 0.0
        %7978 = vmatprep.subr.mxu0 0.0
        %7979 = vmatpush1.msra.mxu0 0.0
        %7980 = vmatprep.subr.mxu0 0.0
        %7981 = vmatpush1.msra.mxu0 0.0
        %7982 = vmatprep.subr.mxu0 0.0
        %7983 = vmatpush1.msra.mxu0 0.0
        %7984 = vmatprep.subr.mxu0 0.0
        %7985 = vmatpush1.msra.mxu0 0.0
        %7986 = vmatprep.subr.mxu0 0.0
        %7987 = vmatpush1.msra.mxu0 0.0
        %7988 = vmatprep.subr.mxu0 0.0
        %7989 = vmatpush1.msra.mxu0 0.0
        %7990 = vmatprep.subr.mxu0 0.0
        %7991 = vmatpush1.msra.mxu0 0.0
        %7992 = vmatprep.subr.mxu0 0.0
        %7993 = vmatpush1.msra.mxu0 0.0
        %7994 = vmatprep.subr.mxu0 0.0
        %7995 = vmatpush1.msra.mxu0 0.0
        %7996 = vmatprep.subr.mxu0 0.0
        %7997 = vmatpush1.msra.mxu0 0.0
        %7998 = vmatprep.subr.mxu0 0.0
        %7999 = vmatpush1.msra.mxu0 0.0
        %8000 = vmatprep.mubr.f32.mxu0 0.0
        %8001 = vmatmul.mubr.f32.gmra.mrb[0].mxu0 %v7926
        %v8002 = vpop.f32.mrb[0].mxu0
        %v8003 = vadd.f32 0.0, %v8002
        %v8004 = vpop.f32.mrb[0].mxu0
        %8005 = vmatprep.mubr.f32.mxu0 0.0
        %8006 = vmatmul.mubr.f32.gmra.mrb[0].mxu0 %v7928
        %v8007 = vpop.f32.mrb[0].mxu0
        %v8008 = vadd.f32 0.0, %v8007
        %v8009 = vpop.f32.mrb[0].mxu0
        %8010 = vmatprep.mubr.f32.mxu0 0.0
        %8011 = vmatmul.mubr.f32.gmra.mrb[0].mxu0 %v7930
        %v8012 = vpop.f32.mrb[0].mxu0
        %v8013 = vadd.f32 0.0, %v8012
        %v8014 = vpop.f32.mrb[0].mxu0
        %8015 = vmatprep.mubr.f32.mxu0 0.0
        %8016 = vmatmul.mubr.f32.gmra.mrb[0].mxu0 %v7932
        %v8017 = vpop.f32.mrb[0].mxu0
        %v8018 = vadd.f32 0.0, %v8017
        %v8019 = vpop.f32.mrb[0].mxu0
        %8020 = vmatprep.mubr.f32.mxu0 0.0
        %8021 = vmatmul.mubr.f32.gmra.mrb[0].mxu0 %v7934
        %v8022 = vpop.f32.mrb[0].mxu0
        %v8023 = vadd.f32 0.0, %v8022
        %v8024 = vpop.f32.mrb[0].mxu0
        %8025 = vdwg.mxu0
        %v8026 = vadd.f32 %v7906, %v8003
        %v8027 = vadd.f32 %v7907, %v8008
        %v8028 = vadd.f32 %v7908, %v8013
        %v8029 = vadd.f32 %v7909, %v8018
        %v8030 = vadd.f32 %v7910, %v8023
        %v8031 = vld [vmem:[%s7 + $0xa0] sm:$0xff]
        %v8032 = vld [vmem:[%s7 + $0xa8] sm:$0xff]
        %v8033 = vld [vmem:[%s7 + $0xb0] sm:$0xff]
        %v8034 = vld [vmem:[%s7 + $0xb8] sm:$0xff]
        %v8035 = vsel %vm412, %v7448, 0
        %8037 = vmatprep.subr.mxu0 0.0
        %8038 = vmatpush1.msra.mxu0 %v8031
        %8039 = vmatprep.subr.mxu0 0.0
        %8040 = vmatpush1.msra.mxu0 %v8032
        %8041 = vmatprep.subr.mxu0 0.0
        %8042 = vmatpush1.msra.mxu0 %v8033
        %8043 = vmatprep.subr.mxu0 0.0
        %8044 = vmatpush1.msra.mxu0 %v8034
        %8045 = vmatprep.subr.mxu0 0.0
        %8046 = vmatpush1.msra.mxu0 0.0
        %8047 = vmatprep.subr.mxu0 0.0
        %8048 = vmatpush1.msra.mxu0 0.0
        %8049 = vmatprep.subr.mxu0 0.0
        %8050 = vmatpush1.msra.mxu0 0.0
        %8051 = vmatprep.subr.mxu0 0.0
        %8052 = vmatpush1.msra.mxu0 0.0
        %8053 = vmatprep.subr.mxu0 0.0
        %8054 = vmatpush1.msra.mxu0 0.0
        %8055 = vmatprep.subr.mxu0 0.0
        %8056 = vmatpush1.msra.mxu0 0.0
        %8057 = vmatprep.subr.mxu0 0.0
        %8058 = vmatpush1.msra.mxu0 0.0
        %8059 = vmatprep.subr.mxu0 0.0
        %8060 = vmatpush1.msra.mxu0 0.0
        %8061 = vmatprep.subr.mxu0 0.0
        %8062 = vmatpush1.msra.mxu0 0.0
        %8063 = vmatprep.subr.mxu0 0.0
        %8064 = vmatpush1.msra.mxu0 0.0
        %8065 = vmatprep.subr.mxu0 0.0
        %8066 = vmatpush1.msra.mxu0 0.0
        %8067 = vmatprep.subr.mxu0 0.0
        %8068 = vmatpush1.msra.mxu0 0.0
        %8069 = vmatprep.subr.mxu0 0.0
        %8070 = vmatpush1.msra.mxu0 0.0
        %8071 = vmatprep.subr.mxu0 0.0
        %8072 = vmatpush1.msra.mxu0 0.0
        %8073 = vmatprep.subr.mxu0 0.0
        %8074 = vmatpush1.msra.mxu0 0.0
        %8075 = vmatprep.subr.mxu0 0.0
        %8076 = vmatpush1.msra.mxu0 0.0
        %8077 = vmatprep.subr.mxu0 0.0
        %8078 = vmatpush1.msra.mxu0 0.0
        %8079 = vmatprep.subr.mxu0 0.0
        %8080 = vmatpush1.msra.mxu0 0.0
        %8081 = vmatprep.subr.mxu0 0.0
        %8082 = vmatpush1.msra.mxu0 0.0
        %8083 = vmatprep.subr.mxu0 0.0
        %8084 = vmatpush1.msra.mxu0 0.0
        %8085 = vmatprep.subr.mxu0 0.0
        %8086 = vmatpush1.msra.mxu0 0.0
        %8087 = vmatprep.subr.mxu0 0.0
        %8088 = vmatpush1.msra.mxu0 0.0
        %8089 = vmatprep.subr.mxu0 0.0
        %8090 = vmatpush1.msra.mxu0 0.0
        %8091 = vmatprep.subr.mxu0 0.0
        %8092 = vmatpush1.msra.mxu0 0.0
        %8093 = vmatprep.subr.mxu0 0.0
        %8094 = vmatpush1.msra.mxu0 0.0
        %8095 = vmatprep.subr.mxu0 0.0
        %8096 = vmatpush1.msra.mxu0 0.0
        %8097 = vmatprep.subr.mxu0 0.0
        %8098 = vmatpush1.msra.mxu0 0.0
        %8099 = vmatprep.subr.mxu0 0.0
        %8100 = vmatpush1.msra.mxu0 0.0
        %8101 = vmatprep.mubr.f32.mxu0 0.0
        %8102 = vmatmul.mubr.f32.gmra.mrb[0].mxu0 %v7574
        %v8103 = vpop.f32.mrb[0].mxu0
        %v8104 = vadd.f32 0.0, %v8103
        %v8105 = vpop.f32.mrb[0].mxu0
        %8106 = vmatprep.mubr.f32.mxu0 0.0
        %8107 = vmatmul.mubr.f32.gmra.mrb[0].mxu0 %v7576
        %v8108 = vpop.f32.mrb[0].mxu0
        %v8109 = vadd.f32 0.0, %v8108
        %v8110 = vpop.f32.mrb[0].mxu0
        %8111 = vmatprep.mubr.f32.mxu0 0.0
        %8112 = vmatmul.mubr.f32.gmra.mrb[0].mxu0 %v7578
        %v8113 = vpop.f32.mrb[0].mxu0
        %v8114 = vadd.f32 0.0, %v8113
        %v8115 = vpop.f32.mrb[0].mxu0
        %8116 = vmatprep.mubr.f32.mxu0 0.0
        %8117 = vmatmul.mubr.f32.gmra.mrb[0].mxu0 %v7580
        %v8118 = vpop.f32.mrb[0].mxu0
        %v8119 = vadd.f32 0.0, %v8118
        %v8120 = vpop.f32.mrb[0].mxu0
        %8121 = vmatprep.mubr.f32.mxu0 0.0
        %8122 = vmatmul.mubr.f32.gmra.mrb[0].mxu0 %v8035
        %v8123 = vpop.f32.mrb[0].mxu0
        %v8124 = vadd.f32 0.0, %v8123
        %v8125 = vpop.f32.mrb[0].mxu0
        %8126 = vdwg.mxu0
        %v8127 = vadd.f32 %v8026, %v8104
        %v8128 = vadd.f32 %v8027, %v8109
        %v8129 = vadd.f32 %v8028, %v8114
        %v8130 = vadd.f32 %v8029, %v8119
        %v8131 = vadd.f32 %v8030, %v8124
        %v8132 = vld [vmem:[%s7 + $0xc0] sm:$0xff]
        %v8133 = vld [vmem:[%s7 + $0xc8] sm:$0xff]
        %v8134 = vld [vmem:[%s7 + $0xd0] sm:$0xff]
        %v8135 = vld [vmem:[%s7 + $0xd8] sm:$0xff]
        %v8136 = vrot.slane %v7444, 4
        %v8137 = vrot.slane %v7445, 4
        %v8138 = vsel %vm2550, %v8136, %v8137
        %v8139 = vrot.slane %v7446, 4
        %v8140 = vsel %vm2550, %v8137, %v8139
        %v8141 = vrot.slane %v7447, 4
        %v8142 = vsel %vm2550, %v8139, %v8141
        %v8143 = vrot.slane %v7448, 4
        %v8144 = vsel %vm2550, %v8141, %v8143
        %v8145 = vsel %vm412, %v8138, 0
        %v8147 = vsel %vm412, %v8140, 0
        %v8149 = vsel %vm412, %v8142, 0
        %v8151 = vsel %vm412, %v8144, 0
        %v8153 = vsel %vm412, %v8143, 0
        %8155 = vmatprep.subr.mxu0 0.0
        %8156 = vmatpush1.msra.mxu0 %v8132
        %8157 = vmatprep.subr.mxu0 0.0
        %8158 = vmatpush1.msra.mxu0 %v8133
        %8159 = vmatprep.subr.mxu0 0.0
        %8160 = vmatpush1.msra.mxu0 %v8134
        %8161 = vmatprep.subr.mxu0 0.0
        %8162 = vmatpush1.msra.mxu0 %v8135
        %8163 = vmatprep.subr.mxu0 0.0
        %8164 = vmatpush1.msra.mxu0 0.0
        %8165 = vmatprep.subr.mxu0 0.0
        %8166 = vmatpush1.msra.mxu0 0.0
        %8167 = vmatprep.subr.mxu0 0.0
        %8168 = vmatpush1.msra.mxu0 0.0
        %8169 = vmatprep.subr.mxu0 0.0
        %8170 = vmatpush1.msra.mxu0 0.0
        %8171 = vmatprep.subr.mxu0 0.0
        %8172 = vmatpush1.msra.mxu0 0.0
        %8173 = vmatprep.subr.mxu0 0.0
        %8174 = vmatpush1.msra.mxu0 0.0
        %8175 = vmatprep.subr.mxu0 0.0
        %8176 = vmatpush1.msra.mxu0 0.0
        %8177 = vmatprep.subr.mxu0 0.0
        %8178 = vmatpush1.msra.mxu0 0.0
        %8179 = vmatprep.subr.mxu0 0.0
        %8180 = vmatpush1.msra.mxu0 0.0
        %8181 = vmatprep.subr.mxu0 0.0
        %8182 = vmatpush1.msra.mxu0 0.0
        %8183 = vmatprep.subr.mxu0 0.0
        %8184 = vmatpush1.msra.mxu0 0.0
        %8185 = vmatprep.subr.mxu0 0.0
        %8186 = vmatpush1.msra.mxu0 0.0
        %8187 = vmatprep.subr.mxu0 0.0
        %8188 = vmatpush1.msra.mxu0 0.0
        %8189 = vmatprep.subr.mxu0 0.0
        %8190 = vmatpush1.msra.mxu0 0.0
        %8191 = vmatprep.subr.mxu0 0.0
        %8192 = vmatpush1.msra.mxu0 0.0
        %8193 = vmatprep.subr.mxu0 0.0
        %8194 = vmatpush1.msra.mxu0 0.0
        %8195 = vmatprep.subr.mxu0 0.0
        %8196 = vmatpush1.msra.mxu0 0.0
        %8197 = vmatprep.subr.mxu0 0.0
        %8198 = vmatpush1.msra.mxu0 0.0
        %8199 = vmatprep.subr.mxu0 0.0
        %8200 = vmatpush1.msra.mxu0 0.0
        %8201 = vmatprep.subr.mxu0 0.0
        %8202 = vmatpush1.msra.mxu0 0.0
        %8203 = vmatprep.subr.mxu0 0.0
        %8204 = vmatpush1.msra.mxu0 0.0
        %8205 = vmatprep.subr.mxu0 0.0
        %8206 = vmatpush1.msra.mxu0 0.0
        %8207 = vmatprep.subr.mxu0 0.0
        %8208 = vmatpush1.msra.mxu0 0.0
        %8209 = vmatprep.subr.mxu0 0.0
        %8210 = vmatpush1.msra.mxu0 0.0
        %8211 = vmatprep.subr.mxu0 0.0
        %8212 = vmatpush1.msra.mxu0 0.0
        %8213 = vmatprep.subr.mxu0 0.0
        %8214 = vmatpush1.msra.mxu0 0.0
        %8215 = vmatprep.subr.mxu0 0.0
        %8216 = vmatpush1.msra.mxu0 0.0
        %8217 = vmatprep.subr.mxu0 0.0
        %8218 = vmatpush1.msra.mxu0 0.0
        %8219 = vmatprep.mubr.f32.mxu0 0.0
        %8220 = vmatmul.mubr.f32.gmra.mrb[0].mxu0 %v8145
        %v8221 = vpop.f32.mrb[0].mxu0
        %v8222 = vadd.f32 0.0, %v8221
        %v8223 = vpop.f32.mrb[0].mxu0
        %8224 = vmatprep.mubr.f32.mxu0 0.0
        %8225 = vmatmul.mubr.f32.gmra.mrb[0].mxu0 %v8147
        %v8226 = vpop.f32.mrb[0].mxu0
        %v8227 = vadd.f32 0.0, %v8226
        %v8228 = vpop.f32.mrb[0].mxu0
        %8229 = vmatprep.mubr.f32.mxu0 0.0
        %8230 = vmatmul.mubr.f32.gmra.mrb[0].mxu0 %v8149
        %v8231 = vpop.f32.mrb[0].mxu0
        %v8232 = vadd.f32 0.0, %v8231
        %v8233 = vpop.f32.mrb[0].mxu0
        %8234 = vmatprep.mubr.f32.mxu0 0.0
        %8235 = vmatmul.mubr.f32.gmra.mrb[0].mxu0 %v8151
        %v8236 = vpop.f32.mrb[0].mxu0
        %v8237 = vadd.f32 0.0, %v8236
        %v8238 = vpop.f32.mrb[0].mxu0
        %8239 = vmatprep.mubr.f32.mxu0 0.0
        %8240 = vmatmul.mubr.f32.gmra.mrb[0].mxu0 %v8153
        %v8241 = vpop.f32.mrb[0].mxu0
        %v8242 = vadd.f32 0.0, %v8241
        %v8243 = vpop.f32.mrb[0].mxu0
        %8244 = vdwg.mxu0
        %v8245 = vadd.f32 %v8127, %v8222
        %v8246 = vadd.f32 %v8128, %v8227
        %v8247 = vadd.f32 %v8129, %v8232
        %v8248 = vadd.f32 %v8130, %v8237
        %v8249 = vadd.f32 %v8131, %v8242
        %v8250 = vld [vmem:[%s7 + $0xe0] sm:$0xff]
        %v8251 = vld [vmem:[%s7 + $0xe8] sm:$0xff]
        %v8252 = vld [vmem:[%s7 + $0xf0] sm:$0xff]
        %v8253 = vld [vmem:[%s7 + $0xf8] sm:$0xff]
        %v8255 = vrot.slane %v7444, 5
        %v8256 = vrot.slane %v7445, 5
        %v8257 = vsel %vm3339, %v8255, %v8256
        %v8258 = vrot.slane %v7446, 5
        %v8259 = vsel %vm3339, %v8256, %v8258
        %v8260 = vrot.slane %v7447, 5
        %v8261 = vsel %vm3339, %v8258, %v8260
        %v8262 = vrot.slane %v7448, 5
        %v8263 = vsel %vm3339, %v8260, %v8262
        %v8264 = vrot.slane %v7449, 5
        %v8265 = vsel %vm3339, %v8262, %v8264
        %v8266 = vsel %vm412, %v8257, 0
        %v8268 = vsel %vm412, %v8259, 0
        %v8270 = vsel %vm412, %v8261, 0
        %v8272 = vsel %vm412, %v8263, 0
        %v8274 = vsel %vm412, %v8265, 0
        %8276 = vmatprep.subr.mxu0 0.0
        %8277 = vmatpush1.msra.mxu0 %v8250
        %8278 = vmatprep.subr.mxu0 0.0
        %8279 = vmatpush1.msra.mxu0 %v8251
        %8280 = vmatprep.subr.mxu0 0.0
        %8281 = vmatpush1.msra.mxu0 %v8252
        %8282 = vmatprep.subr.mxu0 0.0
        %8283 = vmatpush1.msra.mxu0 %v8253
        %8284 = vmatprep.subr.mxu0 0.0
        %8285 = vmatpush1.msra.mxu0 0.0
        %8286 = vmatprep.subr.mxu0 0.0
        %8287 = vmatpush1.msra.mxu0 0.0
        %8288 = vmatprep.subr.mxu0 0.0
        %8289 = vmatpush1.msra.mxu0 0.0
        %8290 = vmatprep.subr.mxu0 0.0
        %8291 = vmatpush1.msra.mxu0 0.0
        %8292 = vmatprep.subr.mxu0 0.0
        %8293 = vmatpush1.msra.mxu0 0.0
        %8294 = vmatprep.subr.mxu0 0.0
        %8295 = vmatpush1.msra.mxu0 0.0
        %8296 = vmatprep.subr.mxu0 0.0
        %8297 = vmatpush1.msra.mxu0 0.0
        %8298 = vmatprep.subr.mxu0 0.0
        %8299 = vmatpush1.msra.mxu0 0.0
        %8300 = vmatprep.subr.mxu0 0.0
        %8301 = vmatpush1.msra.mxu0 0.0
        %8302 = vmatprep.subr.mxu0 0.0
        %8303 = vmatpush1.msra.mxu0 0.0
        %8304 = vmatprep.subr.mxu0 0.0
        %8305 = vmatpush1.msra.mxu0 0.0
        %8306 = vmatprep.subr.mxu0 0.0
        %8307 = vmatpush1.msra.mxu0 0.0
        %8308 = vmatprep.subr.mxu0 0.0
        %8309 = vmatpush1.msra.mxu0 0.0
        %8310 = vmatprep.subr.mxu0 0.0
        %8311 = vmatpush1.msra.mxu0 0.0
        %8312 = vmatprep.subr.mxu0 0.0
        %8313 = vmatpush1.msra.mxu0 0.0
        %8314 = vmatprep.subr.mxu0 0.0
        %8315 = vmatpush1.msra.mxu0 0.0
        %8316 = vmatprep.subr.mxu0 0.0
        %8317 = vmatpush1.msra.mxu0 0.0
        %8318 = vmatprep.subr.mxu0 0.0
        %8319 = vmatpush1.msra.mxu0 0.0
        %8320 = vmatprep.subr.mxu0 0.0
        %8321 = vmatpush1.msra.mxu0 0.0
        %8322 = vmatprep.subr.mxu0 0.0
        %8323 = vmatpush1.msra.mxu0 0.0
        %8324 = vmatprep.subr.mxu0 0.0
        %8325 = vmatpush1.msra.mxu0 0.0
        %8326 = vmatprep.subr.mxu0 0.0
        %8327 = vmatpush1.msra.mxu0 0.0
        %8328 = vmatprep.subr.mxu0 0.0
        %8329 = vmatpush1.msra.mxu0 0.0
        %8330 = vmatprep.subr.mxu0 0.0
        %8331 = vmatpush1.msra.mxu0 0.0
        %8332 = vmatprep.subr.mxu0 0.0
        %8333 = vmatpush1.msra.mxu0 0.0
        %8334 = vmatprep.subr.mxu0 0.0
        %8335 = vmatpush1.msra.mxu0 0.0
        %8336 = vmatprep.subr.mxu0 0.0
        %8337 = vmatpush1.msra.mxu0 0.0
        %8338 = vmatprep.subr.mxu0 0.0
        %8339 = vmatpush1.msra.mxu0 0.0
        %8340 = vmatprep.mubr.f32.mxu0 0.0
        %8341 = vmatmul.mubr.f32.gmra.mrb[0].mxu0 %v8266
        %v8342 = vpop.f32.mrb[0].mxu0
        %v8343 = vadd.f32 0.0, %v8342
        %v8344 = vpop.f32.mrb[0].mxu0
        %8345 = vmatprep.mubr.f32.mxu0 0.0
        %8346 = vmatmul.mubr.f32.gmra.mrb[0].mxu0 %v8268
        %v8347 = vpop.f32.mrb[0].mxu0
        %v8348 = vadd.f32 0.0, %v8347
        %v8349 = vpop.f32.mrb[0].mxu0
        %8350 = vmatprep.mubr.f32.mxu0 0.0
        %8351 = vmatmul.mubr.f32.gmra.mrb[0].mxu0 %v8270
        %v8352 = vpop.f32.mrb[0].mxu0
        %v8353 = vadd.f32 0.0, %v8352
        %v8354 = vpop.f32.mrb[0].mxu0
        %8355 = vmatprep.mubr.f32.mxu0 0.0
        %8356 = vmatmul.mubr.f32.gmra.mrb[0].mxu0 %v8272
        %v8357 = vpop.f32.mrb[0].mxu0
        %v8358 = vadd.f32 0.0, %v8357
        %v8359 = vpop.f32.mrb[0].mxu0
        %8360 = vmatprep.mubr.f32.mxu0 0.0
        %8361 = vmatmul.mubr.f32.gmra.mrb[0].mxu0 %v8274
        %v8362 = vpop.f32.mrb[0].mxu0
        %v8363 = vadd.f32 0.0, %v8362
        %v8364 = vpop.f32.mrb[0].mxu0
        %8365 = vdwg.mxu0
        %v8366 = vadd.f32 %v8245, %v8343
        %v8367 = vadd.f32 %v8246, %v8348
        %v8368 = vadd.f32 %v8247, %v8353
        %v8369 = vadd.f32 %v8248, %v8358
        %v8370 = vadd.f32 %v8249, %v8363
        %v8371 = vld [vmem:[%s7 + $0x100] sm:$0xff]
        %v8372 = vld [vmem:[%s7 + $0x108] sm:$0xff]
        %v8373 = vld [vmem:[%s7 + $0x110] sm:$0xff]
        %v8374 = vld [vmem:[%s7 + $0x118] sm:$0xff]
        %v8375 = vrot.slane %v7449, 6
        %v8376 = vsel %vm3811, %v7804, %v8375
        %v8377 = vsel %vm412, %v8376, 0
        %8379 = vmatprep.subr.mxu0 0.0
        %8380 = vmatpush1.msra.mxu0 %v8371
        %8381 = vmatprep.subr.mxu0 0.0
        %8382 = vmatpush1.msra.mxu0 %v8372
        %8383 = vmatprep.subr.mxu0 0.0
        %8384 = vmatpush1.msra.mxu0 %v8373
        %8385 = vmatprep.subr.mxu0 0.0
        %8386 = vmatpush1.msra.mxu0 %v8374
        %8387 = vmatprep.subr.mxu0 0.0
        %8388 = vmatpush1.msra.mxu0 0.0
        %8389 = vmatprep.subr.mxu0 0.0
        %8390 = vmatpush1.msra.mxu0 0.0
        %8391 = vmatprep.subr.mxu0 0.0
        %8392 = vmatpush1.msra.mxu0 0.0
        %8393 = vmatprep.subr.mxu0 0.0
        %8394 = vmatpush1.msra.mxu0 0.0
        %8395 = vmatprep.subr.mxu0 0.0
        %8396 = vmatpush1.msra.mxu0 0.0
        %8397 = vmatprep.subr.mxu0 0.0
        %8398 = vmatpush1.msra.mxu0 0.0
        %8399 = vmatprep.subr.mxu0 0.0
        %8400 = vmatpush1.msra.mxu0 0.0
        %8401 = vmatprep.subr.mxu0 0.0
        %8402 = vmatpush1.msra.mxu0 0.0
        %8403 = vmatprep.subr.mxu0 0.0
        %8404 = vmatpush1.msra.mxu0 0.0
        %8405 = vmatprep.subr.mxu0 0.0
        %8406 = vmatpush1.msra.mxu0 0.0
        %8407 = vmatprep.subr.mxu0 0.0
        %8408 = vmatpush1.msra.mxu0 0.0
        %8409 = vmatprep.subr.mxu0 0.0
        %8410 = vmatpush1.msra.mxu0 0.0
        %8411 = vmatprep.subr.mxu0 0.0
        %8412 = vmatpush1.msra.mxu0 0.0
        %8413 = vmatprep.subr.mxu0 0.0
        %8414 = vmatpush1.msra.mxu0 0.0
        %8415 = vmatprep.subr.mxu0 0.0
        %8416 = vmatpush1.msra.mxu0 0.0
        %8417 = vmatprep.subr.mxu0 0.0
        %8418 = vmatpush1.msra.mxu0 0.0
        %8419 = vmatprep.subr.mxu0 0.0
        %8420 = vmatpush1.msra.mxu0 0.0
        %8421 = vmatprep.subr.mxu0 0.0
        %8422 = vmatpush1.msra.mxu0 0.0
        %8423 = vmatprep.subr.mxu0 0.0
        %8424 = vmatpush1.msra.mxu0 0.0
        %8425 = vmatprep.subr.mxu0 0.0
        %8426 = vmatpush1.msra.mxu0 0.0
        %8427 = vmatprep.subr.mxu0 0.0
        %8428 = vmatpush1.msra.mxu0 0.0
        %8429 = vmatprep.subr.mxu0 0.0
        %8430 = vmatpush1.msra.mxu0 0.0
        %8431 = vmatprep.subr.mxu0 0.0
        %8432 = vmatpush1.msra.mxu0 0.0
        %8433 = vmatprep.subr.mxu0 0.0
        %8434 = vmatpush1.msra.mxu0 0.0
        %8435 = vmatprep.subr.mxu0 0.0
        %8436 = vmatpush1.msra.mxu0 0.0
        %8437 = vmatprep.subr.mxu0 0.0
        %8438 = vmatpush1.msra.mxu0 0.0
        %8439 = vmatprep.subr.mxu0 0.0
        %8440 = vmatpush1.msra.mxu0 0.0
        %8441 = vmatprep.subr.mxu0 0.0
        %8442 = vmatpush1.msra.mxu0 0.0
        %8443 = vmatprep.mubr.f32.mxu0 0.0
        %8444 = vmatmul.mubr.f32.gmra.mrb[0].mxu0 %v7808
        %v8445 = vpop.f32.mrb[0].mxu0
        %v8446 = vadd.f32 0.0, %v8445
        %v8447 = vpop.f32.mrb[0].mxu0
        %8448 = vmatprep.mubr.f32.mxu0 0.0
        %8449 = vmatmul.mubr.f32.gmra.mrb[0].mxu0 %v7810
        %v8450 = vpop.f32.mrb[0].mxu0
        %v8451 = vadd.f32 0.0, %v8450
        %v8452 = vpop.f32.mrb[0].mxu0
        %8453 = vmatprep.mubr.f32.mxu0 0.0
        %8454 = vmatmul.mubr.f32.gmra.mrb[0].mxu0 %v7812
        %v8455 = vpop.f32.mrb[0].mxu0
        %v8456 = vadd.f32 0.0, %v8455
        %v8457 = vpop.f32.mrb[0].mxu0
        %8458 = vmatprep.mubr.f32.mxu0 0.0
        %8459 = vmatmul.mubr.f32.gmra.mrb[0].mxu0 %v7814
        %v8460 = vpop.f32.mrb[0].mxu0
        %v8461 = vadd.f32 0.0, %v8460
        %v8462 = vpop.f32.mrb[0].mxu0
        %8463 = vmatprep.mubr.f32.mxu0 0.0
        %8464 = vmatmul.mubr.f32.gmra.mrb[0].mxu0 %v8377
        %v8465 = vpop.f32.mrb[0].mxu0
        %v8466 = vadd.f32 0.0, %v8465
        %v8467 = vpop.f32.mrb[0].mxu0
        %8468 = vdwg.mxu0
        %v8469 = vadd.f32 %v8366, %v8446
        %v8470 = vadd.f32 %v8367, %v8451
        %v8471 = vadd.f32 %v8368, %v8456
        %v8472 = vadd.f32 %v8369, %v8461
        %v8473 = vadd.f32 %v8370, %v8466
        %v8474 = vld [vmem:[%s8] sm:$0x1]
        %v8476 = vlaneseq
        %v8477 = vshrl.u32 %v8476, 7
        %v8478 = vsub.s32 0, %v8477
        %v8479 = vrot.slane %v8474, %v8478
        %v8481 = vadd.f32 %v8469, %v8479
        %v8482 = vadd.f32 %v8470, %v8479
        %v8483 = vadd.f32 %v8471, %v8479
        %v8484 = vadd.f32 %v8472, %v8479
        %v8485 = vadd.f32 %v8473, %v8479
        %v8490 = vrot.slane %v8481, 1
        %v8491 = vrot.slane %v8482, 1
        %v8492 = vsel %vm510, %v8490, %v8491
        %v8493 = vrot.slane %v8483, 1
        %v8494 = vsel %vm510, %v8491, %v8493
        %v8495 = vrot.slane %v8484, 1
        %v8496 = vsel %vm510, %v8493, %v8495
        %v8501 = vmax.f32 %v8481, %v8492
        %v8502 = vmax.f32 %v8482, %v8494
        %v8503 = vmax.f32 %v8483, %v8496
        %v8504 = vmax.f32 %v8484, %v8495
        %v8506 = vrot.slane %v8485, 1
        %v8507 = vsel %vm510, %v8495, %v8506
        %v8510 = vmax.f32 %v8484, %v8507
        %v8511 = vmax.f32 %v8485, %v8506
        %v8517 = vrot.slane %v8501, 6
        %v8518 = vrot.slane %v8502, 6
        %v8519 = vsel %vm3811, %v8517, %v8518
        %v8520 = vrot.slane %v8503, 6
        %v8521 = vsel %vm3811, %v8518, %v8520
        %v8522 = vrot.slane %v8510, 6
        %v8523 = vsel %vm3811, %v8520, %v8522
        %v8524 = vrot.slane %v8511, 6
        %v8525 = vsel %vm3811, %v8522, %v8524
        %v8530 = vmax.f32 %v8501, %v8519
        %v8531 = vmax.f32 %v8502, %v8521
        %v8532 = vmax.f32 %v8503, %v8523
        %v8533 = vmax.f32 %v8504, %v8525
        %v8534 = vld [vmem:[%s9] sm:$0xff]
        %v8535 = vld [vmem:[%s9 + $0x8] sm:$0xff]
        %v8536 = vld [vmem:[%s9 + $0x10] sm:$0xff]
        %v8537 = vld [vmem:[%s9 + $0x18] sm:$0xff]
        %v8538 = vld [vmem:[%s10] sm:$0x1]
        %v8540 = vlaneseq
        %v8541 = vshrl.u32 %v8540, 7
        %v8542 = vsub.s32 0, %v8541
        %v8543 = vrot.slane %v8538, %v8542
        %v8546 = vsel %vm412, %v8530, 0
        %v8549 = vsel %vm412, %v8531, 0
        %v8552 = vsel %vm412, %v8532, 0
        %v8555 = vsel %vm412, %v8533, 0
        %8557 = vmatprep.subr.mxu0 0.0
        %8558 = vmatpush1.msra.mxu0 %v8534
        %8559 = vmatprep.subr.mxu0 0.0
        %8560 = vmatpush1.msra.mxu0 %v8535
        %8561 = vmatprep.subr.mxu0 0.0
        %8562 = vmatpush1.msra.mxu0 %v8536
        %8563 = vmatprep.subr.mxu0 0.0
        %8564 = vmatpush1.msra.mxu0 %v8537
        %8565 = vmatprep.subr.mxu0 0.0
        %8566 = vmatpush1.msra.mxu0 0.0
        %8567 = vmatprep.subr.mxu0 0.0
        %8568 = vmatpush1.msra.mxu0 0.0
        %8569 = vmatprep.subr.mxu0 0.0
        %8570 = vmatpush1.msra.mxu0 0.0
        %8571 = vmatprep.subr.mxu0 0.0
        %8572 = vmatpush1.msra.mxu0 0.0
        %8573 = vmatprep.subr.mxu0 0.0
        %8574 = vmatpush1.msra.mxu0 0.0
        %8575 = vmatprep.subr.mxu0 0.0
        %8576 = vmatpush1.msra.mxu0 0.0
        %8577 = vmatprep.subr.mxu0 0.0
        %8578 = vmatpush1.msra.mxu0 0.0
        %8579 = vmatprep.subr.mxu0 0.0
        %8580 = vmatpush1.msra.mxu0 0.0
        %8581 = vmatprep.subr.mxu0 0.0
        %8582 = vmatpush1.msra.mxu0 0.0
        %8583 = vmatprep.subr.mxu0 0.0
        %8584 = vmatpush1.msra.mxu0 0.0
        %8585 = vmatprep.subr.mxu0 0.0
        %8586 = vmatpush1.msra.mxu0 0.0
        %8587 = vmatprep.subr.mxu0 0.0
        %8588 = vmatpush1.msra.mxu0 0.0
        %8589 = vmatprep.subr.mxu0 0.0
        %8590 = vmatpush1.msra.mxu0 0.0
        %8591 = vmatprep.subr.mxu0 0.0
        %8592 = vmatpush1.msra.mxu0 0.0
        %8593 = vmatprep.subr.mxu0 0.0
        %8594 = vmatpush1.msra.mxu0 0.0
        %8595 = vmatprep.subr.mxu0 0.0
        %8596 = vmatpush1.msra.mxu0 0.0
        %8597 = vmatprep.subr.mxu0 0.0
        %8598 = vmatpush1.msra.mxu0 0.0
        %8599 = vmatprep.subr.mxu0 0.0
        %8600 = vmatpush1.msra.mxu0 0.0
        %8601 = vmatprep.subr.mxu0 0.0
        %8602 = vmatpush1.msra.mxu0 0.0
        %8603 = vmatprep.subr.mxu0 0.0
        %8604 = vmatpush1.msra.mxu0 0.0
        %8605 = vmatprep.subr.mxu0 0.0
        %8606 = vmatpush1.msra.mxu0 0.0
        %8607 = vmatprep.subr.mxu0 0.0
        %8608 = vmatpush1.msra.mxu0 0.0
        %8609 = vmatprep.subr.mxu0 0.0
        %8610 = vmatpush1.msra.mxu0 0.0
        %8611 = vmatprep.subr.mxu0 0.0
        %8612 = vmatpush1.msra.mxu0 0.0
        %8613 = vmatprep.subr.mxu0 0.0
        %8614 = vmatpush1.msra.mxu0 0.0
        %8615 = vmatprep.subr.mxu0 0.0
        %8616 = vmatpush1.msra.mxu0 0.0
        %8617 = vmatprep.subr.mxu0 0.0
        %8618 = vmatpush1.msra.mxu0 0.0
        %8619 = vmatprep.subr.mxu0 0.0
        %8620 = vmatpush1.msra.mxu0 0.0
        %8621 = vmatprep.mubr.f32.mxu0 0.0
        %8622 = vmatmul.mubr.f32.gmra.mrb[0].mxu0 %v8546
        %v8623 = vpop.f32.mrb[0].mxu0
        %v8624 = vadd.f32 %v8543, %v8623
        %v8625 = vpop.f32.mrb[0].mxu0
        %8626 = vmatprep.mubr.f32.mxu0 0.0
        %8627 = vmatmul.mubr.f32.gmra.mrb[0].mxu0 %v8549
        %v8628 = vpop.f32.mrb[0].mxu0
        %v8629 = vadd.f32 %v8543, %v8628
        %v8630 = vpop.f32.mrb[0].mxu0
        %8631 = vmatprep.mubr.f32.mxu0 0.0
        %8632 = vmatmul.mubr.f32.gmra.mrb[0].mxu0 %v8552
        %v8633 = vpop.f32.mrb[0].mxu0
        %v8634 = vpop.f32.mrb[0].mxu0
        %8635 = vmatprep.mubr.f32.mxu0 0.0
        %8636 = vmatmul.mubr.f32.gmra.mrb[0].mxu0 %v8555
        %v8637 = vpop.f32.mrb[0].mxu0
        %v8638 = vpop.f32.mrb[0].mxu0
        %8639 = vdwg.mxu0
        %8640 = vst.msk [vmem:[%s379] sm:$0x1] %vm4630, %v8624
        %8641 = vst.msk [vmem:[%s379 - $0x1] sm:$0x4] %vm4632, %v8624
        %8642 = vst.msk [vmem:[%s379 - $0x2] sm:$0x10] %vm4634, %v8629
        %8643 = vst.msk [vmem:[%s379 - $0x3] sm:$0x40] %vm4636, %v8629
        %s8644 = sand.u32 %s269, 1
        %s8645 = scalar_lea.sflag [#allocation6], %s8644
        %s8646 = sand.u32 %s269, 1
        %s8647 = smul.addr %s8646, 4
        %s8648 = scalar_lea.vmem [#allocation5], %s8647
        // Predicated region
        $region65: #{wide_cipsi_forward.1} parent=63 // pred_check
          %p8649 = pneg %p279
        $region66: #{wide_cipsi_forward.1} parent=63 // pred_check_branch
          %8651 = sbr.rel (%p8649) target = $region68
        $region67: #{wide_cipsi_forward.1} parent=63 // pred_region
          %s8653 = ssub.s32 64, 64
          %8654 = vsyncadd %s8645, %s8653
          %s8655 = smul.addr %s25, 64
          %s8656 = scalar_lea.hbm %s11, %s8655
          %s8658 = sshll.u32 %s8648, 4
          %s8659 = int_to_ptr.vmem [resolvable:$true] %s8658
          %8661 = dma.vmem_to_hbm [thread:$0]  %s8659, 64, %s8656, %s8645
        $region68: #{wide_cipsi_forward.1} parent=63 // pred_fallthru
          _
      $region64: #{wide_cipsi_forward.1} parent=5 // pred_fallthru
        _
      %p8662 = scmp.le.s32.totalorder 2, %s20
      // Predicated region
      $region69: #{wide_cipsi_forward.1} parent=5 // pred_check
        %p8663 = pneg %p8662
      $region70: #{wide_cipsi_forward.1} parent=5 // pred_check_branch
        %8665 = sbr.rel (%p8663) target = $region72
      $region71: #{wide_cipsi_forward.1} parent=5 // pred_region
        %s8666 = ssub.s32 %s20, 2
        // Predicated region
        $region73: #{wide_cipsi_forward.1} parent=71 // pred_check
          %p8667 = pneg %p285
        $region74: #{wide_cipsi_forward.1} parent=71 // pred_check_branch
          %8669 = sbr.rel (%p8667) target = $region76
        $region75: #{wide_cipsi_forward.1} parent=71 // pred_region
          %s8670 = sand.u32 %s270, 1
          %s8671 = scalar_lea.sflag [#allocation6], %s8670
          %s8672 = sand.u32 %s270, 1
          %s8673 = smul.addr %s8672, 4
          %s8674 = scalar_lea.vmem [#allocation5], %s8673
          %8675 = dma.done %s8671, 64
        $region76: #{wide_cipsi_forward.1} parent=71 // pred_fallthru
          _
      $region72: #{wide_cipsi_forward.1} parent=5 // pred_fallthru
        _
    $region6: #{wide_cipsi_forward.1} parent=1 // loop_footer
      %s24 = sadd.s32 1, %s20
    $region7: #{wide_cipsi_forward.1} parent=1 // loop_footer_branch
      %19 = sbr.rel target = $region3
    $region8: #{wide_cipsi_forward.1} parent=1 // loop_exit
      _
    %8676 = vsyncpa [#allocation6], 1
    %s8677 = scalar_lea.sflag [#allocation6], 1
    %8678 = vsyncpa %s8677, 1

</llo_original>
